<compile_context>
chip_gen: v7x
topology: tpu7x:2x2x1
jax: 0.10.0
libtpu: 0.0.40
codegen_flags: <defaults>
</compile_context>

<pallas_src>
import jax
import jax.numpy as jnp
from jax.experimental import pallas as pl
from jax.experimental.pallas import tpu as pltpu

MATMUL_DTYPE = jnp.bfloat16   # MXU operand dtype (accumulation stays f32)

_SELU_ALPHA = 1.6732632423543772
_SELU_SCALE = 1.0507009873554805


def _selu(y):
    # exp only on the non-positive branch (no inf on the discarded side).
    return _SELU_SCALE * jnp.where(
        y > 0, y, _SELU_ALPHA * (jnp.exp(jnp.minimum(y, 0.0)) - 1.0))


def _conv_pool_bn_selu(p_ref, w_ref, b_ref, g_ref, beta_ref, pooled_ref):
    """Fused conv(k3,s2) + 2x2 maxpool + BatchNorm2d(batch stats) + SELU.

    p_ref:      [4, N, MP, K]  im2col patches, one leading slot per pool tap
    w_ref:      [K, C]         conv weight, (kh, kw, cin) x cout
    b_ref:      [1, C]         conv bias
    g_ref:      [1, C]         BN weight
    beta_ref:   [1, C]         BN bias
    pooled_ref: VMEM scratch [N, MP, C] f32
    Returns the activated [N, MP, C] f32 value.
    """
    w = w_ref[...]
    n_img = p_ref.shape[1]
    for n in range(n_img):                       # static unroll over batch
        m = jnp.dot(p_ref[0, n], w, preferred_element_type=jnp.float32)
        for t in range(1, 4):                    # remaining 2x2 pooling taps
            m = jnp.maximum(
                m, jnp.dot(p_ref[t, n], w, preferred_element_type=jnp.float32))
        pooled_ref[n] = m + b_ref[...]           # max(conv)+b == max(conv+b)

    pooled = pooled_ref[...]                                         # [N, MP, C]
    # BatchNorm2d, training-mode (biased) batch statistics over N*MP.
    # mean-of-means is exact: every image contributes the same MP count.
    mean = jnp.mean(jnp.mean(pooled, axis=1, keepdims=True),
                    axis=0, keepdims=True)                           # [1, 1, C]
    ex2 = jnp.mean(jnp.mean(pooled * pooled, axis=1, keepdims=True),
                   axis=0, keepdims=True)                            # [1, 1, C]
    var = ex2 - mean * mean
    xhat = (pooled - mean) * jax.lax.rsqrt(var + 1e-5)
    return _selu(xhat * g_ref[...] + beta_ref[...])


def _convblock_kernel(p_ref, w_ref, b_ref, g_ref, beta_ref, o_ref, pooled_ref):
    o_ref[...] = _conv_pool_bn_selu(p_ref, w_ref, b_ref, g_ref, beta_ref,
                                    pooled_ref)


def _convblock_attn_kernel(p_ref, w_ref, b_ref, g_ref, beta_ref,
                           w1_ref, b1_ref, w2t_ref, b2_ref, o_ref, pooled_ref):
    act = _conv_pool_bn_selu(p_ref, w_ref, b_ref, g_ref, beta_ref, pooled_ref)
    # Attention: AdaptiveAvgPool2d(1) + Flatten + Linear(C, C//16) + Sigmoid
    #            + Linear(C//16, C) + ReLU, then channel-wise gating.
    xm = jnp.mean(act, axis=1)                                                   # [N, C]
    h = jnp.sum(xm[:, None, :] * w1_ref[...][None, :, :], axis=2) + b1_ref[...]  # [N, C16]
    s = jax.nn.sigmoid(h)
    y = jnp.sum(s[:, :, None] * w2t_ref[...][None, :, :], axis=1) + b2_ref[...]  # [N, C]
    y = jnp.maximum(y, 0.0)
    o_ref[...] = act * y[:, None, :]


# ----------------------------------------------------------------------------
# Wrappers
# ----------------------------------------------------------------------------
def _im2col_pool_taps(x, PH, PW):
    """x: [N, H, W, Cin] -> [4, N, PH*PW, 9*Cin].

    Tap (dh, dw) of pooled pixel (ph, pw) corresponds to conv output
    (2*ph+dh, 2*pw+dw), i.e. conv input rows/cols 4*ph + 2*dh + kh.
    Odd trailing conv rows/cols (dropped by MaxPool2d floor mode) are never
    computed.
    """
    N, H, W, Cin = x.shape
    taps = []
    for dh in range(2):
        for dw in range(2):
            cols = []
            for kh in range(3):
                for kw in range(3):
                    h0 = 2 * dh + kh
                    w0 = 2 * dw + kw
                    cols.append(x[:, h0:h0 + 4 * (PH - 1) + 1:4,
                                  w0:w0 + 4 * (PW - 1) + 1:4, :])
            tap = jnp.stack(cols, axis=3)                  # [N, PH, PW, 9, Cin]
            taps.append(tap.reshape(N, PH * PW, 9 * Cin))
    return jnp.stack(taps, axis=0)                         # [4, N, PH*PW, 9*Cin]


def conv_block(x, w, b, gamma, beta, attn=None):
    """One ConvolutionalBlock (+ optional fused Attention) as a single pallas_call.

    x: [N, H, W, Cin] f32.  w: [Cout, Cin, 3, 3] (PyTorch layout).  b: [Cout].
    attn: None or (w1 [C16, Cout], b1 [C16], w2t [C16, Cout], b2 [Cout]),
          with w2t = PyTorch Linear(C16, Cout).weight.T.
    Returns [N, PH, PW, Cout] f32.
    """
    N, H, W, Cin = x.shape
    Cout = w.shape[0]
    OH = (H - 3) // 2 + 1
    OW = (W - 3) // 2 + 1
    PH, PW = OH // 2, OW // 2
    MP = PH * PW
    K = 9 * Cin

    patches = _im2col_pool_taps(x, PH, PW).astype(MATMUL_DTYPE)   # [4, N, MP, K]
    wmat = jnp.transpose(w, (2, 3, 1, 0)).reshape(K, Cout).astype(MATMUL_DTYPE)
    b2d = b.reshape(1, Cout).astype(jnp.float32)
    g2d = gamma.reshape(1, Cout).astype(jnp.float32)
    be2d = beta.reshape(1, Cout).astype(jnp.float32)

    in_specs = [
        pl.BlockSpec((4, N, MP, K), lambda i: (0, 0, 0, 0)),
        pl.BlockSpec((K, Cout), lambda i: (0, 0)),
        pl.BlockSpec((1, Cout), lambda i: (0, 0)),
        pl.BlockSpec((1, Cout), lambda i: (0, 0)),
        pl.BlockSpec((1, Cout), lambda i: (0, 0)),
    ]
    operands = [patches, wmat, b2d, g2d, be2d]
    kernel = _convblock_kernel

    if attn is not None:
        w1, b1, w2t, b2 = attn
        C16 = w1.shape[0]
        in_specs += [
            pl.BlockSpec((C16, Cout), lambda i: (0, 0)),
            pl.BlockSpec((1, C16), lambda i: (0, 0)),
            pl.BlockSpec((C16, Cout), lambda i: (0, 0)),
            pl.BlockSpec((1, Cout), lambda i: (0, 0)),
        ]
        operands += [
            w1.astype(jnp.float32),
            b1.reshape(1, C16).astype(jnp.float32),
            w2t.astype(jnp.float32),
            b2.reshape(1, Cout).astype(jnp.float32),
        ]
        kernel = _convblock_attn_kernel

    out = pl.pallas_call(
        kernel,
        out_shape=jax.ShapeDtypeStruct((N, MP, Cout), jnp.float32),
        grid=(1,),
        in_specs=in_specs,
        out_specs=pl.BlockSpec((N, MP, Cout), lambda i: (0, 0, 0)),
        scratch_shapes=[pltpu.VMEM((N, MP, Cout), jnp.float32)],
        compiler_params=pltpu.CompilerParams(
            dimension_semantics=("arbitrary",)),
    )(*operands)

    return out.reshape(N, PH, PW, Cout)


@jax.jit
def branch_forward(x_nchw, params):
    x = jnp.transpose(x_nchw, (0, 2, 3, 1))          # NCHW -> NHWC

    # ConvolutionalBlock(3, 24) + Attention(24), fused into one kernel.
    x = conv_block(x, params["conv1_w"], params["conv1_b"],
                   params["bn1_g"], params["bn1_b"],
                   attn=(params["att_w1"], params["att_b1"],
                         params["att_w2t"], params["att_b2"]))

    # ConvolutionalBlock(24, 40)
    x = conv_block(x, params["conv2_w"], params["conv2_b"],
                   params["bn2_g"], params["bn2_b"])

    # ConvolutionalBlock(40, 64)
    x = conv_block(x, params["conv3_w"], params["conv3_b"],
                   params["bn3_g"], params["bn3_b"])

    return jnp.transpose(x, (0, 3, 1, 2))            # back to NCHW


def init_params(key):
    ks = jax.random.split(key, 16)
    p = {}
    # ConvolutionalBlock(3, 24)
    p["conv1_w"] = 0.1 * jax.random.normal(ks[0], (24, 3, 3, 3), jnp.float32)
    p["conv1_b"] = 0.1 * jax.random.normal(ks[1], (24,), jnp.float32)
    p["bn1_g"] = 1.0 + 0.1 * jax.random.normal(ks[2], (24,), jnp.float32)
    p["bn1_b"] = 0.1 * jax.random.normal(ks[3], (24,), jnp.float32)
    # Attention(24): Linear(24 -> 1), Linear(1 -> 24)
    p["att_w1"] = 0.1 * jax.random.normal(ks[4], (1, 24), jnp.float32)   # [out, in]
    p["att_b1"] = 0.1 * jax.random.normal(ks[5], (1,), jnp.float32)
    p["att_w2t"] = 0.1 * jax.random.normal(ks[6], (1, 24), jnp.float32)  # PyTorch weight.T
    p["att_b2"] = 0.1 * jax.random.normal(ks[7], (24,), jnp.float32)
    # ConvolutionalBlock(24, 40)
    p["conv2_w"] = 0.1 * jax.random.normal(ks[8], (40, 24, 3, 3), jnp.float32)
    p["conv2_b"] = 0.1 * jax.random.normal(ks[9], (40,), jnp.float32)
    p["bn2_g"] = 1.0 + 0.1 * jax.random.normal(ks[10], (40,), jnp.float32)
    p["bn2_b"] = 0.1 * jax.random.normal(ks[11], (40,), jnp.float32)
    # ConvolutionalBlock(40, 64)
    p["conv3_w"] = 0.1 * jax.random.normal(ks[12], (64, 40, 3, 3), jnp.float32)
    p["conv3_b"] = 0.1 * jax.random.normal(ks[13], (64,), jnp.float32)
    p["bn3_g"] = 1.0 + 0.1 * jax.random.normal(ks[14], (64,), jnp.float32)
    p["bn3_b"] = 0.1 * jax.random.normal(ks[15], (64,), jnp.float32)
    return p


if __name__ == "__main__":
    key = jax.random.PRNGKey(0)
    kx, kp = jax.random.split(key)
    # 96x96 is the smallest "nice" spatial size that survives three
    # (conv k3 s2 -> maxpool 2) downsampling stages: 96 -> 23 -> 5 -> 1.
    x = jax.random.normal(kx, (2, 3, 96, 96), jnp.float32)
    params = init_params(kp)

    out = jax.block_until_ready(branch_forward(x, params))

    assert out.shape == (2, 64, 1, 1), out.shape
    assert bool(jnp.all(jnp.isfinite(out)))
    print("KERNEL_OK")
</pallas_src>

<mosaic_0001>
module attributes {stable_mosaic.version = 11 : i64} {
  func.func @_convblock_attn_kernel(%arg0: i32, %arg1: memref<4x2x529x27xbf16, #tpu.memory_space<vmem>>, %arg2: memref<27x24xbf16, #tpu.memory_space<vmem>>, %arg3: memref<1x24xf32, #tpu.memory_space<vmem>>, %arg4: memref<1x24xf32, #tpu.memory_space<vmem>>, %arg5: memref<1x24xf32, #tpu.memory_space<vmem>>, %arg6: memref<1x24xf32, #tpu.memory_space<vmem>>, %arg7: memref<1x1xf32, #tpu.memory_space<vmem>>, %arg8: memref<1x24xf32, #tpu.memory_space<vmem>>, %arg9: memref<1x24xf32, #tpu.memory_space<vmem>>, %arg10: memref<2x529x24xf32, #tpu.memory_space<vmem>>, %arg11: memref<2x529x24xf32, #tpu.memory_space<vmem>>) attributes {dimension_semantics = [#tpu.dimension_semantics<arbitrary>], iteration_bounds = array<i64: 1>, scalar_prefetch = 0 : i64, scratch_operands = 1 : i64, tpu.core_type = #tpu.core_type<tc>, window_params = [{pipeline_mode = #tpu.pipeline_mode<synchronous>, transform_indices = @transform_0, window_bounds = array<i64: 4, 2, 529, 27>}, {pipeline_mode = #tpu.pipeline_mode<synchronous>, transform_indices = @transform_1, window_bounds = array<i64: 27, 24>}, {pipeline_mode = #tpu.pipeline_mode<synchronous>, transform_indices = @transform_2, window_bounds = array<i64: 1, 24>}, {pipeline_mode = #tpu.pipeline_mode<synchronous>, transform_indices = @transform_3, window_bounds = array<i64: 1, 24>}, {pipeline_mode = #tpu.pipeline_mode<synchronous>, transform_indices = @transform_4, window_bounds = array<i64: 1, 24>}, {pipeline_mode = #tpu.pipeline_mode<synchronous>, transform_indices = @transform_5, window_bounds = array<i64: 1, 24>}, {pipeline_mode = #tpu.pipeline_mode<synchronous>, transform_indices = @transform_6, window_bounds = array<i64: 1, 1>}, {pipeline_mode = #tpu.pipeline_mode<synchronous>, transform_indices = @transform_7, window_bounds = array<i64: 1, 24>}, {pipeline_mode = #tpu.pipeline_mode<synchronous>, transform_indices = @transform_8, window_bounds = array<i64: 1, 24>}, {pipeline_mode = #tpu.pipeline_mode<synchronous>, transform_indices = @transform_9, window_bounds = array<i64: 2, 529, 24>}]} {
    %c0 = arith.constant 0 : index
    %c0_0 = arith.constant 0 : index
    %0 = vector.load %arg2[%c0, %c0_0] : memref<27x24xbf16, #tpu.memory_space<vmem>>, vector<27x24xbf16>
    %c0_1 = arith.constant 0 : index
    %c0_2 = arith.constant 0 : index
    %c0_3 = arith.constant 0 : index
    %c0_4 = arith.constant 0 : index
    %1 = vector.load %arg1[%c0_1, %c0_2, %c0_3, %c0_4] : memref<4x2x529x27xbf16, #tpu.memory_space<vmem>>, vector<1x1x529x27xbf16>
    %2 = vector.shape_cast %1 : vector<1x1x529x27xbf16> to vector<529x27xbf16>
    %cst = arith.constant dense<0.000000e+00> : vector<529x24xf32>
    %3 = tpu.matmul %2, %0, %cst {dimension_numbers = #tpu.dot_dimension_numbers<[1], [0], [0], [1], [0, 0, 1, 1], [], []>} : vector<529x27xbf16>, vector<27x24xbf16>, vector<529x24xf32> -> vector<529x24xf32>
    %c1 = arith.constant 1 : index
    %c0_5 = arith.constant 0 : index
    %c0_6 = arith.constant 0 : index
    %c0_7 = arith.constant 0 : index
    %4 = vector.load %arg1[%c1, %c0_5, %c0_6, %c0_7] : memref<4x2x529x27xbf16, #tpu.memory_space<vmem>>, vector<1x1x529x27xbf16>
    %5 = vector.shape_cast %4 : vector<1x1x529x27xbf16> to vector<529x27xbf16>
    %cst_8 = arith.constant dense<0.000000e+00> : vector<529x24xf32>
    %6 = tpu.matmul %5, %0, %cst_8 {dimension_numbers = #tpu.dot_dimension_numbers<[1], [0], [0], [1], [0, 0, 1, 1], [], []>} : vector<529x27xbf16>, vector<27x24xbf16>, vector<529x24xf32> -> vector<529x24xf32>
    %7 = arith.maximumf %3, %6 : vector<529x24xf32>
    %c2 = arith.constant 2 : index
    %c0_9 = arith.constant 0 : index
    %c0_10 = arith.constant 0 : index
    %c0_11 = arith.constant 0 : index
    %8 = vector.load %arg1[%c2, %c0_9, %c0_10, %c0_11] : memref<4x2x529x27xbf16, #tpu.memory_space<vmem>>, vector<1x1x529x27xbf16>
    %9 = vector.shape_cast %8 : vector<1x1x529x27xbf16> to vector<529x27xbf16>
    %cst_12 = arith.constant dense<0.000000e+00> : vector<529x24xf32>
    %10 = tpu.matmul %9, %0, %cst_12 {dimension_numbers = #tpu.dot_dimension_numbers<[1], [0], [0], [1], [0, 0, 1, 1], [], []>} : vector<529x27xbf16>, vector<27x24xbf16>, vector<529x24xf32> -> vector<529x24xf32>
    %11 = arith.maximumf %7, %10 : vector<529x24xf32>
    %c3 = arith.constant 3 : index
    %c0_13 = arith.constant 0 : index
    %c0_14 = arith.constant 0 : index
    %c0_15 = arith.constant 0 : index
    %12 = vector.load %arg1[%c3, %c0_13, %c0_14, %c0_15] : memref<4x2x529x27xbf16, #tpu.memory_space<vmem>>, vector<1x1x529x27xbf16>
    %13 = vector.shape_cast %12 : vector<1x1x529x27xbf16> to vector<529x27xbf16>
    %cst_16 = arith.constant dense<0.000000e+00> : vector<529x24xf32>
    %14 = tpu.matmul %13, %0, %cst_16 {dimension_numbers = #tpu.dot_dimension_numbers<[1], [0], [0], [1], [0, 0, 1, 1], [], []>} : vector<529x27xbf16>, vector<27x24xbf16>, vector<529x24xf32> -> vector<529x24xf32>
    %15 = arith.maximumf %11, %14 : vector<529x24xf32>
    %c0_17 = arith.constant 0 : index
    %c0_18 = arith.constant 0 : index
    %16 = vector.load %arg3[%c0_17, %c0_18] : memref<1x24xf32, #tpu.memory_space<vmem>>, vector<1x24xf32>
    %17 = vector.broadcast %16 : vector<1x24xf32> to vector<529x24xf32>
    %18 = arith.addf %15, %17 : vector<529x24xf32>
    %c0_19 = arith.constant 0 : index
    %c0_20 = arith.constant 0 : index
    %c0_21 = arith.constant 0 : index
    %19 = vector.load %arg11[%c0_19, %c0_20, %c0_21] : memref<2x529x24xf32, #tpu.memory_space<vmem>>, vector<1x529x24xf32>
    %20 = vector.shape_cast %19 : vector<1x529x24xf32> to vector<529x24xf32>
    %21 = vector.shape_cast %18 : vector<529x24xf32> to vector<1x529x24xf32>
    tpu.vector_store %arg11[%c0_19, %c0_20, %c0_21], %21 {strides = array<i32>} : memref<2x529x24xf32, #tpu.memory_space<vmem>>, vector<1x529x24xf32>,
    %c0_22 = arith.constant 0 : index
    %c1_23 = arith.constant 1 : index
    %c0_24 = arith.constant 0 : index
    %c0_25 = arith.constant 0 : index
    %22 = vector.load %arg1[%c0_22, %c1_23, %c0_24, %c0_25] : memref<4x2x529x27xbf16, #tpu.memory_space<vmem>>, vector<1x1x529x27xbf16>
    %23 = vector.shape_cast %22 : vector<1x1x529x27xbf16> to vector<529x27xbf16>
    %cst_26 = arith.constant dense<0.000000e+00> : vector<529x24xf32>
    %24 = tpu.matmul %23, %0, %cst_26 {dimension_numbers = #tpu.dot_dimension_numbers<[1], [0], [0], [1], [0, 0, 1, 1], [], []>} : vector<529x27xbf16>, vector<27x24xbf16>, vector<529x24xf32> -> vector<529x24xf32>
    %c1_27 = arith.constant 1 : index
    %c1_28 = arith.constant 1 : index
    %c0_29 = arith.constant 0 : index
    %c0_30 = arith.constant 0 : index
    %25 = vector.load %arg1[%c1_27, %c1_28, %c0_29, %c0_30] : memref<4x2x529x27xbf16, #tpu.memory_space<vmem>>, vector<1x1x529x27xbf16>
    %26 = vector.shape_cast %25 : vector<1x1x529x27xbf16> to vector<529x27xbf16>
    %cst_31 = arith.constant dense<0.000000e+00> : vector<529x24xf32>
    %27 = tpu.matmul %26, %0, %cst_31 {dimension_numbers = #tpu.dot_dimension_numbers<[1], [0], [0], [1], [0, 0, 1, 1], [], []>} : vector<529x27xbf16>, vector<27x24xbf16>, vector<529x24xf32> -> vector<529x24xf32>
    %28 = arith.maximumf %24, %27 : vector<529x24xf32>
    %c2_32 = arith.constant 2 : index
    %c1_33 = arith.constant 1 : index
    %c0_34 = arith.constant 0 : index
    %c0_35 = arith.constant 0 : index
    %29 = vector.load %arg1[%c2_32, %c1_33, %c0_34, %c0_35] : memref<4x2x529x27xbf16, #tpu.memory_space<vmem>>, vector<1x1x529x27xbf16>
    %30 = vector.shape_cast %29 : vector<1x1x529x27xbf16> to vector<529x27xbf16>
    %cst_36 = arith.constant dense<0.000000e+00> : vector<529x24xf32>
    %31 = tpu.matmul %30, %0, %cst_36 {dimension_numbers = #tpu.dot_dimension_numbers<[1], [0], [0], [1], [0, 0, 1, 1], [], []>} : vector<529x27xbf16>, vector<27x24xbf16>, vector<529x24xf32> -> vector<529x24xf32>
    %32 = arith.maximumf %28, %31 : vector<529x24xf32>
    %c3_37 = arith.constant 3 : index
    %c1_38 = arith.constant 1 : index
    %c0_39 = arith.constant 0 : index
    %c0_40 = arith.constant 0 : index
    %33 = vector.load %arg1[%c3_37, %c1_38, %c0_39, %c0_40] : memref<4x2x529x27xbf16, #tpu.memory_space<vmem>>, vector<1x1x529x27xbf16>
    %34 = vector.shape_cast %33 : vector<1x1x529x27xbf16> to vector<529x27xbf16>
    %cst_41 = arith.constant dense<0.000000e+00> : vector<529x24xf32>
    %35 = tpu.matmul %34, %0, %cst_41 {dimension_numbers = #tpu.dot_dimension_numbers<[1], [0], [0], [1], [0, 0, 1, 1], [], []>} : vector<529x27xbf16>, vector<27x24xbf16>, vector<529x24xf32> -> vector<529x24xf32>
    %36 = arith.maximumf %32, %35 : vector<529x24xf32>
    %c0_42 = arith.constant 0 : index
    %c0_43 = arith.constant 0 : index
    %37 = vector.load %arg3[%c0_42, %c0_43] : memref<1x24xf32, #tpu.memory_space<vmem>>, vector<1x24xf32>
    %38 = vector.broadcast %37 : vector<1x24xf32> to vector<529x24xf32>
    %39 = arith.addf %36, %38 : vector<529x24xf32>
    %c1_44 = arith.constant 1 : index
    %c0_45 = arith.constant 0 : index
    %c0_46 = arith.constant 0 : index
    %40 = vector.load %arg11[%c1_44, %c0_45, %c0_46] : memref<2x529x24xf32, #tpu.memory_space<vmem>>, vector<1x529x24xf32>
    %41 = vector.shape_cast %40 : vector<1x529x24xf32> to vector<529x24xf32>
    %42 = vector.shape_cast %39 : vector<529x24xf32> to vector<1x529x24xf32>
    tpu.vector_store %arg11[%c1_44, %c0_45, %c0_46], %42 {strides = array<i32>} : memref<2x529x24xf32, #tpu.memory_space<vmem>>, vector<1x529x24xf32>,
    %c0_47 = arith.constant 0 : index
    %c0_48 = arith.constant 0 : index
    %c0_49 = arith.constant 0 : index
    %43 = vector.load %arg11[%c0_47, %c0_48, %c0_49] : memref<2x529x24xf32, #tpu.memory_space<vmem>>, vector<2x529x24xf32>
    %cst_50 = arith.constant dense<0.000000e+00> : vector<2x24xf32>
    %44 = vector.multi_reduction <add>, %43, %cst_50 [1] : vector<2x529x24xf32> to vector<2x24xf32>
    %45 = vector.shape_cast %44 : vector<2x24xf32> to vector<2x1x24xf32>
    %cst_51 = arith.constant 5.290000e+02 : f32
    %46 = vector.broadcast %cst_51 : f32 to vector<2x1x24xf32>
    %47 = arith.divf %45, %46 : vector<2x1x24xf32>
    %cst_52 = arith.constant dense<0.000000e+00> : vector<1x24xf32>
    %48 = vector.multi_reduction <add>, %47, %cst_52 [0] : vector<2x1x24xf32> to vector<1x24xf32>
    %49 = vector.shape_cast %48 : vector<1x24xf32> to vector<1x1x24xf32>
    %cst_53 = arith.constant 2.000000e+00 : f32
    %50 = vector.broadcast %cst_53 : f32 to vector<1x1x24xf32>
    %51 = arith.divf %49, %50 : vector<1x1x24xf32>
    %52 = arith.mulf %43, %43 : vector<2x529x24xf32>
    %cst_54 = arith.constant dense<0.000000e+00> : vector<2x24xf32>
    %53 = vector.multi_reduction <add>, %52, %cst_54 [1] : vector<2x529x24xf32> to vector<2x24xf32>
    %54 = vector.shape_cast %53 : vector<2x24xf32> to vector<2x1x24xf32>
    %cst_55 = arith.constant 5.290000e+02 : f32
    %55 = vector.broadcast %cst_55 : f32 to vector<2x1x24xf32>
    %56 = arith.divf %54, %55 : vector<2x1x24xf32>
    %cst_56 = arith.constant dense<0.000000e+00> : vector<1x24xf32>
    %57 = vector.multi_reduction <add>, %56, %cst_56 [0] : vector<2x1x24xf32> to vector<1x24xf32>
    %58 = vector.shape_cast %57 : vector<1x24xf32> to vector<1x1x24xf32>
    %cst_57 = arith.constant 2.000000e+00 : f32
    %59 = vector.broadcast %cst_57 : f32 to vector<1x1x24xf32>
    %60 = arith.divf %58, %59 : vector<1x1x24xf32>
    %61 = arith.mulf %51, %51 : vector<1x1x24xf32>
    %62 = arith.subf %60, %61 : vector<1x1x24xf32>
    %63 = vector.broadcast %51 : vector<1x1x24xf32> to vector<2x529x24xf32>
    %64 = arith.subf %43, %63 : vector<2x529x24xf32>
    %cst_58 = arith.constant 9.99999974E-6 : f32
    %65 = vector.broadcast %cst_58 : f32 to vector<1x1x24xf32>
    %66 = arith.addf %62, %65 : vector<1x1x24xf32>
    %67 = math.rsqrt %66 : vector<1x1x24xf32>
    %68 = vector.broadcast %67 : vector<1x1x24xf32> to vector<2x529x24xf32>
    %69 = arith.mulf %64, %68 : vector<2x529x24xf32>
    %c0_59 = arith.constant 0 : index
    %c0_60 = arith.constant 0 : index
    %70 = vector.load %arg4[%c0_59, %c0_60] : memref<1x24xf32, #tpu.memory_space<vmem>>, vector<1x24xf32>
    %71 = vector.shape_cast %70 : vector<1x24xf32> to vector<1x1x24xf32>
    %72 = vector.broadcast %71 : vector<1x1x24xf32> to vector<2x529x24xf32>
    %73 = arith.mulf %69, %72 : vector<2x529x24xf32>
    %c0_61 = arith.constant 0 : index
    %c0_62 = arith.constant 0 : index
    %74 = vector.load %arg5[%c0_61, %c0_62] : memref<1x24xf32, #tpu.memory_space<vmem>>, vector<1x24xf32>
    %75 = vector.shape_cast %74 : vector<1x24xf32> to vector<1x1x24xf32>
    %76 = vector.broadcast %75 : vector<1x1x24xf32> to vector<2x529x24xf32>
    %77 = arith.addf %73, %76 : vector<2x529x24xf32>
    %cst_63 = arith.constant 0.000000e+00 : f32
    %78 = vector.broadcast %cst_63 : f32 to vector<2x529x24xf32>
    %79 = arith.cmpf ogt, %77, %78 : vector<2x529x24xf32>
    %cst_64 = arith.constant 0.000000e+00 : f32
    %80 = vector.broadcast %cst_64 : f32 to vector<2x529x24xf32>
    %81 = arith.minimumf %77, %80 : vector<2x529x24xf32>
    %82 = math.exp %81 : vector<2x529x24xf32>
    %cst_65 = arith.constant 1.000000e+00 : f32
    %83 = vector.broadcast %cst_65 : f32 to vector<2x529x24xf32>
    %84 = arith.subf %82, %83 : vector<2x529x24xf32>
    %cst_66 = arith.constant 1.67326319 : f32
    %85 = vector.broadcast %cst_66 : f32 to vector<2x529x24xf32>
    %86 = arith.mulf %85, %84 : vector<2x529x24xf32>
    %87 = arith.select %79, %77, %86 : vector<2x529x24xi1>, vector<2x529x24xf32>
    %cst_67 = arith.constant 1.05070102 : f32
    %88 = vector.broadcast %cst_67 : f32 to vector<2x529x24xf32>
    %89 = arith.mulf %88, %87 : vector<2x529x24xf32>
    %cst_68 = arith.constant dense<0.000000e+00> : vector<2x24xf32>
    %90 = vector.multi_reduction <add>, %89, %cst_68 [1] : vector<2x529x24xf32> to vector<2x24xf32>
    %cst_69 = arith.constant 5.290000e+02 : f32
    %91 = vector.broadcast %cst_69 : f32 to vector<2x24xf32>
    %92 = arith.divf %90, %91 : vector<2x24xf32>
    %93 = vector.shape_cast %92 : vector<2x24xf32> to vector<2x1x24xf32>
    %c0_70 = arith.constant 0 : index
    %c0_71 = arith.constant 0 : index
    %94 = vector.load %arg6[%c0_70, %c0_71] : memref<1x24xf32, #tpu.memory_space<vmem>>, vector<1x24xf32>
    %95 = vector.shape_cast %94 : vector<1x24xf32> to vector<1x1x24xf32>
    %96 = vector.broadcast %95 : vector<1x1x24xf32> to vector<2x1x24xf32>
    %97 = arith.mulf %93, %96 : vector<2x1x24xf32>
    %cst_72 = arith.constant dense<0.000000e+00> : vector<2x1xf32>
    %98 = vector.multi_reduction <add>, %97, %cst_72 [2] : vector<2x1x24xf32> to vector<2x1xf32>
    %c0_73 = arith.constant 0 : index
    %c0_74 = arith.constant 0 : index
    %99 = vector.load %arg7[%c0_73, %c0_74] : memref<1x1xf32, #tpu.memory_space<vmem>>, vector<1x1xf32>
    %100 = vector.broadcast %99 : vector<1x1xf32> to vector<2x1xf32>
    %101 = arith.addf %98, %100 : vector<2x1xf32>
    %102 = arith.negf %101 : vector<2x1xf32>
    %103 = math.exp %102 : vector<2x1xf32>
    %cst_75 = arith.constant 1.000000e+00 : f32
    %104 = vector.broadcast %cst_75 : f32 to vector<2x1xf32>
    %105 = arith.addf %104, %103 : vector<2x1xf32>
    %106 = arith.divf %104, %105 : vector<2x1xf32>
    %107 = vector.shape_cast %106 : vector<2x1xf32> to vector<2x1x1xf32>
    %c0_76 = arith.constant 0 : index
    %c0_77 = arith.constant 0 : index
    %108 = vector.load %arg8[%c0_76, %c0_77] : memref<1x24xf32, #tpu.memory_space<vmem>>, vector<1x24xf32>
    %109 = vector.shape_cast %108 : vector<1x24xf32> to vector<1x1x24xf32>
    %110 = vector.broadcast %107 : vector<2x1x1xf32> to vector<2x1x24xf32>
    %111 = vector.broadcast %109 : vector<1x1x24xf32> to vector<2x1x24xf32>
    %112 = arith.mulf %110, %111 : vector<2x1x24xf32>
    %cst_78 = arith.constant dense<0.000000e+00> : vector<2x24xf32>
    %113 = vector.multi_reduction <add>, %112, %cst_78 [1] : vector<2x1x24xf32> to vector<2x24xf32>
    %c0_79 = arith.constant 0 : index
    %c0_80 = arith.constant 0 : index
    %114 = vector.load %arg9[%c0_79, %c0_80] : memref<1x24xf32, #tpu.memory_space<vmem>>, vector<1x24xf32>
    %115 = vector.broadcast %114 : vector<1x24xf32> to vector<2x24xf32>
    %116 = arith.addf %113, %115 : vector<2x24xf32>
    %cst_81 = arith.constant 0.000000e+00 : f32
    %117 = vector.broadcast %cst_81 : f32 to vector<2x24xf32>
    %118 = arith.maximumf %116, %117 : vector<2x24xf32>
    %119 = vector.shape_cast %118 : vector<2x24xf32> to vector<2x1x24xf32>
    %120 = vector.broadcast %119 : vector<2x1x24xf32> to vector<2x529x24xf32>
    %121 = arith.mulf %89, %120 : vector<2x529x24xf32>
    %c0_82 = arith.constant 0 : index
    %c0_83 = arith.constant 0 : index
    %c0_84 = arith.constant 0 : index
    %122 = vector.load %arg10[%c0_82, %c0_83, %c0_84] : memref<2x529x24xf32, #tpu.memory_space<vmem>>, vector<2x529x24xf32>
    tpu.vector_store %arg10[%c0_82, %c0_83, %c0_84], %121 {strides = array<i32>} : memref<2x529x24xf32, #tpu.memory_space<vmem>>, vector<2x529x24xf32>,
    return
  }
  func.func @transform_0(%arg0: i32) -> (i32, i32, i32, i32) {
    %c0_i32 = arith.constant 0 : i32
    %c0_i32_0 = arith.constant 0 : i32
    %c0_i32_1 = arith.constant 0 : i32
    %c0_i32_2 = arith.constant 0 : i32
    %c0_i32_3 = arith.constant 0 : i32
    return %c0_i32, %c0_i32_0, %c0_i32_1, %c0_i32_2 : i32, i32, i32, i32
  }
  func.func @transform_1(%arg0: i32) -> (i32, i32) {
    %c0_i32 = arith.constant 0 : i32
    %c0_i32_0 = arith.constant 0 : i32
    %c0_i32_1 = arith.constant 0 : i32
    return %c0_i32, %c0_i32_0 : i32, i32
  }
  func.func @transform_2(%arg0: i32) -> (i32, i32) {
    %c0_i32 = arith.constant 0 : i32
    %c0_i32_0 = arith.constant 0 : i32
    %c0_i32_1 = arith.constant 0 : i32
    return %c0_i32, %c0_i32_0 : i32, i32
  }
  func.func @transform_3(%arg0: i32) -> (i32, i32) {
    %c0_i32 = arith.constant 0 : i32
    %c0_i32_0 = arith.constant 0 : i32
    %c0_i32_1 = arith.constant 0 : i32
    return %c0_i32, %c0_i32_0 : i32, i32
  }
  func.func @transform_4(%arg0: i32) -> (i32, i32) {
    %c0_i32 = arith.constant 0 : i32
    %c0_i32_0 = arith.constant 0 : i32
    %c0_i32_1 = arith.constant 0 : i32
    return %c0_i32, %c0_i32_0 : i32, i32
  }
  func.func @transform_5(%arg0: i32) -> (i32, i32) {
    %c0_i32 = arith.constant 0 : i32
    %c0_i32_0 = arith.constant 0 : i32
    %c0_i32_1 = arith.constant 0 : i32
    return %c0_i32, %c0_i32_0 : i32, i32
  }
  func.func @transform_6(%arg0: i32) -> (i32, i32) {
    %c0_i32 = arith.constant 0 : i32
    %c0_i32_0 = arith.constant 0 : i32
    %c0_i32_1 = arith.constant 0 : i32
    return %c0_i32, %c0_i32_0 : i32, i32
  }
  func.func @transform_7(%arg0: i32) -> (i32, i32) {
    %c0_i32 = arith.constant 0 : i32
    %c0_i32_0 = arith.constant 0 : i32
    %c0_i32_1 = arith.constant 0 : i32
    return %c0_i32, %c0_i32_0 : i32, i32
  }
  func.func @transform_8(%arg0: i32) -> (i32, i32) {
    %c0_i32 = arith.constant 0 : i32
    %c0_i32_0 = arith.constant 0 : i32
    %c0_i32_1 = arith.constant 0 : i32
    return %c0_i32, %c0_i32_0 : i32, i32
  }
  func.func @transform_9(%arg0: i32) -> (i32, i32, i32) {
    %c0_i32 = arith.constant 0 : i32
    %c0_i32_0 = arith.constant 0 : i32
    %c0_i32_1 = arith.constant 0 : i32
    %c0_i32_2 = arith.constant 0 : i32
    return %c0_i32, %c0_i32_0, %c0_i32_1 : i32, i32, i32
  }
}

module attributes {stable_mosaic.version = 11 : i64} {
  func.func @_convblock_kernel(%arg0: i32, %arg1: memref<4x2x25x216xbf16, #tpu.memory_space<vmem>>, %arg2: memref<216x40xbf16, #tpu.memory_space<vmem>>, %arg3: memref<1x40xf32, #tpu.memory_space<vmem>>, %arg4: memref<1x40xf32, #tpu.memory_space<vmem>>, %arg5: memref<1x40xf32, #tpu.memory_space<vmem>>, %arg6: memref<2x25x40xf32, #tpu.memory_space<vmem>>, %arg7: memref<2x25x40xf32, #tpu.memory_space<vmem>>) attributes {dimension_semantics = [#tpu.dimension_semantics<arbitrary>], iteration_bounds = array<i64: 1>, scalar_prefetch = 0 : i64, scratch_operands = 1 : i64, tpu.core_type = #tpu.core_type<tc>, window_params = [{pipeline_mode = #tpu.pipeline_mode<synchronous>, transform_indices = @transform_0, window_bounds = array<i64: 4, 2, 25, 216>}, {pipeline_mode = #tpu.pipeline_mode<synchronous>, transform_indices = @transform_1, window_bounds = array<i64: 216, 40>}, {pipeline_mode = #tpu.pipeline_mode<synchronous>, transform_indices = @transform_2, window_bounds = array<i64: 1, 40>}, {pipeline_mode = #tpu.pipeline_mode<synchronous>, transform_indices = @transform_3, window_bounds = array<i64: 1, 40>}, {pipeline_mode = #tpu.pipeline_mode<synchronous>, transform_indices = @transform_4, window_bounds = array<i64: 1, 40>}, {pipeline_mode = #tpu.pipeline_mode<synchronous>, transform_indices = @transform_5, window_bounds = array<i64: 2, 25, 40>}]} {
    %c0 = arith.constant 0 : index
    %c0_0 = arith.constant 0 : index
    %0 = vector.load %arg2[%c0, %c0_0] : memref<216x40xbf16, #tpu.memory_space<vmem>>, vector<216x40xbf16>
    %c0_1 = arith.constant 0 : index
    %c0_2 = arith.constant 0 : index
    %c0_3 = arith.constant 0 : index
    %c0_4 = arith.constant 0 : index
    %1 = vector.load %arg1[%c0_1, %c0_2, %c0_3, %c0_4] : memref<4x2x25x216xbf16, #tpu.memory_space<vmem>>, vector<1x1x25x216xbf16>
    %2 = vector.shape_cast %1 : vector<1x1x25x216xbf16> to vector<25x216xbf16>
    %cst = arith.constant dense<0.000000e+00> : vector<25x40xf32>
    %3 = tpu.matmul %2, %0, %cst {dimension_numbers = #tpu.dot_dimension_numbers<[1], [0], [0], [1], [0, 0, 1, 1], [], []>} : vector<25x216xbf16>, vector<216x40xbf16>, vector<25x40xf32> -> vector<25x40xf32>
    %c1 = arith.constant 1 : index
    %c0_5 = arith.constant 0 : index
    %c0_6 = arith.constant 0 : index
    %c0_7 = arith.constant 0 : index
    %4 = vector.load %arg1[%c1, %c0_5, %c0_6, %c0_7] : memref<4x2x25x216xbf16, #tpu.memory_space<vmem>>, vector<1x1x25x216xbf16>
    %5 = vector.shape_cast %4 : vector<1x1x25x216xbf16> to vector<25x216xbf16>
    %cst_8 = arith.constant dense<0.000000e+00> : vector<25x40xf32>
    %6 = tpu.matmul %5, %0, %cst_8 {dimension_numbers = #tpu.dot_dimension_numbers<[1], [0], [0], [1], [0, 0, 1, 1], [], []>} : vector<25x216xbf16>, vector<216x40xbf16>, vector<25x40xf32> -> vector<25x40xf32>
    %7 = arith.maximumf %3, %6 : vector<25x40xf32>
    %c2 = arith.constant 2 : index
    %c0_9 = arith.constant 0 : index
    %c0_10 = arith.constant 0 : index
    %c0_11 = arith.constant 0 : index
    %8 = vector.load %arg1[%c2, %c0_9, %c0_10, %c0_11] : memref<4x2x25x216xbf16, #tpu.memory_space<vmem>>, vector<1x1x25x216xbf16>
    %9 = vector.shape_cast %8 : vector<1x1x25x216xbf16> to vector<25x216xbf16>
    %cst_12 = arith.constant dense<0.000000e+00> : vector<25x40xf32>
    %10 = tpu.matmul %9, %0, %cst_12 {dimension_numbers = #tpu.dot_dimension_numbers<[1], [0], [0], [1], [0, 0, 1, 1], [], []>} : vector<25x216xbf16>, vector<216x40xbf16>, vector<25x40xf32> -> vector<25x40xf32>
    %11 = arith.maximumf %7, %10 : vector<25x40xf32>
    %c3 = arith.constant 3 : index
    %c0_13 = arith.constant 0 : index
    %c0_14 = arith.constant 0 : index
    %c0_15 = arith.constant 0 : index
    %12 = vector.load %arg1[%c3, %c0_13, %c0_14, %c0_15] : memref<4x2x25x216xbf16, #tpu.memory_space<vmem>>, vector<1x1x25x216xbf16>
    %13 = vector.shape_cast %12 : vector<1x1x25x216xbf16> to vector<25x216xbf16>
    %cst_16 = arith.constant dense<0.000000e+00> : vector<25x40xf32>
    %14 = tpu.matmul %13, %0, %cst_16 {dimension_numbers = #tpu.dot_dimension_numbers<[1], [0], [0], [1], [0, 0, 1, 1], [], []>} : vector<25x216xbf16>, vector<216x40xbf16>, vector<25x40xf32> -> vector<25x40xf32>
    %15 = arith.maximumf %11, %14 : vector<25x40xf32>
    %c0_17 = arith.constant 0 : index
    %c0_18 = arith.constant 0 : index
    %16 = vector.load %arg3[%c0_17, %c0_18] : memref<1x40xf32, #tpu.memory_space<vmem>>, vector<1x40xf32>
    %17 = vector.broadcast %16 : vector<1x40xf32> to vector<25x40xf32>
    %18 = arith.addf %15, %17 : vector<25x40xf32>
    %c0_19 = arith.constant 0 : index
    %c0_20 = arith.constant 0 : index
    %c0_21 = arith.constant 0 : index
    %19 = vector.load %arg7[%c0_19, %c0_20, %c0_21] : memref<2x25x40xf32, #tpu.memory_space<vmem>>, vector<1x25x40xf32>
    %20 = vector.shape_cast %19 : vector<1x25x40xf32> to vector<25x40xf32>
    %21 = vector.shape_cast %18 : vector<25x40xf32> to vector<1x25x40xf32>
    tpu.vector_store %arg7[%c0_19, %c0_20, %c0_21], %21 {strides = array<i32>} : memref<2x25x40xf32, #tpu.memory_space<vmem>>, vector<1x25x40xf32>,
    %c0_22 = arith.constant 0 : index
    %c1_23 = arith.constant 1 : index
    %c0_24 = arith.constant 0 : index
    %c0_25 = arith.constant 0 : index
    %22 = vector.load %arg1[%c0_22, %c1_23, %c0_24, %c0_25] : memref<4x2x25x216xbf16, #tpu.memory_space<vmem>>, vector<1x1x25x216xbf16>
    %23 = vector.shape_cast %22 : vector<1x1x25x216xbf16> to vector<25x216xbf16>
    %cst_26 = arith.constant dense<0.000000e+00> : vector<25x40xf32>
    %24 = tpu.matmul %23, %0, %cst_26 {dimension_numbers = #tpu.dot_dimension_numbers<[1], [0], [0], [1], [0, 0, 1, 1], [], []>} : vector<25x216xbf16>, vector<216x40xbf16>, vector<25x40xf32> -> vector<25x40xf32>
    %c1_27 = arith.constant 1 : index
    %c1_28 = arith.constant 1 : index
    %c0_29 = arith.constant 0 : index
    %c0_30 = arith.constant 0 : index
    %25 = vector.load %arg1[%c1_27, %c1_28, %c0_29, %c0_30] : memref<4x2x25x216xbf16, #tpu.memory_space<vmem>>, vector<1x1x25x216xbf16>
    %26 = vector.shape_cast %25 : vector<1x1x25x216xbf16> to vector<25x216xbf16>
    %cst_31 = arith.constant dense<0.000000e+00> : vector<25x40xf32>
    %27 = tpu.matmul %26, %0, %cst_31 {dimension_numbers = #tpu.dot_dimension_numbers<[1], [0], [0], [1], [0, 0, 1, 1], [], []>} : vector<25x216xbf16>, vector<216x40xbf16>, vector<25x40xf32> -> vector<25x40xf32>
    %28 = arith.maximumf %24, %27 : vector<25x40xf32>
    %c2_32 = arith.constant 2 : index
    %c1_33 = arith.constant 1 : index
    %c0_34 = arith.constant 0 : index
    %c0_35 = arith.constant 0 : index
    %29 = vector.load %arg1[%c2_32, %c1_33, %c0_34, %c0_35] : memref<4x2x25x216xbf16, #tpu.memory_space<vmem>>, vector<1x1x25x216xbf16>
    %30 = vector.shape_cast %29 : vector<1x1x25x216xbf16> to vector<25x216xbf16>
    %cst_36 = arith.constant dense<0.000000e+00> : vector<25x40xf32>
    %31 = tpu.matmul %30, %0, %cst_36 {dimension_numbers = #tpu.dot_dimension_numbers<[1], [0], [0], [1], [0, 0, 1, 1], [], []>} : vector<25x216xbf16>, vector<216x40xbf16>, vector<25x40xf32> -> vector<25x40xf32>
    %32 = arith.maximumf %28, %31 : vector<25x40xf32>
    %c3_37 = arith.constant 3 : index
    %c1_38 = arith.constant 1 : index
    %c0_39 = arith.constant 0 : index
    %c0_40 = arith.constant 0 : index
    %33 = vector.load %arg1[%c3_37, %c1_38, %c0_39, %c0_40] : memref<4x2x25x216xbf16, #tpu.memory_space<vmem>>, vector<1x1x25x216xbf16>
    %34 = vector.shape_cast %33 : vector<1x1x25x216xbf16> to vector<25x216xbf16>
    %cst_41 = arith.constant dense<0.000000e+00> : vector<25x40xf32>
    %35 = tpu.matmul %34, %0, %cst_41 {dimension_numbers = #tpu.dot_dimension_numbers<[1], [0], [0], [1], [0, 0, 1, 1], [], []>} : vector<25x216xbf16>, vector<216x40xbf16>, vector<25x40xf32> -> vector<25x40xf32>
    %36 = arith.maximumf %32, %35 : vector<25x40xf32>
    %c0_42 = arith.constant 0 : index
    %c0_43 = arith.constant 0 : index
    %37 = vector.load %arg3[%c0_42, %c0_43] : memref<1x40xf32, #tpu.memory_space<vmem>>, vector<1x40xf32>
    %38 = vector.broadcast %37 : vector<1x40xf32> to vector<25x40xf32>
    %39 = arith.addf %36, %38 : vector<25x40xf32>
    %c1_44 = arith.constant 1 : index
    %c0_45 = arith.constant 0 : index
    %c0_46 = arith.constant 0 : index
    %40 = vector.load %arg7[%c1_44, %c0_45, %c0_46] : memref<2x25x40xf32, #tpu.memory_space<vmem>>, vector<1x25x40xf32>
    %41 = vector.shape_cast %40 : vector<1x25x40xf32> to vector<25x40xf32>
    %42 = vector.shape_cast %39 : vector<25x40xf32> to vector<1x25x40xf32>
    tpu.vector_store %arg7[%c1_44, %c0_45, %c0_46], %42 {strides = array<i32>} : memref<2x25x40xf32, #tpu.memory_space<vmem>>, vector<1x25x40xf32>,
    %c0_47 = arith.constant 0 : index
    %c0_48 = arith.constant 0 : index
    %c0_49 = arith.constant 0 : index
    %43 = vector.load %arg7[%c0_47, %c0_48, %c0_49] : memref<2x25x40xf32, #tpu.memory_space<vmem>>, vector<2x25x40xf32>
    %cst_50 = arith.constant dense<0.000000e+00> : vector<2x40xf32>
    %44 = vector.multi_reduction <add>, %43, %cst_50 [1] : vector<2x25x40xf32> to vector<2x40xf32>
    %45 = vector.shape_cast %44 : vector<2x40xf32> to vector<2x1x40xf32>
    %cst_51 = arith.constant 2.500000e+01 : f32
    %46 = vector.broadcast %cst_51 : f32 to vector<2x1x40xf32>
    %47 = arith.divf %45, %46 : vector<2x1x40xf32>
    %cst_52 = arith.constant dense<0.000000e+00> : vector<1x40xf32>
    %48 = vector.multi_reduction <add>, %47, %cst_52 [0] : vector<2x1x40xf32> to vector<1x40xf32>
    %49 = vector.shape_cast %48 : vector<1x40xf32> to vector<1x1x40xf32>
    %cst_53 = arith.constant 2.000000e+00 : f32
    %50 = vector.broadcast %cst_53 : f32 to vector<1x1x40xf32>
    %51 = arith.divf %49, %50 : vector<1x1x40xf32>
    %52 = arith.mulf %43, %43 : vector<2x25x40xf32>
    %cst_54 = arith.constant dense<0.000000e+00> : vector<2x40xf32>
    %53 = vector.multi_reduction <add>, %52, %cst_54 [1] : vector<2x25x40xf32> to vector<2x40xf32>
    %54 = vector.shape_cast %53 : vector<2x40xf32> to vector<2x1x40xf32>
    %cst_55 = arith.constant 2.500000e+01 : f32
    %55 = vector.broadcast %cst_55 : f32 to vector<2x1x40xf32>
    %56 = arith.divf %54, %55 : vector<2x1x40xf32>
    %cst_56 = arith.constant dense<0.000000e+00> : vector<1x40xf32>
    %57 = vector.multi_reduction <add>, %56, %cst_56 [0] : vector<2x1x40xf32> to vector<1x40xf32>
    %58 = vector.shape_cast %57 : vector<1x40xf32> to vector<1x1x40xf32>
    %cst_57 = arith.constant 2.000000e+00 : f32
    %59 = vector.broadcast %cst_57 : f32 to vector<1x1x40xf32>
    %60 = arith.divf %58, %59 : vector<1x1x40xf32>
    %61 = arith.mulf %51, %51 : vector<1x1x40xf32>
    %62 = arith.subf %60, %61 : vector<1x1x40xf32>
    %63 = vector.broadcast %51 : vector<1x1x40xf32> to vector<2x25x40xf32>
    %64 = arith.subf %43, %63 : vector<2x25x40xf32>
    %cst_58 = arith.constant 9.99999974E-6 : f32
    %65 = vector.broadcast %cst_58 : f32 to vector<1x1x40xf32>
    %66 = arith.addf %62, %65 : vector<1x1x40xf32>
    %67 = math.rsqrt %66 : vector<1x1x40xf32>
    %68 = vector.broadcast %67 : vector<1x1x40xf32> to vector<2x25x40xf32>
    %69 = arith.mulf %64, %68 : vector<2x25x40xf32>
    %c0_59 = arith.constant 0 : index
    %c0_60 = arith.constant 0 : index
    %70 = vector.load %arg4[%c0_59, %c0_60] : memref<1x40xf32, #tpu.memory_space<vmem>>, vector<1x40xf32>
    %71 = vector.shape_cast %70 : vector<1x40xf32> to vector<1x1x40xf32>
    %72 = vector.broadcast %71 : vector<1x1x40xf32> to vector<2x25x40xf32>
    %73 = arith.mulf %69, %72 : vector<2x25x40xf32>
    %c0_61 = arith.constant 0 : index
    %c0_62 = arith.constant 0 : index
    %74 = vector.load %arg5[%c0_61, %c0_62] : memref<1x40xf32, #tpu.memory_space<vmem>>, vector<1x40xf32>
    %75 = vector.shape_cast %74 : vector<1x40xf32> to vector<1x1x40xf32>
    %76 = vector.broadcast %75 : vector<1x1x40xf32> to vector<2x25x40xf32>
    %77 = arith.addf %73, %76 : vector<2x25x40xf32>
    %cst_63 = arith.constant 0.000000e+00 : f32
    %78 = vector.broadcast %cst_63 : f32 to vector<2x25x40xf32>
    %79 = arith.cmpf ogt, %77, %78 : vector<2x25x40xf32>
    %cst_64 = arith.constant 0.000000e+00 : f32
    %80 = vector.broadcast %cst_64 : f32 to vector<2x25x40xf32>
    %81 = arith.minimumf %77, %80 : vector<2x25x40xf32>
    %82 = math.exp %81 : vector<2x25x40xf32>
    %cst_65 = arith.constant 1.000000e+00 : f32
    %83 = vector.broadcast %cst_65 : f32 to vector<2x25x40xf32>
    %84 = arith.subf %82, %83 : vector<2x25x40xf32>
    %cst_66 = arith.constant 1.67326319 : f32
    %85 = vector.broadcast %cst_66 : f32 to vector<2x25x40xf32>
    %86 = arith.mulf %85, %84 : vector<2x25x40xf32>
    %87 = arith.select %79, %77, %86 : vector<2x25x40xi1>, vector<2x25x40xf32>
    %cst_67 = arith.constant 1.05070102 : f32
    %88 = vector.broadcast %cst_67 : f32 to vector<2x25x40xf32>
    %89 = arith.mulf %88, %87 : vector<2x25x40xf32>
    %c0_68 = arith.constant 0 : index
    %c0_69 = arith.constant 0 : index
    %c0_70 = arith.constant 0 : index
    %90 = vector.load %arg6[%c0_68, %c0_69, %c0_70] : memref<2x25x40xf32, #tpu.memory_space<vmem>>, vector<2x25x40xf32>
    tpu.vector_store %arg6[%c0_68, %c0_69, %c0_70], %89 {strides = array<i32>} : memref<2x25x40xf32, #tpu.memory_space<vmem>>, vector<2x25x40xf32>,
    return
  }
  func.func @transform_0(%arg0: i32) -> (i32, i32, i32, i32) {
    %c0_i32 = arith.constant 0 : i32
    %c0_i32_0 = arith.constant 0 : i32
    %c0_i32_1 = arith.constant 0 : i32
    %c0_i32_2 = arith.constant 0 : i32
    %c0_i32_3 = arith.constant 0 : i32
    return %c0_i32, %c0_i32_0, %c0_i32_1, %c0_i32_2 : i32, i32, i32, i32
  }
  func.func @transform_1(%arg0: i32) -> (i32, i32) {
    %c0_i32 = arith.constant 0 : i32
    %c0_i32_0 = arith.constant 0 : i32
    %c0_i32_1 = arith.constant 0 : i32
    return %c0_i32, %c0_i32_0 : i32, i32
  }
  func.func @transform_2(%arg0: i32) -> (i32, i32) {
    %c0_i32 = arith.constant 0 : i32
    %c0_i32_0 = arith.constant 0 : i32
    %c0_i32_1 = arith.constant 0 : i32
    return %c0_i32, %c0_i32_0 : i32, i32
  }
  func.func @transform_3(%arg0: i32) -> (i32, i32) {
    %c0_i32 = arith.constant 0 : i32
    %c0_i32_0 = arith.constant 0 : i32
    %c0_i32_1 = arith.constant 0 : i32
    return %c0_i32, %c0_i32_0 : i32, i32
  }
  func.func @transform_4(%arg0: i32) -> (i32, i32) {
    %c0_i32 = arith.constant 0 : i32
    %c0_i32_0 = arith.constant 0 : i32
    %c0_i32_1 = arith.constant 0 : i32
    return %c0_i32, %c0_i32_0 : i32, i32
  }
  func.func @transform_5(%arg0: i32) -> (i32, i32, i32) {
    %c0_i32 = arith.constant 0 : i32
    %c0_i32_0 = arith.constant 0 : i32
    %c0_i32_1 = arith.constant 0 : i32
    %c0_i32_2 = arith.constant 0 : i32
    return %c0_i32, %c0_i32_0, %c0_i32_1 : i32, i32, i32
  }
}

module attributes {stable_mosaic.version = 11 : i64} {
  func.func @_convblock_kernel(%arg0: i32, %arg1: memref<4x2x1x360xbf16, #tpu.memory_space<vmem>>, %arg2: memref<360x64xbf16, #tpu.memory_space<vmem>>, %arg3: memref<1x64xf32, #tpu.memory_space<vmem>>, %arg4: memref<1x64xf32, #tpu.memory_space<vmem>>, %arg5: memref<1x64xf32, #tpu.memory_space<vmem>>, %arg6: memref<2x1x64xf32, #tpu.memory_space<vmem>>, %arg7: memref<2x1x64xf32, #tpu.memory_space<vmem>>) attributes {dimension_semantics = [#tpu.dimension_semantics<arbitrary>], iteration_bounds = array<i64: 1>, scalar_prefetch = 0 : i64, scratch_operands = 1 : i64, tpu.core_type = #tpu.core_type<tc>, window_params = [{pipeline_mode = #tpu.pipeline_mode<synchronous>, transform_indices = @transform_0, window_bounds = array<i64: 4, 2, 1, 360>}, {pipeline_mode = #tpu.pipeline_mode<synchronous>, transform_indices = @transform_1, window_bounds = array<i64: 360, 64>}, {pipeline_mode = #tpu.pipeline_mode<synchronous>, transform_indices = @transform_2, window_bounds = array<i64: 1, 64>}, {pipeline_mode = #tpu.pipeline_mode<synchronous>, transform_indices = @transform_3, window_bounds = array<i64: 1, 64>}, {pipeline_mode = #tpu.pipeline_mode<synchronous>, transform_indices = @transform_4, window_bounds = array<i64: 1, 64>}, {pipeline_mode = #tpu.pipeline_mode<synchronous>, transform_indices = @transform_5, window_bounds = array<i64: 2, 1, 64>}]} {
    %c0 = arith.constant 0 : index
    %c0_0 = arith.constant 0 : index
    %0 = vector.load %arg2[%c0, %c0_0] : memref<360x64xbf16, #tpu.memory_space<vmem>>, vector<360x64xbf16>
    %c0_1 = arith.constant 0 : index
    %c0_2 = arith.constant 0 : index
    %c0_3 = arith.constant 0 : index
    %c0_4 = arith.constant 0 : index
    %1 = vector.load %arg1[%c0_1, %c0_2, %c0_3, %c0_4] : memref<4x2x1x360xbf16, #tpu.memory_space<vmem>>, vector<1x1x1x360xbf16>
    %2 = vector.shape_cast %1 : vector<1x1x1x360xbf16> to vector<1x360xbf16>
    %cst = arith.constant dense<0.000000e+00> : vector<1x64xf32>
    %3 = tpu.matmul %2, %0, %cst {dimension_numbers = #tpu.dot_dimension_numbers<[1], [0], [0], [1], [0, 0, 1, 1], [], []>} : vector<1x360xbf16>, vector<360x64xbf16>, vector<1x64xf32> -> vector<1x64xf32>
    %c1 = arith.constant 1 : index
    %c0_5 = arith.constant 0 : index
    %c0_6 = arith.constant 0 : index
    %c0_7 = arith.constant 0 : index
    %4 = vector.load %arg1[%c1, %c0_5, %c0_6, %c0_7] : memref<4x2x1x360xbf16, #tpu.memory_space<vmem>>, vector<1x1x1x360xbf16>
    %5 = vector.shape_cast %4 : vector<1x1x1x360xbf16> to vector<1x360xbf16>
    %cst_8 = arith.constant dense<0.000000e+00> : vector<1x64xf32>
    %6 = tpu.matmul %5, %0, %cst_8 {dimension_numbers = #tpu.dot_dimension_numbers<[1], [0], [0], [1], [0, 0, 1, 1], [], []>} : vector<1x360xbf16>, vector<360x64xbf16>, vector<1x64xf32> -> vector<1x64xf32>
    %7 = arith.maximumf %3, %6 : vector<1x64xf32>
    %c2 = arith.constant 2 : index
    %c0_9 = arith.constant 0 : index
    %c0_10 = arith.constant 0 : index
    %c0_11 = arith.constant 0 : index
    %8 = vector.load %arg1[%c2, %c0_9, %c0_10, %c0_11] : memref<4x2x1x360xbf16, #tpu.memory_space<vmem>>, vector<1x1x1x360xbf16>
    %9 = vector.shape_cast %8 : vector<1x1x1x360xbf16> to vector<1x360xbf16>
    %cst_12 = arith.constant dense<0.000000e+00> : vector<1x64xf32>
    %10 = tpu.matmul %9, %0, %cst_12 {dimension_numbers = #tpu.dot_dimension_numbers<[1], [0], [0], [1], [0, 0, 1, 1], [], []>} : vector<1x360xbf16>, vector<360x64xbf16>, vector<1x64xf32> -> vector<1x64xf32>
    %11 = arith.maximumf %7, %10 : vector<1x64xf32>
    %c3 = arith.constant 3 : index
    %c0_13 = arith.constant 0 : index
    %c0_14 = arith.constant 0 : index
    %c0_15 = arith.constant 0 : index
    %12 = vector.load %arg1[%c3, %c0_13, %c0_14, %c0_15] : memref<4x2x1x360xbf16, #tpu.memory_space<vmem>>, vector<1x1x1x360xbf16>
    %13 = vector.shape_cast %12 : vector<1x1x1x360xbf16> to vector<1x360xbf16>
    %cst_16 = arith.constant dense<0.000000e+00> : vector<1x64xf32>
    %14 = tpu.matmul %13, %0, %cst_16 {dimension_numbers = #tpu.dot_dimension_numbers<[1], [0], [0], [1], [0, 0, 1, 1], [], []>} : vector<1x360xbf16>, vector<360x64xbf16>, vector<1x64xf32> -> vector<1x64xf32>
    %15 = arith.maximumf %11, %14 : vector<1x64xf32>
    %c0_17 = arith.constant 0 : index
    %c0_18 = arith.constant 0 : index
    %16 = vector.load %arg3[%c0_17, %c0_18] : memref<1x64xf32, #tpu.memory_space<vmem>>, vector<1x64xf32>
    %17 = arith.addf %15, %16 : vector<1x64xf32>
    %c0_19 = arith.constant 0 : index
    %c0_20 = arith.constant 0 : index
    %c0_21 = arith.constant 0 : index
    %18 = vector.load %arg7[%c0_19, %c0_20, %c0_21] : memref<2x1x64xf32, #tpu.memory_space<vmem>>, vector<1x1x64xf32>
    %19 = vector.shape_cast %18 : vector<1x1x64xf32> to vector<1x64xf32>
    %20 = vector.shape_cast %17 : vector<1x64xf32> to vector<1x1x64xf32>
    tpu.vector_store %arg7[%c0_19, %c0_20, %c0_21], %20 {strides = array<i32>} : memref<2x1x64xf32, #tpu.memory_space<vmem>>, vector<1x1x64xf32>,
    %c0_22 = arith.constant 0 : index
    %c1_23 = arith.constant 1 : index
    %c0_24 = arith.constant 0 : index
    %c0_25 = arith.constant 0 : index
    %21 = vector.load %arg1[%c0_22, %c1_23, %c0_24, %c0_25] : memref<4x2x1x360xbf16, #tpu.memory_space<vmem>>, vector<1x1x1x360xbf16>
    %22 = vector.shape_cast %21 : vector<1x1x1x360xbf16> to vector<1x360xbf16>
    %cst_26 = arith.constant dense<0.000000e+00> : vector<1x64xf32>
    %23 = tpu.matmul %22, %0, %cst_26 {dimension_numbers = #tpu.dot_dimension_numbers<[1], [0], [0], [1], [0, 0, 1, 1], [], []>} : vector<1x360xbf16>, vector<360x64xbf16>, vector<1x64xf32> -> vector<1x64xf32>
    %c1_27 = arith.constant 1 : index
    %c1_28 = arith.constant 1 : index
    %c0_29 = arith.constant 0 : index
    %c0_30 = arith.constant 0 : index
    %24 = vector.load %arg1[%c1_27, %c1_28, %c0_29, %c0_30] : memref<4x2x1x360xbf16, #tpu.memory_space<vmem>>, vector<1x1x1x360xbf16>
    %25 = vector.shape_cast %24 : vector<1x1x1x360xbf16> to vector<1x360xbf16>
    %cst_31 = arith.constant dense<0.000000e+00> : vector<1x64xf32>
    %26 = tpu.matmul %25, %0, %cst_31 {dimension_numbers = #tpu.dot_dimension_numbers<[1], [0], [0], [1], [0, 0, 1, 1], [], []>} : vector<1x360xbf16>, vector<360x64xbf16>, vector<1x64xf32> -> vector<1x64xf32>
    %27 = arith.maximumf %23, %26 : vector<1x64xf32>
    %c2_32 = arith.constant 2 : index
    %c1_33 = arith.constant 1 : index
    %c0_34 = arith.constant 0 : index
    %c0_35 = arith.constant 0 : index
    %28 = vector.load %arg1[%c2_32, %c1_33, %c0_34, %c0_35] : memref<4x2x1x360xbf16, #tpu.memory_space<vmem>>, vector<1x1x1x360xbf16>
    %29 = vector.shape_cast %28 : vector<1x1x1x360xbf16> to vector<1x360xbf16>
    %cst_36 = arith.constant dense<0.000000e+00> : vector<1x64xf32>
    %30 = tpu.matmul %29, %0, %cst_36 {dimension_numbers = #tpu.dot_dimension_numbers<[1], [0], [0], [1], [0, 0, 1, 1], [], []>} : vector<1x360xbf16>, vector<360x64xbf16>, vector<1x64xf32> -> vector<1x64xf32>
    %31 = arith.maximumf %27, %30 : vector<1x64xf32>
    %c3_37 = arith.constant 3 : index
    %c1_38 = arith.constant 1 : index
    %c0_39 = arith.constant 0 : index
    %c0_40 = arith.constant 0 : index
    %32 = vector.load %arg1[%c3_37, %c1_38, %c0_39, %c0_40] : memref<4x2x1x360xbf16, #tpu.memory_space<vmem>>, vector<1x1x1x360xbf16>
    %33 = vector.shape_cast %32 : vector<1x1x1x360xbf16> to vector<1x360xbf16>
    %cst_41 = arith.constant dense<0.000000e+00> : vector<1x64xf32>
    %34 = tpu.matmul %33, %0, %cst_41 {dimension_numbers = #tpu.dot_dimension_numbers<[1], [0], [0], [1], [0, 0, 1, 1], [], []>} : vector<1x360xbf16>, vector<360x64xbf16>, vector<1x64xf32> -> vector<1x64xf32>
    %35 = arith.maximumf %31, %34 : vector<1x64xf32>
    %c0_42 = arith.constant 0 : index
    %c0_43 = arith.constant 0 : index
    %36 = vector.load %arg3[%c0_42, %c0_43] : memref<1x64xf32, #tpu.memory_space<vmem>>, vector<1x64xf32>
    %37 = arith.addf %35, %36 : vector<1x64xf32>
    %c1_44 = arith.constant 1 : index
    %c0_45 = arith.constant 0 : index
    %c0_46 = arith.constant 0 : index
    %38 = vector.load %arg7[%c1_44, %c0_45, %c0_46] : memref<2x1x64xf32, #tpu.memory_space<vmem>>, vector<1x1x64xf32>
    %39 = vector.shape_cast %38 : vector<1x1x64xf32> to vector<1x64xf32>
    %40 = vector.shape_cast %37 : vector<1x64xf32> to vector<1x1x64xf32>
    tpu.vector_store %arg7[%c1_44, %c0_45, %c0_46], %40 {strides = array<i32>} : memref<2x1x64xf32, #tpu.memory_space<vmem>>, vector<1x1x64xf32>,
    %c0_47 = arith.constant 0 : index
    %c0_48 = arith.constant 0 : index
    %c0_49 = arith.constant 0 : index
    %41 = vector.load %arg7[%c0_47, %c0_48, %c0_49] : memref<2x1x64xf32, #tpu.memory_space<vmem>>, vector<2x1x64xf32>
    %cst_50 = arith.constant dense<0.000000e+00> : vector<2x64xf32>
    %42 = vector.multi_reduction <add>, %41, %cst_50 [1] : vector<2x1x64xf32> to vector<2x64xf32>
    %43 = vector.shape_cast %42 : vector<2x64xf32> to vector<2x1x64xf32>
    %cst_51 = arith.constant 1.000000e+00 : f32
    %44 = vector.broadcast %cst_51 : f32 to vector<2x1x64xf32>
    %45 = arith.divf %43, %44 : vector<2x1x64xf32>
    %cst_52 = arith.constant dense<0.000000e+00> : vector<1x64xf32>
    %46 = vector.multi_reduction <add>, %45, %cst_52 [0] : vector<2x1x64xf32> to vector<1x64xf32>
    %47 = vector.shape_cast %46 : vector<1x64xf32> to vector<1x1x64xf32>
    %cst_53 = arith.constant 2.000000e+00 : f32
    %48 = vector.broadcast %cst_53 : f32 to vector<1x1x64xf32>
    %49 = arith.divf %47, %48 : vector<1x1x64xf32>
    %50 = arith.mulf %41, %41 : vector<2x1x64xf32>
    %cst_54 = arith.constant dense<0.000000e+00> : vector<2x64xf32>
    %51 = vector.multi_reduction <add>, %50, %cst_54 [1] : vector<2x1x64xf32> to vector<2x64xf32>
    %52 = vector.shape_cast %51 : vector<2x64xf32> to vector<2x1x64xf32>
    %cst_55 = arith.constant 1.000000e+00 : f32
    %53 = vector.broadcast %cst_55 : f32 to vector<2x1x64xf32>
    %54 = arith.divf %52, %53 : vector<2x1x64xf32>
    %cst_56 = arith.constant dense<0.000000e+00> : vector<1x64xf32>
    %55 = vector.multi_reduction <add>, %54, %cst_56 [0] : vector<2x1x64xf32> to vector<1x64xf32>
    %56 = vector.shape_cast %55 : vector<1x64xf32> to vector<1x1x64xf32>
    %cst_57 = arith.constant 2.000000e+00 : f32
    %57 = vector.broadcast %cst_57 : f32 to vector<1x1x64xf32>
    %58 = arith.divf %56, %57 : vector<1x1x64xf32>
    %59 = arith.mulf %49, %49 : vector<1x1x64xf32>
    %60 = arith.subf %58, %59 : vector<1x1x64xf32>
    %61 = vector.broadcast %49 : vector<1x1x64xf32> to vector<2x1x64xf32>
    %62 = arith.subf %41, %61 : vector<2x1x64xf32>
    %cst_58 = arith.constant 9.99999974E-6 : f32
    %63 = vector.broadcast %cst_58 : f32 to vector<1x1x64xf32>
    %64 = arith.addf %60, %63 : vector<1x1x64xf32>
    %65 = math.rsqrt %64 : vector<1x1x64xf32>
    %66 = vector.broadcast %65 : vector<1x1x64xf32> to vector<2x1x64xf32>
    %67 = arith.mulf %62, %66 : vector<2x1x64xf32>
    %c0_59 = arith.constant 0 : index
    %c0_60 = arith.constant 0 : index
    %68 = vector.load %arg4[%c0_59, %c0_60] : memref<1x64xf32, #tpu.memory_space<vmem>>, vector<1x64xf32>
    %69 = vector.shape_cast %68 : vector<1x64xf32> to vector<1x1x64xf32>
    %70 = vector.broadcast %69 : vector<1x1x64xf32> to vector<2x1x64xf32>
    %71 = arith.mulf %67, %70 : vector<2x1x64xf32>
    %c0_61 = arith.constant 0 : index
    %c0_62 = arith.constant 0 : index
    %72 = vector.load %arg5[%c0_61, %c0_62] : memref<1x64xf32, #tpu.memory_space<vmem>>, vector<1x64xf32>
    %73 = vector.shape_cast %72 : vector<1x64xf32> to vector<1x1x64xf32>
    %74 = vector.broadcast %73 : vector<1x1x64xf32> to vector<2x1x64xf32>
    %75 = arith.addf %71, %74 : vector<2x1x64xf32>
    %cst_63 = arith.constant 0.000000e+00 : f32
    %76 = vector.broadcast %cst_63 : f32 to vector<2x1x64xf32>
    %77 = arith.cmpf ogt, %75, %76 : vector<2x1x64xf32>
    %cst_64 = arith.constant 0.000000e+00 : f32
    %78 = vector.broadcast %cst_64 : f32 to vector<2x1x64xf32>
    %79 = arith.minimumf %75, %78 : vector<2x1x64xf32>
    %80 = math.exp %79 : vector<2x1x64xf32>
    %cst_65 = arith.constant 1.000000e+00 : f32
    %81 = vector.broadcast %cst_65 : f32 to vector<2x1x64xf32>
    %82 = arith.subf %80, %81 : vector<2x1x64xf32>
    %cst_66 = arith.constant 1.67326319 : f32
    %83 = vector.broadcast %cst_66 : f32 to vector<2x1x64xf32>
    %84 = arith.mulf %83, %82 : vector<2x1x64xf32>
    %85 = arith.select %77, %75, %84 : vector<2x1x64xi1>, vector<2x1x64xf32>
    %cst_67 = arith.constant 1.05070102 : f32
    %86 = vector.broadcast %cst_67 : f32 to vector<2x1x64xf32>
    %87 = arith.mulf %86, %85 : vector<2x1x64xf32>
    %c0_68 = arith.constant 0 : index
    %c0_69 = arith.constant 0 : index
    %c0_70 = arith.constant 0 : index
    %88 = vector.load %arg6[%c0_68, %c0_69, %c0_70] : memref<2x1x64xf32, #tpu.memory_space<vmem>>, vector<2x1x64xf32>
    tpu.vector_store %arg6[%c0_68, %c0_69, %c0_70], %87 {strides = array<i32>} : memref<2x1x64xf32, #tpu.memory_space<vmem>>, vector<2x1x64xf32>,
    return
  }
  func.func @transform_0(%arg0: i32) -> (i32, i32, i32, i32) {
    %c0_i32 = arith.constant 0 : i32
    %c0_i32_0 = arith.constant 0 : i32
    %c0_i32_1 = arith.constant 0 : i32
    %c0_i32_2 = arith.constant 0 : i32
    %c0_i32_3 = arith.constant 0 : i32
    return %c0_i32, %c0_i32_0, %c0_i32_1, %c0_i32_2 : i32, i32, i32, i32
  }
  func.func @transform_1(%arg0: i32) -> (i32, i32) {
    %c0_i32 = arith.constant 0 : i32
    %c0_i32_0 = arith.constant 0 : i32
    %c0_i32_1 = arith.constant 0 : i32
    return %c0_i32, %c0_i32_0 : i32, i32
  }
  func.func @transform_2(%arg0: i32) -> (i32, i32) {
    %c0_i32 = arith.constant 0 : i32
    %c0_i32_0 = arith.constant 0 : i32
    %c0_i32_1 = arith.constant 0 : i32
    return %c0_i32, %c0_i32_0 : i32, i32
  }
  func.func @transform_3(%arg0: i32) -> (i32, i32) {
    %c0_i32 = arith.constant 0 : i32
    %c0_i32_0 = arith.constant 0 : i32
    %c0_i32_1 = arith.constant 0 : i32
    return %c0_i32, %c0_i32_0 : i32, i32
  }
  func.func @transform_4(%arg0: i32) -> (i32, i32) {
    %c0_i32 = arith.constant 0 : i32
    %c0_i32_0 = arith.constant 0 : i32
    %c0_i32_1 = arith.constant 0 : i32
    return %c0_i32, %c0_i32_0 : i32, i32
  }
  func.func @transform_5(%arg0: i32) -> (i32, i32, i32) {
    %c0_i32 = arith.constant 0 : i32
    %c0_i32_0 = arith.constant 0 : i32
    %c0_i32_1 = arith.constant 0 : i32
    %c0_i32_2 = arith.constant 0 : i32
    return %c0_i32, %c0_i32_0, %c0_i32_1 : i32, i32, i32
  }
}

</mosaic_0001>

<llo_original>
// kernel: branch_forward.3
$region0: #{branch_forward.3}
  #allocation0 [shape = 'u32[]', space=smem, size = 0x4, offset = 0x4, fixed_abs, tag = 'smem constant byte address 0x4 - core index']
  #allocation1 [shape = 'u32[144,128]{1,0:T(1,128)}', space=vmem, size = 0x12000, scoped, tag = 'internal scratch']
  #allocation2 [shape = 'f32[2,529,24]{2,1,0:T(8,128)}', space=vmem, size = 0x86000, scoped, tag = 'scratch operand']
  #allocation3 [shape = 'f32[1,1]{1,0:T(1,128)S(1)}', space=vmem, size = 0x200, scoped, tag = 'scoped memory for branch_forward.3']
  %s0 = inlined_call_operand.vmem [shape: bf16[4,2,529,27], index: 0, kind: input, shape index: {}]
  %s1 = inlined_call_operand.vmem [shape: bf16[27,24], index: 1, kind: input, shape index: {}]
  %s2 = inlined_call_operand.vmem [shape: f32[1,24], index: 2, kind: input, shape index: {}]
  %s3 = inlined_call_operand.vmem [shape: f32[1,24], index: 3, kind: input, shape index: {}]
  %s4 = inlined_call_operand.vmem [shape: f32[1,24], index: 4, kind: input, shape index: {}]
  %s5 = inlined_call_operand.vmem [shape: f32[1,24], index: 5, kind: input, shape index: {}]
  %s6 = inlined_call_operand.<no memory space> [shape: f32[1,1], index: 6, kind: input, shape index: {}]
  %s7 = inlined_call_operand.vmem [shape: f32[1,24], index: 7, kind: input, shape index: {}]
  %s8 = inlined_call_operand.vmem [shape: f32[1,24], index: 8, kind: input, shape index: {}]
  %s9 = inlined_call_operand.vmem [shape: f32[2,529,24], index: 9, kind: output, shape index: {}]
  %s10 = sld [smem:[#allocation0]]
  $region46: #{branch_forward.3} parent=0
    _
  %s12 = ssub.s32 1, %s10
  %s13 = scalar_select 0, %s12, %s10
  %v14 = vstv %s6
  %15 = vst [vmem:[#allocation3] sm:$0x1] %v14
  // Predicated region
  $region2: #{branch_forward.3} parent=0 // pred_check
    _
  $region3: #{branch_forward.3} parent=0 // pred_check_branch
    %17 = sbr.rel (0) target = $region5
  $region4: #{branch_forward.3} parent=0 // pred_region
    _
  $region5: #{branch_forward.3} parent=0 // pred_fallthru
    _
  // Predicated region
  $region6: #{branch_forward.3} parent=0 // pred_check
    _
  $region7: #{branch_forward.3} parent=0 // pred_check_branch
    %19 = sbr.rel (0) target = $region9
  $region8: #{branch_forward.3} parent=0 // pred_region
    _
  $region9: #{branch_forward.3} parent=0 // pred_fallthru
    _
  // Predicated region
  $region10: #{branch_forward.3} parent=0 // pred_check
    _
  $region11: #{branch_forward.3} parent=0 // pred_check_branch
    %21 = sbr.rel (0) target = $region13
  $region12: #{branch_forward.3} parent=0 // pred_region
    _
  $region13: #{branch_forward.3} parent=0 // pred_fallthru
    _
  // Predicated region
  $region14: #{branch_forward.3} parent=0 // pred_check
    _
  $region15: #{branch_forward.3} parent=0 // pred_check_branch
    %23 = sbr.rel (0) target = $region17
  $region16: #{branch_forward.3} parent=0 // pred_region
    _
  $region17: #{branch_forward.3} parent=0 // pred_fallthru
    _
  // Predicated region
  $region18: #{branch_forward.3} parent=0 // pred_check
    _
  $region19: #{branch_forward.3} parent=0 // pred_check_branch
    %25 = sbr.rel (0) target = $region21
  $region20: #{branch_forward.3} parent=0 // pred_region
    _
  $region21: #{branch_forward.3} parent=0 // pred_fallthru
    _
  // Predicated region
  $region22: #{branch_forward.3} parent=0 // pred_check
    _
  $region23: #{branch_forward.3} parent=0 // pred_check_branch
    %27 = sbr.rel (0) target = $region25
  $region24: #{branch_forward.3} parent=0 // pred_region
    _
  $region25: #{branch_forward.3} parent=0 // pred_fallthru
    _
  // Predicated region
  $region26: #{branch_forward.3} parent=0 // pred_check
    _
  $region27: #{branch_forward.3} parent=0 // pred_check_branch
    %29 = sbr.rel (0) target = $region29
  $region28: #{branch_forward.3} parent=0 // pred_region
    _
  $region29: #{branch_forward.3} parent=0 // pred_fallthru
    _
  // Predicated region
  $region30: #{branch_forward.3} parent=0 // pred_check
    _
  $region31: #{branch_forward.3} parent=0 // pred_check_branch
    %31 = sbr.rel (0) target = $region33
  $region32: #{branch_forward.3} parent=0 // pred_region
    _
  $region33: #{branch_forward.3} parent=0 // pred_fallthru
    _
  // Predicated region
  $region34: #{branch_forward.3} parent=0 // pred_check
    _
  $region35: #{branch_forward.3} parent=0 // pred_check_branch
    %33 = sbr.rel (0) target = $region37
  $region36: #{branch_forward.3} parent=0 // pred_region
    _
  $region37: #{branch_forward.3} parent=0 // pred_fallthru
    _
  %v35 = vld [vmem:[%s1] sm:$0xf]
  %v36 = vld [vmem:[%s1 + $0x4] sm:$0xf]
  %v37 = vld [vmem:[%s1 + $0x8] sm:$0xf]
  %v38 = vld [vmem:[%s1 + $0xc] sm:$0x3]
  %v39 = vld [vmem:[%s0] sm:$0xf]
  %v40 = vld [vmem:[%s0 + $0x4] sm:$0xf]
  %v41 = vld [vmem:[%s0 + $0x8] sm:$0xf]
  %v42 = vld [vmem:[%s0 + $0xc] sm:$0xf]
  %v43 = vld [vmem:[%s0 + $0x10] sm:$0xf]
  %v44 = vld [vmem:[%s0 + $0x14] sm:$0xf]
  %v45 = vld [vmem:[%s0 + $0x18] sm:$0xf]
  %v46 = vld [vmem:[%s0 + $0x1c] sm:$0xf]
  %v47 = vld [vmem:[%s0 + $0x20] sm:$0xf]
  %v48 = vld [vmem:[%s0 + $0x24] sm:$0xf]
  %v49 = vld [vmem:[%s0 + $0x28] sm:$0xf]
  %v50 = vld [vmem:[%s0 + $0x2c] sm:$0xf]
  %v51 = vld [vmem:[%s0 + $0x30] sm:$0xf]
  %v52 = vld [vmem:[%s0 + $0x34] sm:$0xf]
  %v53 = vld [vmem:[%s0 + $0x38] sm:$0xf]
  %v54 = vld [vmem:[%s0 + $0x3c] sm:$0xf]
  %v55 = vld [vmem:[%s0 + $0x40] sm:$0xf]
  %v56 = vld [vmem:[%s0 + $0x44] sm:$0xf]
  %v57 = vld [vmem:[%s0 + $0x48] sm:$0xf]
  %v58 = vld [vmem:[%s0 + $0x4c] sm:$0xf]
  %v59 = vld [vmem:[%s0 + $0x50] sm:$0xf]
  %v60 = vld [vmem:[%s0 + $0x54] sm:$0xf]
  %v61 = vld [vmem:[%s0 + $0x58] sm:$0xf]
  %v62 = vld [vmem:[%s0 + $0x5c] sm:$0xf]
  %v63 = vld [vmem:[%s0 + $0x60] sm:$0xf]
  %v64 = vld [vmem:[%s0 + $0x64] sm:$0xf]
  %v65 = vld [vmem:[%s0 + $0x68] sm:$0xf]
  %v66 = vld [vmem:[%s0 + $0x6c] sm:$0xf]
  %v67 = vld [vmem:[%s0 + $0x70] sm:$0xf]
  %v68 = vld [vmem:[%s0 + $0x74] sm:$0xf]
  %v69 = vld [vmem:[%s0 + $0x78] sm:$0xf]
  %v70 = vld [vmem:[%s0 + $0x7c] sm:$0xf]
  %v71 = vld [vmem:[%s0 + $0x80] sm:$0xf]
  %v72 = vld [vmem:[%s0 + $0x84] sm:$0xf]
  %v73 = vld [vmem:[%s0 + $0x88] sm:$0xf]
  %v74 = vld [vmem:[%s0 + $0x8c] sm:$0xf]
  %v75 = vld [vmem:[%s0 + $0x90] sm:$0xf]
  %v76 = vld [vmem:[%s0 + $0x94] sm:$0xf]
  %v77 = vld [vmem:[%s0 + $0x98] sm:$0xf]
  %v78 = vld [vmem:[%s0 + $0x9c] sm:$0xf]
  %v79 = vld [vmem:[%s0 + $0xa0] sm:$0xf]
  %v80 = vld [vmem:[%s0 + $0xa4] sm:$0xf]
  %v81 = vld [vmem:[%s0 + $0xa8] sm:$0xf]
  %v82 = vld [vmem:[%s0 + $0xac] sm:$0xf]
  %v83 = vld [vmem:[%s0 + $0xb0] sm:$0xf]
  %v84 = vld [vmem:[%s0 + $0xb4] sm:$0xf]
  %v85 = vld [vmem:[%s0 + $0xb8] sm:$0xf]
  %v86 = vld [vmem:[%s0 + $0xbc] sm:$0xf]
  %v87 = vld [vmem:[%s0 + $0xc0] sm:$0xf]
  %v88 = vld [vmem:[%s0 + $0xc4] sm:$0xf]
  %v89 = vld [vmem:[%s0 + $0xc8] sm:$0xf]
  %v90 = vld [vmem:[%s0 + $0xcc] sm:$0xf]
  %v91 = vld [vmem:[%s0 + $0xd0] sm:$0xf]
  %v92 = vld [vmem:[%s0 + $0xd4] sm:$0xf]
  %v93 = vld [vmem:[%s0 + $0xd8] sm:$0xf]
  %v94 = vld [vmem:[%s0 + $0xdc] sm:$0xf]
  %v95 = vld [vmem:[%s0 + $0xe0] sm:$0xf]
  %v96 = vld [vmem:[%s0 + $0xe4] sm:$0xf]
  %v97 = vld [vmem:[%s0 + $0xe8] sm:$0xf]
  %v98 = vld [vmem:[%s0 + $0xec] sm:$0xf]
  %v99 = vld [vmem:[%s0 + $0xf0] sm:$0xf]
  %v100 = vld [vmem:[%s0 + $0xf4] sm:$0xf]
  %v101 = vld [vmem:[%s0 + $0xf8] sm:$0xf]
  %v102 = vld [vmem:[%s0 + $0xfc] sm:$0xf]
  %v103 = vld [vmem:[%s0 + $0x100] sm:$0xf]
  %v104 = vld [vmem:[%s0 + $0x104] sm:$0xf]
  %v105 = vld [vmem:[%s0 + $0x108] sm:$0x1]
  %v173 = vunpack.c.l.b16 %v39
  %v174 = vunpack.c.l.b16 %v40
  %v175 = vunpack.c.l.b16 %v41
  %v176 = vunpack.c.l.b16 %v42
  %v177 = vunpack.c.l.b16 %v43
  %v178 = vunpack.c.l.b16 %v44
  %v179 = vunpack.c.l.b16 %v45
  %v180 = vunpack.c.l.b16 %v46
  %v181 = vunpack.c.l.b16 %v47
  %v182 = vunpack.c.l.b16 %v48
  %v183 = vunpack.c.l.b16 %v49
  %v184 = vunpack.c.l.b16 %v50
  %v185 = vunpack.c.l.b16 %v51
  %v186 = vunpack.c.l.b16 %v52
  %v187 = vunpack.c.l.b16 %v53
  %v188 = vunpack.c.l.b16 %v54
  %v189 = vunpack.c.l.b16 %v55
  %v190 = vunpack.c.l.b16 %v56
  %v191 = vunpack.c.l.b16 %v57
  %v192 = vunpack.c.l.b16 %v58
  %v193 = vunpack.c.l.b16 %v59
  %v194 = vunpack.c.l.b16 %v60
  %v195 = vunpack.c.l.b16 %v61
  %v196 = vunpack.c.l.b16 %v62
  %v197 = vunpack.c.l.b16 %v63
  %v198 = vunpack.c.l.b16 %v64
  %v199 = vunpack.c.l.b16 %v65
  %v200 = vunpack.c.l.b16 %v66
  %v201 = vunpack.c.l.b16 %v67
  %v202 = vunpack.c.l.b16 %v68
  %v203 = vunpack.c.l.b16 %v69
  %v204 = vunpack.c.l.b16 %v70
  %v205 = vunpack.c.l.b16 %v71
  %v206 = vunpack.c.l.b16 %v72
  %v207 = vunpack.c.l.b16 %v73
  %v208 = vunpack.c.l.b16 %v74
  %v209 = vunpack.c.l.b16 %v75
  %v210 = vunpack.c.l.b16 %v76
  %v211 = vunpack.c.l.b16 %v77
  %v212 = vunpack.c.l.b16 %v78
  %v213 = vunpack.c.l.b16 %v79
  %v214 = vunpack.c.l.b16 %v80
  %v215 = vunpack.c.l.b16 %v81
  %v216 = vunpack.c.l.b16 %v82
  %v217 = vunpack.c.l.b16 %v83
  %v218 = vunpack.c.l.b16 %v84
  %v219 = vunpack.c.l.b16 %v85
  %v220 = vunpack.c.l.b16 %v86
  %v221 = vunpack.c.l.b16 %v87
  %v222 = vunpack.c.l.b16 %v88
  %v223 = vunpack.c.l.b16 %v89
  %v224 = vunpack.c.l.b16 %v90
  %v225 = vunpack.c.l.b16 %v91
  %v226 = vunpack.c.l.b16 %v92
  %v227 = vunpack.c.l.b16 %v93
  %v228 = vunpack.c.l.b16 %v94
  %v229 = vunpack.c.l.b16 %v95
  %v230 = vunpack.c.l.b16 %v96
  %v231 = vunpack.c.l.b16 %v97
  %v232 = vunpack.c.l.b16 %v98
  %v233 = vunpack.c.l.b16 %v99
  %v234 = vunpack.c.l.b16 %v100
  %v235 = vunpack.c.l.b16 %v101
  %v236 = vunpack.c.l.b16 %v102
  %v237 = vunpack.c.l.b16 %v103
  %v238 = vunpack.c.l.b16 %v104
  %v239 = vunpack.c.l.b16 %v105
  %v240 = vpack.c.b16 %v174, %v173
  %v241 = vpack.c.b16 %v176, %v175
  %v242 = vpack.c.b16 %v178, %v177
  %v243 = vpack.c.b16 %v180, %v179
  %v244 = vpack.c.b16 %v182, %v181
  %v245 = vpack.c.b16 %v184, %v183
  %v246 = vpack.c.b16 %v186, %v185
  %v247 = vpack.c.b16 %v188, %v187
  %v248 = vpack.c.b16 %v190, %v189
  %v249 = vpack.c.b16 %v192, %v191
  %v250 = vpack.c.b16 %v194, %v193
  %v251 = vpack.c.b16 %v196, %v195
  %v252 = vpack.c.b16 %v198, %v197
  %v253 = vpack.c.b16 %v200, %v199
  %v254 = vpack.c.b16 %v202, %v201
  %v255 = vpack.c.b16 %v204, %v203
  %v256 = vpack.c.b16 %v206, %v205
  %v257 = vpack.c.b16 %v208, %v207
  %v258 = vpack.c.b16 %v210, %v209
  %v259 = vpack.c.b16 %v212, %v211
  %v260 = vpack.c.b16 %v214, %v213
  %v261 = vpack.c.b16 %v216, %v215
  %v262 = vpack.c.b16 %v218, %v217
  %v263 = vpack.c.b16 %v220, %v219
  %v264 = vpack.c.b16 %v222, %v221
  %v265 = vpack.c.b16 %v224, %v223
  %v266 = vpack.c.b16 %v226, %v225
  %v267 = vpack.c.b16 %v228, %v227
  %v268 = vpack.c.b16 %v230, %v229
  %v269 = vpack.c.b16 %v232, %v231
  %v270 = vpack.c.b16 %v234, %v233
  %v271 = vpack.c.b16 %v236, %v235
  %v272 = vpack.c.b16 %v238, %v237
  %v273 = vpack.c.b16 %v239, %v239
  %v278 = vunpack.c.l.b16 %v35
  %v279 = vunpack.c.l.b16 %v36
  %v280 = vunpack.c.l.b16 %v37
  %v281 = vunpack.c.l.b16 %v38
  %v282 = vpack.c.b16 %v279, %v278
  %v283 = vpack.c.b16 %v281, %v280
  %vm285 = vcmask 220160
  %v287 = vsel %vm285, %v240, 0
  %v290 = vsel %vm285, %v241, 0
  %v293 = vsel %vm285, %v242, 0
  %v296 = vsel %vm285, %v243, 0
  %v299 = vsel %vm285, %v244, 0
  %v302 = vsel %vm285, %v245, 0
  %v305 = vsel %vm285, %v246, 0
  %v308 = vsel %vm285, %v247, 0
  %v311 = vsel %vm285, %v248, 0
  %v314 = vsel %vm285, %v249, 0
  %v317 = vsel %vm285, %v250, 0
  %v320 = vsel %vm285, %v251, 0
  %v323 = vsel %vm285, %v252, 0
  %v326 = vsel %vm285, %v253, 0
  %v329 = vsel %vm285, %v254, 0
  %v332 = vsel %vm285, %v255, 0
  %v335 = vsel %vm285, %v256, 0
  %v338 = vsel %vm285, %v257, 0
  %v341 = vsel %vm285, %v258, 0
  %v344 = vsel %vm285, %v259, 0
  %v347 = vsel %vm285, %v260, 0
  %v350 = vsel %vm285, %v261, 0
  %v353 = vsel %vm285, %v262, 0
  %v356 = vsel %vm285, %v263, 0
  %v359 = vsel %vm285, %v264, 0
  %v362 = vsel %vm285, %v265, 0
  %v365 = vsel %vm285, %v266, 0
  %v368 = vsel %vm285, %v267, 0
  %v371 = vsel %vm285, %v268, 0
  %v374 = vsel %vm285, %v269, 0
  %v377 = vsel %vm285, %v270, 0
  %v380 = vsel %vm285, %v271, 0
  %v383 = vsel %vm285, %v272, 0
  %v386 = vsel %vm285, %v273, 0
  %vm388 = vcmask 1044480
  %vm389 = vcmask 1045504
  %v390 = vsel %vm388, 4294967295, 65535
  %v391 = vsel %vm389, %v390, 0
  %v393 = vand.u32 %v283, %v391
  %395 = vmatprep.subr.bf16.mxu0 0
  %396 = vmatpush1.bf16.msra.mxu0 %v282
  %397 = vmatprep.subr.bf16.mxu0 0
  %398 = vmatpush1.bf16.msra.mxu0 %v393
  %399 = vmatprep.subr.bf16.mxu0 0
  %400 = vmatpush1.bf16.msra.mxu0 0
  %401 = vmatprep.subr.bf16.mxu0 0
  %402 = vmatpush1.bf16.msra.mxu0 0
  %403 = vmatprep.subr.bf16.mxu0 0
  %404 = vmatpush1.bf16.msra.mxu0 0
  %405 = vmatprep.subr.bf16.mxu0 0
  %406 = vmatpush1.bf16.msra.mxu0 0
  %407 = vmatprep.subr.bf16.mxu0 0
  %408 = vmatpush1.bf16.msra.mxu0 0
  %409 = vmatprep.subr.bf16.mxu0 0
  %410 = vmatpush1.bf16.msra.mxu0 0
  %411 = vmatprep.subr.bf16.mxu0 0
  %412 = vmatpush1.bf16.msra.mxu0 0
  %413 = vmatprep.subr.bf16.mxu0 0
  %414 = vmatpush1.bf16.msra.mxu0 0
  %415 = vmatprep.subr.bf16.mxu0 0
  %416 = vmatpush1.bf16.msra.mxu0 0
  %417 = vmatprep.subr.bf16.mxu0 0
  %418 = vmatpush1.bf16.msra.mxu0 0
  %419 = vmatprep.subr.bf16.mxu0 0
  %420 = vmatpush1.bf16.msra.mxu0 0
  %421 = vmatprep.subr.bf16.mxu0 0
  %422 = vmatpush1.bf16.msra.mxu0 0
  %423 = vmatprep.subr.bf16.mxu0 0
  %424 = vmatpush1.bf16.msra.mxu0 0
  %425 = vmatprep.subr.bf16.mxu0 0
  %426 = vmatpush1.bf16.msra.mxu0 0
  %427 = vmatprep.mubr.bf16.mxu0 0
  %428 = vmatmul.mubr.bf16.gmra.mrb[0].mxu0 %v287
  %v429 = vpop.f32.mrb[0].mxu0
  %v430 = vadd.f32 0.0, %v429
  %v431 = vpop.f32.mrb[0].mxu0
  %v432 = vpop.f32.mrb[0].mxu0
  %v433 = vadd.f32 0.0, %v432
  %v434 = vpop.f32.mrb[0].mxu0
  %435 = vmatprep.mubr.bf16.mxu0 0
  %436 = vmatmul.mubr.bf16.gmra.mrb[0].mxu0 %v290
  %v437 = vpop.f32.mrb[0].mxu0
  %v438 = vadd.f32 0.0, %v437
  %v439 = vpop.f32.mrb[0].mxu0
  %v440 = vpop.f32.mrb[0].mxu0
  %v441 = vadd.f32 0.0, %v440
  %v442 = vpop.f32.mrb[0].mxu0
  %443 = vmatprep.mubr.bf16.mxu0 0
  %444 = vmatmul.mubr.bf16.gmra.mrb[0].mxu0 %v293
  %v445 = vpop.f32.mrb[0].mxu0
  %v446 = vadd.f32 0.0, %v445
  %v447 = vpop.f32.mrb[0].mxu0
  %v448 = vpop.f32.mrb[0].mxu0
  %v449 = vadd.f32 0.0, %v448
  %v450 = vpop.f32.mrb[0].mxu0
  %451 = vmatprep.mubr.bf16.mxu0 0
  %452 = vmatmul.mubr.bf16.gmra.mrb[0].mxu0 %v296
  %v453 = vpop.f32.mrb[0].mxu0
  %v454 = vadd.f32 0.0, %v453
  %v455 = vpop.f32.mrb[0].mxu0
  %v456 = vpop.f32.mrb[0].mxu0
  %v457 = vadd.f32 0.0, %v456
  %v458 = vpop.f32.mrb[0].mxu0
  %459 = vmatprep.mubr.bf16.mxu0 0
  %460 = vmatmul.mubr.bf16.gmra.mrb[0].mxu0 %v299
  %v461 = vpop.f32.mrb[0].mxu0
  %v462 = vadd.f32 0.0, %v461
  %v463 = vpop.f32.mrb[0].mxu0
  %v464 = vpop.f32.mrb[0].mxu0
  %v465 = vadd.f32 0.0, %v464
  %v466 = vpop.f32.mrb[0].mxu0
  %467 = vmatprep.mubr.bf16.mxu0 0
  %468 = vmatmul.mubr.bf16.gmra.mrb[0].mxu0 %v302
  %v469 = vpop.f32.mrb[0].mxu0
  %v470 = vadd.f32 0.0, %v469
  %v471 = vpop.f32.mrb[0].mxu0
  %v472 = vpop.f32.mrb[0].mxu0
  %v473 = vadd.f32 0.0, %v472
  %v474 = vpop.f32.mrb[0].mxu0
  %475 = vmatprep.mubr.bf16.mxu0 0
  %476 = vmatmul.mubr.bf16.gmra.mrb[0].mxu0 %v305
  %v477 = vpop.f32.mrb[0].mxu0
  %v478 = vadd.f32 0.0, %v477
  %v479 = vpop.f32.mrb[0].mxu0
  %v480 = vpop.f32.mrb[0].mxu0
  %v481 = vadd.f32 0.0, %v480
  %v482 = vpop.f32.mrb[0].mxu0
  %483 = vmatprep.mubr.bf16.mxu0 0
  %484 = vmatmul.mubr.bf16.gmra.mrb[0].mxu0 %v308
  %v485 = vpop.f32.mrb[0].mxu0
  %v486 = vadd.f32 0.0, %v485
  %v487 = vpop.f32.mrb[0].mxu0
  %v488 = vpop.f32.mrb[0].mxu0
  %v489 = vadd.f32 0.0, %v488
  %v490 = vpop.f32.mrb[0].mxu0
  %491 = vmatprep.mubr.bf16.mxu0 0
  %492 = vmatmul.mubr.bf16.gmra.mrb[0].mxu0 %v311
  %v493 = vpop.f32.mrb[0].mxu0
  %v494 = vadd.f32 0.0, %v493
  %v495 = vpop.f32.mrb[0].mxu0
  %v496 = vpop.f32.mrb[0].mxu0
  %v497 = vadd.f32 0.0, %v496
  %v498 = vpop.f32.mrb[0].mxu0
  %499 = vmatprep.mubr.bf16.mxu0 0
  %500 = vmatmul.mubr.bf16.gmra.mrb[0].mxu0 %v314
  %v501 = vpop.f32.mrb[0].mxu0
  %v502 = vadd.f32 0.0, %v501
  %v503 = vpop.f32.mrb[0].mxu0
  %v504 = vpop.f32.mrb[0].mxu0
  %v505 = vadd.f32 0.0, %v504
  %v506 = vpop.f32.mrb[0].mxu0
  %507 = vmatprep.mubr.bf16.mxu0 0
  %508 = vmatmul.mubr.bf16.gmra.mrb[0].mxu0 %v317
  %v509 = vpop.f32.mrb[0].mxu0
  %v510 = vadd.f32 0.0, %v509
  %v511 = vpop.f32.mrb[0].mxu0
  %v512 = vpop.f32.mrb[0].mxu0
  %v513 = vadd.f32 0.0, %v512
  %v514 = vpop.f32.mrb[0].mxu0
  %515 = vmatprep.mubr.bf16.mxu0 0
  %516 = vmatmul.mubr.bf16.gmra.mrb[0].mxu0 %v320
  %v517 = vpop.f32.mrb[0].mxu0
  %v518 = vadd.f32 0.0, %v517
  %v519 = vpop.f32.mrb[0].mxu0
  %v520 = vpop.f32.mrb[0].mxu0
  %v521 = vadd.f32 0.0, %v520
  %v522 = vpop.f32.mrb[0].mxu0
  %523 = vmatprep.mubr.bf16.mxu0 0
  %524 = vmatmul.mubr.bf16.gmra.mrb[0].mxu0 %v323
  %v525 = vpop.f32.mrb[0].mxu0
  %v526 = vadd.f32 0.0, %v525
  %v527 = vpop.f32.mrb[0].mxu0
  %v528 = vpop.f32.mrb[0].mxu0
  %v529 = vadd.f32 0.0, %v528
  %v530 = vpop.f32.mrb[0].mxu0
  %531 = vmatprep.mubr.bf16.mxu0 0
  %532 = vmatmul.mubr.bf16.gmra.mrb[0].mxu0 %v326
  %v533 = vpop.f32.mrb[0].mxu0
  %v534 = vadd.f32 0.0, %v533
  %v535 = vpop.f32.mrb[0].mxu0
  %v536 = vpop.f32.mrb[0].mxu0
  %v537 = vadd.f32 0.0, %v536
  %v538 = vpop.f32.mrb[0].mxu0
  %539 = vmatprep.mubr.bf16.mxu0 0
  %540 = vmatmul.mubr.bf16.gmra.mrb[0].mxu0 %v329
  %v541 = vpop.f32.mrb[0].mxu0
  %v542 = vadd.f32 0.0, %v541
  %v543 = vpop.f32.mrb[0].mxu0
  %v544 = vpop.f32.mrb[0].mxu0
  %v545 = vadd.f32 0.0, %v544
  %v546 = vpop.f32.mrb[0].mxu0
  %547 = vmatprep.mubr.bf16.mxu0 0
  %548 = vmatmul.mubr.bf16.gmra.mrb[0].mxu0 %v332
  %v549 = vpop.f32.mrb[0].mxu0
  %v550 = vadd.f32 0.0, %v549
  %v551 = vpop.f32.mrb[0].mxu0
  %v552 = vpop.f32.mrb[0].mxu0
  %v553 = vadd.f32 0.0, %v552
  %v554 = vpop.f32.mrb[0].mxu0
  %555 = vmatprep.mubr.bf16.mxu0 0
  %556 = vmatmul.mubr.bf16.gmra.mrb[0].mxu0 %v335
  %v557 = vpop.f32.mrb[0].mxu0
  %v558 = vadd.f32 0.0, %v557
  %v559 = vpop.f32.mrb[0].mxu0
  %v560 = vpop.f32.mrb[0].mxu0
  %v561 = vadd.f32 0.0, %v560
  %v562 = vpop.f32.mrb[0].mxu0
  %563 = vmatprep.mubr.bf16.mxu0 0
  %564 = vmatmul.mubr.bf16.gmra.mrb[0].mxu0 %v338
  %v565 = vpop.f32.mrb[0].mxu0
  %v566 = vadd.f32 0.0, %v565
  %v567 = vpop.f32.mrb[0].mxu0
  %v568 = vpop.f32.mrb[0].mxu0
  %v569 = vadd.f32 0.0, %v568
  %v570 = vpop.f32.mrb[0].mxu0
  %571 = vmatprep.mubr.bf16.mxu0 0
  %572 = vmatmul.mubr.bf16.gmra.mrb[0].mxu0 %v341
  %v573 = vpop.f32.mrb[0].mxu0
  %v574 = vadd.f32 0.0, %v573
  %v575 = vpop.f32.mrb[0].mxu0
  %v576 = vpop.f32.mrb[0].mxu0
  %v577 = vadd.f32 0.0, %v576
  %v578 = vpop.f32.mrb[0].mxu0
  %579 = vmatprep.mubr.bf16.mxu0 0
  %580 = vmatmul.mubr.bf16.gmra.mrb[0].mxu0 %v344
  %v581 = vpop.f32.mrb[0].mxu0
  %v582 = vadd.f32 0.0, %v581
  %v583 = vpop.f32.mrb[0].mxu0
  %v584 = vpop.f32.mrb[0].mxu0
  %v585 = vadd.f32 0.0, %v584
  %v586 = vpop.f32.mrb[0].mxu0
  %587 = vmatprep.mubr.bf16.mxu0 0
  %588 = vmatmul.mubr.bf16.gmra.mrb[0].mxu0 %v347
  %v589 = vpop.f32.mrb[0].mxu0
  %v590 = vadd.f32 0.0, %v589
  %v591 = vpop.f32.mrb[0].mxu0
  %v592 = vpop.f32.mrb[0].mxu0
  %v593 = vadd.f32 0.0, %v592
  %v594 = vpop.f32.mrb[0].mxu0
  %595 = vmatprep.mubr.bf16.mxu0 0
  %596 = vmatmul.mubr.bf16.gmra.mrb[0].mxu0 %v350
  %v597 = vpop.f32.mrb[0].mxu0
  %v598 = vadd.f32 0.0, %v597
  %v599 = vpop.f32.mrb[0].mxu0
  %v600 = vpop.f32.mrb[0].mxu0
  %v601 = vadd.f32 0.0, %v600
  %v602 = vpop.f32.mrb[0].mxu0
  %603 = vmatprep.mubr.bf16.mxu0 0
  %604 = vmatmul.mubr.bf16.gmra.mrb[0].mxu0 %v353
  %v605 = vpop.f32.mrb[0].mxu0
  %v606 = vadd.f32 0.0, %v605
  %v607 = vpop.f32.mrb[0].mxu0
  %v608 = vpop.f32.mrb[0].mxu0
  %v609 = vadd.f32 0.0, %v608
  %v610 = vpop.f32.mrb[0].mxu0
  %611 = vmatprep.mubr.bf16.mxu0 0
  %612 = vmatmul.mubr.bf16.gmra.mrb[0].mxu0 %v356
  %v613 = vpop.f32.mrb[0].mxu0
  %v614 = vadd.f32 0.0, %v613
  %v615 = vpop.f32.mrb[0].mxu0
  %v616 = vpop.f32.mrb[0].mxu0
  %v617 = vadd.f32 0.0, %v616
  %v618 = vpop.f32.mrb[0].mxu0
  %619 = vmatprep.mubr.bf16.mxu0 0
  %620 = vmatmul.mubr.bf16.gmra.mrb[0].mxu0 %v359
  %v621 = vpop.f32.mrb[0].mxu0
  %v622 = vadd.f32 0.0, %v621
  %v623 = vpop.f32.mrb[0].mxu0
  %v624 = vpop.f32.mrb[0].mxu0
  %v625 = vadd.f32 0.0, %v624
  %v626 = vpop.f32.mrb[0].mxu0
  %627 = vmatprep.mubr.bf16.mxu0 0
  %628 = vmatmul.mubr.bf16.gmra.mrb[0].mxu0 %v362
  %v629 = vpop.f32.mrb[0].mxu0
  %v630 = vadd.f32 0.0, %v629
  %v631 = vpop.f32.mrb[0].mxu0
  %v632 = vpop.f32.mrb[0].mxu0
  %v633 = vadd.f32 0.0, %v632
  %v634 = vpop.f32.mrb[0].mxu0
  %635 = vmatprep.mubr.bf16.mxu0 0
  %636 = vmatmul.mubr.bf16.gmra.mrb[0].mxu0 %v365
  %v637 = vpop.f32.mrb[0].mxu0
  %v638 = vadd.f32 0.0, %v637
  %v639 = vpop.f32.mrb[0].mxu0
  %v640 = vpop.f32.mrb[0].mxu0
  %v641 = vadd.f32 0.0, %v640
  %v642 = vpop.f32.mrb[0].mxu0
  %643 = vmatprep.mubr.bf16.mxu0 0
  %644 = vmatmul.mubr.bf16.gmra.mrb[0].mxu0 %v368
  %v645 = vpop.f32.mrb[0].mxu0
  %v646 = vadd.f32 0.0, %v645
  %v647 = vpop.f32.mrb[0].mxu0
  %v648 = vpop.f32.mrb[0].mxu0
  %v649 = vadd.f32 0.0, %v648
  %v650 = vpop.f32.mrb[0].mxu0
  %651 = vmatprep.mubr.bf16.mxu0 0
  %652 = vmatmul.mubr.bf16.gmra.mrb[0].mxu0 %v371
  %v653 = vpop.f32.mrb[0].mxu0
  %v654 = vadd.f32 0.0, %v653
  %v655 = vpop.f32.mrb[0].mxu0
  %v656 = vpop.f32.mrb[0].mxu0
  %v657 = vadd.f32 0.0, %v656
  %v658 = vpop.f32.mrb[0].mxu0
  %659 = vmatprep.mubr.bf16.mxu0 0
  %660 = vmatmul.mubr.bf16.gmra.mrb[0].mxu0 %v374
  %v661 = vpop.f32.mrb[0].mxu0
  %v662 = vadd.f32 0.0, %v661
  %v663 = vpop.f32.mrb[0].mxu0
  %v664 = vpop.f32.mrb[0].mxu0
  %v665 = vadd.f32 0.0, %v664
  %v666 = vpop.f32.mrb[0].mxu0
  %667 = vmatprep.mubr.bf16.mxu0 0
  %668 = vmatmul.mubr.bf16.gmra.mrb[0].mxu0 %v377
  %v669 = vpop.f32.mrb[0].mxu0
  %v670 = vadd.f32 0.0, %v669
  %v671 = vpop.f32.mrb[0].mxu0
  %v672 = vpop.f32.mrb[0].mxu0
  %v673 = vadd.f32 0.0, %v672
  %v674 = vpop.f32.mrb[0].mxu0
  %675 = vmatprep.mubr.bf16.mxu0 0
  %676 = vmatmul.mubr.bf16.gmra.mrb[0].mxu0 %v380
  %v677 = vpop.f32.mrb[0].mxu0
  %v678 = vadd.f32 0.0, %v677
  %v679 = vpop.f32.mrb[0].mxu0
  %v680 = vpop.f32.mrb[0].mxu0
  %v681 = vadd.f32 0.0, %v680
  %v682 = vpop.f32.mrb[0].mxu0
  %683 = vmatprep.mubr.bf16.mxu0 0
  %684 = vmatmul.mubr.bf16.gmra.mrb[0].mxu0 %v383
  %v685 = vpop.f32.mrb[0].mxu0
  %v686 = vadd.f32 0.0, %v685
  %v687 = vpop.f32.mrb[0].mxu0
  %v688 = vpop.f32.mrb[0].mxu0
  %v689 = vadd.f32 0.0, %v688
  %v690 = vpop.f32.mrb[0].mxu0
  %691 = vmatprep.mubr.bf16.mxu0 0
  %692 = vmatmul.mubr.bf16.gmra.mrb[0].mxu0 %v386
  %v693 = vpop.f32.mrb[0].mxu0
  %v694 = vadd.f32 0.0, %v693
  %v695 = vpop.f32.mrb[0].mxu0
  %v696 = vpop.f32.mrb[0].mxu0
  %v697 = vpop.f32.mrb[0].mxu0
  %698 = vdwg.mxu0
  %s699 = scalar_lea.vmem %s0, 536
  %v700 = vld [vmem:[%s699] sm:$0xf]
  %v701 = vld [vmem:[%s699 + $0x4] sm:$0xf]
  %v702 = vld [vmem:[%s699 + $0x8] sm:$0xf]
  %v703 = vld [vmem:[%s699 + $0xc] sm:$0xf]
  %v704 = vld [vmem:[%s699 + $0x10] sm:$0xf]
  %v705 = vld [vmem:[%s699 + $0x14] sm:$0xf]
  %v706 = vld [vmem:[%s699 + $0x18] sm:$0xf]
  %v707 = vld [vmem:[%s699 + $0x1c] sm:$0xf]
  %v708 = vld [vmem:[%s699 + $0x20] sm:$0xf]
  %v709 = vld [vmem:[%s699 + $0x24] sm:$0xf]
  %v710 = vld [vmem:[%s699 + $0x28] sm:$0xf]
  %v711 = vld [vmem:[%s699 + $0x2c] sm:$0xf]
  %v712 = vld [vmem:[%s699 + $0x30] sm:$0xf]
  %v713 = vld [vmem:[%s699 + $0x34] sm:$0xf]
  %v714 = vld [vmem:[%s699 + $0x38] sm:$0xf]
  %v715 = vld [vmem:[%s699 + $0x3c] sm:$0xf]
  %v716 = vld [vmem:[%s699 + $0x40] sm:$0xf]
  %v717 = vld [vmem:[%s699 + $0x44] sm:$0xf]
  %v718 = vld [vmem:[%s699 + $0x48] sm:$0xf]
  %v719 = vld [vmem:[%s699 + $0x4c] sm:$0xf]
  %v720 = vld [vmem:[%s699 + $0x50] sm:$0xf]
  %v721 = vld [vmem:[%s699 + $0x54] sm:$0xf]
  %v722 = vld [vmem:[%s699 + $0x58] sm:$0xf]
  %v723 = vld [vmem:[%s699 + $0x5c] sm:$0xf]
  %v724 = vld [vmem:[%s699 + $0x60] sm:$0xf]
  %v725 = vld [vmem:[%s699 + $0x64] sm:$0xf]
  %v726 = vld [vmem:[%s699 + $0x68] sm:$0xf]
  %v727 = vld [vmem:[%s699 + $0x6c] sm:$0xf]
  %v728 = vld [vmem:[%s699 + $0x70] sm:$0xf]
  %v729 = vld [vmem:[%s699 + $0x74] sm:$0xf]
  %v730 = vld [vmem:[%s699 + $0x78] sm:$0xf]
  %v731 = vld [vmem:[%s699 + $0x7c] sm:$0xf]
  %v732 = vld [vmem:[%s699 + $0x80] sm:$0xf]
  %v733 = vld [vmem:[%s699 + $0x84] sm:$0xf]
  %v734 = vld [vmem:[%s699 + $0x88] sm:$0xf]
  %v735 = vld [vmem:[%s699 + $0x8c] sm:$0xf]
  %v736 = vld [vmem:[%s699 + $0x90] sm:$0xf]
  %v737 = vld [vmem:[%s699 + $0x94] sm:$0xf]
  %v738 = vld [vmem:[%s699 + $0x98] sm:$0xf]
  %v739 = vld [vmem:[%s699 + $0x9c] sm:$0xf]
  %v740 = vld [vmem:[%s699 + $0xa0] sm:$0xf]
  %v741 = vld [vmem:[%s699 + $0xa4] sm:$0xf]
  %v742 = vld [vmem:[%s699 + $0xa8] sm:$0xf]
  %v743 = vld [vmem:[%s699 + $0xac] sm:$0xf]
  %v744 = vld [vmem:[%s699 + $0xb0] sm:$0xf]
  %v745 = vld [vmem:[%s699 + $0xb4] sm:$0xf]
  %v746 = vld [vmem:[%s699 + $0xb8] sm:$0xf]
  %v747 = vld [vmem:[%s699 + $0xbc] sm:$0xf]
  %v748 = vld [vmem:[%s699 + $0xc0] sm:$0xf]
  %v749 = vld [vmem:[%s699 + $0xc4] sm:$0xf]
  %v750 = vld [vmem:[%s699 + $0xc8] sm:$0xf]
  %v751 = vld [vmem:[%s699 + $0xcc] sm:$0xf]
  %v752 = vld [vmem:[%s699 + $0xd0] sm:$0xf]
  %v753 = vld [vmem:[%s699 + $0xd4] sm:$0xf]
  %v754 = vld [vmem:[%s699 + $0xd8] sm:$0xf]
  %v755 = vld [vmem:[%s699 + $0xdc] sm:$0xf]
  %v756 = vld [vmem:[%s699 + $0xe0] sm:$0xf]
  %v757 = vld [vmem:[%s699 + $0xe4] sm:$0xf]
  %v758 = vld [vmem:[%s699 + $0xe8] sm:$0xf]
  %v759 = vld [vmem:[%s699 + $0xec] sm:$0xf]
  %v760 = vld [vmem:[%s699 + $0xf0] sm:$0xf]
  %v761 = vld [vmem:[%s699 + $0xf4] sm:$0xf]
  %v762 = vld [vmem:[%s699 + $0xf8] sm:$0xf]
  %v763 = vld [vmem:[%s699 + $0xfc] sm:$0xf]
  %v764 = vld [vmem:[%s699 + $0x100] sm:$0xf]
  %v765 = vld [vmem:[%s699 + $0x104] sm:$0xf]
  %v766 = vld [vmem:[%s699 + $0x108] sm:$0x1]
  %v834 = vunpack.c.l.b16 %v700
  %v835 = vunpack.c.l.b16 %v701
  %v836 = vunpack.c.l.b16 %v702
  %v837 = vunpack.c.l.b16 %v703
  %v838 = vunpack.c.l.b16 %v704
  %v839 = vunpack.c.l.b16 %v705
  %v840 = vunpack.c.l.b16 %v706
  %v841 = vunpack.c.l.b16 %v707
  %v842 = vunpack.c.l.b16 %v708
  %v843 = vunpack.c.l.b16 %v709
  %v844 = vunpack.c.l.b16 %v710
  %v845 = vunpack.c.l.b16 %v711
  %v846 = vunpack.c.l.b16 %v712
  %v847 = vunpack.c.l.b16 %v713
  %v848 = vunpack.c.l.b16 %v714
  %v849 = vunpack.c.l.b16 %v715
  %v850 = vunpack.c.l.b16 %v716
  %v851 = vunpack.c.l.b16 %v717
  %v852 = vunpack.c.l.b16 %v718
  %v853 = vunpack.c.l.b16 %v719
  %v854 = vunpack.c.l.b16 %v720
  %v855 = vunpack.c.l.b16 %v721
  %v856 = vunpack.c.l.b16 %v722
  %v857 = vunpack.c.l.b16 %v723
  %v858 = vunpack.c.l.b16 %v724
  %v859 = vunpack.c.l.b16 %v725
  %v860 = vunpack.c.l.b16 %v726
  %v861 = vunpack.c.l.b16 %v727
  %v862 = vunpack.c.l.b16 %v728
  %v863 = vunpack.c.l.b16 %v729
  %v864 = vunpack.c.l.b16 %v730
  %v865 = vunpack.c.l.b16 %v731
  %v866 = vunpack.c.l.b16 %v732
  %v867 = vunpack.c.l.b16 %v733
  %v868 = vunpack.c.l.b16 %v734
  %v869 = vunpack.c.l.b16 %v735
  %v870 = vunpack.c.l.b16 %v736
  %v871 = vunpack.c.l.b16 %v737
  %v872 = vunpack.c.l.b16 %v738
  %v873 = vunpack.c.l.b16 %v739
  %v874 = vunpack.c.l.b16 %v740
  %v875 = vunpack.c.l.b16 %v741
  %v876 = vunpack.c.l.b16 %v742
  %v877 = vunpack.c.l.b16 %v743
  %v878 = vunpack.c.l.b16 %v744
  %v879 = vunpack.c.l.b16 %v745
  %v880 = vunpack.c.l.b16 %v746
  %v881 = vunpack.c.l.b16 %v747
  %v882 = vunpack.c.l.b16 %v748
  %v883 = vunpack.c.l.b16 %v749
  %v884 = vunpack.c.l.b16 %v750
  %v885 = vunpack.c.l.b16 %v751
  %v886 = vunpack.c.l.b16 %v752
  %v887 = vunpack.c.l.b16 %v753
  %v888 = vunpack.c.l.b16 %v754
  %v889 = vunpack.c.l.b16 %v755
  %v890 = vunpack.c.l.b16 %v756
  %v891 = vunpack.c.l.b16 %v757
  %v892 = vunpack.c.l.b16 %v758
  %v893 = vunpack.c.l.b16 %v759
  %v894 = vunpack.c.l.b16 %v760
  %v895 = vunpack.c.l.b16 %v761
  %v896 = vunpack.c.l.b16 %v762
  %v897 = vunpack.c.l.b16 %v763
  %v898 = vunpack.c.l.b16 %v764
  %v899 = vunpack.c.l.b16 %v765
  %v900 = vunpack.c.l.b16 %v766
  %v901 = vpack.c.b16 %v835, %v834
  %v902 = vpack.c.b16 %v837, %v836
  %v903 = vpack.c.b16 %v839, %v838
  %v904 = vpack.c.b16 %v841, %v840
  %v905 = vpack.c.b16 %v843, %v842
  %v906 = vpack.c.b16 %v845, %v844
  %v907 = vpack.c.b16 %v847, %v846
  %v908 = vpack.c.b16 %v849, %v848
  %v909 = vpack.c.b16 %v851, %v850
  %v910 = vpack.c.b16 %v853, %v852
  %v911 = vpack.c.b16 %v855, %v854
  %v912 = vpack.c.b16 %v857, %v856
  %v913 = vpack.c.b16 %v859, %v858
  %v914 = vpack.c.b16 %v861, %v860
  %v915 = vpack.c.b16 %v863, %v862
  %v916 = vpack.c.b16 %v865, %v864
  %v917 = vpack.c.b16 %v867, %v866
  %v918 = vpack.c.b16 %v869, %v868
  %v919 = vpack.c.b16 %v871, %v870
  %v920 = vpack.c.b16 %v873, %v872
  %v921 = vpack.c.b16 %v875, %v874
  %v922 = vpack.c.b16 %v877, %v876
  %v923 = vpack.c.b16 %v879, %v878
  %v924 = vpack.c.b16 %v881, %v880
  %v925 = vpack.c.b16 %v883, %v882
  %v926 = vpack.c.b16 %v885, %v884
  %v927 = vpack.c.b16 %v887, %v886
  %v928 = vpack.c.b16 %v889, %v888
  %v929 = vpack.c.b16 %v891, %v890
  %v930 = vpack.c.b16 %v893, %v892
  %v931 = vpack.c.b16 %v895, %v894
  %v932 = vpack.c.b16 %v897, %v896
  %v933 = vpack.c.b16 %v899, %v898
  %v934 = vpack.c.b16 %v900, %v900
  %v936 = vsel %vm285, %v901, 0
  %v939 = vsel %vm285, %v902, 0
  %v942 = vsel %vm285, %v903, 0
  %v945 = vsel %vm285, %v904, 0
  %v948 = vsel %vm285, %v905, 0
  %v951 = vsel %vm285, %v906, 0
  %v954 = vsel %vm285, %v907, 0
  %v957 = vsel %vm285, %v908, 0
  %v960 = vsel %vm285, %v909, 0
  %v963 = vsel %vm285, %v910, 0
  %v966 = vsel %vm285, %v911, 0
  %v969 = vsel %vm285, %v912, 0
  %v972 = vsel %vm285, %v913, 0
  %v975 = vsel %vm285, %v914, 0
  %v978 = vsel %vm285, %v915, 0
  %v981 = vsel %vm285, %v916, 0
  %v984 = vsel %vm285, %v917, 0
  %v987 = vsel %vm285, %v918, 0
  %v990 = vsel %vm285, %v919, 0
  %v993 = vsel %vm285, %v920, 0
  %v996 = vsel %vm285, %v921, 0
  %v999 = vsel %vm285, %v922, 0
  %v1002 = vsel %vm285, %v923, 0
  %v1005 = vsel %vm285, %v924, 0
  %v1008 = vsel %vm285, %v925, 0
  %v1011 = vsel %vm285, %v926, 0
  %v1014 = vsel %vm285, %v927, 0
  %v1017 = vsel %vm285, %v928, 0
  %v1020 = vsel %vm285, %v929, 0
  %v1023 = vsel %vm285, %v930, 0
  %v1026 = vsel %vm285, %v931, 0
  %v1029 = vsel %vm285, %v932, 0
  %v1032 = vsel %vm285, %v933, 0
  %v1035 = vsel %vm285, %v934, 0
  %1037 = vmatprep.subr.bf16.mxu0 0
  %1038 = vmatpush1.bf16.msra.mxu0 %v282
  %1039 = vmatprep.subr.bf16.mxu0 0
  %1040 = vmatpush1.bf16.msra.mxu0 %v393
  %1041 = vmatprep.subr.bf16.mxu0 0
  %1042 = vmatpush1.bf16.msra.mxu0 0
  %1043 = vmatprep.subr.bf16.mxu0 0
  %1044 = vmatpush1.bf16.msra.mxu0 0
  %1045 = vmatprep.subr.bf16.mxu0 0
  %1046 = vmatpush1.bf16.msra.mxu0 0
  %1047 = vmatprep.subr.bf16.mxu0 0
  %1048 = vmatpush1.bf16.msra.mxu0 0
  %1049 = vmatprep.subr.bf16.mxu0 0
  %1050 = vmatpush1.bf16.msra.mxu0 0
  %1051 = vmatprep.subr.bf16.mxu0 0
  %1052 = vmatpush1.bf16.msra.mxu0 0
  %1053 = vmatprep.subr.bf16.mxu0 0
  %1054 = vmatpush1.bf16.msra.mxu0 0
  %1055 = vmatprep.subr.bf16.mxu0 0
  %1056 = vmatpush1.bf16.msra.mxu0 0
  %1057 = vmatprep.subr.bf16.mxu0 0
  %1058 = vmatpush1.bf16.msra.mxu0 0
  %1059 = vmatprep.subr.bf16.mxu0 0
  %1060 = vmatpush1.bf16.msra.mxu0 0
  %1061 = vmatprep.subr.bf16.mxu0 0
  %1062 = vmatpush1.bf16.msra.mxu0 0
  %1063 = vmatprep.subr.bf16.mxu0 0
  %1064 = vmatpush1.bf16.msra.mxu0 0
  %1065 = vmatprep.subr.bf16.mxu0 0
  %1066 = vmatpush1.bf16.msra.mxu0 0
  %1067 = vmatprep.subr.bf16.mxu0 0
  %1068 = vmatpush1.bf16.msra.mxu0 0
  %1069 = vmatprep.mubr.bf16.mxu0 0
  %1070 = vmatmul.mubr.bf16.gmra.mrb[0].mxu0 %v936
  %v1071 = vpop.f32.mrb[0].mxu0
  %v1072 = vadd.f32 0.0, %v1071
  %v1073 = vpop.f32.mrb[0].mxu0
  %v1074 = vpop.f32.mrb[0].mxu0
  %v1075 = vadd.f32 0.0, %v1074
  %v1076 = vpop.f32.mrb[0].mxu0
  %1077 = vmatprep.mubr.bf16.mxu0 0
  %1078 = vmatmul.mubr.bf16.gmra.mrb[0].mxu0 %v939
  %v1079 = vpop.f32.mrb[0].mxu0
  %v1080 = vadd.f32 0.0, %v1079
  %v1081 = vpop.f32.mrb[0].mxu0
  %v1082 = vpop.f32.mrb[0].mxu0
  %v1083 = vadd.f32 0.0, %v1082
  %v1084 = vpop.f32.mrb[0].mxu0
  %1085 = vmatprep.mubr.bf16.mxu0 0
  %1086 = vmatmul.mubr.bf16.gmra.mrb[0].mxu0 %v942
  %v1087 = vpop.f32.mrb[0].mxu0
  %v1088 = vadd.f32 0.0, %v1087
  %v1089 = vpop.f32.mrb[0].mxu0
  %v1090 = vpop.f32.mrb[0].mxu0
  %v1091 = vadd.f32 0.0, %v1090
  %v1092 = vpop.f32.mrb[0].mxu0
  %1093 = vmatprep.mubr.bf16.mxu0 0
  %1094 = vmatmul.mubr.bf16.gmra.mrb[0].mxu0 %v945
  %v1095 = vpop.f32.mrb[0].mxu0
  %v1096 = vadd.f32 0.0, %v1095
  %v1097 = vpop.f32.mrb[0].mxu0
  %v1098 = vpop.f32.mrb[0].mxu0
  %v1099 = vadd.f32 0.0, %v1098
  %v1100 = vpop.f32.mrb[0].mxu0
  %1101 = vmatprep.mubr.bf16.mxu0 0
  %1102 = vmatmul.mubr.bf16.gmra.mrb[0].mxu0 %v948
  %v1103 = vpop.f32.mrb[0].mxu0
  %v1104 = vadd.f32 0.0, %v1103
  %v1105 = vpop.f32.mrb[0].mxu0
  %v1106 = vpop.f32.mrb[0].mxu0
  %v1107 = vadd.f32 0.0, %v1106
  %v1108 = vpop.f32.mrb[0].mxu0
  %1109 = vmatprep.mubr.bf16.mxu0 0
  %1110 = vmatmul.mubr.bf16.gmra.mrb[0].mxu0 %v951
  %v1111 = vpop.f32.mrb[0].mxu0
  %v1112 = vadd.f32 0.0, %v1111
  %v1113 = vpop.f32.mrb[0].mxu0
  %v1114 = vpop.f32.mrb[0].mxu0
  %v1115 = vadd.f32 0.0, %v1114
  %v1116 = vpop.f32.mrb[0].mxu0
  %1117 = vmatprep.mubr.bf16.mxu0 0
  %1118 = vmatmul.mubr.bf16.gmra.mrb[0].mxu0 %v954
  %v1119 = vpop.f32.mrb[0].mxu0
  %v1120 = vadd.f32 0.0, %v1119
  %v1121 = vpop.f32.mrb[0].mxu0
  %v1122 = vpop.f32.mrb[0].mxu0
  %v1123 = vadd.f32 0.0, %v1122
  %v1124 = vpop.f32.mrb[0].mxu0
  %1125 = vmatprep.mubr.bf16.mxu0 0
  %1126 = vmatmul.mubr.bf16.gmra.mrb[0].mxu0 %v957
  %v1127 = vpop.f32.mrb[0].mxu0
  %v1128 = vadd.f32 0.0, %v1127
  %v1129 = vpop.f32.mrb[0].mxu0
  %v1130 = vpop.f32.mrb[0].mxu0
  %v1131 = vadd.f32 0.0, %v1130
  %v1132 = vpop.f32.mrb[0].mxu0
  %1133 = vmatprep.mubr.bf16.mxu0 0
  %1134 = vmatmul.mubr.bf16.gmra.mrb[0].mxu0 %v960
  %v1135 = vpop.f32.mrb[0].mxu0
  %v1136 = vadd.f32 0.0, %v1135
  %v1137 = vpop.f32.mrb[0].mxu0
  %v1138 = vpop.f32.mrb[0].mxu0
  %v1139 = vadd.f32 0.0, %v1138
  %v1140 = vpop.f32.mrb[0].mxu0
  %1141 = vmatprep.mubr.bf16.mxu0 0
  %1142 = vmatmul.mubr.bf16.gmra.mrb[0].mxu0 %v963
  %v1143 = vpop.f32.mrb[0].mxu0
  %v1144 = vadd.f32 0.0, %v1143
  %v1145 = vpop.f32.mrb[0].mxu0
  %v1146 = vpop.f32.mrb[0].mxu0
  %v1147 = vadd.f32 0.0, %v1146
  %v1148 = vpop.f32.mrb[0].mxu0
  %1149 = vmatprep.mubr.bf16.mxu0 0
  %1150 = vmatmul.mubr.bf16.gmra.mrb[0].mxu0 %v966
  %v1151 = vpop.f32.mrb[0].mxu0
  %v1152 = vadd.f32 0.0, %v1151
  %v1153 = vpop.f32.mrb[0].mxu0
  %v1154 = vpop.f32.mrb[0].mxu0
  %v1155 = vadd.f32 0.0, %v1154
  %v1156 = vpop.f32.mrb[0].mxu0
  %1157 = vmatprep.mubr.bf16.mxu0 0
  %1158 = vmatmul.mubr.bf16.gmra.mrb[0].mxu0 %v969
  %v1159 = vpop.f32.mrb[0].mxu0
  %v1160 = vadd.f32 0.0, %v1159
  %v1161 = vpop.f32.mrb[0].mxu0
  %v1162 = vpop.f32.mrb[0].mxu0
  %v1163 = vadd.f32 0.0, %v1162
  %v1164 = vpop.f32.mrb[0].mxu0
  %1165 = vmatprep.mubr.bf16.mxu0 0
  %1166 = vmatmul.mubr.bf16.gmra.mrb[0].mxu0 %v972
  %v1167 = vpop.f32.mrb[0].mxu0
  %v1168 = vadd.f32 0.0, %v1167
  %v1169 = vpop.f32.mrb[0].mxu0
  %v1170 = vpop.f32.mrb[0].mxu0
  %v1171 = vadd.f32 0.0, %v1170
  %v1172 = vpop.f32.mrb[0].mxu0
  %1173 = vmatprep.mubr.bf16.mxu0 0
  %1174 = vmatmul.mubr.bf16.gmra.mrb[0].mxu0 %v975
  %v1175 = vpop.f32.mrb[0].mxu0
  %v1176 = vadd.f32 0.0, %v1175
  %v1177 = vpop.f32.mrb[0].mxu0
  %v1178 = vpop.f32.mrb[0].mxu0
  %v1179 = vadd.f32 0.0, %v1178
  %v1180 = vpop.f32.mrb[0].mxu0
  %1181 = vmatprep.mubr.bf16.mxu0 0
  %1182 = vmatmul.mubr.bf16.gmra.mrb[0].mxu0 %v978
  %v1183 = vpop.f32.mrb[0].mxu0
  %v1184 = vadd.f32 0.0, %v1183
  %v1185 = vpop.f32.mrb[0].mxu0
  %v1186 = vpop.f32.mrb[0].mxu0
  %v1187 = vadd.f32 0.0, %v1186
  %v1188 = vpop.f32.mrb[0].mxu0
  %1189 = vmatprep.mubr.bf16.mxu0 0
  %1190 = vmatmul.mubr.bf16.gmra.mrb[0].mxu0 %v981
  %v1191 = vpop.f32.mrb[0].mxu0
  %v1192 = vadd.f32 0.0, %v1191
  %v1193 = vpop.f32.mrb[0].mxu0
  %v1194 = vpop.f32.mrb[0].mxu0
  %v1195 = vadd.f32 0.0, %v1194
  %v1196 = vpop.f32.mrb[0].mxu0
  %1197 = vmatprep.mubr.bf16.mxu0 0
  %1198 = vmatmul.mubr.bf16.gmra.mrb[0].mxu0 %v984
  %v1199 = vpop.f32.mrb[0].mxu0
  %v1200 = vadd.f32 0.0, %v1199
  %v1201 = vpop.f32.mrb[0].mxu0
  %v1202 = vpop.f32.mrb[0].mxu0
  %v1203 = vadd.f32 0.0, %v1202
  %v1204 = vpop.f32.mrb[0].mxu0
  %1205 = vmatprep.mubr.bf16.mxu0 0
  %1206 = vmatmul.mubr.bf16.gmra.mrb[0].mxu0 %v987
  %v1207 = vpop.f32.mrb[0].mxu0
  %v1208 = vadd.f32 0.0, %v1207
  %v1209 = vpop.f32.mrb[0].mxu0
  %v1210 = vpop.f32.mrb[0].mxu0
  %v1211 = vadd.f32 0.0, %v1210
  %v1212 = vpop.f32.mrb[0].mxu0
  %1213 = vmatprep.mubr.bf16.mxu0 0
  %1214 = vmatmul.mubr.bf16.gmra.mrb[0].mxu0 %v990
  %v1215 = vpop.f32.mrb[0].mxu0
  %v1216 = vadd.f32 0.0, %v1215
  %v1217 = vpop.f32.mrb[0].mxu0
  %v1218 = vpop.f32.mrb[0].mxu0
  %v1219 = vadd.f32 0.0, %v1218
  %v1220 = vpop.f32.mrb[0].mxu0
  %1221 = vmatprep.mubr.bf16.mxu0 0
  %1222 = vmatmul.mubr.bf16.gmra.mrb[0].mxu0 %v993
  %v1223 = vpop.f32.mrb[0].mxu0
  %v1224 = vadd.f32 0.0, %v1223
  %v1225 = vpop.f32.mrb[0].mxu0
  %v1226 = vpop.f32.mrb[0].mxu0
  %v1227 = vadd.f32 0.0, %v1226
  %v1228 = vpop.f32.mrb[0].mxu0
  %1229 = vmatprep.mubr.bf16.mxu0 0
  %1230 = vmatmul.mubr.bf16.gmra.mrb[0].mxu0 %v996
  %v1231 = vpop.f32.mrb[0].mxu0
  %v1232 = vadd.f32 0.0, %v1231
  %v1233 = vpop.f32.mrb[0].mxu0
  %v1234 = vpop.f32.mrb[0].mxu0
  %v1235 = vadd.f32 0.0, %v1234
  %v1236 = vpop.f32.mrb[0].mxu0
  %1237 = vmatprep.mubr.bf16.mxu0 0
  %1238 = vmatmul.mubr.bf16.gmra.mrb[0].mxu0 %v999
  %v1239 = vpop.f32.mrb[0].mxu0
  %v1240 = vadd.f32 0.0, %v1239
  %v1241 = vpop.f32.mrb[0].mxu0
  %v1242 = vpop.f32.mrb[0].mxu0
  %v1243 = vadd.f32 0.0, %v1242
  %v1244 = vpop.f32.mrb[0].mxu0
  %1245 = vmatprep.mubr.bf16.mxu0 0
  %1246 = vmatmul.mubr.bf16.gmra.mrb[0].mxu0 %v1002
  %v1247 = vpop.f32.mrb[0].mxu0
  %v1248 = vadd.f32 0.0, %v1247
  %v1249 = vpop.f32.mrb[0].mxu0
  %v1250 = vpop.f32.mrb[0].mxu0
  %v1251 = vadd.f32 0.0, %v1250
  %v1252 = vpop.f32.mrb[0].mxu0
  %1253 = vmatprep.mubr.bf16.mxu0 0
  %1254 = vmatmul.mubr.bf16.gmra.mrb[0].mxu0 %v1005
  %v1255 = vpop.f32.mrb[0].mxu0
  %v1256 = vadd.f32 0.0, %v1255
  %v1257 = vpop.f32.mrb[0].mxu0
  %v1258 = vpop.f32.mrb[0].mxu0
  %v1259 = vadd.f32 0.0, %v1258
  %v1260 = vpop.f32.mrb[0].mxu0
  %1261 = vmatprep.mubr.bf16.mxu0 0
  %1262 = vmatmul.mubr.bf16.gmra.mrb[0].mxu0 %v1008
  %v1263 = vpop.f32.mrb[0].mxu0
  %v1264 = vadd.f32 0.0, %v1263
  %v1265 = vpop.f32.mrb[0].mxu0
  %v1266 = vpop.f32.mrb[0].mxu0
  %v1267 = vadd.f32 0.0, %v1266
  %v1268 = vpop.f32.mrb[0].mxu0
  %1269 = vmatprep.mubr.bf16.mxu0 0
  %1270 = vmatmul.mubr.bf16.gmra.mrb[0].mxu0 %v1011
  %v1271 = vpop.f32.mrb[0].mxu0
  %v1272 = vadd.f32 0.0, %v1271
  %v1273 = vpop.f32.mrb[0].mxu0
  %v1274 = vpop.f32.mrb[0].mxu0
  %v1275 = vadd.f32 0.0, %v1274
  %v1276 = vpop.f32.mrb[0].mxu0
  %1277 = vmatprep.mubr.bf16.mxu0 0
  %1278 = vmatmul.mubr.bf16.gmra.mrb[0].mxu0 %v1014
  %v1279 = vpop.f32.mrb[0].mxu0
  %v1280 = vadd.f32 0.0, %v1279
  %v1281 = vpop.f32.mrb[0].mxu0
  %v1282 = vpop.f32.mrb[0].mxu0
  %v1283 = vadd.f32 0.0, %v1282
  %v1284 = vpop.f32.mrb[0].mxu0
  %1285 = vmatprep.mubr.bf16.mxu0 0
  %1286 = vmatmul.mubr.bf16.gmra.mrb[0].mxu0 %v1017
  %v1287 = vpop.f32.mrb[0].mxu0
  %v1288 = vadd.f32 0.0, %v1287
  %v1289 = vpop.f32.mrb[0].mxu0
  %v1290 = vpop.f32.mrb[0].mxu0
  %v1291 = vadd.f32 0.0, %v1290
  %v1292 = vpop.f32.mrb[0].mxu0
  %1293 = vmatprep.mubr.bf16.mxu0 0
  %1294 = vmatmul.mubr.bf16.gmra.mrb[0].mxu0 %v1020
  %v1295 = vpop.f32.mrb[0].mxu0
  %v1296 = vadd.f32 0.0, %v1295
  %v1297 = vpop.f32.mrb[0].mxu0
  %v1298 = vpop.f32.mrb[0].mxu0
  %v1299 = vadd.f32 0.0, %v1298
  %v1300 = vpop.f32.mrb[0].mxu0
  %1301 = vmatprep.mubr.bf16.mxu0 0
  %1302 = vmatmul.mubr.bf16.gmra.mrb[0].mxu0 %v1023
  %v1303 = vpop.f32.mrb[0].mxu0
  %v1304 = vadd.f32 0.0, %v1303
  %v1305 = vpop.f32.mrb[0].mxu0
  %v1306 = vpop.f32.mrb[0].mxu0
  %v1307 = vadd.f32 0.0, %v1306
  %v1308 = vpop.f32.mrb[0].mxu0
  %1309 = vmatprep.mubr.bf16.mxu0 0
  %1310 = vmatmul.mubr.bf16.gmra.mrb[0].mxu0 %v1026
  %v1311 = vpop.f32.mrb[0].mxu0
  %v1312 = vadd.f32 0.0, %v1311
  %v1313 = vpop.f32.mrb[0].mxu0
  %v1314 = vpop.f32.mrb[0].mxu0
  %v1315 = vadd.f32 0.0, %v1314
  %v1316 = vpop.f32.mrb[0].mxu0
  %1317 = vmatprep.mubr.bf16.mxu0 0
  %1318 = vmatmul.mubr.bf16.gmra.mrb[0].mxu0 %v1029
  %v1319 = vpop.f32.mrb[0].mxu0
  %v1320 = vadd.f32 0.0, %v1319
  %v1321 = vpop.f32.mrb[0].mxu0
  %v1322 = vpop.f32.mrb[0].mxu0
  %v1323 = vadd.f32 0.0, %v1322
  %v1324 = vpop.f32.mrb[0].mxu0
  %1325 = vmatprep.mubr.bf16.mxu0 0
  %1326 = vmatmul.mubr.bf16.gmra.mrb[0].mxu0 %v1032
  %v1327 = vpop.f32.mrb[0].mxu0
  %v1328 = vadd.f32 0.0, %v1327
  %v1329 = vpop.f32.mrb[0].mxu0
  %v1330 = vpop.f32.mrb[0].mxu0
  %v1331 = vadd.f32 0.0, %v1330
  %v1332 = vpop.f32.mrb[0].mxu0
  %1333 = vmatprep.mubr.bf16.mxu0 0
  %1334 = vmatmul.mubr.bf16.gmra.mrb[0].mxu0 %v1035
  %v1335 = vpop.f32.mrb[0].mxu0
  %v1336 = vadd.f32 0.0, %v1335
  %v1337 = vpop.f32.mrb[0].mxu0
  %v1338 = vpop.f32.mrb[0].mxu0
  %v1339 = vpop.f32.mrb[0].mxu0
  %1340 = vdwg.mxu0
  %v1341 = vmax.f32 %v430, %v1072
  %v1342 = vmax.f32 %v433, %v1075
  %v1343 = vmax.f32 %v438, %v1080
  %v1344 = vmax.f32 %v441, %v1083
  %v1345 = vmax.f32 %v446, %v1088
  %v1346 = vmax.f32 %v449, %v1091
  %v1347 = vmax.f32 %v454, %v1096
  %v1348 = vmax.f32 %v457, %v1099
  %v1349 = vmax.f32 %v462, %v1104
  %v1350 = vmax.f32 %v465, %v1107
  %v1351 = vmax.f32 %v470, %v1112
  %v1352 = vmax.f32 %v473, %v1115
  %v1353 = vmax.f32 %v478, %v1120
  %v1354 = vmax.f32 %v481, %v1123
  %v1355 = vmax.f32 %v486, %v1128
  %v1356 = vmax.f32 %v489, %v1131
  %v1357 = vmax.f32 %v494, %v1136
  %v1358 = vmax.f32 %v497, %v1139
  %v1359 = vmax.f32 %v502, %v1144
  %v1360 = vmax.f32 %v505, %v1147
  %v1361 = vmax.f32 %v510, %v1152
  %v1362 = vmax.f32 %v513, %v1155
  %v1363 = vmax.f32 %v518, %v1160
  %v1364 = vmax.f32 %v521, %v1163
  %v1365 = vmax.f32 %v526, %v1168
  %v1366 = vmax.f32 %v529, %v1171
  %v1367 = vmax.f32 %v534, %v1176
  %v1368 = vmax.f32 %v537, %v1179
  %v1369 = vmax.f32 %v542, %v1184
  %v1370 = vmax.f32 %v545, %v1187
  %v1371 = vmax.f32 %v550, %v1192
  %v1372 = vmax.f32 %v553, %v1195
  %v1373 = vmax.f32 %v558, %v1200
  %v1374 = vmax.f32 %v561, %v1203
  %v1375 = vmax.f32 %v566, %v1208
  %v1376 = vmax.f32 %v569, %v1211
  %v1377 = vmax.f32 %v574, %v1216
  %v1378 = vmax.f32 %v577, %v1219
  %v1379 = vmax.f32 %v582, %v1224
  %v1380 = vmax.f32 %v585, %v1227
  %v1381 = vmax.f32 %v590, %v1232
  %v1382 = vmax.f32 %v593, %v1235
  %v1383 = vmax.f32 %v598, %v1240
  %v1384 = vmax.f32 %v601, %v1243
  %v1385 = vmax.f32 %v606, %v1248
  %v1386 = vmax.f32 %v609, %v1251
  %v1387 = vmax.f32 %v614, %v1256
  %v1388 = vmax.f32 %v617, %v1259
  %v1389 = vmax.f32 %v622, %v1264
  %v1390 = vmax.f32 %v625, %v1267
  %v1391 = vmax.f32 %v630, %v1272
  %v1392 = vmax.f32 %v633, %v1275
  %v1393 = vmax.f32 %v638, %v1280
  %v1394 = vmax.f32 %v641, %v1283
  %v1395 = vmax.f32 %v646, %v1288
  %v1396 = vmax.f32 %v649, %v1291
  %v1397 = vmax.f32 %v654, %v1296
  %v1398 = vmax.f32 %v657, %v1299
  %v1399 = vmax.f32 %v662, %v1304
  %v1400 = vmax.f32 %v665, %v1307
  %v1401 = vmax.f32 %v670, %v1312
  %v1402 = vmax.f32 %v673, %v1315
  %v1403 = vmax.f32 %v678, %v1320
  %v1404 = vmax.f32 %v681, %v1323
  %v1405 = vmax.f32 %v686, %v1328
  %v1406 = vmax.f32 %v689, %v1331
  %v1407 = vmax.f32 %v694, %v1336
  %s1408 = scalar_lea.vmem %s0, 1072
  %v1409 = vld [vmem:[%s1408] sm:$0xf]
  %v1410 = vld [vmem:[%s1408 + $0x4] sm:$0xf]
  %v1411 = vld [vmem:[%s1408 + $0x8] sm:$0xf]
  %v1412 = vld [vmem:[%s1408 + $0xc] sm:$0xf]
  %v1413 = vld [vmem:[%s1408 + $0x10] sm:$0xf]
  %v1414 = vld [vmem:[%s1408 + $0x14] sm:$0xf]
  %v1415 = vld [vmem:[%s1408 + $0x18] sm:$0xf]
  %v1416 = vld [vmem:[%s1408 + $0x1c] sm:$0xf]
  %v1417 = vld [vmem:[%s1408 + $0x20] sm:$0xf]
  %v1418 = vld [vmem:[%s1408 + $0x24] sm:$0xf]
  %v1419 = vld [vmem:[%s1408 + $0x28] sm:$0xf]
  %v1420 = vld [vmem:[%s1408 + $0x2c] sm:$0xf]
  %v1421 = vld [vmem:[%s1408 + $0x30] sm:$0xf]
  %v1422 = vld [vmem:[%s1408 + $0x34] sm:$0xf]
  %v1423 = vld [vmem:[%s1408 + $0x38] sm:$0xf]
  %v1424 = vld [vmem:[%s1408 + $0x3c] sm:$0xf]
  %v1425 = vld [vmem:[%s1408 + $0x40] sm:$0xf]
  %v1426 = vld [vmem:[%s1408 + $0x44] sm:$0xf]
  %v1427 = vld [vmem:[%s1408 + $0x48] sm:$0xf]
  %v1428 = vld [vmem:[%s1408 + $0x4c] sm:$0xf]
  %v1429 = vld [vmem:[%s1408 + $0x50] sm:$0xf]
  %v1430 = vld [vmem:[%s1408 + $0x54] sm:$0xf]
  %v1431 = vld [vmem:[%s1408 + $0x58] sm:$0xf]
  %v1432 = vld [vmem:[%s1408 + $0x5c] sm:$0xf]
  %v1433 = vld [vmem:[%s1408 + $0x60] sm:$0xf]
  %v1434 = vld [vmem:[%s1408 + $0x64] sm:$0xf]
  %v1435 = vld [vmem:[%s1408 + $0x68] sm:$0xf]
  %v1436 = vld [vmem:[%s1408 + $0x6c] sm:$0xf]
  %v1437 = vld [vmem:[%s1408 + $0x70] sm:$0xf]
  %v1438 = vld [vmem:[%s1408 + $0x74] sm:$0xf]
  %v1439 = vld [vmem:[%s1408 + $0x78] sm:$0xf]
  %v1440 = vld [vmem:[%s1408 + $0x7c] sm:$0xf]
  %v1441 = vld [vmem:[%s1408 + $0x80] sm:$0xf]
  %v1442 = vld [vmem:[%s1408 + $0x84] sm:$0xf]
  %v1443 = vld [vmem:[%s1408 + $0x88] sm:$0xf]
  %v1444 = vld [vmem:[%s1408 + $0x8c] sm:$0xf]
  %v1445 = vld [vmem:[%s1408 + $0x90] sm:$0xf]
  %v1446 = vld [vmem:[%s1408 + $0x94] sm:$0xf]
  %v1447 = vld [vmem:[%s1408 + $0x98] sm:$0xf]
  %v1448 = vld [vmem:[%s1408 + $0x9c] sm:$0xf]
  %v1449 = vld [vmem:[%s1408 + $0xa0] sm:$0xf]
  %v1450 = vld [vmem:[%s1408 + $0xa4] sm:$0xf]
  %v1451 = vld [vmem:[%s1408 + $0xa8] sm:$0xf]
  %v1452 = vld [vmem:[%s1408 + $0xac] sm:$0xf]
  %v1453 = vld [vmem:[%s1408 + $0xb0] sm:$0xf]
  %v1454 = vld [vmem:[%s1408 + $0xb4] sm:$0xf]
  %v1455 = vld [vmem:[%s1408 + $0xb8] sm:$0xf]
  %v1456 = vld [vmem:[%s1408 + $0xbc] sm:$0xf]
  %v1457 = vld [vmem:[%s1408 + $0xc0] sm:$0xf]
  %v1458 = vld [vmem:[%s1408 + $0xc4] sm:$0xf]
  %v1459 = vld [vmem:[%s1408 + $0xc8] sm:$0xf]
  %v1460 = vld [vmem:[%s1408 + $0xcc] sm:$0xf]
  %v1461 = vld [vmem:[%s1408 + $0xd0] sm:$0xf]
  %v1462 = vld [vmem:[%s1408 + $0xd4] sm:$0xf]
  %v1463 = vld [vmem:[%s1408 + $0xd8] sm:$0xf]
  %v1464 = vld [vmem:[%s1408 + $0xdc] sm:$0xf]
  %v1465 = vld [vmem:[%s1408 + $0xe0] sm:$0xf]
  %v1466 = vld [vmem:[%s1408 + $0xe4] sm:$0xf]
  %v1467 = vld [vmem:[%s1408 + $0xe8] sm:$0xf]
  %v1468 = vld [vmem:[%s1408 + $0xec] sm:$0xf]
  %v1469 = vld [vmem:[%s1408 + $0xf0] sm:$0xf]
  %v1470 = vld [vmem:[%s1408 + $0xf4] sm:$0xf]
  %v1471 = vld [vmem:[%s1408 + $0xf8] sm:$0xf]
  %v1472 = vld [vmem:[%s1408 + $0xfc] sm:$0xf]
  %v1473 = vld [vmem:[%s1408 + $0x100] sm:$0xf]
  %v1474 = vld [vmem:[%s1408 + $0x104] sm:$0xf]
  %v1475 = vld [vmem:[%s1408 + $0x108] sm:$0x1]
  %v1543 = vunpack.c.l.b16 %v1409
  %v1544 = vunpack.c.l.b16 %v1410
  %v1545 = vunpack.c.l.b16 %v1411
  %v1546 = vunpack.c.l.b16 %v1412
  %v1547 = vunpack.c.l.b16 %v1413
  %v1548 = vunpack.c.l.b16 %v1414
  %v1549 = vunpack.c.l.b16 %v1415
  %v1550 = vunpack.c.l.b16 %v1416
  %v1551 = vunpack.c.l.b16 %v1417
  %v1552 = vunpack.c.l.b16 %v1418
  %v1553 = vunpack.c.l.b16 %v1419
  %v1554 = vunpack.c.l.b16 %v1420
  %v1555 = vunpack.c.l.b16 %v1421
  %v1556 = vunpack.c.l.b16 %v1422
  %v1557 = vunpack.c.l.b16 %v1423
  %v1558 = vunpack.c.l.b16 %v1424
  %v1559 = vunpack.c.l.b16 %v1425
  %v1560 = vunpack.c.l.b16 %v1426
  %v1561 = vunpack.c.l.b16 %v1427
  %v1562 = vunpack.c.l.b16 %v1428
  %v1563 = vunpack.c.l.b16 %v1429
  %v1564 = vunpack.c.l.b16 %v1430
  %v1565 = vunpack.c.l.b16 %v1431
  %v1566 = vunpack.c.l.b16 %v1432
  %v1567 = vunpack.c.l.b16 %v1433
  %v1568 = vunpack.c.l.b16 %v1434
  %v1569 = vunpack.c.l.b16 %v1435
  %v1570 = vunpack.c.l.b16 %v1436
  %v1571 = vunpack.c.l.b16 %v1437
  %v1572 = vunpack.c.l.b16 %v1438
  %v1573 = vunpack.c.l.b16 %v1439
  %v1574 = vunpack.c.l.b16 %v1440
  %v1575 = vunpack.c.l.b16 %v1441
  %v1576 = vunpack.c.l.b16 %v1442
  %v1577 = vunpack.c.l.b16 %v1443
  %v1578 = vunpack.c.l.b16 %v1444
  %v1579 = vunpack.c.l.b16 %v1445
  %v1580 = vunpack.c.l.b16 %v1446
  %v1581 = vunpack.c.l.b16 %v1447
  %v1582 = vunpack.c.l.b16 %v1448
  %v1583 = vunpack.c.l.b16 %v1449
  %v1584 = vunpack.c.l.b16 %v1450
  %v1585 = vunpack.c.l.b16 %v1451
  %v1586 = vunpack.c.l.b16 %v1452
  %v1587 = vunpack.c.l.b16 %v1453
  %v1588 = vunpack.c.l.b16 %v1454
  %v1589 = vunpack.c.l.b16 %v1455
  %v1590 = vunpack.c.l.b16 %v1456
  %v1591 = vunpack.c.l.b16 %v1457
  %v1592 = vunpack.c.l.b16 %v1458
  %v1593 = vunpack.c.l.b16 %v1459
  %v1594 = vunpack.c.l.b16 %v1460
  %v1595 = vunpack.c.l.b16 %v1461
  %v1596 = vunpack.c.l.b16 %v1462
  %v1597 = vunpack.c.l.b16 %v1463
  %v1598 = vunpack.c.l.b16 %v1464
  %v1599 = vunpack.c.l.b16 %v1465
  %v1600 = vunpack.c.l.b16 %v1466
  %v1601 = vunpack.c.l.b16 %v1467
  %v1602 = vunpack.c.l.b16 %v1468
  %v1603 = vunpack.c.l.b16 %v1469
  %v1604 = vunpack.c.l.b16 %v1470
  %v1605 = vunpack.c.l.b16 %v1471
  %v1606 = vunpack.c.l.b16 %v1472
  %v1607 = vunpack.c.l.b16 %v1473
  %v1608 = vunpack.c.l.b16 %v1474
  %v1609 = vunpack.c.l.b16 %v1475
  %v1610 = vpack.c.b16 %v1544, %v1543
  %v1611 = vpack.c.b16 %v1546, %v1545
  %v1612 = vpack.c.b16 %v1548, %v1547
  %v1613 = vpack.c.b16 %v1550, %v1549
  %v1614 = vpack.c.b16 %v1552, %v1551
  %v1615 = vpack.c.b16 %v1554, %v1553
  %v1616 = vpack.c.b16 %v1556, %v1555
  %v1617 = vpack.c.b16 %v1558, %v1557
  %v1618 = vpack.c.b16 %v1560, %v1559
  %v1619 = vpack.c.b16 %v1562, %v1561
  %v1620 = vpack.c.b16 %v1564, %v1563
  %v1621 = vpack.c.b16 %v1566, %v1565
  %v1622 = vpack.c.b16 %v1568, %v1567
  %v1623 = vpack.c.b16 %v1570, %v1569
  %v1624 = vpack.c.b16 %v1572, %v1571
  %v1625 = vpack.c.b16 %v1574, %v1573
  %v1626 = vpack.c.b16 %v1576, %v1575
  %v1627 = vpack.c.b16 %v1578, %v1577
  %v1628 = vpack.c.b16 %v1580, %v1579
  %v1629 = vpack.c.b16 %v1582, %v1581
  %v1630 = vpack.c.b16 %v1584, %v1583
  %v1631 = vpack.c.b16 %v1586, %v1585
  %v1632 = vpack.c.b16 %v1588, %v1587
  %v1633 = vpack.c.b16 %v1590, %v1589
  %v1634 = vpack.c.b16 %v1592, %v1591
  %v1635 = vpack.c.b16 %v1594, %v1593
  %v1636 = vpack.c.b16 %v1596, %v1595
  %v1637 = vpack.c.b16 %v1598, %v1597
  %v1638 = vpack.c.b16 %v1600, %v1599
  %v1639 = vpack.c.b16 %v1602, %v1601
  %v1640 = vpack.c.b16 %v1604, %v1603
  %v1641 = vpack.c.b16 %v1606, %v1605
  %v1642 = vpack.c.b16 %v1608, %v1607
  %v1643 = vpack.c.b16 %v1609, %v1609
  %v1645 = vsel %vm285, %v1610, 0
  %v1648 = vsel %vm285, %v1611, 0
  %v1651 = vsel %vm285, %v1612, 0
  %v1654 = vsel %vm285, %v1613, 0
  %v1657 = vsel %vm285, %v1614, 0
  %v1660 = vsel %vm285, %v1615, 0
  %v1663 = vsel %vm285, %v1616, 0
  %v1666 = vsel %vm285, %v1617, 0
  %v1669 = vsel %vm285, %v1618, 0
  %v1672 = vsel %vm285, %v1619, 0
  %v1675 = vsel %vm285, %v1620, 0
  %v1678 = vsel %vm285, %v1621, 0
  %v1681 = vsel %vm285, %v1622, 0
  %v1684 = vsel %vm285, %v1623, 0
  %v1687 = vsel %vm285, %v1624, 0
  %v1690 = vsel %vm285, %v1625, 0
  %v1693 = vsel %vm285, %v1626, 0
  %v1696 = vsel %vm285, %v1627, 0
  %v1699 = vsel %vm285, %v1628, 0
  %v1702 = vsel %vm285, %v1629, 0
  %v1705 = vsel %vm285, %v1630, 0
  %v1708 = vsel %vm285, %v1631, 0
  %v1711 = vsel %vm285, %v1632, 0
  %v1714 = vsel %vm285, %v1633, 0
  %v1717 = vsel %vm285, %v1634, 0
  %v1720 = vsel %vm285, %v1635, 0
  %v1723 = vsel %vm285, %v1636, 0
  %v1726 = vsel %vm285, %v1637, 0
  %v1729 = vsel %vm285, %v1638, 0
  %v1732 = vsel %vm285, %v1639, 0
  %v1735 = vsel %vm285, %v1640, 0
  %v1738 = vsel %vm285, %v1641, 0
  %v1741 = vsel %vm285, %v1642, 0
  %v1744 = vsel %vm285, %v1643, 0
  %1746 = vmatprep.subr.bf16.mxu0 0
  %1747 = vmatpush1.bf16.msra.mxu0 %v282
  %1748 = vmatprep.subr.bf16.mxu0 0
  %1749 = vmatpush1.bf16.msra.mxu0 %v393
  %1750 = vmatprep.subr.bf16.mxu0 0
  %1751 = vmatpush1.bf16.msra.mxu0 0
  %1752 = vmatprep.subr.bf16.mxu0 0
  %1753 = vmatpush1.bf16.msra.mxu0 0
  %1754 = vmatprep.subr.bf16.mxu0 0
  %1755 = vmatpush1.bf16.msra.mxu0 0
  %1756 = vmatprep.subr.bf16.mxu0 0
  %1757 = vmatpush1.bf16.msra.mxu0 0
  %1758 = vmatprep.subr.bf16.mxu0 0
  %1759 = vmatpush1.bf16.msra.mxu0 0
  %1760 = vmatprep.subr.bf16.mxu0 0
  %1761 = vmatpush1.bf16.msra.mxu0 0
  %1762 = vmatprep.subr.bf16.mxu0 0
  %1763 = vmatpush1.bf16.msra.mxu0 0
  %1764 = vmatprep.subr.bf16.mxu0 0
  %1765 = vmatpush1.bf16.msra.mxu0 0
  %1766 = vmatprep.subr.bf16.mxu0 0
  %1767 = vmatpush1.bf16.msra.mxu0 0
  %1768 = vmatprep.subr.bf16.mxu0 0
  %1769 = vmatpush1.bf16.msra.mxu0 0
  %1770 = vmatprep.subr.bf16.mxu0 0
  %1771 = vmatpush1.bf16.msra.mxu0 0
  %1772 = vmatprep.subr.bf16.mxu0 0
  %1773 = vmatpush1.bf16.msra.mxu0 0
  %1774 = vmatprep.subr.bf16.mxu0 0
  %1775 = vmatpush1.bf16.msra.mxu0 0
  %1776 = vmatprep.subr.bf16.mxu0 0
  %1777 = vmatpush1.bf16.msra.mxu0 0
  %1778 = vmatprep.mubr.bf16.mxu0 0
  %1779 = vmatmul.mubr.bf16.gmra.mrb[0].mxu0 %v1645
  %v1780 = vpop.f32.mrb[0].mxu0
  %v1781 = vadd.f32 0.0, %v1780
  %v1782 = vpop.f32.mrb[0].mxu0
  %v1783 = vpop.f32.mrb[0].mxu0
  %v1784 = vadd.f32 0.0, %v1783
  %v1785 = vpop.f32.mrb[0].mxu0
  %1786 = vmatprep.mubr.bf16.mxu0 0
  %1787 = vmatmul.mubr.bf16.gmra.mrb[0].mxu0 %v1648
  %v1788 = vpop.f32.mrb[0].mxu0
  %v1789 = vadd.f32 0.0, %v1788
  %v1790 = vpop.f32.mrb[0].mxu0
  %v1791 = vpop.f32.mrb[0].mxu0
  %v1792 = vadd.f32 0.0, %v1791
  %v1793 = vpop.f32.mrb[0].mxu0
  %1794 = vmatprep.mubr.bf16.mxu0 0
  %1795 = vmatmul.mubr.bf16.gmra.mrb[0].mxu0 %v1651
  %v1796 = vpop.f32.mrb[0].mxu0
  %v1797 = vadd.f32 0.0, %v1796
  %v1798 = vpop.f32.mrb[0].mxu0
  %v1799 = vpop.f32.mrb[0].mxu0
  %v1800 = vadd.f32 0.0, %v1799
  %v1801 = vpop.f32.mrb[0].mxu0
  %1802 = vmatprep.mubr.bf16.mxu0 0
  %1803 = vmatmul.mubr.bf16.gmra.mrb[0].mxu0 %v1654
  %v1804 = vpop.f32.mrb[0].mxu0
  %v1805 = vadd.f32 0.0, %v1804
  %v1806 = vpop.f32.mrb[0].mxu0
  %v1807 = vpop.f32.mrb[0].mxu0
  %v1808 = vadd.f32 0.0, %v1807
  %v1809 = vpop.f32.mrb[0].mxu0
  %1810 = vmatprep.mubr.bf16.mxu0 0
  %1811 = vmatmul.mubr.bf16.gmra.mrb[0].mxu0 %v1657
  %v1812 = vpop.f32.mrb[0].mxu0
  %v1813 = vadd.f32 0.0, %v1812
  %v1814 = vpop.f32.mrb[0].mxu0
  %v1815 = vpop.f32.mrb[0].mxu0
  %v1816 = vadd.f32 0.0, %v1815
  %v1817 = vpop.f32.mrb[0].mxu0
  %1818 = vmatprep.mubr.bf16.mxu0 0
  %1819 = vmatmul.mubr.bf16.gmra.mrb[0].mxu0 %v1660
  %v1820 = vpop.f32.mrb[0].mxu0
  %v1821 = vadd.f32 0.0, %v1820
  %v1822 = vpop.f32.mrb[0].mxu0
  %v1823 = vpop.f32.mrb[0].mxu0
  %v1824 = vadd.f32 0.0, %v1823
  %v1825 = vpop.f32.mrb[0].mxu0
  %1826 = vmatprep.mubr.bf16.mxu0 0
  %1827 = vmatmul.mubr.bf16.gmra.mrb[0].mxu0 %v1663
  %v1828 = vpop.f32.mrb[0].mxu0
  %v1829 = vadd.f32 0.0, %v1828
  %v1830 = vpop.f32.mrb[0].mxu0
  %v1831 = vpop.f32.mrb[0].mxu0
  %v1832 = vadd.f32 0.0, %v1831
  %v1833 = vpop.f32.mrb[0].mxu0
  %1834 = vmatprep.mubr.bf16.mxu0 0
  %1835 = vmatmul.mubr.bf16.gmra.mrb[0].mxu0 %v1666
  %v1836 = vpop.f32.mrb[0].mxu0
  %v1837 = vadd.f32 0.0, %v1836
  %v1838 = vpop.f32.mrb[0].mxu0
  %v1839 = vpop.f32.mrb[0].mxu0
  %v1840 = vadd.f32 0.0, %v1839
  %v1841 = vpop.f32.mrb[0].mxu0
  %1842 = vmatprep.mubr.bf16.mxu0 0
  %1843 = vmatmul.mubr.bf16.gmra.mrb[0].mxu0 %v1669
  %v1844 = vpop.f32.mrb[0].mxu0
  %v1845 = vadd.f32 0.0, %v1844
  %v1846 = vpop.f32.mrb[0].mxu0
  %v1847 = vpop.f32.mrb[0].mxu0
  %v1848 = vadd.f32 0.0, %v1847
  %v1849 = vpop.f32.mrb[0].mxu0
  %1850 = vmatprep.mubr.bf16.mxu0 0
  %1851 = vmatmul.mubr.bf16.gmra.mrb[0].mxu0 %v1672
  %v1852 = vpop.f32.mrb[0].mxu0
  %v1853 = vadd.f32 0.0, %v1852
  %v1854 = vpop.f32.mrb[0].mxu0
  %v1855 = vpop.f32.mrb[0].mxu0
  %v1856 = vadd.f32 0.0, %v1855
  %v1857 = vpop.f32.mrb[0].mxu0
  %1858 = vmatprep.mubr.bf16.mxu0 0
  %1859 = vmatmul.mubr.bf16.gmra.mrb[0].mxu0 %v1675
  %v1860 = vpop.f32.mrb[0].mxu0
  %v1861 = vadd.f32 0.0, %v1860
  %v1862 = vpop.f32.mrb[0].mxu0
  %v1863 = vpop.f32.mrb[0].mxu0
  %v1864 = vadd.f32 0.0, %v1863
  %v1865 = vpop.f32.mrb[0].mxu0
  %1866 = vmatprep.mubr.bf16.mxu0 0
  %1867 = vmatmul.mubr.bf16.gmra.mrb[0].mxu0 %v1678
  %v1868 = vpop.f32.mrb[0].mxu0
  %v1869 = vadd.f32 0.0, %v1868
  %v1870 = vpop.f32.mrb[0].mxu0
  %v1871 = vpop.f32.mrb[0].mxu0
  %v1872 = vadd.f32 0.0, %v1871
  %v1873 = vpop.f32.mrb[0].mxu0
  %1874 = vmatprep.mubr.bf16.mxu0 0
  %1875 = vmatmul.mubr.bf16.gmra.mrb[0].mxu0 %v1681
  %v1876 = vpop.f32.mrb[0].mxu0
  %v1877 = vadd.f32 0.0, %v1876
  %v1878 = vpop.f32.mrb[0].mxu0
  %v1879 = vpop.f32.mrb[0].mxu0
  %v1880 = vadd.f32 0.0, %v1879
  %v1881 = vpop.f32.mrb[0].mxu0
  %1882 = vmatprep.mubr.bf16.mxu0 0
  %1883 = vmatmul.mubr.bf16.gmra.mrb[0].mxu0 %v1684
  %v1884 = vpop.f32.mrb[0].mxu0
  %v1885 = vadd.f32 0.0, %v1884
  %v1886 = vpop.f32.mrb[0].mxu0
  %v1887 = vpop.f32.mrb[0].mxu0
  %v1888 = vadd.f32 0.0, %v1887
  %v1889 = vpop.f32.mrb[0].mxu0
  %1890 = vmatprep.mubr.bf16.mxu0 0
  %1891 = vmatmul.mubr.bf16.gmra.mrb[0].mxu0 %v1687
  %v1892 = vpop.f32.mrb[0].mxu0
  %v1893 = vadd.f32 0.0, %v1892
  %v1894 = vpop.f32.mrb[0].mxu0
  %v1895 = vpop.f32.mrb[0].mxu0
  %v1896 = vadd.f32 0.0, %v1895
  %v1897 = vpop.f32.mrb[0].mxu0
  %1898 = vmatprep.mubr.bf16.mxu0 0
  %1899 = vmatmul.mubr.bf16.gmra.mrb[0].mxu0 %v1690
  %v1900 = vpop.f32.mrb[0].mxu0
  %v1901 = vadd.f32 0.0, %v1900
  %v1902 = vpop.f32.mrb[0].mxu0
  %v1903 = vpop.f32.mrb[0].mxu0
  %v1904 = vadd.f32 0.0, %v1903
  %v1905 = vpop.f32.mrb[0].mxu0
  %1906 = vmatprep.mubr.bf16.mxu0 0
  %1907 = vmatmul.mubr.bf16.gmra.mrb[0].mxu0 %v1693
  %v1908 = vpop.f32.mrb[0].mxu0
  %v1909 = vadd.f32 0.0, %v1908
  %v1910 = vpop.f32.mrb[0].mxu0
  %v1911 = vpop.f32.mrb[0].mxu0
  %v1912 = vadd.f32 0.0, %v1911
  %v1913 = vpop.f32.mrb[0].mxu0
  %1914 = vmatprep.mubr.bf16.mxu0 0
  %1915 = vmatmul.mubr.bf16.gmra.mrb[0].mxu0 %v1696
  %v1916 = vpop.f32.mrb[0].mxu0
  %v1917 = vadd.f32 0.0, %v1916
  %v1918 = vpop.f32.mrb[0].mxu0
  %v1919 = vpop.f32.mrb[0].mxu0
  %v1920 = vadd.f32 0.0, %v1919
  %v1921 = vpop.f32.mrb[0].mxu0
  %1922 = vmatprep.mubr.bf16.mxu0 0
  %1923 = vmatmul.mubr.bf16.gmra.mrb[0].mxu0 %v1699
  %v1924 = vpop.f32.mrb[0].mxu0
  %v1925 = vadd.f32 0.0, %v1924
  %v1926 = vpop.f32.mrb[0].mxu0
  %v1927 = vpop.f32.mrb[0].mxu0
  %v1928 = vadd.f32 0.0, %v1927
  %v1929 = vpop.f32.mrb[0].mxu0
  %1930 = vmatprep.mubr.bf16.mxu0 0
  %1931 = vmatmul.mubr.bf16.gmra.mrb[0].mxu0 %v1702
  %v1932 = vpop.f32.mrb[0].mxu0
  %v1933 = vadd.f32 0.0, %v1932
  %v1934 = vpop.f32.mrb[0].mxu0
  %v1935 = vpop.f32.mrb[0].mxu0
  %v1936 = vadd.f32 0.0, %v1935
  %v1937 = vpop.f32.mrb[0].mxu0
  %1938 = vmatprep.mubr.bf16.mxu0 0
  %1939 = vmatmul.mubr.bf16.gmra.mrb[0].mxu0 %v1705
  %v1940 = vpop.f32.mrb[0].mxu0
  %v1941 = vadd.f32 0.0, %v1940
  %v1942 = vpop.f32.mrb[0].mxu0
  %v1943 = vpop.f32.mrb[0].mxu0
  %v1944 = vadd.f32 0.0, %v1943
  %v1945 = vpop.f32.mrb[0].mxu0
  %1946 = vmatprep.mubr.bf16.mxu0 0
  %1947 = vmatmul.mubr.bf16.gmra.mrb[0].mxu0 %v1708
  %v1948 = vpop.f32.mrb[0].mxu0
  %v1949 = vadd.f32 0.0, %v1948
  %v1950 = vpop.f32.mrb[0].mxu0
  %v1951 = vpop.f32.mrb[0].mxu0
  %v1952 = vadd.f32 0.0, %v1951
  %v1953 = vpop.f32.mrb[0].mxu0
  %1954 = vmatprep.mubr.bf16.mxu0 0
  %1955 = vmatmul.mubr.bf16.gmra.mrb[0].mxu0 %v1711
  %v1956 = vpop.f32.mrb[0].mxu0
  %v1957 = vadd.f32 0.0, %v1956
  %v1958 = vpop.f32.mrb[0].mxu0
  %v1959 = vpop.f32.mrb[0].mxu0
  %v1960 = vadd.f32 0.0, %v1959
  %v1961 = vpop.f32.mrb[0].mxu0
  %1962 = vmatprep.mubr.bf16.mxu0 0
  %1963 = vmatmul.mubr.bf16.gmra.mrb[0].mxu0 %v1714
  %v1964 = vpop.f32.mrb[0].mxu0
  %v1965 = vadd.f32 0.0, %v1964
  %v1966 = vpop.f32.mrb[0].mxu0
  %v1967 = vpop.f32.mrb[0].mxu0
  %v1968 = vadd.f32 0.0, %v1967
  %v1969 = vpop.f32.mrb[0].mxu0
  %1970 = vmatprep.mubr.bf16.mxu0 0
  %1971 = vmatmul.mubr.bf16.gmra.mrb[0].mxu0 %v1717
  %v1972 = vpop.f32.mrb[0].mxu0
  %v1973 = vadd.f32 0.0, %v1972
  %v1974 = vpop.f32.mrb[0].mxu0
  %v1975 = vpop.f32.mrb[0].mxu0
  %v1976 = vadd.f32 0.0, %v1975
  %v1977 = vpop.f32.mrb[0].mxu0
  %1978 = vmatprep.mubr.bf16.mxu0 0
  %1979 = vmatmul.mubr.bf16.gmra.mrb[0].mxu0 %v1720
  %v1980 = vpop.f32.mrb[0].mxu0
  %v1981 = vadd.f32 0.0, %v1980
  %v1982 = vpop.f32.mrb[0].mxu0
  %v1983 = vpop.f32.mrb[0].mxu0
  %v1984 = vadd.f32 0.0, %v1983
  %v1985 = vpop.f32.mrb[0].mxu0
  %1986 = vmatprep.mubr.bf16.mxu0 0
  %1987 = vmatmul.mubr.bf16.gmra.mrb[0].mxu0 %v1723
  %v1988 = vpop.f32.mrb[0].mxu0
  %v1989 = vadd.f32 0.0, %v1988
  %v1990 = vpop.f32.mrb[0].mxu0
  %v1991 = vpop.f32.mrb[0].mxu0
  %v1992 = vadd.f32 0.0, %v1991
  %v1993 = vpop.f32.mrb[0].mxu0
  %1994 = vmatprep.mubr.bf16.mxu0 0
  %1995 = vmatmul.mubr.bf16.gmra.mrb[0].mxu0 %v1726
  %v1996 = vpop.f32.mrb[0].mxu0
  %v1997 = vadd.f32 0.0, %v1996
  %v1998 = vpop.f32.mrb[0].mxu0
  %v1999 = vpop.f32.mrb[0].mxu0
  %v2000 = vadd.f32 0.0, %v1999
  %v2001 = vpop.f32.mrb[0].mxu0
  %2002 = vmatprep.mubr.bf16.mxu0 0
  %2003 = vmatmul.mubr.bf16.gmra.mrb[0].mxu0 %v1729
  %v2004 = vpop.f32.mrb[0].mxu0
  %v2005 = vadd.f32 0.0, %v2004
  %v2006 = vpop.f32.mrb[0].mxu0
  %v2007 = vpop.f32.mrb[0].mxu0
  %v2008 = vadd.f32 0.0, %v2007
  %v2009 = vpop.f32.mrb[0].mxu0
  %2010 = vmatprep.mubr.bf16.mxu0 0
  %2011 = vmatmul.mubr.bf16.gmra.mrb[0].mxu0 %v1732
  %v2012 = vpop.f32.mrb[0].mxu0
  %v2013 = vadd.f32 0.0, %v2012
  %v2014 = vpop.f32.mrb[0].mxu0
  %v2015 = vpop.f32.mrb[0].mxu0
  %v2016 = vadd.f32 0.0, %v2015
  %v2017 = vpop.f32.mrb[0].mxu0
  %2018 = vmatprep.mubr.bf16.mxu0 0
  %2019 = vmatmul.mubr.bf16.gmra.mrb[0].mxu0 %v1735
  %v2020 = vpop.f32.mrb[0].mxu0
  %v2021 = vadd.f32 0.0, %v2020
  %v2022 = vpop.f32.mrb[0].mxu0
  %v2023 = vpop.f32.mrb[0].mxu0
  %v2024 = vadd.f32 0.0, %v2023
  %v2025 = vpop.f32.mrb[0].mxu0
  %2026 = vmatprep.mubr.bf16.mxu0 0
  %2027 = vmatmul.mubr.bf16.gmra.mrb[0].mxu0 %v1738
  %v2028 = vpop.f32.mrb[0].mxu0
  %v2029 = vadd.f32 0.0, %v2028
  %v2030 = vpop.f32.mrb[0].mxu0
  %v2031 = vpop.f32.mrb[0].mxu0
  %v2032 = vadd.f32 0.0, %v2031
  %v2033 = vpop.f32.mrb[0].mxu0
  %2034 = vmatprep.mubr.bf16.mxu0 0
  %2035 = vmatmul.mubr.bf16.gmra.mrb[0].mxu0 %v1741
  %v2036 = vpop.f32.mrb[0].mxu0
  %v2037 = vadd.f32 0.0, %v2036
  %v2038 = vpop.f32.mrb[0].mxu0
  %v2039 = vpop.f32.mrb[0].mxu0
  %v2040 = vadd.f32 0.0, %v2039
  %v2041 = vpop.f32.mrb[0].mxu0
  %2042 = vmatprep.mubr.bf16.mxu0 0
  %2043 = vmatmul.mubr.bf16.gmra.mrb[0].mxu0 %v1744
  %v2044 = vpop.f32.mrb[0].mxu0
  %v2045 = vadd.f32 0.0, %v2044
  %v2046 = vpop.f32.mrb[0].mxu0
  %v2047 = vpop.f32.mrb[0].mxu0
  %v2048 = vpop.f32.mrb[0].mxu0
  %2049 = vdwg.mxu0
  %v2050 = vmax.f32 %v1341, %v1781
  %v2051 = vmax.f32 %v1342, %v1784
  %v2052 = vmax.f32 %v1343, %v1789
  %v2053 = vmax.f32 %v1344, %v1792
  %v2054 = vmax.f32 %v1345, %v1797
  %v2055 = vmax.f32 %v1346, %v1800
  %v2056 = vmax.f32 %v1347, %v1805
  %v2057 = vmax.f32 %v1348, %v1808
  %v2058 = vmax.f32 %v1349, %v1813
  %v2059 = vmax.f32 %v1350, %v1816
  %v2060 = vmax.f32 %v1351, %v1821
  %v2061 = vmax.f32 %v1352, %v1824
  %v2062 = vmax.f32 %v1353, %v1829
  %v2063 = vmax.f32 %v1354, %v1832
  %v2064 = vmax.f32 %v1355, %v1837
  %v2065 = vmax.f32 %v1356, %v1840
  %v2066 = vmax.f32 %v1357, %v1845
  %v2067 = vmax.f32 %v1358, %v1848
  %v2068 = vmax.f32 %v1359, %v1853
  %v2069 = vmax.f32 %v1360, %v1856
  %v2070 = vmax.f32 %v1361, %v1861
  %v2071 = vmax.f32 %v1362, %v1864
  %v2072 = vmax.f32 %v1363, %v1869
  %v2073 = vmax.f32 %v1364, %v1872
  %v2074 = vmax.f32 %v1365, %v1877
  %v2075 = vmax.f32 %v1366, %v1880
  %v2076 = vmax.f32 %v1367, %v1885
  %v2077 = vmax.f32 %v1368, %v1888
  %v2078 = vmax.f32 %v1369, %v1893
  %v2079 = vmax.f32 %v1370, %v1896
  %v2080 = vmax.f32 %v1371, %v1901
  %v2081 = vmax.f32 %v1372, %v1904
  %v2082 = vmax.f32 %v1373, %v1909
  %v2083 = vmax.f32 %v1374, %v1912
  %v2084 = vmax.f32 %v1375, %v1917
  %v2085 = vmax.f32 %v1376, %v1920
  %v2086 = vmax.f32 %v1377, %v1925
  %v2087 = vmax.f32 %v1378, %v1928
  %v2088 = vmax.f32 %v1379, %v1933
  %v2089 = vmax.f32 %v1380, %v1936
  %v2090 = vmax.f32 %v1381, %v1941
  %v2091 = vmax.f32 %v1382, %v1944
  %v2092 = vmax.f32 %v1383, %v1949
  %v2093 = vmax.f32 %v1384, %v1952
  %v2094 = vmax.f32 %v1385, %v1957
  %v2095 = vmax.f32 %v1386, %v1960
  %v2096 = vmax.f32 %v1387, %v1965
  %v2097 = vmax.f32 %v1388, %v1968
  %v2098 = vmax.f32 %v1389, %v1973
  %v2099 = vmax.f32 %v1390, %v1976
  %v2100 = vmax.f32 %v1391, %v1981
  %v2101 = vmax.f32 %v1392, %v1984
  %v2102 = vmax.f32 %v1393, %v1989
  %v2103 = vmax.f32 %v1394, %v1992
  %v2104 = vmax.f32 %v1395, %v1997
  %v2105 = vmax.f32 %v1396, %v2000
  %v2106 = vmax.f32 %v1397, %v2005
  %v2107 = vmax.f32 %v1398, %v2008
  %v2108 = vmax.f32 %v1399, %v2013
  %v2109 = vmax.f32 %v1400, %v2016
  %v2110 = vmax.f32 %v1401, %v2021
  %v2111 = vmax.f32 %v1402, %v2024
  %v2112 = vmax.f32 %v1403, %v2029
  %v2113 = vmax.f32 %v1404, %v2032
  %v2114 = vmax.f32 %v1405, %v2037
  %v2115 = vmax.f32 %v1406, %v2040
  %v2116 = vmax.f32 %v1407, %v2045
  %s2117 = scalar_lea.vmem %s0, 1608
  %v2118 = vld [vmem:[%s2117] sm:$0xf]
  %v2119 = vld [vmem:[%s2117 + $0x4] sm:$0xf]
  %v2120 = vld [vmem:[%s2117 + $0x8] sm:$0xf]
  %v2121 = vld [vmem:[%s2117 + $0xc] sm:$0xf]
  %v2122 = vld [vmem:[%s2117 + $0x10] sm:$0xf]
  %v2123 = vld [vmem:[%s2117 + $0x14] sm:$0xf]
  %v2124 = vld [vmem:[%s2117 + $0x18] sm:$0xf]
  %v2125 = vld [vmem:[%s2117 + $0x1c] sm:$0xf]
  %v2126 = vld [vmem:[%s2117 + $0x20] sm:$0xf]
  %v2127 = vld [vmem:[%s2117 + $0x24] sm:$0xf]
  %v2128 = vld [vmem:[%s2117 + $0x28] sm:$0xf]
  %v2129 = vld [vmem:[%s2117 + $0x2c] sm:$0xf]
  %v2130 = vld [vmem:[%s2117 + $0x30] sm:$0xf]
  %v2131 = vld [vmem:[%s2117 + $0x34] sm:$0xf]
  %v2132 = vld [vmem:[%s2117 + $0x38] sm:$0xf]
  %v2133 = vld [vmem:[%s2117 + $0x3c] sm:$0xf]
  %v2134 = vld [vmem:[%s2117 + $0x40] sm:$0xf]
  %v2135 = vld [vmem:[%s2117 + $0x44] sm:$0xf]
  %v2136 = vld [vmem:[%s2117 + $0x48] sm:$0xf]
  %v2137 = vld [vmem:[%s2117 + $0x4c] sm:$0xf]
  %v2138 = vld [vmem:[%s2117 + $0x50] sm:$0xf]
  %v2139 = vld [vmem:[%s2117 + $0x54] sm:$0xf]
  %v2140 = vld [vmem:[%s2117 + $0x58] sm:$0xf]
  %v2141 = vld [vmem:[%s2117 + $0x5c] sm:$0xf]
  %v2142 = vld [vmem:[%s2117 + $0x60] sm:$0xf]
  %v2143 = vld [vmem:[%s2117 + $0x64] sm:$0xf]
  %v2144 = vld [vmem:[%s2117 + $0x68] sm:$0xf]
  %v2145 = vld [vmem:[%s2117 + $0x6c] sm:$0xf]
  %v2146 = vld [vmem:[%s2117 + $0x70] sm:$0xf]
  %v2147 = vld [vmem:[%s2117 + $0x74] sm:$0xf]
  %v2148 = vld [vmem:[%s2117 + $0x78] sm:$0xf]
  %v2149 = vld [vmem:[%s2117 + $0x7c] sm:$0xf]
  %v2150 = vld [vmem:[%s2117 + $0x80] sm:$0xf]
  %v2151 = vld [vmem:[%s2117 + $0x84] sm:$0xf]
  %v2152 = vld [vmem:[%s2117 + $0x88] sm:$0xf]
  %v2153 = vld [vmem:[%s2117 + $0x8c] sm:$0xf]
  %v2154 = vld [vmem:[%s2117 + $0x90] sm:$0xf]
  %v2155 = vld [vmem:[%s2117 + $0x94] sm:$0xf]
  %v2156 = vld [vmem:[%s2117 + $0x98] sm:$0xf]
  %v2157 = vld [vmem:[%s2117 + $0x9c] sm:$0xf]
  %v2158 = vld [vmem:[%s2117 + $0xa0] sm:$0xf]
  %v2159 = vld [vmem:[%s2117 + $0xa4] sm:$0xf]
  %v2160 = vld [vmem:[%s2117 + $0xa8] sm:$0xf]
  %v2161 = vld [vmem:[%s2117 + $0xac] sm:$0xf]
  %v2162 = vld [vmem:[%s2117 + $0xb0] sm:$0xf]
  %v2163 = vld [vmem:[%s2117 + $0xb4] sm:$0xf]
  %v2164 = vld [vmem:[%s2117 + $0xb8] sm:$0xf]
  %v2165 = vld [vmem:[%s2117 + $0xbc] sm:$0xf]
  %v2166 = vld [vmem:[%s2117 + $0xc0] sm:$0xf]
  %v2167 = vld [vmem:[%s2117 + $0xc4] sm:$0xf]
  %v2168 = vld [vmem:[%s2117 + $0xc8] sm:$0xf]
  %v2169 = vld [vmem:[%s2117 + $0xcc] sm:$0xf]
  %v2170 = vld [vmem:[%s2117 + $0xd0] sm:$0xf]
  %v2171 = vld [vmem:[%s2117 + $0xd4] sm:$0xf]
  %v2172 = vld [vmem:[%s2117 + $0xd8] sm:$0xf]
  %v2173 = vld [vmem:[%s2117 + $0xdc] sm:$0xf]
  %v2174 = vld [vmem:[%s2117 + $0xe0] sm:$0xf]
  %v2175 = vld [vmem:[%s2117 + $0xe4] sm:$0xf]
  %v2176 = vld [vmem:[%s2117 + $0xe8] sm:$0xf]
  %v2177 = vld [vmem:[%s2117 + $0xec] sm:$0xf]
  %v2178 = vld [vmem:[%s2117 + $0xf0] sm:$0xf]
  %v2179 = vld [vmem:[%s2117 + $0xf4] sm:$0xf]
  %v2180 = vld [vmem:[%s2117 + $0xf8] sm:$0xf]
  %v2181 = vld [vmem:[%s2117 + $0xfc] sm:$0xf]
  %v2182 = vld [vmem:[%s2117 + $0x100] sm:$0xf]
  %v2183 = vld [vmem:[%s2117 + $0x104] sm:$0xf]
  %v2184 = vld [vmem:[%s2117 + $0x108] sm:$0x1]
  %v2252 = vunpack.c.l.b16 %v2118
  %v2253 = vunpack.c.l.b16 %v2119
  %v2254 = vunpack.c.l.b16 %v2120
  %v2255 = vunpack.c.l.b16 %v2121
  %v2256 = vunpack.c.l.b16 %v2122
  %v2257 = vunpack.c.l.b16 %v2123
  %v2258 = vunpack.c.l.b16 %v2124
  %v2259 = vunpack.c.l.b16 %v2125
  %v2260 = vunpack.c.l.b16 %v2126
  %v2261 = vunpack.c.l.b16 %v2127
  %v2262 = vunpack.c.l.b16 %v2128
  %v2263 = vunpack.c.l.b16 %v2129
  %v2264 = vunpack.c.l.b16 %v2130
  %v2265 = vunpack.c.l.b16 %v2131
  %v2266 = vunpack.c.l.b16 %v2132
  %v2267 = vunpack.c.l.b16 %v2133
  %v2268 = vunpack.c.l.b16 %v2134
  %v2269 = vunpack.c.l.b16 %v2135
  %v2270 = vunpack.c.l.b16 %v2136
  %v2271 = vunpack.c.l.b16 %v2137
  %v2272 = vunpack.c.l.b16 %v2138
  %v2273 = vunpack.c.l.b16 %v2139
  %v2274 = vunpack.c.l.b16 %v2140
  %v2275 = vunpack.c.l.b16 %v2141
  %v2276 = vunpack.c.l.b16 %v2142
  %v2277 = vunpack.c.l.b16 %v2143
  %v2278 = vunpack.c.l.b16 %v2144
  %v2279 = vunpack.c.l.b16 %v2145
  %v2280 = vunpack.c.l.b16 %v2146
  %v2281 = vunpack.c.l.b16 %v2147
  %v2282 = vunpack.c.l.b16 %v2148
  %v2283 = vunpack.c.l.b16 %v2149
  %v2284 = vunpack.c.l.b16 %v2150
  %v2285 = vunpack.c.l.b16 %v2151
  %v2286 = vunpack.c.l.b16 %v2152
  %v2287 = vunpack.c.l.b16 %v2153
  %v2288 = vunpack.c.l.b16 %v2154
  %v2289 = vunpack.c.l.b16 %v2155
  %v2290 = vunpack.c.l.b16 %v2156
  %v2291 = vunpack.c.l.b16 %v2157
  %v2292 = vunpack.c.l.b16 %v2158
  %v2293 = vunpack.c.l.b16 %v2159
  %v2294 = vunpack.c.l.b16 %v2160
  %v2295 = vunpack.c.l.b16 %v2161
  %v2296 = vunpack.c.l.b16 %v2162
  %v2297 = vunpack.c.l.b16 %v2163
  %v2298 = vunpack.c.l.b16 %v2164
  %v2299 = vunpack.c.l.b16 %v2165
  %v2300 = vunpack.c.l.b16 %v2166
  %v2301 = vunpack.c.l.b16 %v2167
  %v2302 = vunpack.c.l.b16 %v2168
  %v2303 = vunpack.c.l.b16 %v2169
  %v2304 = vunpack.c.l.b16 %v2170
  %v2305 = vunpack.c.l.b16 %v2171
  %v2306 = vunpack.c.l.b16 %v2172
  %v2307 = vunpack.c.l.b16 %v2173
  %v2308 = vunpack.c.l.b16 %v2174
  %v2309 = vunpack.c.l.b16 %v2175
  %v2310 = vunpack.c.l.b16 %v2176
  %v2311 = vunpack.c.l.b16 %v2177
  %v2312 = vunpack.c.l.b16 %v2178
  %v2313 = vunpack.c.l.b16 %v2179
  %v2314 = vunpack.c.l.b16 %v2180
  %v2315 = vunpack.c.l.b16 %v2181
  %v2316 = vunpack.c.l.b16 %v2182
  %v2317 = vunpack.c.l.b16 %v2183
  %v2318 = vunpack.c.l.b16 %v2184
  %v2319 = vpack.c.b16 %v2253, %v2252
  %v2320 = vpack.c.b16 %v2255, %v2254
  %v2321 = vpack.c.b16 %v2257, %v2256
  %v2322 = vpack.c.b16 %v2259, %v2258
  %v2323 = vpack.c.b16 %v2261, %v2260
  %v2324 = vpack.c.b16 %v2263, %v2262
  %v2325 = vpack.c.b16 %v2265, %v2264
  %v2326 = vpack.c.b16 %v2267, %v2266
  %v2327 = vpack.c.b16 %v2269, %v2268
  %v2328 = vpack.c.b16 %v2271, %v2270
  %v2329 = vpack.c.b16 %v2273, %v2272
  %v2330 = vpack.c.b16 %v2275, %v2274
  %v2331 = vpack.c.b16 %v2277, %v2276
  %v2332 = vpack.c.b16 %v2279, %v2278
  %v2333 = vpack.c.b16 %v2281, %v2280
  %v2334 = vpack.c.b16 %v2283, %v2282
  %v2335 = vpack.c.b16 %v2285, %v2284
  %v2336 = vpack.c.b16 %v2287, %v2286
  %v2337 = vpack.c.b16 %v2289, %v2288
  %v2338 = vpack.c.b16 %v2291, %v2290
  %v2339 = vpack.c.b16 %v2293, %v2292
  %v2340 = vpack.c.b16 %v2295, %v2294
  %v2341 = vpack.c.b16 %v2297, %v2296
  %v2342 = vpack.c.b16 %v2299, %v2298
  %v2343 = vpack.c.b16 %v2301, %v2300
  %v2344 = vpack.c.b16 %v2303, %v2302
  %v2345 = vpack.c.b16 %v2305, %v2304
  %v2346 = vpack.c.b16 %v2307, %v2306
  %v2347 = vpack.c.b16 %v2309, %v2308
  %v2348 = vpack.c.b16 %v2311, %v2310
  %v2349 = vpack.c.b16 %v2313, %v2312
  %v2350 = vpack.c.b16 %v2315, %v2314
  %v2351 = vpack.c.b16 %v2317, %v2316
  %v2352 = vpack.c.b16 %v2318, %v2318
  %v2354 = vsel %vm285, %v2319, 0
  %v2357 = vsel %vm285, %v2320, 0
  %v2360 = vsel %vm285, %v2321, 0
  %v2363 = vsel %vm285, %v2322, 0
  %v2366 = vsel %vm285, %v2323, 0
  %v2369 = vsel %vm285, %v2324, 0
  %v2372 = vsel %vm285, %v2325, 0
  %v2375 = vsel %vm285, %v2326, 0
  %v2378 = vsel %vm285, %v2327, 0
  %v2381 = vsel %vm285, %v2328, 0
  %v2384 = vsel %vm285, %v2329, 0
  %v2387 = vsel %vm285, %v2330, 0
  %v2390 = vsel %vm285, %v2331, 0
  %v2393 = vsel %vm285, %v2332, 0
  %v2396 = vsel %vm285, %v2333, 0
  %v2399 = vsel %vm285, %v2334, 0
  %v2402 = vsel %vm285, %v2335, 0
  %v2405 = vsel %vm285, %v2336, 0
  %v2408 = vsel %vm285, %v2337, 0
  %v2411 = vsel %vm285, %v2338, 0
  %v2414 = vsel %vm285, %v2339, 0
  %v2417 = vsel %vm285, %v2340, 0
  %v2420 = vsel %vm285, %v2341, 0
  %v2423 = vsel %vm285, %v2342, 0
  %v2426 = vsel %vm285, %v2343, 0
  %v2429 = vsel %vm285, %v2344, 0
  %v2432 = vsel %vm285, %v2345, 0
  %v2435 = vsel %vm285, %v2346, 0
  %v2438 = vsel %vm285, %v2347, 0
  %v2441 = vsel %vm285, %v2348, 0
  %v2444 = vsel %vm285, %v2349, 0
  %v2447 = vsel %vm285, %v2350, 0
  %v2450 = vsel %vm285, %v2351, 0
  %v2453 = vsel %vm285, %v2352, 0
  %2455 = vmatprep.subr.bf16.mxu0 0
  %2456 = vmatpush1.bf16.msra.mxu0 %v282
  %2457 = vmatprep.subr.bf16.mxu0 0
  %2458 = vmatpush1.bf16.msra.mxu0 %v393
  %2459 = vmatprep.subr.bf16.mxu0 0
  %2460 = vmatpush1.bf16.msra.mxu0 0
  %2461 = vmatprep.subr.bf16.mxu0 0
  %2462 = vmatpush1.bf16.msra.mxu0 0
  %2463 = vmatprep.subr.bf16.mxu0 0
  %2464 = vmatpush1.bf16.msra.mxu0 0
  %2465 = vmatprep.subr.bf16.mxu0 0
  %2466 = vmatpush1.bf16.msra.mxu0 0
  %2467 = vmatprep.subr.bf16.mxu0 0
  %2468 = vmatpush1.bf16.msra.mxu0 0
  %2469 = vmatprep.subr.bf16.mxu0 0
  %2470 = vmatpush1.bf16.msra.mxu0 0
  %2471 = vmatprep.subr.bf16.mxu0 0
  %2472 = vmatpush1.bf16.msra.mxu0 0
  %2473 = vmatprep.subr.bf16.mxu0 0
  %2474 = vmatpush1.bf16.msra.mxu0 0
  %2475 = vmatprep.subr.bf16.mxu0 0
  %2476 = vmatpush1.bf16.msra.mxu0 0
  %2477 = vmatprep.subr.bf16.mxu0 0
  %2478 = vmatpush1.bf16.msra.mxu0 0
  %2479 = vmatprep.subr.bf16.mxu0 0
  %2480 = vmatpush1.bf16.msra.mxu0 0
  %2481 = vmatprep.subr.bf16.mxu0 0
  %2482 = vmatpush1.bf16.msra.mxu0 0
  %2483 = vmatprep.subr.bf16.mxu0 0
  %2484 = vmatpush1.bf16.msra.mxu0 0
  %2485 = vmatprep.subr.bf16.mxu0 0
  %2486 = vmatpush1.bf16.msra.mxu0 0
  %2487 = vmatprep.mubr.bf16.mxu0 0
  %2488 = vmatmul.mubr.bf16.gmra.mrb[0].mxu0 %v2354
  %v2489 = vpop.f32.mrb[0].mxu0
  %v2490 = vadd.f32 0.0, %v2489
  %v2491 = vpop.f32.mrb[0].mxu0
  %v2492 = vpop.f32.mrb[0].mxu0
  %v2493 = vadd.f32 0.0, %v2492
  %v2494 = vpop.f32.mrb[0].mxu0
  %2495 = vmatprep.mubr.bf16.mxu0 0
  %2496 = vmatmul.mubr.bf16.gmra.mrb[0].mxu0 %v2357
  %v2497 = vpop.f32.mrb[0].mxu0
  %v2498 = vadd.f32 0.0, %v2497
  %v2499 = vpop.f32.mrb[0].mxu0
  %v2500 = vpop.f32.mrb[0].mxu0
  %v2501 = vadd.f32 0.0, %v2500
  %v2502 = vpop.f32.mrb[0].mxu0
  %2503 = vmatprep.mubr.bf16.mxu0 0
  %2504 = vmatmul.mubr.bf16.gmra.mrb[0].mxu0 %v2360
  %v2505 = vpop.f32.mrb[0].mxu0
  %v2506 = vadd.f32 0.0, %v2505
  %v2507 = vpop.f32.mrb[0].mxu0
  %v2508 = vpop.f32.mrb[0].mxu0
  %v2509 = vadd.f32 0.0, %v2508
  %v2510 = vpop.f32.mrb[0].mxu0
  %2511 = vmatprep.mubr.bf16.mxu0 0
  %2512 = vmatmul.mubr.bf16.gmra.mrb[0].mxu0 %v2363
  %v2513 = vpop.f32.mrb[0].mxu0
  %v2514 = vadd.f32 0.0, %v2513
  %v2515 = vpop.f32.mrb[0].mxu0
  %v2516 = vpop.f32.mrb[0].mxu0
  %v2517 = vadd.f32 0.0, %v2516
  %v2518 = vpop.f32.mrb[0].mxu0
  %2519 = vmatprep.mubr.bf16.mxu0 0
  %2520 = vmatmul.mubr.bf16.gmra.mrb[0].mxu0 %v2366
  %v2521 = vpop.f32.mrb[0].mxu0
  %v2522 = vadd.f32 0.0, %v2521
  %v2523 = vpop.f32.mrb[0].mxu0
  %v2524 = vpop.f32.mrb[0].mxu0
  %v2525 = vadd.f32 0.0, %v2524
  %v2526 = vpop.f32.mrb[0].mxu0
  %2527 = vmatprep.mubr.bf16.mxu0 0
  %2528 = vmatmul.mubr.bf16.gmra.mrb[0].mxu0 %v2369
  %v2529 = vpop.f32.mrb[0].mxu0
  %v2530 = vadd.f32 0.0, %v2529
  %v2531 = vpop.f32.mrb[0].mxu0
  %v2532 = vpop.f32.mrb[0].mxu0
  %v2533 = vadd.f32 0.0, %v2532
  %v2534 = vpop.f32.mrb[0].mxu0
  %2535 = vmatprep.mubr.bf16.mxu0 0
  %2536 = vmatmul.mubr.bf16.gmra.mrb[0].mxu0 %v2372
  %v2537 = vpop.f32.mrb[0].mxu0
  %v2538 = vadd.f32 0.0, %v2537
  %v2539 = vpop.f32.mrb[0].mxu0
  %v2540 = vpop.f32.mrb[0].mxu0
  %v2541 = vadd.f32 0.0, %v2540
  %v2542 = vpop.f32.mrb[0].mxu0
  %2543 = vmatprep.mubr.bf16.mxu0 0
  %2544 = vmatmul.mubr.bf16.gmra.mrb[0].mxu0 %v2375
  %v2545 = vpop.f32.mrb[0].mxu0
  %v2546 = vadd.f32 0.0, %v2545
  %v2547 = vpop.f32.mrb[0].mxu0
  %v2548 = vpop.f32.mrb[0].mxu0
  %v2549 = vadd.f32 0.0, %v2548
  %v2550 = vpop.f32.mrb[0].mxu0
  %2551 = vmatprep.mubr.bf16.mxu0 0
  %2552 = vmatmul.mubr.bf16.gmra.mrb[0].mxu0 %v2378
  %v2553 = vpop.f32.mrb[0].mxu0
  %v2554 = vadd.f32 0.0, %v2553
  %v2555 = vpop.f32.mrb[0].mxu0
  %v2556 = vpop.f32.mrb[0].mxu0
  %v2557 = vadd.f32 0.0, %v2556
  %v2558 = vpop.f32.mrb[0].mxu0
  %2559 = vmatprep.mubr.bf16.mxu0 0
  %2560 = vmatmul.mubr.bf16.gmra.mrb[0].mxu0 %v2381
  %v2561 = vpop.f32.mrb[0].mxu0
  %v2562 = vadd.f32 0.0, %v2561
  %v2563 = vpop.f32.mrb[0].mxu0
  %v2564 = vpop.f32.mrb[0].mxu0
  %v2565 = vadd.f32 0.0, %v2564
  %v2566 = vpop.f32.mrb[0].mxu0
  %2567 = vmatprep.mubr.bf16.mxu0 0
  %2568 = vmatmul.mubr.bf16.gmra.mrb[0].mxu0 %v2384
  %v2569 = vpop.f32.mrb[0].mxu0
  %v2570 = vadd.f32 0.0, %v2569
  %v2571 = vpop.f32.mrb[0].mxu0
  %v2572 = vpop.f32.mrb[0].mxu0
  %v2573 = vadd.f32 0.0, %v2572
  %v2574 = vpop.f32.mrb[0].mxu0
  %2575 = vmatprep.mubr.bf16.mxu0 0
  %2576 = vmatmul.mubr.bf16.gmra.mrb[0].mxu0 %v2387
  %v2577 = vpop.f32.mrb[0].mxu0
  %v2578 = vadd.f32 0.0, %v2577
  %v2579 = vpop.f32.mrb[0].mxu0
  %v2580 = vpop.f32.mrb[0].mxu0
  %v2581 = vadd.f32 0.0, %v2580
  %v2582 = vpop.f32.mrb[0].mxu0
  %2583 = vmatprep.mubr.bf16.mxu0 0
  %2584 = vmatmul.mubr.bf16.gmra.mrb[0].mxu0 %v2390
  %v2585 = vpop.f32.mrb[0].mxu0
  %v2586 = vadd.f32 0.0, %v2585
  %v2587 = vpop.f32.mrb[0].mxu0
  %v2588 = vpop.f32.mrb[0].mxu0
  %v2589 = vadd.f32 0.0, %v2588
  %v2590 = vpop.f32.mrb[0].mxu0
  %2591 = vmatprep.mubr.bf16.mxu0 0
  %2592 = vmatmul.mubr.bf16.gmra.mrb[0].mxu0 %v2393
  %v2593 = vpop.f32.mrb[0].mxu0
  %v2594 = vadd.f32 0.0, %v2593
  %v2595 = vpop.f32.mrb[0].mxu0
  %v2596 = vpop.f32.mrb[0].mxu0
  %v2597 = vadd.f32 0.0, %v2596
  %v2598 = vpop.f32.mrb[0].mxu0
  %2599 = vmatprep.mubr.bf16.mxu0 0
  %2600 = vmatmul.mubr.bf16.gmra.mrb[0].mxu0 %v2396
  %v2601 = vpop.f32.mrb[0].mxu0
  %v2602 = vadd.f32 0.0, %v2601
  %v2603 = vpop.f32.mrb[0].mxu0
  %v2604 = vpop.f32.mrb[0].mxu0
  %v2605 = vadd.f32 0.0, %v2604
  %v2606 = vpop.f32.mrb[0].mxu0
  %2607 = vmatprep.mubr.bf16.mxu0 0
  %2608 = vmatmul.mubr.bf16.gmra.mrb[0].mxu0 %v2399
  %v2609 = vpop.f32.mrb[0].mxu0
  %v2610 = vadd.f32 0.0, %v2609
  %v2611 = vpop.f32.mrb[0].mxu0
  %v2612 = vpop.f32.mrb[0].mxu0
  %v2613 = vadd.f32 0.0, %v2612
  %v2614 = vpop.f32.mrb[0].mxu0
  %2615 = vmatprep.mubr.bf16.mxu0 0
  %2616 = vmatmul.mubr.bf16.gmra.mrb[0].mxu0 %v2402
  %v2617 = vpop.f32.mrb[0].mxu0
  %v2618 = vadd.f32 0.0, %v2617
  %v2619 = vpop.f32.mrb[0].mxu0
  %v2620 = vpop.f32.mrb[0].mxu0
  %v2621 = vadd.f32 0.0, %v2620
  %v2622 = vpop.f32.mrb[0].mxu0
  %2623 = vmatprep.mubr.bf16.mxu0 0
  %2624 = vmatmul.mubr.bf16.gmra.mrb[0].mxu0 %v2405
  %v2625 = vpop.f32.mrb[0].mxu0
  %v2626 = vadd.f32 0.0, %v2625
  %v2627 = vpop.f32.mrb[0].mxu0
  %v2628 = vpop.f32.mrb[0].mxu0
  %v2629 = vadd.f32 0.0, %v2628
  %v2630 = vpop.f32.mrb[0].mxu0
  %2631 = vmatprep.mubr.bf16.mxu0 0
  %2632 = vmatmul.mubr.bf16.gmra.mrb[0].mxu0 %v2408
  %v2633 = vpop.f32.mrb[0].mxu0
  %v2634 = vadd.f32 0.0, %v2633
  %v2635 = vpop.f32.mrb[0].mxu0
  %v2636 = vpop.f32.mrb[0].mxu0
  %v2637 = vadd.f32 0.0, %v2636
  %v2638 = vpop.f32.mrb[0].mxu0
  %2639 = vmatprep.mubr.bf16.mxu0 0
  %2640 = vmatmul.mubr.bf16.gmra.mrb[0].mxu0 %v2411
  %v2641 = vpop.f32.mrb[0].mxu0
  %v2642 = vadd.f32 0.0, %v2641
  %v2643 = vpop.f32.mrb[0].mxu0
  %v2644 = vpop.f32.mrb[0].mxu0
  %v2645 = vadd.f32 0.0, %v2644
  %v2646 = vpop.f32.mrb[0].mxu0
  %2647 = vmatprep.mubr.bf16.mxu0 0
  %2648 = vmatmul.mubr.bf16.gmra.mrb[0].mxu0 %v2414
  %v2649 = vpop.f32.mrb[0].mxu0
  %v2650 = vadd.f32 0.0, %v2649
  %v2651 = vpop.f32.mrb[0].mxu0
  %v2652 = vpop.f32.mrb[0].mxu0
  %v2653 = vadd.f32 0.0, %v2652
  %v2654 = vpop.f32.mrb[0].mxu0
  %2655 = vmatprep.mubr.bf16.mxu0 0
  %2656 = vmatmul.mubr.bf16.gmra.mrb[0].mxu0 %v2417
  %v2657 = vpop.f32.mrb[0].mxu0
  %v2658 = vadd.f32 0.0, %v2657
  %v2659 = vpop.f32.mrb[0].mxu0
  %v2660 = vpop.f32.mrb[0].mxu0
  %v2661 = vadd.f32 0.0, %v2660
  %v2662 = vpop.f32.mrb[0].mxu0
  %2663 = vmatprep.mubr.bf16.mxu0 0
  %2664 = vmatmul.mubr.bf16.gmra.mrb[0].mxu0 %v2420
  %v2665 = vpop.f32.mrb[0].mxu0
  %v2666 = vadd.f32 0.0, %v2665
  %v2667 = vpop.f32.mrb[0].mxu0
  %v2668 = vpop.f32.mrb[0].mxu0
  %v2669 = vadd.f32 0.0, %v2668
  %v2670 = vpop.f32.mrb[0].mxu0
  %2671 = vmatprep.mubr.bf16.mxu0 0
  %2672 = vmatmul.mubr.bf16.gmra.mrb[0].mxu0 %v2423
  %v2673 = vpop.f32.mrb[0].mxu0
  %v2674 = vadd.f32 0.0, %v2673
  %v2675 = vpop.f32.mrb[0].mxu0
  %v2676 = vpop.f32.mrb[0].mxu0
  %v2677 = vadd.f32 0.0, %v2676
  %v2678 = vpop.f32.mrb[0].mxu0
  %2679 = vmatprep.mubr.bf16.mxu0 0
  %2680 = vmatmul.mubr.bf16.gmra.mrb[0].mxu0 %v2426
  %v2681 = vpop.f32.mrb[0].mxu0
  %v2682 = vadd.f32 0.0, %v2681
  %v2683 = vpop.f32.mrb[0].mxu0
  %v2684 = vpop.f32.mrb[0].mxu0
  %v2685 = vadd.f32 0.0, %v2684
  %v2686 = vpop.f32.mrb[0].mxu0
  %2687 = vmatprep.mubr.bf16.mxu0 0
  %2688 = vmatmul.mubr.bf16.gmra.mrb[0].mxu0 %v2429
  %v2689 = vpop.f32.mrb[0].mxu0
  %v2690 = vadd.f32 0.0, %v2689
  %v2691 = vpop.f32.mrb[0].mxu0
  %v2692 = vpop.f32.mrb[0].mxu0
  %v2693 = vadd.f32 0.0, %v2692
  %v2694 = vpop.f32.mrb[0].mxu0
  %2695 = vmatprep.mubr.bf16.mxu0 0
  %2696 = vmatmul.mubr.bf16.gmra.mrb[0].mxu0 %v2432
  %v2697 = vpop.f32.mrb[0].mxu0
  %v2698 = vadd.f32 0.0, %v2697
  %v2699 = vpop.f32.mrb[0].mxu0
  %v2700 = vpop.f32.mrb[0].mxu0
  %v2701 = vadd.f32 0.0, %v2700
  %v2702 = vpop.f32.mrb[0].mxu0
  %2703 = vmatprep.mubr.bf16.mxu0 0
  %2704 = vmatmul.mubr.bf16.gmra.mrb[0].mxu0 %v2435
  %v2705 = vpop.f32.mrb[0].mxu0
  %v2706 = vadd.f32 0.0, %v2705
  %v2707 = vpop.f32.mrb[0].mxu0
  %v2708 = vpop.f32.mrb[0].mxu0
  %v2709 = vadd.f32 0.0, %v2708
  %v2710 = vpop.f32.mrb[0].mxu0
  %2711 = vmatprep.mubr.bf16.mxu0 0
  %2712 = vmatmul.mubr.bf16.gmra.mrb[0].mxu0 %v2438
  %v2713 = vpop.f32.mrb[0].mxu0
  %v2714 = vadd.f32 0.0, %v2713
  %v2715 = vpop.f32.mrb[0].mxu0
  %v2716 = vpop.f32.mrb[0].mxu0
  %v2717 = vadd.f32 0.0, %v2716
  %v2718 = vpop.f32.mrb[0].mxu0
  %2719 = vmatprep.mubr.bf16.mxu0 0
  %2720 = vmatmul.mubr.bf16.gmra.mrb[0].mxu0 %v2441
  %v2721 = vpop.f32.mrb[0].mxu0
  %v2722 = vadd.f32 0.0, %v2721
  %v2723 = vpop.f32.mrb[0].mxu0
  %v2724 = vpop.f32.mrb[0].mxu0
  %v2725 = vadd.f32 0.0, %v2724
  %v2726 = vpop.f32.mrb[0].mxu0
  %2727 = vmatprep.mubr.bf16.mxu0 0
  %2728 = vmatmul.mubr.bf16.gmra.mrb[0].mxu0 %v2444
  %v2729 = vpop.f32.mrb[0].mxu0
  %v2730 = vadd.f32 0.0, %v2729
  %v2731 = vpop.f32.mrb[0].mxu0
  %v2732 = vpop.f32.mrb[0].mxu0
  %v2733 = vadd.f32 0.0, %v2732
  %v2734 = vpop.f32.mrb[0].mxu0
  %2735 = vmatprep.mubr.bf16.mxu0 0
  %2736 = vmatmul.mubr.bf16.gmra.mrb[0].mxu0 %v2447
  %v2737 = vpop.f32.mrb[0].mxu0
  %v2738 = vadd.f32 0.0, %v2737
  %v2739 = vpop.f32.mrb[0].mxu0
  %v2740 = vpop.f32.mrb[0].mxu0
  %v2741 = vadd.f32 0.0, %v2740
  %v2742 = vpop.f32.mrb[0].mxu0
  %2743 = vmatprep.mubr.bf16.mxu0 0
  %2744 = vmatmul.mubr.bf16.gmra.mrb[0].mxu0 %v2450
  %v2745 = vpop.f32.mrb[0].mxu0
  %v2746 = vadd.f32 0.0, %v2745
  %v2747 = vpop.f32.mrb[0].mxu0
  %v2748 = vpop.f32.mrb[0].mxu0
  %v2749 = vadd.f32 0.0, %v2748
  %v2750 = vpop.f32.mrb[0].mxu0
  %2751 = vmatprep.mubr.bf16.mxu0 0
  %2752 = vmatmul.mubr.bf16.gmra.mrb[0].mxu0 %v2453
  %v2753 = vpop.f32.mrb[0].mxu0
  %v2754 = vadd.f32 0.0, %v2753
  %v2755 = vpop.f32.mrb[0].mxu0
  %v2756 = vpop.f32.mrb[0].mxu0
  %v2757 = vpop.f32.mrb[0].mxu0
  %2758 = vdwg.mxu0
  %v2759 = vmax.f32 %v2050, %v2490
  %v2760 = vmax.f32 %v2051, %v2493
  %v2761 = vmax.f32 %v2052, %v2498
  %v2762 = vmax.f32 %v2053, %v2501
  %v2763 = vmax.f32 %v2054, %v2506
  %v2764 = vmax.f32 %v2055, %v2509
  %v2765 = vmax.f32 %v2056, %v2514
  %v2766 = vmax.f32 %v2057, %v2517
  %v2767 = vmax.f32 %v2058, %v2522
  %v2768 = vmax.f32 %v2059, %v2525
  %v2769 = vmax.f32 %v2060, %v2530
  %v2770 = vmax.f32 %v2061, %v2533
  %v2771 = vmax.f32 %v2062, %v2538
  %v2772 = vmax.f32 %v2063, %v2541
  %v2773 = vmax.f32 %v2064, %v2546
  %v2774 = vmax.f32 %v2065, %v2549
  %v2775 = vmax.f32 %v2066, %v2554
  %v2776 = vmax.f32 %v2067, %v2557
  %v2777 = vmax.f32 %v2068, %v2562
  %v2778 = vmax.f32 %v2069, %v2565
  %v2779 = vmax.f32 %v2070, %v2570
  %v2780 = vmax.f32 %v2071, %v2573
  %v2781 = vmax.f32 %v2072, %v2578
  %v2782 = vmax.f32 %v2073, %v2581
  %v2783 = vmax.f32 %v2074, %v2586
  %v2784 = vmax.f32 %v2075, %v2589
  %v2785 = vmax.f32 %v2076, %v2594
  %v2786 = vmax.f32 %v2077, %v2597
  %v2787 = vmax.f32 %v2078, %v2602
  %v2788 = vmax.f32 %v2079, %v2605
  %v2789 = vmax.f32 %v2080, %v2610
  %v2790 = vmax.f32 %v2081, %v2613
  %v2791 = vmax.f32 %v2082, %v2618
  %v2792 = vmax.f32 %v2083, %v2621
  %v2793 = vmax.f32 %v2084, %v2626
  %v2794 = vmax.f32 %v2085, %v2629
  %v2795 = vmax.f32 %v2086, %v2634
  %v2796 = vmax.f32 %v2087, %v2637
  %v2797 = vmax.f32 %v2088, %v2642
  %v2798 = vmax.f32 %v2089, %v2645
  %v2799 = vmax.f32 %v2090, %v2650
  %v2800 = vmax.f32 %v2091, %v2653
  %v2801 = vmax.f32 %v2092, %v2658
  %v2802 = vmax.f32 %v2093, %v2661
  %v2803 = vmax.f32 %v2094, %v2666
  %v2804 = vmax.f32 %v2095, %v2669
  %v2805 = vmax.f32 %v2096, %v2674
  %v2806 = vmax.f32 %v2097, %v2677
  %v2807 = vmax.f32 %v2098, %v2682
  %v2808 = vmax.f32 %v2099, %v2685
  %v2809 = vmax.f32 %v2100, %v2690
  %v2810 = vmax.f32 %v2101, %v2693
  %v2811 = vmax.f32 %v2102, %v2698
  %v2812 = vmax.f32 %v2103, %v2701
  %v2813 = vmax.f32 %v2104, %v2706
  %v2814 = vmax.f32 %v2105, %v2709
  %v2815 = vmax.f32 %v2106, %v2714
  %v2816 = vmax.f32 %v2107, %v2717
  %v2817 = vmax.f32 %v2108, %v2722
  %v2818 = vmax.f32 %v2109, %v2725
  %v2819 = vmax.f32 %v2110, %v2730
  %v2820 = vmax.f32 %v2111, %v2733
  %v2821 = vmax.f32 %v2112, %v2738
  %v2822 = vmax.f32 %v2113, %v2741
  %v2823 = vmax.f32 %v2114, %v2746
  %v2824 = vmax.f32 %v2115, %v2749
  %v2825 = vmax.f32 %v2116, %v2754
  %v2826 = vld [vmem:[%s2] sm:$0x1]
  %v2828 = vlaneseq
  %v2829 = vshrl.u32 %v2828, 7
  %v2830 = vsub.s32 0, %v2829
  %v2831 = vrot.slane %v2826, %v2830
  %v2833 = vadd.f32 %v2759, %v2831
  %v2834 = vadd.f32 %v2760, %v2831
  %v2835 = vadd.f32 %v2761, %v2831
  %v2836 = vadd.f32 %v2762, %v2831
  %v2837 = vadd.f32 %v2763, %v2831
  %v2838 = vadd.f32 %v2764, %v2831
  %v2839 = vadd.f32 %v2765, %v2831
  %v2840 = vadd.f32 %v2766, %v2831
  %v2841 = vadd.f32 %v2767, %v2831
  %v2842 = vadd.f32 %v2768, %v2831
  %v2843 = vadd.f32 %v2769, %v2831
  %v2844 = vadd.f32 %v2770, %v2831
  %v2845 = vadd.f32 %v2771, %v2831
  %v2846 = vadd.f32 %v2772, %v2831
  %v2847 = vadd.f32 %v2773, %v2831
  %v2848 = vadd.f32 %v2774, %v2831
  %v2849 = vadd.f32 %v2775, %v2831
  %v2850 = vadd.f32 %v2776, %v2831
  %v2851 = vadd.f32 %v2777, %v2831
  %v2852 = vadd.f32 %v2778, %v2831
  %v2853 = vadd.f32 %v2779, %v2831
  %v2854 = vadd.f32 %v2780, %v2831
  %v2855 = vadd.f32 %v2781, %v2831
  %v2856 = vadd.f32 %v2782, %v2831
  %v2857 = vadd.f32 %v2783, %v2831
  %v2858 = vadd.f32 %v2784, %v2831
  %v2859 = vadd.f32 %v2785, %v2831
  %v2860 = vadd.f32 %v2786, %v2831
  %v2861 = vadd.f32 %v2787, %v2831
  %v2862 = vadd.f32 %v2788, %v2831
  %v2863 = vadd.f32 %v2789, %v2831
  %v2864 = vadd.f32 %v2790, %v2831
  %v2865 = vadd.f32 %v2791, %v2831
  %v2866 = vadd.f32 %v2792, %v2831
  %v2867 = vadd.f32 %v2793, %v2831
  %v2868 = vadd.f32 %v2794, %v2831
  %v2869 = vadd.f32 %v2795, %v2831
  %v2870 = vadd.f32 %v2796, %v2831
  %v2871 = vadd.f32 %v2797, %v2831
  %v2872 = vadd.f32 %v2798, %v2831
  %v2873 = vadd.f32 %v2799, %v2831
  %v2874 = vadd.f32 %v2800, %v2831
  %v2875 = vadd.f32 %v2801, %v2831
  %v2876 = vadd.f32 %v2802, %v2831
  %v2877 = vadd.f32 %v2803, %v2831
  %v2878 = vadd.f32 %v2804, %v2831
  %v2879 = vadd.f32 %v2805, %v2831
  %v2880 = vadd.f32 %v2806, %v2831
  %v2881 = vadd.f32 %v2807, %v2831
  %v2882 = vadd.f32 %v2808, %v2831
  %v2883 = vadd.f32 %v2809, %v2831
  %v2884 = vadd.f32 %v2810, %v2831
  %v2885 = vadd.f32 %v2811, %v2831
  %v2886 = vadd.f32 %v2812, %v2831
  %v2887 = vadd.f32 %v2813, %v2831
  %v2888 = vadd.f32 %v2814, %v2831
  %v2889 = vadd.f32 %v2815, %v2831
  %v2890 = vadd.f32 %v2816, %v2831
  %v2891 = vadd.f32 %v2817, %v2831
  %v2892 = vadd.f32 %v2818, %v2831
  %v2893 = vadd.f32 %v2819, %v2831
  %v2894 = vadd.f32 %v2820, %v2831
  %v2895 = vadd.f32 %v2821, %v2831
  %v2896 = vadd.f32 %v2822, %v2831
  %v2897 = vadd.f32 %v2823, %v2831
  %v2898 = vadd.f32 %v2824, %v2831
  %v2899 = vadd.f32 %v2825, %v2831
  %vm2900 = vcmask 195584
  %2901 = vst.msk [vmem:[#allocation2] sm:$0xff] %vm2900, %v2833
  %2902 = vst.msk [vmem:[#allocation2 + $0x8] sm:$0xff] %vm2900, %v2834
  %2903 = vst.msk [vmem:[#allocation2 + $0x10] sm:$0xff] %vm2900, %v2835
  %2904 = vst.msk [vmem:[#allocation2 + $0x18] sm:$0xff] %vm2900, %v2836
  %2905 = vst.msk [vmem:[#allocation2 + $0x20] sm:$0xff] %vm2900, %v2837
  %2906 = vst.msk [vmem:[#allocation2 + $0x28] sm:$0xff] %vm2900, %v2838
  %2907 = vst.msk [vmem:[#allocation2 + $0x30] sm:$0xff] %vm2900, %v2839
  %2908 = vst.msk [vmem:[#allocation2 + $0x38] sm:$0xff] %vm2900, %v2840
  %2909 = vst.msk [vmem:[#allocation2 + $0x40] sm:$0xff] %vm2900, %v2841
  %2910 = vst.msk [vmem:[#allocation2 + $0x48] sm:$0xff] %vm2900, %v2842
  %2911 = vst.msk [vmem:[#allocation2 + $0x50] sm:$0xff] %vm2900, %v2843
  %2912 = vst.msk [vmem:[#allocation2 + $0x58] sm:$0xff] %vm2900, %v2844
  %2913 = vst.msk [vmem:[#allocation2 + $0x60] sm:$0xff] %vm2900, %v2845
  %2914 = vst.msk [vmem:[#allocation2 + $0x68] sm:$0xff] %vm2900, %v2846
  %2915 = vst.msk [vmem:[#allocation2 + $0x70] sm:$0xff] %vm2900, %v2847
  %2916 = vst.msk [vmem:[#allocation2 + $0x78] sm:$0xff] %vm2900, %v2848
  %2917 = vst.msk [vmem:[#allocation2 + $0x80] sm:$0xff] %vm2900, %v2849
  %2918 = vst.msk [vmem:[#allocation2 + $0x88] sm:$0xff] %vm2900, %v2850
  %2919 = vst.msk [vmem:[#allocation2 + $0x90] sm:$0xff] %vm2900, %v2851
  %2920 = vst.msk [vmem:[#allocation2 + $0x98] sm:$0xff] %vm2900, %v2852
  %2921 = vst.msk [vmem:[#allocation2 + $0xa0] sm:$0xff] %vm2900, %v2853
  %2922 = vst.msk [vmem:[#allocation2 + $0xa8] sm:$0xff] %vm2900, %v2854
  %2923 = vst.msk [vmem:[#allocation2 + $0xb0] sm:$0xff] %vm2900, %v2855
  %2924 = vst.msk [vmem:[#allocation2 + $0xb8] sm:$0xff] %vm2900, %v2856
  %2925 = vst.msk [vmem:[#allocation2 + $0xc0] sm:$0xff] %vm2900, %v2857
  %2926 = vst.msk [vmem:[#allocation2 + $0xc8] sm:$0xff] %vm2900, %v2858
  %2927 = vst.msk [vmem:[#allocation2 + $0xd0] sm:$0xff] %vm2900, %v2859
  %2928 = vst.msk [vmem:[#allocation2 + $0xd8] sm:$0xff] %vm2900, %v2860
  %2929 = vst.msk [vmem:[#allocation2 + $0xe0] sm:$0xff] %vm2900, %v2861
  %2930 = vst.msk [vmem:[#allocation2 + $0xe8] sm:$0xff] %vm2900, %v2862
  %2931 = vst.msk [vmem:[#allocation2 + $0xf0] sm:$0xff] %vm2900, %v2863
  %2932 = vst.msk [vmem:[#allocation2 + $0xf8] sm:$0xff] %vm2900, %v2864
  %2933 = vst.msk [vmem:[#allocation2 + $0x100] sm:$0xff] %vm2900, %v2865
  %2934 = vst.msk [vmem:[#allocation2 + $0x108] sm:$0xff] %vm2900, %v2866
  %2935 = vst.msk [vmem:[#allocation2 + $0x110] sm:$0xff] %vm2900, %v2867
  %2936 = vst.msk [vmem:[#allocation2 + $0x118] sm:$0xff] %vm2900, %v2868
  %2937 = vst.msk [vmem:[#allocation2 + $0x120] sm:$0xff] %vm2900, %v2869
  %2938 = vst.msk [vmem:[#allocation2 + $0x128] sm:$0xff] %vm2900, %v2870
  %2939 = vst.msk [vmem:[#allocation2 + $0x130] sm:$0xff] %vm2900, %v2871
  %2940 = vst.msk [vmem:[#allocation2 + $0x138] sm:$0xff] %vm2900, %v2872
  %2941 = vst.msk [vmem:[#allocation2 + $0x140] sm:$0xff] %vm2900, %v2873
  %2942 = vst.msk [vmem:[#allocation2 + $0x148] sm:$0xff] %vm2900, %v2874
  %2943 = vst.msk [vmem:[#allocation2 + $0x150] sm:$0xff] %vm2900, %v2875
  %2944 = vst.msk [vmem:[#allocation2 + $0x158] sm:$0xff] %vm2900, %v2876
  %2945 = vst.msk [vmem:[#allocation2 + $0x160] sm:$0xff] %vm2900, %v2877
  %2946 = vst.msk [vmem:[#allocation2 + $0x168] sm:$0xff] %vm2900, %v2878
  %2947 = vst.msk [vmem:[#allocation2 + $0x170] sm:$0xff] %vm2900, %v2879
  %2948 = vst.msk [vmem:[#allocation2 + $0x178] sm:$0xff] %vm2900, %v2880
  %2949 = vst.msk [vmem:[#allocation2 + $0x180] sm:$0xff] %vm2900, %v2881
  %2950 = vst.msk [vmem:[#allocation2 + $0x188] sm:$0xff] %vm2900, %v2882
  %2951 = vst.msk [vmem:[#allocation2 + $0x190] sm:$0xff] %vm2900, %v2883
  %2952 = vst.msk [vmem:[#allocation2 + $0x198] sm:$0xff] %vm2900, %v2884
  %2953 = vst.msk [vmem:[#allocation2 + $0x1a0] sm:$0xff] %vm2900, %v2885
  %2954 = vst.msk [vmem:[#allocation2 + $0x1a8] sm:$0xff] %vm2900, %v2886
  %2955 = vst.msk [vmem:[#allocation2 + $0x1b0] sm:$0xff] %vm2900, %v2887
  %2956 = vst.msk [vmem:[#allocation2 + $0x1b8] sm:$0xff] %vm2900, %v2888
  %2957 = vst.msk [vmem:[#allocation2 + $0x1c0] sm:$0xff] %vm2900, %v2889
  %2958 = vst.msk [vmem:[#allocation2 + $0x1c8] sm:$0xff] %vm2900, %v2890
  %2959 = vst.msk [vmem:[#allocation2 + $0x1d0] sm:$0xff] %vm2900, %v2891
  %2960 = vst.msk [vmem:[#allocation2 + $0x1d8] sm:$0xff] %vm2900, %v2892
  %2961 = vst.msk [vmem:[#allocation2 + $0x1e0] sm:$0xff] %vm2900, %v2893
  %2962 = vst.msk [vmem:[#allocation2 + $0x1e8] sm:$0xff] %vm2900, %v2894
  %2963 = vst.msk [vmem:[#allocation2 + $0x1f0] sm:$0xff] %vm2900, %v2895
  %2964 = vst.msk [vmem:[#allocation2 + $0x1f8] sm:$0xff] %vm2900, %v2896
  %2965 = vst.msk [vmem:[#allocation2 + $0x200] sm:$0xff] %vm2900, %v2897
  %2966 = vst.msk [vmem:[#allocation2 + $0x208] sm:$0xff] %vm2900, %v2898
  %vm2967 = vcmask 188416
  %2968 = vst.msk [vmem:[#allocation2 + $0x210] sm:$0x1] %vm2967, %v2899
  %s2969 = scalar_lea.vmem %s0, 268
  %v2970 = vld [vmem:[%s2969] sm:$0xf]
  %v2971 = vld [vmem:[%s2969 + $0x4] sm:$0xf]
  %v2972 = vld [vmem:[%s2969 + $0x8] sm:$0xf]
  %v2973 = vld [vmem:[%s2969 + $0xc] sm:$0xf]
  %v2974 = vld [vmem:[%s2969 + $0x10] sm:$0xf]
  %v2975 = vld [vmem:[%s2969 + $0x14] sm:$0xf]
  %v2976 = vld [vmem:[%s2969 + $0x18] sm:$0xf]
  %v2977 = vld [vmem:[%s2969 + $0x1c] sm:$0xf]
  %v2978 = vld [vmem:[%s2969 + $0x20] sm:$0xf]
  %v2979 = vld [vmem:[%s2969 + $0x24] sm:$0xf]
  %v2980 = vld [vmem:[%s2969 + $0x28] sm:$0xf]
  %v2981 = vld [vmem:[%s2969 + $0x2c] sm:$0xf]
  %v2982 = vld [vmem:[%s2969 + $0x30] sm:$0xf]
  %v2983 = vld [vmem:[%s2969 + $0x34] sm:$0xf]
  %v2984 = vld [vmem:[%s2969 + $0x38] sm:$0xf]
  %v2985 = vld [vmem:[%s2969 + $0x3c] sm:$0xf]
  %v2986 = vld [vmem:[%s2969 + $0x40] sm:$0xf]
  %v2987 = vld [vmem:[%s2969 + $0x44] sm:$0xf]
  %v2988 = vld [vmem:[%s2969 + $0x48] sm:$0xf]
  %v2989 = vld [vmem:[%s2969 + $0x4c] sm:$0xf]
  %v2990 = vld [vmem:[%s2969 + $0x50] sm:$0xf]
  %v2991 = vld [vmem:[%s2969 + $0x54] sm:$0xf]
  %v2992 = vld [vmem:[%s2969 + $0x58] sm:$0xf]
  %v2993 = vld [vmem:[%s2969 + $0x5c] sm:$0xf]
  %v2994 = vld [vmem:[%s2969 + $0x60] sm:$0xf]
  %v2995 = vld [vmem:[%s2969 + $0x64] sm:$0xf]
  %v2996 = vld [vmem:[%s2969 + $0x68] sm:$0xf]
  %v2997 = vld [vmem:[%s2969 + $0x6c] sm:$0xf]
  %v2998 = vld [vmem:[%s2969 + $0x70] sm:$0xf]
  %v2999 = vld [vmem:[%s2969 + $0x74] sm:$0xf]
  %v3000 = vld [vmem:[%s2969 + $0x78] sm:$0xf]
  %v3001 = vld [vmem:[%s2969 + $0x7c] sm:$0xf]
  %v3002 = vld [vmem:[%s2969 + $0x80] sm:$0xf]
  %v3003 = vld [vmem:[%s2969 + $0x84] sm:$0xf]
  %v3004 = vld [vmem:[%s2969 + $0x88] sm:$0xf]
  %v3005 = vld [vmem:[%s2969 + $0x8c] sm:$0xf]
  %v3006 = vld [vmem:[%s2969 + $0x90] sm:$0xf]
  %v3007 = vld [vmem:[%s2969 + $0x94] sm:$0xf]
  %v3008 = vld [vmem:[%s2969 + $0x98] sm:$0xf]
  %v3009 = vld [vmem:[%s2969 + $0x9c] sm:$0xf]
  %v3010 = vld [vmem:[%s2969 + $0xa0] sm:$0xf]
  %v3011 = vld [vmem:[%s2969 + $0xa4] sm:$0xf]
  %v3012 = vld [vmem:[%s2969 + $0xa8] sm:$0xf]
  %v3013 = vld [vmem:[%s2969 + $0xac] sm:$0xf]
  %v3014 = vld [vmem:[%s2969 + $0xb0] sm:$0xf]
  %v3015 = vld [vmem:[%s2969 + $0xb4] sm:$0xf]
  %v3016 = vld [vmem:[%s2969 + $0xb8] sm:$0xf]
  %v3017 = vld [vmem:[%s2969 + $0xbc] sm:$0xf]
  %v3018 = vld [vmem:[%s2969 + $0xc0] sm:$0xf]
  %v3019 = vld [vmem:[%s2969 + $0xc4] sm:$0xf]
  %v3020 = vld [vmem:[%s2969 + $0xc8] sm:$0xf]
  %v3021 = vld [vmem:[%s2969 + $0xcc] sm:$0xf]
  %v3022 = vld [vmem:[%s2969 + $0xd0] sm:$0xf]
  %v3023 = vld [vmem:[%s2969 + $0xd4] sm:$0xf]
  %v3024 = vld [vmem:[%s2969 + $0xd8] sm:$0xf]
  %v3025 = vld [vmem:[%s2969 + $0xdc] sm:$0xf]
  %v3026 = vld [vmem:[%s2969 + $0xe0] sm:$0xf]
  %v3027 = vld [vmem:[%s2969 + $0xe4] sm:$0xf]
  %v3028 = vld [vmem:[%s2969 + $0xe8] sm:$0xf]
  %v3029 = vld [vmem:[%s2969 + $0xec] sm:$0xf]
  %v3030 = vld [vmem:[%s2969 + $0xf0] sm:$0xf]
  %v3031 = vld [vmem:[%s2969 + $0xf4] sm:$0xf]
  %v3032 = vld [vmem:[%s2969 + $0xf8] sm:$0xf]
  %v3033 = vld [vmem:[%s2969 + $0xfc] sm:$0xf]
  %v3034 = vld [vmem:[%s2969 + $0x100] sm:$0xf]
  %v3035 = vld [vmem:[%s2969 + $0x104] sm:$0xf]
  %v3036 = vld [vmem:[%s2969 + $0x108] sm:$0x1]
  %v3104 = vunpack.c.l.b16 %v2970
  %v3105 = vunpack.c.l.b16 %v2971
  %v3106 = vunpack.c.l.b16 %v2972
  %v3107 = vunpack.c.l.b16 %v2973
  %v3108 = vunpack.c.l.b16 %v2974
  %v3109 = vunpack.c.l.b16 %v2975
  %v3110 = vunpack.c.l.b16 %v2976
  %v3111 = vunpack.c.l.b16 %v2977
  %v3112 = vunpack.c.l.b16 %v2978
  %v3113 = vunpack.c.l.b16 %v2979
  %v3114 = vunpack.c.l.b16 %v2980
  %v3115 = vunpack.c.l.b16 %v2981
  %v3116 = vunpack.c.l.b16 %v2982
  %v3117 = vunpack.c.l.b16 %v2983
  %v3118 = vunpack.c.l.b16 %v2984
  %v3119 = vunpack.c.l.b16 %v2985
  %v3120 = vunpack.c.l.b16 %v2986
  %v3121 = vunpack.c.l.b16 %v2987
  %v3122 = vunpack.c.l.b16 %v2988
  %v3123 = vunpack.c.l.b16 %v2989
  %v3124 = vunpack.c.l.b16 %v2990
  %v3125 = vunpack.c.l.b16 %v2991
  %v3126 = vunpack.c.l.b16 %v2992
  %v3127 = vunpack.c.l.b16 %v2993
  %v3128 = vunpack.c.l.b16 %v2994
  %v3129 = vunpack.c.l.b16 %v2995
  %v3130 = vunpack.c.l.b16 %v2996
  %v3131 = vunpack.c.l.b16 %v2997
  %v3132 = vunpack.c.l.b16 %v2998
  %v3133 = vunpack.c.l.b16 %v2999
  %v3134 = vunpack.c.l.b16 %v3000
  %v3135 = vunpack.c.l.b16 %v3001
  %v3136 = vunpack.c.l.b16 %v3002
  %v3137 = vunpack.c.l.b16 %v3003
  %v3138 = vunpack.c.l.b16 %v3004
  %v3139 = vunpack.c.l.b16 %v3005
  %v3140 = vunpack.c.l.b16 %v3006
  %v3141 = vunpack.c.l.b16 %v3007
  %v3142 = vunpack.c.l.b16 %v3008
  %v3143 = vunpack.c.l.b16 %v3009
  %v3144 = vunpack.c.l.b16 %v3010
  %v3145 = vunpack.c.l.b16 %v3011
  %v3146 = vunpack.c.l.b16 %v3012
  %v3147 = vunpack.c.l.b16 %v3013
  %v3148 = vunpack.c.l.b16 %v3014
  %v3149 = vunpack.c.l.b16 %v3015
  %v3150 = vunpack.c.l.b16 %v3016
  %v3151 = vunpack.c.l.b16 %v3017
  %v3152 = vunpack.c.l.b16 %v3018
  %v3153 = vunpack.c.l.b16 %v3019
  %v3154 = vunpack.c.l.b16 %v3020
  %v3155 = vunpack.c.l.b16 %v3021
  %v3156 = vunpack.c.l.b16 %v3022
  %v3157 = vunpack.c.l.b16 %v3023
  %v3158 = vunpack.c.l.b16 %v3024
  %v3159 = vunpack.c.l.b16 %v3025
  %v3160 = vunpack.c.l.b16 %v3026
  %v3161 = vunpack.c.l.b16 %v3027
  %v3162 = vunpack.c.l.b16 %v3028
  %v3163 = vunpack.c.l.b16 %v3029
  %v3164 = vunpack.c.l.b16 %v3030
  %v3165 = vunpack.c.l.b16 %v3031
  %v3166 = vunpack.c.l.b16 %v3032
  %v3167 = vunpack.c.l.b16 %v3033
  %v3168 = vunpack.c.l.b16 %v3034
  %v3169 = vunpack.c.l.b16 %v3035
  %v3170 = vunpack.c.l.b16 %v3036
  %v3171 = vpack.c.b16 %v3105, %v3104
  %v3172 = vpack.c.b16 %v3107, %v3106
  %v3173 = vpack.c.b16 %v3109, %v3108
  %v3174 = vpack.c.b16 %v3111, %v3110
  %v3175 = vpack.c.b16 %v3113, %v3112
  %v3176 = vpack.c.b16 %v3115, %v3114
  %v3177 = vpack.c.b16 %v3117, %v3116
  %v3178 = vpack.c.b16 %v3119, %v3118
  %v3179 = vpack.c.b16 %v3121, %v3120
  %v3180 = vpack.c.b16 %v3123, %v3122
  %v3181 = vpack.c.b16 %v3125, %v3124
  %v3182 = vpack.c.b16 %v3127, %v3126
  %v3183 = vpack.c.b16 %v3129, %v3128
  %v3184 = vpack.c.b16 %v3131, %v3130
  %v3185 = vpack.c.b16 %v3133, %v3132
  %v3186 = vpack.c.b16 %v3135, %v3134
  %v3187 = vpack.c.b16 %v3137, %v3136
  %v3188 = vpack.c.b16 %v3139, %v3138
  %v3189 = vpack.c.b16 %v3141, %v3140
  %v3190 = vpack.c.b16 %v3143, %v3142
  %v3191 = vpack.c.b16 %v3145, %v3144
  %v3192 = vpack.c.b16 %v3147, %v3146
  %v3193 = vpack.c.b16 %v3149, %v3148
  %v3194 = vpack.c.b16 %v3151, %v3150
  %v3195 = vpack.c.b16 %v3153, %v3152
  %v3196 = vpack.c.b16 %v3155, %v3154
  %v3197 = vpack.c.b16 %v3157, %v3156
  %v3198 = vpack.c.b16 %v3159, %v3158
  %v3199 = vpack.c.b16 %v3161, %v3160
  %v3200 = vpack.c.b16 %v3163, %v3162
  %v3201 = vpack.c.b16 %v3165, %v3164
  %v3202 = vpack.c.b16 %v3167, %v3166
  %v3203 = vpack.c.b16 %v3169, %v3168
  %v3204 = vpack.c.b16 %v3170, %v3170
  %v3206 = vsel %vm285, %v3171, 0
  %v3209 = vsel %vm285, %v3172, 0
  %v3212 = vsel %vm285, %v3173, 0
  %v3215 = vsel %vm285, %v3174, 0
  %v3218 = vsel %vm285, %v3175, 0
  %v3221 = vsel %vm285, %v3176, 0
  %v3224 = vsel %vm285, %v3177, 0
  %v3227 = vsel %vm285, %v3178, 0
  %v3230 = vsel %vm285, %v3179, 0
  %v3233 = vsel %vm285, %v3180, 0
  %v3236 = vsel %vm285, %v3181, 0
  %v3239 = vsel %vm285, %v3182, 0
  %v3242 = vsel %vm285, %v3183, 0
  %v3245 = vsel %vm285, %v3184, 0
  %v3248 = vsel %vm285, %v3185, 0
  %v3251 = vsel %vm285, %v3186, 0
  %v3254 = vsel %vm285, %v3187, 0
  %v3257 = vsel %vm285, %v3188, 0
  %v3260 = vsel %vm285, %v3189, 0
  %v3263 = vsel %vm285, %v3190, 0
  %v3266 = vsel %vm285, %v3191, 0
  %v3269 = vsel %vm285, %v3192, 0
  %v3272 = vsel %vm285, %v3193, 0
  %v3275 = vsel %vm285, %v3194, 0
  %v3278 = vsel %vm285, %v3195, 0
  %v3281 = vsel %vm285, %v3196, 0
  %v3284 = vsel %vm285, %v3197, 0
  %v3287 = vsel %vm285, %v3198, 0
  %v3290 = vsel %vm285, %v3199, 0
  %v3293 = vsel %vm285, %v3200, 0
  %v3296 = vsel %vm285, %v3201, 0
  %v3299 = vsel %vm285, %v3202, 0
  %v3302 = vsel %vm285, %v3203, 0
  %v3305 = vsel %vm285, %v3204, 0
  %3307 = vmatprep.subr.bf16.mxu0 0
  %3308 = vmatpush1.bf16.msra.mxu0 %v282
  %3309 = vmatprep.subr.bf16.mxu0 0
  %3310 = vmatpush1.bf16.msra.mxu0 %v393
  %3311 = vmatprep.subr.bf16.mxu0 0
  %3312 = vmatpush1.bf16.msra.mxu0 0
  %3313 = vmatprep.subr.bf16.mxu0 0
  %3314 = vmatpush1.bf16.msra.mxu0 0
  %3315 = vmatprep.subr.bf16.mxu0 0
  %3316 = vmatpush1.bf16.msra.mxu0 0
  %3317 = vmatprep.subr.bf16.mxu0 0
  %3318 = vmatpush1.bf16.msra.mxu0 0
  %3319 = vmatprep.subr.bf16.mxu0 0
  %3320 = vmatpush1.bf16.msra.mxu0 0
  %3321 = vmatprep.subr.bf16.mxu0 0
  %3322 = vmatpush1.bf16.msra.mxu0 0
  %3323 = vmatprep.subr.bf16.mxu0 0
  %3324 = vmatpush1.bf16.msra.mxu0 0
  %3325 = vmatprep.subr.bf16.mxu0 0
  %3326 = vmatpush1.bf16.msra.mxu0 0
  %3327 = vmatprep.subr.bf16.mxu0 0
  %3328 = vmatpush1.bf16.msra.mxu0 0
  %3329 = vmatprep.subr.bf16.mxu0 0
  %3330 = vmatpush1.bf16.msra.mxu0 0
  %3331 = vmatprep.subr.bf16.mxu0 0
  %3332 = vmatpush1.bf16.msra.mxu0 0
  %3333 = vmatprep.subr.bf16.mxu0 0
  %3334 = vmatpush1.bf16.msra.mxu0 0
  %3335 = vmatprep.subr.bf16.mxu0 0
  %3336 = vmatpush1.bf16.msra.mxu0 0
  %3337 = vmatprep.subr.bf16.mxu0 0
  %3338 = vmatpush1.bf16.msra.mxu0 0
  %3339 = vmatprep.mubr.bf16.mxu0 0
  %3340 = vmatmul.mubr.bf16.gmra.mrb[0].mxu0 %v3206
  %v3341 = vpop.f32.mrb[0].mxu0
  %v3342 = vadd.f32 0.0, %v3341
  %v3343 = vpop.f32.mrb[0].mxu0
  %v3344 = vpop.f32.mrb[0].mxu0
  %v3345 = vadd.f32 0.0, %v3344
  %v3346 = vpop.f32.mrb[0].mxu0
  %3347 = vmatprep.mubr.bf16.mxu0 0
  %3348 = vmatmul.mubr.bf16.gmra.mrb[0].mxu0 %v3209
  %v3349 = vpop.f32.mrb[0].mxu0
  %v3350 = vadd.f32 0.0, %v3349
  %v3351 = vpop.f32.mrb[0].mxu0
  %v3352 = vpop.f32.mrb[0].mxu0
  %v3353 = vadd.f32 0.0, %v3352
  %v3354 = vpop.f32.mrb[0].mxu0
  %3355 = vmatprep.mubr.bf16.mxu0 0
  %3356 = vmatmul.mubr.bf16.gmra.mrb[0].mxu0 %v3212
  %v3357 = vpop.f32.mrb[0].mxu0
  %v3358 = vadd.f32 0.0, %v3357
  %v3359 = vpop.f32.mrb[0].mxu0
  %v3360 = vpop.f32.mrb[0].mxu0
  %v3361 = vadd.f32 0.0, %v3360
  %v3362 = vpop.f32.mrb[0].mxu0
  %3363 = vmatprep.mubr.bf16.mxu0 0
  %3364 = vmatmul.mubr.bf16.gmra.mrb[0].mxu0 %v3215
  %v3365 = vpop.f32.mrb[0].mxu0
  %v3366 = vadd.f32 0.0, %v3365
  %v3367 = vpop.f32.mrb[0].mxu0
  %v3368 = vpop.f32.mrb[0].mxu0
  %v3369 = vadd.f32 0.0, %v3368
  %v3370 = vpop.f32.mrb[0].mxu0
  %3371 = vmatprep.mubr.bf16.mxu0 0
  %3372 = vmatmul.mubr.bf16.gmra.mrb[0].mxu0 %v3218
  %v3373 = vpop.f32.mrb[0].mxu0
  %v3374 = vadd.f32 0.0, %v3373
  %v3375 = vpop.f32.mrb[0].mxu0
  %v3376 = vpop.f32.mrb[0].mxu0
  %v3377 = vadd.f32 0.0, %v3376
  %v3378 = vpop.f32.mrb[0].mxu0
  %3379 = vmatprep.mubr.bf16.mxu0 0
  %3380 = vmatmul.mubr.bf16.gmra.mrb[0].mxu0 %v3221
  %v3381 = vpop.f32.mrb[0].mxu0
  %v3382 = vadd.f32 0.0, %v3381
  %v3383 = vpop.f32.mrb[0].mxu0
  %v3384 = vpop.f32.mrb[0].mxu0
  %v3385 = vadd.f32 0.0, %v3384
  %v3386 = vpop.f32.mrb[0].mxu0
  %3387 = vmatprep.mubr.bf16.mxu0 0
  %3388 = vmatmul.mubr.bf16.gmra.mrb[0].mxu0 %v3224
  %v3389 = vpop.f32.mrb[0].mxu0
  %v3390 = vadd.f32 0.0, %v3389
  %v3391 = vpop.f32.mrb[0].mxu0
  %v3392 = vpop.f32.mrb[0].mxu0
  %v3393 = vadd.f32 0.0, %v3392
  %v3394 = vpop.f32.mrb[0].mxu0
  %3395 = vmatprep.mubr.bf16.mxu0 0
  %3396 = vmatmul.mubr.bf16.gmra.mrb[0].mxu0 %v3227
  %v3397 = vpop.f32.mrb[0].mxu0
  %v3398 = vadd.f32 0.0, %v3397
  %v3399 = vpop.f32.mrb[0].mxu0
  %v3400 = vpop.f32.mrb[0].mxu0
  %v3401 = vadd.f32 0.0, %v3400
  %v3402 = vpop.f32.mrb[0].mxu0
  %3403 = vmatprep.mubr.bf16.mxu0 0
  %3404 = vmatmul.mubr.bf16.gmra.mrb[0].mxu0 %v3230
  %v3405 = vpop.f32.mrb[0].mxu0
  %v3406 = vadd.f32 0.0, %v3405
  %v3407 = vpop.f32.mrb[0].mxu0
  %v3408 = vpop.f32.mrb[0].mxu0
  %v3409 = vadd.f32 0.0, %v3408
  %v3410 = vpop.f32.mrb[0].mxu0
  %3411 = vmatprep.mubr.bf16.mxu0 0
  %3412 = vmatmul.mubr.bf16.gmra.mrb[0].mxu0 %v3233
  %v3413 = vpop.f32.mrb[0].mxu0
  %v3414 = vadd.f32 0.0, %v3413
  %v3415 = vpop.f32.mrb[0].mxu0
  %v3416 = vpop.f32.mrb[0].mxu0
  %v3417 = vadd.f32 0.0, %v3416
  %v3418 = vpop.f32.mrb[0].mxu0
  %3419 = vmatprep.mubr.bf16.mxu0 0
  %3420 = vmatmul.mubr.bf16.gmra.mrb[0].mxu0 %v3236
  %v3421 = vpop.f32.mrb[0].mxu0
  %v3422 = vadd.f32 0.0, %v3421
  %v3423 = vpop.f32.mrb[0].mxu0
  %v3424 = vpop.f32.mrb[0].mxu0
  %v3425 = vadd.f32 0.0, %v3424
  %v3426 = vpop.f32.mrb[0].mxu0
  %3427 = vmatprep.mubr.bf16.mxu0 0
  %3428 = vmatmul.mubr.bf16.gmra.mrb[0].mxu0 %v3239
  %v3429 = vpop.f32.mrb[0].mxu0
  %v3430 = vadd.f32 0.0, %v3429
  %v3431 = vpop.f32.mrb[0].mxu0
  %v3432 = vpop.f32.mrb[0].mxu0
  %v3433 = vadd.f32 0.0, %v3432
  %v3434 = vpop.f32.mrb[0].mxu0
  %3435 = vmatprep.mubr.bf16.mxu0 0
  %3436 = vmatmul.mubr.bf16.gmra.mrb[0].mxu0 %v3242
  %v3437 = vpop.f32.mrb[0].mxu0
  %v3438 = vadd.f32 0.0, %v3437
  %v3439 = vpop.f32.mrb[0].mxu0
  %v3440 = vpop.f32.mrb[0].mxu0
  %v3441 = vadd.f32 0.0, %v3440
  %v3442 = vpop.f32.mrb[0].mxu0
  %3443 = vmatprep.mubr.bf16.mxu0 0
  %3444 = vmatmul.mubr.bf16.gmra.mrb[0].mxu0 %v3245
  %v3445 = vpop.f32.mrb[0].mxu0
  %v3446 = vadd.f32 0.0, %v3445
  %v3447 = vpop.f32.mrb[0].mxu0
  %v3448 = vpop.f32.mrb[0].mxu0
  %v3449 = vadd.f32 0.0, %v3448
  %v3450 = vpop.f32.mrb[0].mxu0
  %3451 = vmatprep.mubr.bf16.mxu0 0
  %3452 = vmatmul.mubr.bf16.gmra.mrb[0].mxu0 %v3248
  %v3453 = vpop.f32.mrb[0].mxu0
  %v3454 = vadd.f32 0.0, %v3453
  %v3455 = vpop.f32.mrb[0].mxu0
  %v3456 = vpop.f32.mrb[0].mxu0
  %v3457 = vadd.f32 0.0, %v3456
  %v3458 = vpop.f32.mrb[0].mxu0
  %3459 = vmatprep.mubr.bf16.mxu0 0
  %3460 = vmatmul.mubr.bf16.gmra.mrb[0].mxu0 %v3251
  %v3461 = vpop.f32.mrb[0].mxu0
  %v3462 = vadd.f32 0.0, %v3461
  %v3463 = vpop.f32.mrb[0].mxu0
  %v3464 = vpop.f32.mrb[0].mxu0
  %v3465 = vadd.f32 0.0, %v3464
  %v3466 = vpop.f32.mrb[0].mxu0
  %3467 = vmatprep.mubr.bf16.mxu0 0
  %3468 = vmatmul.mubr.bf16.gmra.mrb[0].mxu0 %v3254
  %v3469 = vpop.f32.mrb[0].mxu0
  %v3470 = vadd.f32 0.0, %v3469
  %v3471 = vpop.f32.mrb[0].mxu0
  %v3472 = vpop.f32.mrb[0].mxu0
  %v3473 = vadd.f32 0.0, %v3472
  %v3474 = vpop.f32.mrb[0].mxu0
  %3475 = vmatprep.mubr.bf16.mxu0 0
  %3476 = vmatmul.mubr.bf16.gmra.mrb[0].mxu0 %v3257
  %v3477 = vpop.f32.mrb[0].mxu0
  %v3478 = vadd.f32 0.0, %v3477
  %v3479 = vpop.f32.mrb[0].mxu0
  %v3480 = vpop.f32.mrb[0].mxu0
  %v3481 = vadd.f32 0.0, %v3480
  %v3482 = vpop.f32.mrb[0].mxu0
  %3483 = vmatprep.mubr.bf16.mxu0 0
  %3484 = vmatmul.mubr.bf16.gmra.mrb[0].mxu0 %v3260
  %v3485 = vpop.f32.mrb[0].mxu0
  %v3486 = vadd.f32 0.0, %v3485
  %v3487 = vpop.f32.mrb[0].mxu0
  %v3488 = vpop.f32.mrb[0].mxu0
  %v3489 = vadd.f32 0.0, %v3488
  %v3490 = vpop.f32.mrb[0].mxu0
  %3491 = vmatprep.mubr.bf16.mxu0 0
  %3492 = vmatmul.mubr.bf16.gmra.mrb[0].mxu0 %v3263
  %v3493 = vpop.f32.mrb[0].mxu0
  %v3494 = vadd.f32 0.0, %v3493
  %v3495 = vpop.f32.mrb[0].mxu0
  %v3496 = vpop.f32.mrb[0].mxu0
  %v3497 = vadd.f32 0.0, %v3496
  %v3498 = vpop.f32.mrb[0].mxu0
  %3499 = vmatprep.mubr.bf16.mxu0 0
  %3500 = vmatmul.mubr.bf16.gmra.mrb[0].mxu0 %v3266
  %v3501 = vpop.f32.mrb[0].mxu0
  %v3502 = vadd.f32 0.0, %v3501
  %v3503 = vpop.f32.mrb[0].mxu0
  %v3504 = vpop.f32.mrb[0].mxu0
  %v3505 = vadd.f32 0.0, %v3504
  %v3506 = vpop.f32.mrb[0].mxu0
  %3507 = vmatprep.mubr.bf16.mxu0 0
  %3508 = vmatmul.mubr.bf16.gmra.mrb[0].mxu0 %v3269
  %v3509 = vpop.f32.mrb[0].mxu0
  %v3510 = vadd.f32 0.0, %v3509
  %v3511 = vpop.f32.mrb[0].mxu0
  %v3512 = vpop.f32.mrb[0].mxu0
  %v3513 = vadd.f32 0.0, %v3512
  %v3514 = vpop.f32.mrb[0].mxu0
  %3515 = vmatprep.mubr.bf16.mxu0 0
  %3516 = vmatmul.mubr.bf16.gmra.mrb[0].mxu0 %v3272
  %v3517 = vpop.f32.mrb[0].mxu0
  %v3518 = vadd.f32 0.0, %v3517
  %v3519 = vpop.f32.mrb[0].mxu0
  %v3520 = vpop.f32.mrb[0].mxu0
  %v3521 = vadd.f32 0.0, %v3520
  %v3522 = vpop.f32.mrb[0].mxu0
  %3523 = vmatprep.mubr.bf16.mxu0 0
  %3524 = vmatmul.mubr.bf16.gmra.mrb[0].mxu0 %v3275
  %v3525 = vpop.f32.mrb[0].mxu0
  %v3526 = vadd.f32 0.0, %v3525
  %v3527 = vpop.f32.mrb[0].mxu0
  %v3528 = vpop.f32.mrb[0].mxu0
  %v3529 = vadd.f32 0.0, %v3528
  %v3530 = vpop.f32.mrb[0].mxu0
  %3531 = vmatprep.mubr.bf16.mxu0 0
  %3532 = vmatmul.mubr.bf16.gmra.mrb[0].mxu0 %v3278
  %v3533 = vpop.f32.mrb[0].mxu0
  %v3534 = vadd.f32 0.0, %v3533
  %v3535 = vpop.f32.mrb[0].mxu0
  %v3536 = vpop.f32.mrb[0].mxu0
  %v3537 = vadd.f32 0.0, %v3536
  %v3538 = vpop.f32.mrb[0].mxu0
  %3539 = vmatprep.mubr.bf16.mxu0 0
  %3540 = vmatmul.mubr.bf16.gmra.mrb[0].mxu0 %v3281
  %v3541 = vpop.f32.mrb[0].mxu0
  %v3542 = vadd.f32 0.0, %v3541
  %v3543 = vpop.f32.mrb[0].mxu0
  %v3544 = vpop.f32.mrb[0].mxu0
  %v3545 = vadd.f32 0.0, %v3544
  %v3546 = vpop.f32.mrb[0].mxu0
  %3547 = vmatprep.mubr.bf16.mxu0 0
  %3548 = vmatmul.mubr.bf16.gmra.mrb[0].mxu0 %v3284
  %v3549 = vpop.f32.mrb[0].mxu0
  %v3550 = vadd.f32 0.0, %v3549
  %v3551 = vpop.f32.mrb[0].mxu0
  %v3552 = vpop.f32.mrb[0].mxu0
  %v3553 = vadd.f32 0.0, %v3552
  %v3554 = vpop.f32.mrb[0].mxu0
  %3555 = vmatprep.mubr.bf16.mxu0 0
  %3556 = vmatmul.mubr.bf16.gmra.mrb[0].mxu0 %v3287
  %v3557 = vpop.f32.mrb[0].mxu0
  %v3558 = vadd.f32 0.0, %v3557
  %v3559 = vpop.f32.mrb[0].mxu0
  %v3560 = vpop.f32.mrb[0].mxu0
  %v3561 = vadd.f32 0.0, %v3560
  %v3562 = vpop.f32.mrb[0].mxu0
  %3563 = vmatprep.mubr.bf16.mxu0 0
  %3564 = vmatmul.mubr.bf16.gmra.mrb[0].mxu0 %v3290
  %v3565 = vpop.f32.mrb[0].mxu0
  %v3566 = vadd.f32 0.0, %v3565
  %v3567 = vpop.f32.mrb[0].mxu0
  %v3568 = vpop.f32.mrb[0].mxu0
  %v3569 = vadd.f32 0.0, %v3568
  %v3570 = vpop.f32.mrb[0].mxu0
  %3571 = vmatprep.mubr.bf16.mxu0 0
  %3572 = vmatmul.mubr.bf16.gmra.mrb[0].mxu0 %v3293
  %v3573 = vpop.f32.mrb[0].mxu0
  %v3574 = vadd.f32 0.0, %v3573
  %v3575 = vpop.f32.mrb[0].mxu0
  %v3576 = vpop.f32.mrb[0].mxu0
  %v3577 = vadd.f32 0.0, %v3576
  %v3578 = vpop.f32.mrb[0].mxu0
  %3579 = vmatprep.mubr.bf16.mxu0 0
  %3580 = vmatmul.mubr.bf16.gmra.mrb[0].mxu0 %v3296
  %v3581 = vpop.f32.mrb[0].mxu0
  %v3582 = vadd.f32 0.0, %v3581
  %v3583 = vpop.f32.mrb[0].mxu0
  %v3584 = vpop.f32.mrb[0].mxu0
  %v3585 = vadd.f32 0.0, %v3584
  %v3586 = vpop.f32.mrb[0].mxu0
  %3587 = vmatprep.mubr.bf16.mxu0 0
  %3588 = vmatmul.mubr.bf16.gmra.mrb[0].mxu0 %v3299
  %v3589 = vpop.f32.mrb[0].mxu0
  %v3590 = vadd.f32 0.0, %v3589
  %v3591 = vpop.f32.mrb[0].mxu0
  %v3592 = vpop.f32.mrb[0].mxu0
  %v3593 = vadd.f32 0.0, %v3592
  %v3594 = vpop.f32.mrb[0].mxu0
  %3595 = vmatprep.mubr.bf16.mxu0 0
  %3596 = vmatmul.mubr.bf16.gmra.mrb[0].mxu0 %v3302
  %v3597 = vpop.f32.mrb[0].mxu0
  %v3598 = vadd.f32 0.0, %v3597
  %v3599 = vpop.f32.mrb[0].mxu0
  %v3600 = vpop.f32.mrb[0].mxu0
  %v3601 = vadd.f32 0.0, %v3600
  %v3602 = vpop.f32.mrb[0].mxu0
  %3603 = vmatprep.mubr.bf16.mxu0 0
  %3604 = vmatmul.mubr.bf16.gmra.mrb[0].mxu0 %v3305
  %v3605 = vpop.f32.mrb[0].mxu0
  %v3606 = vadd.f32 0.0, %v3605
  %v3607 = vpop.f32.mrb[0].mxu0
  %v3608 = vpop.f32.mrb[0].mxu0
  %v3609 = vpop.f32.mrb[0].mxu0
  %3610 = vdwg.mxu0
  %s3611 = scalar_lea.vmem %s0, 804
  %v3612 = vld [vmem:[%s3611] sm:$0xf]
  %v3613 = vld [vmem:[%s3611 + $0x4] sm:$0xf]
  %v3614 = vld [vmem:[%s3611 + $0x8] sm:$0xf]
  %v3615 = vld [vmem:[%s3611 + $0xc] sm:$0xf]
  %v3616 = vld [vmem:[%s3611 + $0x10] sm:$0xf]
  %v3617 = vld [vmem:[%s3611 + $0x14] sm:$0xf]
  %v3618 = vld [vmem:[%s3611 + $0x18] sm:$0xf]
  %v3619 = vld [vmem:[%s3611 + $0x1c] sm:$0xf]
  %v3620 = vld [vmem:[%s3611 + $0x20] sm:$0xf]
  %v3621 = vld [vmem:[%s3611 + $0x24] sm:$0xf]
  %v3622 = vld [vmem:[%s3611 + $0x28] sm:$0xf]
  %v3623 = vld [vmem:[%s3611 + $0x2c] sm:$0xf]
  %v3624 = vld [vmem:[%s3611 + $0x30] sm:$0xf]
  %v3625 = vld [vmem:[%s3611 + $0x34] sm:$0xf]
  %v3626 = vld [vmem:[%s3611 + $0x38] sm:$0xf]
  %v3627 = vld [vmem:[%s3611 + $0x3c] sm:$0xf]
  %v3628 = vld [vmem:[%s3611 + $0x40] sm:$0xf]
  %v3629 = vld [vmem:[%s3611 + $0x44] sm:$0xf]
  %v3630 = vld [vmem:[%s3611 + $0x48] sm:$0xf]
  %v3631 = vld [vmem:[%s3611 + $0x4c] sm:$0xf]
  %v3632 = vld [vmem:[%s3611 + $0x50] sm:$0xf]
  %v3633 = vld [vmem:[%s3611 + $0x54] sm:$0xf]
  %v3634 = vld [vmem:[%s3611 + $0x58] sm:$0xf]
  %v3635 = vld [vmem:[%s3611 + $0x5c] sm:$0xf]
  %v3636 = vld [vmem:[%s3611 + $0x60] sm:$0xf]
  %v3637 = vld [vmem:[%s3611 + $0x64] sm:$0xf]
  %v3638 = vld [vmem:[%s3611 + $0x68] sm:$0xf]
  %v3639 = vld [vmem:[%s3611 + $0x6c] sm:$0xf]
  %v3640 = vld [vmem:[%s3611 + $0x70] sm:$0xf]
  %v3641 = vld [vmem:[%s3611 + $0x74] sm:$0xf]
  %v3642 = vld [vmem:[%s3611 + $0x78] sm:$0xf]
  %v3643 = vld [vmem:[%s3611 + $0x7c] sm:$0xf]
  %v3644 = vld [vmem:[%s3611 + $0x80] sm:$0xf]
  %v3645 = vld [vmem:[%s3611 + $0x84] sm:$0xf]
  %v3646 = vld [vmem:[%s3611 + $0x88] sm:$0xf]
  %v3647 = vld [vmem:[%s3611 + $0x8c] sm:$0xf]
  %v3648 = vld [vmem:[%s3611 + $0x90] sm:$0xf]
  %v3649 = vld [vmem:[%s3611 + $0x94] sm:$0xf]
  %v3650 = vld [vmem:[%s3611 + $0x98] sm:$0xf]
  %v3651 = vld [vmem:[%s3611 + $0x9c] sm:$0xf]
  %v3652 = vld [vmem:[%s3611 + $0xa0] sm:$0xf]
  %v3653 = vld [vmem:[%s3611 + $0xa4] sm:$0xf]
  %v3654 = vld [vmem:[%s3611 + $0xa8] sm:$0xf]
  %v3655 = vld [vmem:[%s3611 + $0xac] sm:$0xf]
  %v3656 = vld [vmem:[%s3611 + $0xb0] sm:$0xf]
  %v3657 = vld [vmem:[%s3611 + $0xb4] sm:$0xf]
  %v3658 = vld [vmem:[%s3611 + $0xb8] sm:$0xf]
  %v3659 = vld [vmem:[%s3611 + $0xbc] sm:$0xf]
  %v3660 = vld [vmem:[%s3611 + $0xc0] sm:$0xf]
  %v3661 = vld [vmem:[%s3611 + $0xc4] sm:$0xf]
  %v3662 = vld [vmem:[%s3611 + $0xc8] sm:$0xf]
  %v3663 = vld [vmem:[%s3611 + $0xcc] sm:$0xf]
  %v3664 = vld [vmem:[%s3611 + $0xd0] sm:$0xf]
  %v3665 = vld [vmem:[%s3611 + $0xd4] sm:$0xf]
  %v3666 = vld [vmem:[%s3611 + $0xd8] sm:$0xf]
  %v3667 = vld [vmem:[%s3611 + $0xdc] sm:$0xf]
  %v3668 = vld [vmem:[%s3611 + $0xe0] sm:$0xf]
  %v3669 = vld [vmem:[%s3611 + $0xe4] sm:$0xf]
  %v3670 = vld [vmem:[%s3611 + $0xe8] sm:$0xf]
  %v3671 = vld [vmem:[%s3611 + $0xec] sm:$0xf]
  %v3672 = vld [vmem:[%s3611 + $0xf0] sm:$0xf]
  %v3673 = vld [vmem:[%s3611 + $0xf4] sm:$0xf]
  %v3674 = vld [vmem:[%s3611 + $0xf8] sm:$0xf]
  %v3675 = vld [vmem:[%s3611 + $0xfc] sm:$0xf]
  %v3676 = vld [vmem:[%s3611 + $0x100] sm:$0xf]
  %v3677 = vld [vmem:[%s3611 + $0x104] sm:$0xf]
  %v3678 = vld [vmem:[%s3611 + $0x108] sm:$0x1]
  %v3746 = vunpack.c.l.b16 %v3612
  %v3747 = vunpack.c.l.b16 %v3613
  %v3748 = vunpack.c.l.b16 %v3614
  %v3749 = vunpack.c.l.b16 %v3615
  %v3750 = vunpack.c.l.b16 %v3616
  %v3751 = vunpack.c.l.b16 %v3617
  %v3752 = vunpack.c.l.b16 %v3618
  %v3753 = vunpack.c.l.b16 %v3619
  %v3754 = vunpack.c.l.b16 %v3620
  %v3755 = vunpack.c.l.b16 %v3621
  %v3756 = vunpack.c.l.b16 %v3622
  %v3757 = vunpack.c.l.b16 %v3623
  %v3758 = vunpack.c.l.b16 %v3624
  %v3759 = vunpack.c.l.b16 %v3625
  %v3760 = vunpack.c.l.b16 %v3626
  %v3761 = vunpack.c.l.b16 %v3627
  %v3762 = vunpack.c.l.b16 %v3628
  %v3763 = vunpack.c.l.b16 %v3629
  %v3764 = vunpack.c.l.b16 %v3630
  %v3765 = vunpack.c.l.b16 %v3631
  %v3766 = vunpack.c.l.b16 %v3632
  %v3767 = vunpack.c.l.b16 %v3633
  %v3768 = vunpack.c.l.b16 %v3634
  %v3769 = vunpack.c.l.b16 %v3635
  %v3770 = vunpack.c.l.b16 %v3636
  %v3771 = vunpack.c.l.b16 %v3637
  %v3772 = vunpack.c.l.b16 %v3638
  %v3773 = vunpack.c.l.b16 %v3639
  %v3774 = vunpack.c.l.b16 %v3640
  %v3775 = vunpack.c.l.b16 %v3641
  %v3776 = vunpack.c.l.b16 %v3642
  %v3777 = vunpack.c.l.b16 %v3643
  %v3778 = vunpack.c.l.b16 %v3644
  %v3779 = vunpack.c.l.b16 %v3645
  %v3780 = vunpack.c.l.b16 %v3646
  %v3781 = vunpack.c.l.b16 %v3647
  %v3782 = vunpack.c.l.b16 %v3648
  %v3783 = vunpack.c.l.b16 %v3649
  %v3784 = vunpack.c.l.b16 %v3650
  %v3785 = vunpack.c.l.b16 %v3651
  %v3786 = vunpack.c.l.b16 %v3652
  %v3787 = vunpack.c.l.b16 %v3653
  %v3788 = vunpack.c.l.b16 %v3654
  %v3789 = vunpack.c.l.b16 %v3655
  %v3790 = vunpack.c.l.b16 %v3656
  %v3791 = vunpack.c.l.b16 %v3657
  %v3792 = vunpack.c.l.b16 %v3658
  %v3793 = vunpack.c.l.b16 %v3659
  %v3794 = vunpack.c.l.b16 %v3660
  %v3795 = vunpack.c.l.b16 %v3661
  %v3796 = vunpack.c.l.b16 %v3662
  %v3797 = vunpack.c.l.b16 %v3663
  %v3798 = vunpack.c.l.b16 %v3664
  %v3799 = vunpack.c.l.b16 %v3665
  %v3800 = vunpack.c.l.b16 %v3666
  %v3801 = vunpack.c.l.b16 %v3667
  %v3802 = vunpack.c.l.b16 %v3668
  %v3803 = vunpack.c.l.b16 %v3669
  %v3804 = vunpack.c.l.b16 %v3670
  %v3805 = vunpack.c.l.b16 %v3671
  %v3806 = vunpack.c.l.b16 %v3672
  %v3807 = vunpack.c.l.b16 %v3673
  %v3808 = vunpack.c.l.b16 %v3674
  %v3809 = vunpack.c.l.b16 %v3675
  %v3810 = vunpack.c.l.b16 %v3676
  %v3811 = vunpack.c.l.b16 %v3677
  %v3812 = vunpack.c.l.b16 %v3678
  %v3813 = vpack.c.b16 %v3747, %v3746
  %v3814 = vpack.c.b16 %v3749, %v3748
  %v3815 = vpack.c.b16 %v3751, %v3750
  %v3816 = vpack.c.b16 %v3753, %v3752
  %v3817 = vpack.c.b16 %v3755, %v3754
  %v3818 = vpack.c.b16 %v3757, %v3756
  %v3819 = vpack.c.b16 %v3759, %v3758
  %v3820 = vpack.c.b16 %v3761, %v3760
  %v3821 = vpack.c.b16 %v3763, %v3762
  %v3822 = vpack.c.b16 %v3765, %v3764
  %v3823 = vpack.c.b16 %v3767, %v3766
  %v3824 = vpack.c.b16 %v3769, %v3768
  %v3825 = vpack.c.b16 %v3771, %v3770
  %v3826 = vpack.c.b16 %v3773, %v3772
  %v3827 = vpack.c.b16 %v3775, %v3774
  %v3828 = vpack.c.b16 %v3777, %v3776
  %v3829 = vpack.c.b16 %v3779, %v3778
  %v3830 = vpack.c.b16 %v3781, %v3780
  %v3831 = vpack.c.b16 %v3783, %v3782
  %v3832 = vpack.c.b16 %v3785, %v3784
  %v3833 = vpack.c.b16 %v3787, %v3786
  %v3834 = vpack.c.b16 %v3789, %v3788
  %v3835 = vpack.c.b16 %v3791, %v3790
  %v3836 = vpack.c.b16 %v3793, %v3792
  %v3837 = vpack.c.b16 %v3795, %v3794
  %v3838 = vpack.c.b16 %v3797, %v3796
  %v3839 = vpack.c.b16 %v3799, %v3798
  %v3840 = vpack.c.b16 %v3801, %v3800
  %v3841 = vpack.c.b16 %v3803, %v3802
  %v3842 = vpack.c.b16 %v3805, %v3804
  %v3843 = vpack.c.b16 %v3807, %v3806
  %v3844 = vpack.c.b16 %v3809, %v3808
  %v3845 = vpack.c.b16 %v3811, %v3810
  %v3846 = vpack.c.b16 %v3812, %v3812
  %v3848 = vsel %vm285, %v3813, 0
  %v3851 = vsel %vm285, %v3814, 0
  %v3854 = vsel %vm285, %v3815, 0
  %v3857 = vsel %vm285, %v3816, 0
  %v3860 = vsel %vm285, %v3817, 0
  %v3863 = vsel %vm285, %v3818, 0
  %v3866 = vsel %vm285, %v3819, 0
  %v3869 = vsel %vm285, %v3820, 0
  %v3872 = vsel %vm285, %v3821, 0
  %v3875 = vsel %vm285, %v3822, 0
  %v3878 = vsel %vm285, %v3823, 0
  %v3881 = vsel %vm285, %v3824, 0
  %v3884 = vsel %vm285, %v3825, 0
  %v3887 = vsel %vm285, %v3826, 0
  %v3890 = vsel %vm285, %v3827, 0
  %v3893 = vsel %vm285, %v3828, 0
  %v3896 = vsel %vm285, %v3829, 0
  %v3899 = vsel %vm285, %v3830, 0
  %v3902 = vsel %vm285, %v3831, 0
  %v3905 = vsel %vm285, %v3832, 0
  %v3908 = vsel %vm285, %v3833, 0
  %v3911 = vsel %vm285, %v3834, 0
  %v3914 = vsel %vm285, %v3835, 0
  %v3917 = vsel %vm285, %v3836, 0
  %v3920 = vsel %vm285, %v3837, 0
  %v3923 = vsel %vm285, %v3838, 0
  %v3926 = vsel %vm285, %v3839, 0
  %v3929 = vsel %vm285, %v3840, 0
  %v3932 = vsel %vm285, %v3841, 0
  %v3935 = vsel %vm285, %v3842, 0
  %v3938 = vsel %vm285, %v3843, 0
  %v3941 = vsel %vm285, %v3844, 0
  %v3944 = vsel %vm285, %v3845, 0
  %v3947 = vsel %vm285, %v3846, 0
  %3949 = vmatprep.subr.bf16.mxu0 0
  %3950 = vmatpush1.bf16.msra.mxu0 %v282
  %3951 = vmatprep.subr.bf16.mxu0 0
  %3952 = vmatpush1.bf16.msra.mxu0 %v393
  %3953 = vmatprep.subr.bf16.mxu0 0
  %3954 = vmatpush1.bf16.msra.mxu0 0
  %3955 = vmatprep.subr.bf16.mxu0 0
  %3956 = vmatpush1.bf16.msra.mxu0 0
  %3957 = vmatprep.subr.bf16.mxu0 0
  %3958 = vmatpush1.bf16.msra.mxu0 0
  %3959 = vmatprep.subr.bf16.mxu0 0
  %3960 = vmatpush1.bf16.msra.mxu0 0
  %3961 = vmatprep.subr.bf16.mxu0 0
  %3962 = vmatpush1.bf16.msra.mxu0 0
  %3963 = vmatprep.subr.bf16.mxu0 0
  %3964 = vmatpush1.bf16.msra.mxu0 0
  %3965 = vmatprep.subr.bf16.mxu0 0
  %3966 = vmatpush1.bf16.msra.mxu0 0
  %3967 = vmatprep.subr.bf16.mxu0 0
  %3968 = vmatpush1.bf16.msra.mxu0 0
  %3969 = vmatprep.subr.bf16.mxu0 0
  %3970 = vmatpush1.bf16.msra.mxu0 0
  %3971 = vmatprep.subr.bf16.mxu0 0
  %3972 = vmatpush1.bf16.msra.mxu0 0
  %3973 = vmatprep.subr.bf16.mxu0 0
  %3974 = vmatpush1.bf16.msra.mxu0 0
  %3975 = vmatprep.subr.bf16.mxu0 0
  %3976 = vmatpush1.bf16.msra.mxu0 0
  %3977 = vmatprep.subr.bf16.mxu0 0
  %3978 = vmatpush1.bf16.msra.mxu0 0
  %3979 = vmatprep.subr.bf16.mxu0 0
  %3980 = vmatpush1.bf16.msra.mxu0 0
  %3981 = vmatprep.mubr.bf16.mxu0 0
  %3982 = vmatmul.mubr.bf16.gmra.mrb[0].mxu0 %v3848
  %v3983 = vpop.f32.mrb[0].mxu0
  %v3984 = vadd.f32 0.0, %v3983
  %v3985 = vpop.f32.mrb[0].mxu0
  %v3986 = vpop.f32.mrb[0].mxu0
  %v3987 = vadd.f32 0.0, %v3986
  %v3988 = vpop.f32.mrb[0].mxu0
  %3989 = vmatprep.mubr.bf16.mxu0 0
  %3990 = vmatmul.mubr.bf16.gmra.mrb[0].mxu0 %v3851
  %v3991 = vpop.f32.mrb[0].mxu0
  %v3992 = vadd.f32 0.0, %v3991
  %v3993 = vpop.f32.mrb[0].mxu0
  %v3994 = vpop.f32.mrb[0].mxu0
  %v3995 = vadd.f32 0.0, %v3994
  %v3996 = vpop.f32.mrb[0].mxu0
  %3997 = vmatprep.mubr.bf16.mxu0 0
  %3998 = vmatmul.mubr.bf16.gmra.mrb[0].mxu0 %v3854
  %v3999 = vpop.f32.mrb[0].mxu0
  %v4000 = vadd.f32 0.0, %v3999
  %v4001 = vpop.f32.mrb[0].mxu0
  %v4002 = vpop.f32.mrb[0].mxu0
  %v4003 = vadd.f32 0.0, %v4002
  %v4004 = vpop.f32.mrb[0].mxu0
  %4005 = vmatprep.mubr.bf16.mxu0 0
  %4006 = vmatmul.mubr.bf16.gmra.mrb[0].mxu0 %v3857
  %v4007 = vpop.f32.mrb[0].mxu0
  %v4008 = vadd.f32 0.0, %v4007
  %v4009 = vpop.f32.mrb[0].mxu0
  %v4010 = vpop.f32.mrb[0].mxu0
  %v4011 = vadd.f32 0.0, %v4010
  %v4012 = vpop.f32.mrb[0].mxu0
  %4013 = vmatprep.mubr.bf16.mxu0 0
  %4014 = vmatmul.mubr.bf16.gmra.mrb[0].mxu0 %v3860
  %v4015 = vpop.f32.mrb[0].mxu0
  %v4016 = vadd.f32 0.0, %v4015
  %v4017 = vpop.f32.mrb[0].mxu0
  %v4018 = vpop.f32.mrb[0].mxu0
  %v4019 = vadd.f32 0.0, %v4018
  %v4020 = vpop.f32.mrb[0].mxu0
  %4021 = vmatprep.mubr.bf16.mxu0 0
  %4022 = vmatmul.mubr.bf16.gmra.mrb[0].mxu0 %v3863
  %v4023 = vpop.f32.mrb[0].mxu0
  %v4024 = vadd.f32 0.0, %v4023
  %v4025 = vpop.f32.mrb[0].mxu0
  %v4026 = vpop.f32.mrb[0].mxu0
  %v4027 = vadd.f32 0.0, %v4026
  %v4028 = vpop.f32.mrb[0].mxu0
  %4029 = vmatprep.mubr.bf16.mxu0 0
  %4030 = vmatmul.mubr.bf16.gmra.mrb[0].mxu0 %v3866
  %v4031 = vpop.f32.mrb[0].mxu0
  %v4032 = vadd.f32 0.0, %v4031
  %v4033 = vpop.f32.mrb[0].mxu0
  %v4034 = vpop.f32.mrb[0].mxu0
  %v4035 = vadd.f32 0.0, %v4034
  %v4036 = vpop.f32.mrb[0].mxu0
  %4037 = vmatprep.mubr.bf16.mxu0 0
  %4038 = vmatmul.mubr.bf16.gmra.mrb[0].mxu0 %v3869
  %v4039 = vpop.f32.mrb[0].mxu0
  %v4040 = vadd.f32 0.0, %v4039
  %v4041 = vpop.f32.mrb[0].mxu0
  %v4042 = vpop.f32.mrb[0].mxu0
  %v4043 = vadd.f32 0.0, %v4042
  %v4044 = vpop.f32.mrb[0].mxu0
  %4045 = vmatprep.mubr.bf16.mxu0 0
  %4046 = vmatmul.mubr.bf16.gmra.mrb[0].mxu0 %v3872
  %v4047 = vpop.f32.mrb[0].mxu0
  %v4048 = vadd.f32 0.0, %v4047
  %v4049 = vpop.f32.mrb[0].mxu0
  %v4050 = vpop.f32.mrb[0].mxu0
  %v4051 = vadd.f32 0.0, %v4050
  %v4052 = vpop.f32.mrb[0].mxu0
  %4053 = vmatprep.mubr.bf16.mxu0 0
  %4054 = vmatmul.mubr.bf16.gmra.mrb[0].mxu0 %v3875
  %v4055 = vpop.f32.mrb[0].mxu0
  %v4056 = vadd.f32 0.0, %v4055
  %v4057 = vpop.f32.mrb[0].mxu0
  %v4058 = vpop.f32.mrb[0].mxu0
  %v4059 = vadd.f32 0.0, %v4058
  %v4060 = vpop.f32.mrb[0].mxu0
  %4061 = vmatprep.mubr.bf16.mxu0 0
  %4062 = vmatmul.mubr.bf16.gmra.mrb[0].mxu0 %v3878
  %v4063 = vpop.f32.mrb[0].mxu0
  %v4064 = vadd.f32 0.0, %v4063
  %v4065 = vpop.f32.mrb[0].mxu0
  %v4066 = vpop.f32.mrb[0].mxu0
  %v4067 = vadd.f32 0.0, %v4066
  %v4068 = vpop.f32.mrb[0].mxu0
  %4069 = vmatprep.mubr.bf16.mxu0 0
  %4070 = vmatmul.mubr.bf16.gmra.mrb[0].mxu0 %v3881
  %v4071 = vpop.f32.mrb[0].mxu0
  %v4072 = vadd.f32 0.0, %v4071
  %v4073 = vpop.f32.mrb[0].mxu0
  %v4074 = vpop.f32.mrb[0].mxu0
  %v4075 = vadd.f32 0.0, %v4074
  %v4076 = vpop.f32.mrb[0].mxu0
  %4077 = vmatprep.mubr.bf16.mxu0 0
  %4078 = vmatmul.mubr.bf16.gmra.mrb[0].mxu0 %v3884
  %v4079 = vpop.f32.mrb[0].mxu0
  %v4080 = vadd.f32 0.0, %v4079
  %v4081 = vpop.f32.mrb[0].mxu0
  %v4082 = vpop.f32.mrb[0].mxu0
  %v4083 = vadd.f32 0.0, %v4082
  %v4084 = vpop.f32.mrb[0].mxu0
  %4085 = vmatprep.mubr.bf16.mxu0 0
  %4086 = vmatmul.mubr.bf16.gmra.mrb[0].mxu0 %v3887
  %v4087 = vpop.f32.mrb[0].mxu0
  %v4088 = vadd.f32 0.0, %v4087
  %v4089 = vpop.f32.mrb[0].mxu0
  %v4090 = vpop.f32.mrb[0].mxu0
  %v4091 = vadd.f32 0.0, %v4090
  %v4092 = vpop.f32.mrb[0].mxu0
  %4093 = vmatprep.mubr.bf16.mxu0 0
  %4094 = vmatmul.mubr.bf16.gmra.mrb[0].mxu0 %v3890
  %v4095 = vpop.f32.mrb[0].mxu0
  %v4096 = vadd.f32 0.0, %v4095
  %v4097 = vpop.f32.mrb[0].mxu0
  %v4098 = vpop.f32.mrb[0].mxu0
  %v4099 = vadd.f32 0.0, %v4098
  %v4100 = vpop.f32.mrb[0].mxu0
  %4101 = vmatprep.mubr.bf16.mxu0 0
  %4102 = vmatmul.mubr.bf16.gmra.mrb[0].mxu0 %v3893
  %v4103 = vpop.f32.mrb[0].mxu0
  %v4104 = vadd.f32 0.0, %v4103
  %v4105 = vpop.f32.mrb[0].mxu0
  %v4106 = vpop.f32.mrb[0].mxu0
  %v4107 = vadd.f32 0.0, %v4106
  %v4108 = vpop.f32.mrb[0].mxu0
  %4109 = vmatprep.mubr.bf16.mxu0 0
  %4110 = vmatmul.mubr.bf16.gmra.mrb[0].mxu0 %v3896
  %v4111 = vpop.f32.mrb[0].mxu0
  %v4112 = vadd.f32 0.0, %v4111
  %v4113 = vpop.f32.mrb[0].mxu0
  %v4114 = vpop.f32.mrb[0].mxu0
  %v4115 = vadd.f32 0.0, %v4114
  %v4116 = vpop.f32.mrb[0].mxu0
  %4117 = vmatprep.mubr.bf16.mxu0 0
  %4118 = vmatmul.mubr.bf16.gmra.mrb[0].mxu0 %v3899
  %v4119 = vpop.f32.mrb[0].mxu0
  %v4120 = vadd.f32 0.0, %v4119
  %v4121 = vpop.f32.mrb[0].mxu0
  %v4122 = vpop.f32.mrb[0].mxu0
  %v4123 = vadd.f32 0.0, %v4122
  %v4124 = vpop.f32.mrb[0].mxu0
  %4125 = vmatprep.mubr.bf16.mxu0 0
  %4126 = vmatmul.mubr.bf16.gmra.mrb[0].mxu0 %v3902
  %v4127 = vpop.f32.mrb[0].mxu0
  %v4128 = vadd.f32 0.0, %v4127
  %v4129 = vpop.f32.mrb[0].mxu0
  %v4130 = vpop.f32.mrb[0].mxu0
  %v4131 = vadd.f32 0.0, %v4130
  %v4132 = vpop.f32.mrb[0].mxu0
  %4133 = vmatprep.mubr.bf16.mxu0 0
  %4134 = vmatmul.mubr.bf16.gmra.mrb[0].mxu0 %v3905
  %v4135 = vpop.f32.mrb[0].mxu0
  %v4136 = vadd.f32 0.0, %v4135
  %v4137 = vpop.f32.mrb[0].mxu0
  %v4138 = vpop.f32.mrb[0].mxu0
  %v4139 = vadd.f32 0.0, %v4138
  %v4140 = vpop.f32.mrb[0].mxu0
  %4141 = vmatprep.mubr.bf16.mxu0 0
  %4142 = vmatmul.mubr.bf16.gmra.mrb[0].mxu0 %v3908
  %v4143 = vpop.f32.mrb[0].mxu0
  %v4144 = vadd.f32 0.0, %v4143
  %v4145 = vpop.f32.mrb[0].mxu0
  %v4146 = vpop.f32.mrb[0].mxu0
  %v4147 = vadd.f32 0.0, %v4146
  %v4148 = vpop.f32.mrb[0].mxu0
  %4149 = vmatprep.mubr.bf16.mxu0 0
  %4150 = vmatmul.mubr.bf16.gmra.mrb[0].mxu0 %v3911
  %v4151 = vpop.f32.mrb[0].mxu0
  %v4152 = vadd.f32 0.0, %v4151
  %v4153 = vpop.f32.mrb[0].mxu0
  %v4154 = vpop.f32.mrb[0].mxu0
  %v4155 = vadd.f32 0.0, %v4154
  %v4156 = vpop.f32.mrb[0].mxu0
  %4157 = vmatprep.mubr.bf16.mxu0 0
  %4158 = vmatmul.mubr.bf16.gmra.mrb[0].mxu0 %v3914
  %v4159 = vpop.f32.mrb[0].mxu0
  %v4160 = vadd.f32 0.0, %v4159
  %v4161 = vpop.f32.mrb[0].mxu0
  %v4162 = vpop.f32.mrb[0].mxu0
  %v4163 = vadd.f32 0.0, %v4162
  %v4164 = vpop.f32.mrb[0].mxu0
  %4165 = vmatprep.mubr.bf16.mxu0 0
  %4166 = vmatmul.mubr.bf16.gmra.mrb[0].mxu0 %v3917
  %v4167 = vpop.f32.mrb[0].mxu0
  %v4168 = vadd.f32 0.0, %v4167
  %v4169 = vpop.f32.mrb[0].mxu0
  %v4170 = vpop.f32.mrb[0].mxu0
  %v4171 = vadd.f32 0.0, %v4170
  %v4172 = vpop.f32.mrb[0].mxu0
  %4173 = vmatprep.mubr.bf16.mxu0 0
  %4174 = vmatmul.mubr.bf16.gmra.mrb[0].mxu0 %v3920
  %v4175 = vpop.f32.mrb[0].mxu0
  %v4176 = vadd.f32 0.0, %v4175
  %v4177 = vpop.f32.mrb[0].mxu0
  %v4178 = vpop.f32.mrb[0].mxu0
  %v4179 = vadd.f32 0.0, %v4178
  %v4180 = vpop.f32.mrb[0].mxu0
  %4181 = vmatprep.mubr.bf16.mxu0 0
  %4182 = vmatmul.mubr.bf16.gmra.mrb[0].mxu0 %v3923
  %v4183 = vpop.f32.mrb[0].mxu0
  %v4184 = vadd.f32 0.0, %v4183
  %v4185 = vpop.f32.mrb[0].mxu0
  %v4186 = vpop.f32.mrb[0].mxu0
  %v4187 = vadd.f32 0.0, %v4186
  %v4188 = vpop.f32.mrb[0].mxu0
  %4189 = vmatprep.mubr.bf16.mxu0 0
  %4190 = vmatmul.mubr.bf16.gmra.mrb[0].mxu0 %v3926
  %v4191 = vpop.f32.mrb[0].mxu0
  %v4192 = vadd.f32 0.0, %v4191
  %v4193 = vpop.f32.mrb[0].mxu0
  %v4194 = vpop.f32.mrb[0].mxu0
  %v4195 = vadd.f32 0.0, %v4194
  %v4196 = vpop.f32.mrb[0].mxu0
  %4197 = vmatprep.mubr.bf16.mxu0 0
  %4198 = vmatmul.mubr.bf16.gmra.mrb[0].mxu0 %v3929
  %v4199 = vpop.f32.mrb[0].mxu0
  %v4200 = vadd.f32 0.0, %v4199
  %v4201 = vpop.f32.mrb[0].mxu0
  %v4202 = vpop.f32.mrb[0].mxu0
  %v4203 = vadd.f32 0.0, %v4202
  %v4204 = vpop.f32.mrb[0].mxu0
  %4205 = vmatprep.mubr.bf16.mxu0 0
  %4206 = vmatmul.mubr.bf16.gmra.mrb[0].mxu0 %v3932
  %v4207 = vpop.f32.mrb[0].mxu0
  %v4208 = vadd.f32 0.0, %v4207
  %v4209 = vpop.f32.mrb[0].mxu0
  %v4210 = vpop.f32.mrb[0].mxu0
  %v4211 = vadd.f32 0.0, %v4210
  %v4212 = vpop.f32.mrb[0].mxu0
  %4213 = vmatprep.mubr.bf16.mxu0 0
  %4214 = vmatmul.mubr.bf16.gmra.mrb[0].mxu0 %v3935
  %v4215 = vpop.f32.mrb[0].mxu0
  %v4216 = vadd.f32 0.0, %v4215
  %v4217 = vpop.f32.mrb[0].mxu0
  %v4218 = vpop.f32.mrb[0].mxu0
  %v4219 = vadd.f32 0.0, %v4218
  %v4220 = vpop.f32.mrb[0].mxu0
  %4221 = vmatprep.mubr.bf16.mxu0 0
  %4222 = vmatmul.mubr.bf16.gmra.mrb[0].mxu0 %v3938
  %v4223 = vpop.f32.mrb[0].mxu0
  %v4224 = vadd.f32 0.0, %v4223
  %v4225 = vpop.f32.mrb[0].mxu0
  %v4226 = vpop.f32.mrb[0].mxu0
  %v4227 = vadd.f32 0.0, %v4226
  %v4228 = vpop.f32.mrb[0].mxu0
  %4229 = vmatprep.mubr.bf16.mxu0 0
  %4230 = vmatmul.mubr.bf16.gmra.mrb[0].mxu0 %v3941
  %v4231 = vpop.f32.mrb[0].mxu0
  %v4232 = vadd.f32 0.0, %v4231
  %v4233 = vpop.f32.mrb[0].mxu0
  %v4234 = vpop.f32.mrb[0].mxu0
  %v4235 = vadd.f32 0.0, %v4234
  %v4236 = vpop.f32.mrb[0].mxu0
  %4237 = vmatprep.mubr.bf16.mxu0 0
  %4238 = vmatmul.mubr.bf16.gmra.mrb[0].mxu0 %v3944
  %v4239 = vpop.f32.mrb[0].mxu0
  %v4240 = vadd.f32 0.0, %v4239
  %v4241 = vpop.f32.mrb[0].mxu0
  %v4242 = vpop.f32.mrb[0].mxu0
  %v4243 = vadd.f32 0.0, %v4242
  %v4244 = vpop.f32.mrb[0].mxu0
  %4245 = vmatprep.mubr.bf16.mxu0 0
  %4246 = vmatmul.mubr.bf16.gmra.mrb[0].mxu0 %v3947
  %v4247 = vpop.f32.mrb[0].mxu0
  %v4248 = vadd.f32 0.0, %v4247
  %v4249 = vpop.f32.mrb[0].mxu0
  %v4250 = vpop.f32.mrb[0].mxu0
  %v4251 = vpop.f32.mrb[0].mxu0
  %4252 = vdwg.mxu0
  %v4253 = vmax.f32 %v3342, %v3984
  %v4254 = vmax.f32 %v3345, %v3987
  %v4255 = vmax.f32 %v3350, %v3992
  %v4256 = vmax.f32 %v3353, %v3995
  %v4257 = vmax.f32 %v3358, %v4000
  %v4258 = vmax.f32 %v3361, %v4003
  %v4259 = vmax.f32 %v3366, %v4008
  %v4260 = vmax.f32 %v3369, %v4011
  %v4261 = vmax.f32 %v3374, %v4016
  %v4262 = vmax.f32 %v3377, %v4019
  %v4263 = vmax.f32 %v3382, %v4024
  %v4264 = vmax.f32 %v3385, %v4027
  %v4265 = vmax.f32 %v3390, %v4032
  %v4266 = vmax.f32 %v3393, %v4035
  %v4267 = vmax.f32 %v3398, %v4040
  %v4268 = vmax.f32 %v3401, %v4043
  %v4269 = vmax.f32 %v3406, %v4048
  %v4270 = vmax.f32 %v3409, %v4051
  %v4271 = vmax.f32 %v3414, %v4056
  %v4272 = vmax.f32 %v3417, %v4059
  %v4273 = vmax.f32 %v3422, %v4064
  %v4274 = vmax.f32 %v3425, %v4067
  %v4275 = vmax.f32 %v3430, %v4072
  %v4276 = vmax.f32 %v3433, %v4075
  %v4277 = vmax.f32 %v3438, %v4080
  %v4278 = vmax.f32 %v3441, %v4083
  %v4279 = vmax.f32 %v3446, %v4088
  %v4280 = vmax.f32 %v3449, %v4091
  %v4281 = vmax.f32 %v3454, %v4096
  %v4282 = vmax.f32 %v3457, %v4099
  %v4283 = vmax.f32 %v3462, %v4104
  %v4284 = vmax.f32 %v3465, %v4107
  %v4285 = vmax.f32 %v3470, %v4112
  %v4286 = vmax.f32 %v3473, %v4115
  %v4287 = vmax.f32 %v3478, %v4120
  %v4288 = vmax.f32 %v3481, %v4123
  %v4289 = vmax.f32 %v3486, %v4128
  %v4290 = vmax.f32 %v3489, %v4131
  %v4291 = vmax.f32 %v3494, %v4136
  %v4292 = vmax.f32 %v3497, %v4139
  %v4293 = vmax.f32 %v3502, %v4144
  %v4294 = vmax.f32 %v3505, %v4147
  %v4295 = vmax.f32 %v3510, %v4152
  %v4296 = vmax.f32 %v3513, %v4155
  %v4297 = vmax.f32 %v3518, %v4160
  %v4298 = vmax.f32 %v3521, %v4163
  %v4299 = vmax.f32 %v3526, %v4168
  %v4300 = vmax.f32 %v3529, %v4171
  %v4301 = vmax.f32 %v3534, %v4176
  %v4302 = vmax.f32 %v3537, %v4179
  %v4303 = vmax.f32 %v3542, %v4184
  %v4304 = vmax.f32 %v3545, %v4187
  %v4305 = vmax.f32 %v3550, %v4192
  %v4306 = vmax.f32 %v3553, %v4195
  %v4307 = vmax.f32 %v3558, %v4200
  %v4308 = vmax.f32 %v3561, %v4203
  %v4309 = vmax.f32 %v3566, %v4208
  %v4310 = vmax.f32 %v3569, %v4211
  %v4311 = vmax.f32 %v3574, %v4216
  %v4312 = vmax.f32 %v3577, %v4219
  %v4313 = vmax.f32 %v3582, %v4224
  %v4314 = vmax.f32 %v3585, %v4227
  %v4315 = vmax.f32 %v3590, %v4232
  %v4316 = vmax.f32 %v3593, %v4235
  %v4317 = vmax.f32 %v3598, %v4240
  %v4318 = vmax.f32 %v3601, %v4243
  %v4319 = vmax.f32 %v3606, %v4248
  %s4320 = scalar_lea.vmem %s0, 1340
  %v4321 = vld [vmem:[%s4320] sm:$0xf]
  %v4322 = vld [vmem:[%s4320 + $0x4] sm:$0xf]
  %v4323 = vld [vmem:[%s4320 + $0x8] sm:$0xf]
  %v4324 = vld [vmem:[%s4320 + $0xc] sm:$0xf]
  %v4325 = vld [vmem:[%s4320 + $0x10] sm:$0xf]
  %v4326 = vld [vmem:[%s4320 + $0x14] sm:$0xf]
  %v4327 = vld [vmem:[%s4320 + $0x18] sm:$0xf]
  %v4328 = vld [vmem:[%s4320 + $0x1c] sm:$0xf]
  %v4329 = vld [vmem:[%s4320 + $0x20] sm:$0xf]
  %v4330 = vld [vmem:[%s4320 + $0x24] sm:$0xf]
  %v4331 = vld [vmem:[%s4320 + $0x28] sm:$0xf]
  %v4332 = vld [vmem:[%s4320 + $0x2c] sm:$0xf]
  %v4333 = vld [vmem:[%s4320 + $0x30] sm:$0xf]
  %v4334 = vld [vmem:[%s4320 + $0x34] sm:$0xf]
  %v4335 = vld [vmem:[%s4320 + $0x38] sm:$0xf]
  %v4336 = vld [vmem:[%s4320 + $0x3c] sm:$0xf]
  %v4337 = vld [vmem:[%s4320 + $0x40] sm:$0xf]
  %v4338 = vld [vmem:[%s4320 + $0x44] sm:$0xf]
  %v4339 = vld [vmem:[%s4320 + $0x48] sm:$0xf]
  %v4340 = vld [vmem:[%s4320 + $0x4c] sm:$0xf]
  %v4341 = vld [vmem:[%s4320 + $0x50] sm:$0xf]
  %v4342 = vld [vmem:[%s4320 + $0x54] sm:$0xf]
  %v4343 = vld [vmem:[%s4320 + $0x58] sm:$0xf]
  %v4344 = vld [vmem:[%s4320 + $0x5c] sm:$0xf]
  %v4345 = vld [vmem:[%s4320 + $0x60] sm:$0xf]
  %v4346 = vld [vmem:[%s4320 + $0x64] sm:$0xf]
  %v4347 = vld [vmem:[%s4320 + $0x68] sm:$0xf]
  %v4348 = vld [vmem:[%s4320 + $0x6c] sm:$0xf]
  %v4349 = vld [vmem:[%s4320 + $0x70] sm:$0xf]
  %v4350 = vld [vmem:[%s4320 + $0x74] sm:$0xf]
  %v4351 = vld [vmem:[%s4320 + $0x78] sm:$0xf]
  %v4352 = vld [vmem:[%s4320 + $0x7c] sm:$0xf]
  %v4353 = vld [vmem:[%s4320 + $0x80] sm:$0xf]
  %v4354 = vld [vmem:[%s4320 + $0x84] sm:$0xf]
  %v4355 = vld [vmem:[%s4320 + $0x88] sm:$0xf]
  %v4356 = vld [vmem:[%s4320 + $0x8c] sm:$0xf]
  %v4357 = vld [vmem:[%s4320 + $0x90] sm:$0xf]
  %v4358 = vld [vmem:[%s4320 + $0x94] sm:$0xf]
  %v4359 = vld [vmem:[%s4320 + $0x98] sm:$0xf]
  %v4360 = vld [vmem:[%s4320 + $0x9c] sm:$0xf]
  %v4361 = vld [vmem:[%s4320 + $0xa0] sm:$0xf]
  %v4362 = vld [vmem:[%s4320 + $0xa4] sm:$0xf]
  %v4363 = vld [vmem:[%s4320 + $0xa8] sm:$0xf]
  %v4364 = vld [vmem:[%s4320 + $0xac] sm:$0xf]
  %v4365 = vld [vmem:[%s4320 + $0xb0] sm:$0xf]
  %v4366 = vld [vmem:[%s4320 + $0xb4] sm:$0xf]
  %v4367 = vld [vmem:[%s4320 + $0xb8] sm:$0xf]
  %v4368 = vld [vmem:[%s4320 + $0xbc] sm:$0xf]
  %v4369 = vld [vmem:[%s4320 + $0xc0] sm:$0xf]
  %v4370 = vld [vmem:[%s4320 + $0xc4] sm:$0xf]
  %v4371 = vld [vmem:[%s4320 + $0xc8] sm:$0xf]
  %v4372 = vld [vmem:[%s4320 + $0xcc] sm:$0xf]
  %v4373 = vld [vmem:[%s4320 + $0xd0] sm:$0xf]
  %v4374 = vld [vmem:[%s4320 + $0xd4] sm:$0xf]
  %v4375 = vld [vmem:[%s4320 + $0xd8] sm:$0xf]
  %v4376 = vld [vmem:[%s4320 + $0xdc] sm:$0xf]
  %v4377 = vld [vmem:[%s4320 + $0xe0] sm:$0xf]
  %v4378 = vld [vmem:[%s4320 + $0xe4] sm:$0xf]
  %v4379 = vld [vmem:[%s4320 + $0xe8] sm:$0xf]
  %v4380 = vld [vmem:[%s4320 + $0xec] sm:$0xf]
  %v4381 = vld [vmem:[%s4320 + $0xf0] sm:$0xf]
  %v4382 = vld [vmem:[%s4320 + $0xf4] sm:$0xf]
  %v4383 = vld [vmem:[%s4320 + $0xf8] sm:$0xf]
  %v4384 = vld [vmem:[%s4320 + $0xfc] sm:$0xf]
  %v4385 = vld [vmem:[%s4320 + $0x100] sm:$0xf]
  %v4386 = vld [vmem:[%s4320 + $0x104] sm:$0xf]
  %v4387 = vld [vmem:[%s4320 + $0x108] sm:$0x1]
  %v4455 = vunpack.c.l.b16 %v4321
  %v4456 = vunpack.c.l.b16 %v4322
  %v4457 = vunpack.c.l.b16 %v4323
  %v4458 = vunpack.c.l.b16 %v4324
  %v4459 = vunpack.c.l.b16 %v4325
  %v4460 = vunpack.c.l.b16 %v4326
  %v4461 = vunpack.c.l.b16 %v4327
  %v4462 = vunpack.c.l.b16 %v4328
  %v4463 = vunpack.c.l.b16 %v4329
  %v4464 = vunpack.c.l.b16 %v4330
  %v4465 = vunpack.c.l.b16 %v4331
  %v4466 = vunpack.c.l.b16 %v4332
  %v4467 = vunpack.c.l.b16 %v4333
  %v4468 = vunpack.c.l.b16 %v4334
  %v4469 = vunpack.c.l.b16 %v4335
  %v4470 = vunpack.c.l.b16 %v4336
  %v4471 = vunpack.c.l.b16 %v4337
  %v4472 = vunpack.c.l.b16 %v4338
  %v4473 = vunpack.c.l.b16 %v4339
  %v4474 = vunpack.c.l.b16 %v4340
  %v4475 = vunpack.c.l.b16 %v4341
  %v4476 = vunpack.c.l.b16 %v4342
  %v4477 = vunpack.c.l.b16 %v4343
  %v4478 = vunpack.c.l.b16 %v4344
  %v4479 = vunpack.c.l.b16 %v4345
  %v4480 = vunpack.c.l.b16 %v4346
  %v4481 = vunpack.c.l.b16 %v4347
  %v4482 = vunpack.c.l.b16 %v4348
  %v4483 = vunpack.c.l.b16 %v4349
  %v4484 = vunpack.c.l.b16 %v4350
  %v4485 = vunpack.c.l.b16 %v4351
  %v4486 = vunpack.c.l.b16 %v4352
  %v4487 = vunpack.c.l.b16 %v4353
  %v4488 = vunpack.c.l.b16 %v4354
  %v4489 = vunpack.c.l.b16 %v4355
  %v4490 = vunpack.c.l.b16 %v4356
  %v4491 = vunpack.c.l.b16 %v4357
  %v4492 = vunpack.c.l.b16 %v4358
  %v4493 = vunpack.c.l.b16 %v4359
  %v4494 = vunpack.c.l.b16 %v4360
  %v4495 = vunpack.c.l.b16 %v4361
  %v4496 = vunpack.c.l.b16 %v4362
  %v4497 = vunpack.c.l.b16 %v4363
  %v4498 = vunpack.c.l.b16 %v4364
  %v4499 = vunpack.c.l.b16 %v4365
  %v4500 = vunpack.c.l.b16 %v4366
  %v4501 = vunpack.c.l.b16 %v4367
  %v4502 = vunpack.c.l.b16 %v4368
  %v4503 = vunpack.c.l.b16 %v4369
  %v4504 = vunpack.c.l.b16 %v4370
  %v4505 = vunpack.c.l.b16 %v4371
  %v4506 = vunpack.c.l.b16 %v4372
  %v4507 = vunpack.c.l.b16 %v4373
  %v4508 = vunpack.c.l.b16 %v4374
  %v4509 = vunpack.c.l.b16 %v4375
  %v4510 = vunpack.c.l.b16 %v4376
  %v4511 = vunpack.c.l.b16 %v4377
  %v4512 = vunpack.c.l.b16 %v4378
  %v4513 = vunpack.c.l.b16 %v4379
  %v4514 = vunpack.c.l.b16 %v4380
  %v4515 = vunpack.c.l.b16 %v4381
  %v4516 = vunpack.c.l.b16 %v4382
  %v4517 = vunpack.c.l.b16 %v4383
  %v4518 = vunpack.c.l.b16 %v4384
  %v4519 = vunpack.c.l.b16 %v4385
  %v4520 = vunpack.c.l.b16 %v4386
  %v4521 = vunpack.c.l.b16 %v4387
  %v4522 = vpack.c.b16 %v4456, %v4455
  %v4523 = vpack.c.b16 %v4458, %v4457
  %v4524 = vpack.c.b16 %v4460, %v4459
  %v4525 = vpack.c.b16 %v4462, %v4461
  %v4526 = vpack.c.b16 %v4464, %v4463
  %v4527 = vpack.c.b16 %v4466, %v4465
  %v4528 = vpack.c.b16 %v4468, %v4467
  %v4529 = vpack.c.b16 %v4470, %v4469
  %v4530 = vpack.c.b16 %v4472, %v4471
  %v4531 = vpack.c.b16 %v4474, %v4473
  %v4532 = vpack.c.b16 %v4476, %v4475
  %v4533 = vpack.c.b16 %v4478, %v4477
  %v4534 = vpack.c.b16 %v4480, %v4479
  %v4535 = vpack.c.b16 %v4482, %v4481
  %v4536 = vpack.c.b16 %v4484, %v4483
  %v4537 = vpack.c.b16 %v4486, %v4485
  %v4538 = vpack.c.b16 %v4488, %v4487
  %v4539 = vpack.c.b16 %v4490, %v4489
  %v4540 = vpack.c.b16 %v4492, %v4491
  %v4541 = vpack.c.b16 %v4494, %v4493
  %v4542 = vpack.c.b16 %v4496, %v4495
  %v4543 = vpack.c.b16 %v4498, %v4497
  %v4544 = vpack.c.b16 %v4500, %v4499
  %v4545 = vpack.c.b16 %v4502, %v4501
  %v4546 = vpack.c.b16 %v4504, %v4503
  %v4547 = vpack.c.b16 %v4506, %v4505
  %v4548 = vpack.c.b16 %v4508, %v4507
  %v4549 = vpack.c.b16 %v4510, %v4509
  %v4550 = vpack.c.b16 %v4512, %v4511
  %v4551 = vpack.c.b16 %v4514, %v4513
  %v4552 = vpack.c.b16 %v4516, %v4515
  %v4553 = vpack.c.b16 %v4518, %v4517
  %v4554 = vpack.c.b16 %v4520, %v4519
  %v4555 = vpack.c.b16 %v4521, %v4521
  %v4557 = vsel %vm285, %v4522, 0
  %v4560 = vsel %vm285, %v4523, 0
  %v4563 = vsel %vm285, %v4524, 0
  %v4566 = vsel %vm285, %v4525, 0
  %v4569 = vsel %vm285, %v4526, 0
  %v4572 = vsel %vm285, %v4527, 0
  %v4575 = vsel %vm285, %v4528, 0
  %v4578 = vsel %vm285, %v4529, 0
  %v4581 = vsel %vm285, %v4530, 0
  %v4584 = vsel %vm285, %v4531, 0
  %v4587 = vsel %vm285, %v4532, 0
  %v4590 = vsel %vm285, %v4533, 0
  %v4593 = vsel %vm285, %v4534, 0
  %v4596 = vsel %vm285, %v4535, 0
  %v4599 = vsel %vm285, %v4536, 0
  %v4602 = vsel %vm285, %v4537, 0
  %v4605 = vsel %vm285, %v4538, 0
  %v4608 = vsel %vm285, %v4539, 0
  %v4611 = vsel %vm285, %v4540, 0
  %v4614 = vsel %vm285, %v4541, 0
  %v4617 = vsel %vm285, %v4542, 0
  %v4620 = vsel %vm285, %v4543, 0
  %v4623 = vsel %vm285, %v4544, 0
  %v4626 = vsel %vm285, %v4545, 0
  %v4629 = vsel %vm285, %v4546, 0
  %v4632 = vsel %vm285, %v4547, 0
  %v4635 = vsel %vm285, %v4548, 0
  %v4638 = vsel %vm285, %v4549, 0
  %v4641 = vsel %vm285, %v4550, 0
  %v4644 = vsel %vm285, %v4551, 0
  %v4647 = vsel %vm285, %v4552, 0
  %v4650 = vsel %vm285, %v4553, 0
  %v4653 = vsel %vm285, %v4554, 0
  %v4656 = vsel %vm285, %v4555, 0
  %4658 = vmatprep.subr.bf16.mxu0 0
  %4659 = vmatpush1.bf16.msra.mxu0 %v282
  %4660 = vmatprep.subr.bf16.mxu0 0
  %4661 = vmatpush1.bf16.msra.mxu0 %v393
  %4662 = vmatprep.subr.bf16.mxu0 0
  %4663 = vmatpush1.bf16.msra.mxu0 0
  %4664 = vmatprep.subr.bf16.mxu0 0
  %4665 = vmatpush1.bf16.msra.mxu0 0
  %4666 = vmatprep.subr.bf16.mxu0 0
  %4667 = vmatpush1.bf16.msra.mxu0 0
  %4668 = vmatprep.subr.bf16.mxu0 0
  %4669 = vmatpush1.bf16.msra.mxu0 0
  %4670 = vmatprep.subr.bf16.mxu0 0
  %4671 = vmatpush1.bf16.msra.mxu0 0
  %4672 = vmatprep.subr.bf16.mxu0 0
  %4673 = vmatpush1.bf16.msra.mxu0 0
  %4674 = vmatprep.subr.bf16.mxu0 0
  %4675 = vmatpush1.bf16.msra.mxu0 0
  %4676 = vmatprep.subr.bf16.mxu0 0
  %4677 = vmatpush1.bf16.msra.mxu0 0
  %4678 = vmatprep.subr.bf16.mxu0 0
  %4679 = vmatpush1.bf16.msra.mxu0 0
  %4680 = vmatprep.subr.bf16.mxu0 0
  %4681 = vmatpush1.bf16.msra.mxu0 0
  %4682 = vmatprep.subr.bf16.mxu0 0
  %4683 = vmatpush1.bf16.msra.mxu0 0
  %4684 = vmatprep.subr.bf16.mxu0 0
  %4685 = vmatpush1.bf16.msra.mxu0 0
  %4686 = vmatprep.subr.bf16.mxu0 0
  %4687 = vmatpush1.bf16.msra.mxu0 0
  %4688 = vmatprep.subr.bf16.mxu0 0
  %4689 = vmatpush1.bf16.msra.mxu0 0
  %4690 = vmatprep.mubr.bf16.mxu0 0
  %4691 = vmatmul.mubr.bf16.gmra.mrb[0].mxu0 %v4557
  %v4692 = vpop.f32.mrb[0].mxu0
  %v4693 = vadd.f32 0.0, %v4692
  %v4694 = vpop.f32.mrb[0].mxu0
  %v4695 = vpop.f32.mrb[0].mxu0
  %v4696 = vadd.f32 0.0, %v4695
  %v4697 = vpop.f32.mrb[0].mxu0
  %4698 = vmatprep.mubr.bf16.mxu0 0
  %4699 = vmatmul.mubr.bf16.gmra.mrb[0].mxu0 %v4560
  %v4700 = vpop.f32.mrb[0].mxu0
  %v4701 = vadd.f32 0.0, %v4700
  %v4702 = vpop.f32.mrb[0].mxu0
  %v4703 = vpop.f32.mrb[0].mxu0
  %v4704 = vadd.f32 0.0, %v4703
  %v4705 = vpop.f32.mrb[0].mxu0
  %4706 = vmatprep.mubr.bf16.mxu0 0
  %4707 = vmatmul.mubr.bf16.gmra.mrb[0].mxu0 %v4563
  %v4708 = vpop.f32.mrb[0].mxu0
  %v4709 = vadd.f32 0.0, %v4708
  %v4710 = vpop.f32.mrb[0].mxu0
  %v4711 = vpop.f32.mrb[0].mxu0
  %v4712 = vadd.f32 0.0, %v4711
  %v4713 = vpop.f32.mrb[0].mxu0
  %4714 = vmatprep.mubr.bf16.mxu0 0
  %4715 = vmatmul.mubr.bf16.gmra.mrb[0].mxu0 %v4566
  %v4716 = vpop.f32.mrb[0].mxu0
  %v4717 = vadd.f32 0.0, %v4716
  %v4718 = vpop.f32.mrb[0].mxu0
  %v4719 = vpop.f32.mrb[0].mxu0
  %v4720 = vadd.f32 0.0, %v4719
  %v4721 = vpop.f32.mrb[0].mxu0
  %4722 = vmatprep.mubr.bf16.mxu0 0
  %4723 = vmatmul.mubr.bf16.gmra.mrb[0].mxu0 %v4569
  %v4724 = vpop.f32.mrb[0].mxu0
  %v4725 = vadd.f32 0.0, %v4724
  %v4726 = vpop.f32.mrb[0].mxu0
  %v4727 = vpop.f32.mrb[0].mxu0
  %v4728 = vadd.f32 0.0, %v4727
  %v4729 = vpop.f32.mrb[0].mxu0
  %4730 = vmatprep.mubr.bf16.mxu0 0
  %4731 = vmatmul.mubr.bf16.gmra.mrb[0].mxu0 %v4572
  %v4732 = vpop.f32.mrb[0].mxu0
  %v4733 = vadd.f32 0.0, %v4732
  %v4734 = vpop.f32.mrb[0].mxu0
  %v4735 = vpop.f32.mrb[0].mxu0
  %v4736 = vadd.f32 0.0, %v4735
  %v4737 = vpop.f32.mrb[0].mxu0
  %4738 = vmatprep.mubr.bf16.mxu0 0
  %4739 = vmatmul.mubr.bf16.gmra.mrb[0].mxu0 %v4575
  %v4740 = vpop.f32.mrb[0].mxu0
  %v4741 = vadd.f32 0.0, %v4740
  %v4742 = vpop.f32.mrb[0].mxu0
  %v4743 = vpop.f32.mrb[0].mxu0
  %v4744 = vadd.f32 0.0, %v4743
  %v4745 = vpop.f32.mrb[0].mxu0
  %4746 = vmatprep.mubr.bf16.mxu0 0
  %4747 = vmatmul.mubr.bf16.gmra.mrb[0].mxu0 %v4578
  %v4748 = vpop.f32.mrb[0].mxu0
  %v4749 = vadd.f32 0.0, %v4748
  %v4750 = vpop.f32.mrb[0].mxu0
  %v4751 = vpop.f32.mrb[0].mxu0
  %v4752 = vadd.f32 0.0, %v4751
  %v4753 = vpop.f32.mrb[0].mxu0
  %4754 = vmatprep.mubr.bf16.mxu0 0
  %4755 = vmatmul.mubr.bf16.gmra.mrb[0].mxu0 %v4581
  %v4756 = vpop.f32.mrb[0].mxu0
  %v4757 = vadd.f32 0.0, %v4756
  %v4758 = vpop.f32.mrb[0].mxu0
  %v4759 = vpop.f32.mrb[0].mxu0
  %v4760 = vadd.f32 0.0, %v4759
  %v4761 = vpop.f32.mrb[0].mxu0
  %4762 = vmatprep.mubr.bf16.mxu0 0
  %4763 = vmatmul.mubr.bf16.gmra.mrb[0].mxu0 %v4584
  %v4764 = vpop.f32.mrb[0].mxu0
  %v4765 = vadd.f32 0.0, %v4764
  %v4766 = vpop.f32.mrb[0].mxu0
  %v4767 = vpop.f32.mrb[0].mxu0
  %v4768 = vadd.f32 0.0, %v4767
  %v4769 = vpop.f32.mrb[0].mxu0
  %4770 = vmatprep.mubr.bf16.mxu0 0
  %4771 = vmatmul.mubr.bf16.gmra.mrb[0].mxu0 %v4587
  %v4772 = vpop.f32.mrb[0].mxu0
  %v4773 = vadd.f32 0.0, %v4772
  %v4774 = vpop.f32.mrb[0].mxu0
  %v4775 = vpop.f32.mrb[0].mxu0
  %v4776 = vadd.f32 0.0, %v4775
  %v4777 = vpop.f32.mrb[0].mxu0
  %4778 = vmatprep.mubr.bf16.mxu0 0
  %4779 = vmatmul.mubr.bf16.gmra.mrb[0].mxu0 %v4590
  %v4780 = vpop.f32.mrb[0].mxu0
  %v4781 = vadd.f32 0.0, %v4780
  %v4782 = vpop.f32.mrb[0].mxu0
  %v4783 = vpop.f32.mrb[0].mxu0
  %v4784 = vadd.f32 0.0, %v4783
  %v4785 = vpop.f32.mrb[0].mxu0
  %4786 = vmatprep.mubr.bf16.mxu0 0
  %4787 = vmatmul.mubr.bf16.gmra.mrb[0].mxu0 %v4593
  %v4788 = vpop.f32.mrb[0].mxu0
  %v4789 = vadd.f32 0.0, %v4788
  %v4790 = vpop.f32.mrb[0].mxu0
  %v4791 = vpop.f32.mrb[0].mxu0
  %v4792 = vadd.f32 0.0, %v4791
  %v4793 = vpop.f32.mrb[0].mxu0
  %4794 = vmatprep.mubr.bf16.mxu0 0
  %4795 = vmatmul.mubr.bf16.gmra.mrb[0].mxu0 %v4596
  %v4796 = vpop.f32.mrb[0].mxu0
  %v4797 = vadd.f32 0.0, %v4796
  %v4798 = vpop.f32.mrb[0].mxu0
  %v4799 = vpop.f32.mrb[0].mxu0
  %v4800 = vadd.f32 0.0, %v4799
  %v4801 = vpop.f32.mrb[0].mxu0
  %4802 = vmatprep.mubr.bf16.mxu0 0
  %4803 = vmatmul.mubr.bf16.gmra.mrb[0].mxu0 %v4599
  %v4804 = vpop.f32.mrb[0].mxu0
  %v4805 = vadd.f32 0.0, %v4804
  %v4806 = vpop.f32.mrb[0].mxu0
  %v4807 = vpop.f32.mrb[0].mxu0
  %v4808 = vadd.f32 0.0, %v4807
  %v4809 = vpop.f32.mrb[0].mxu0
  %4810 = vmatprep.mubr.bf16.mxu0 0
  %4811 = vmatmul.mubr.bf16.gmra.mrb[0].mxu0 %v4602
  %v4812 = vpop.f32.mrb[0].mxu0
  %v4813 = vadd.f32 0.0, %v4812
  %v4814 = vpop.f32.mrb[0].mxu0
  %v4815 = vpop.f32.mrb[0].mxu0
  %v4816 = vadd.f32 0.0, %v4815
  %v4817 = vpop.f32.mrb[0].mxu0
  %4818 = vmatprep.mubr.bf16.mxu0 0
  %4819 = vmatmul.mubr.bf16.gmra.mrb[0].mxu0 %v4605
  %v4820 = vpop.f32.mrb[0].mxu0
  %v4821 = vadd.f32 0.0, %v4820
  %v4822 = vpop.f32.mrb[0].mxu0
  %v4823 = vpop.f32.mrb[0].mxu0
  %v4824 = vadd.f32 0.0, %v4823
  %v4825 = vpop.f32.mrb[0].mxu0
  %4826 = vmatprep.mubr.bf16.mxu0 0
  %4827 = vmatmul.mubr.bf16.gmra.mrb[0].mxu0 %v4608
  %v4828 = vpop.f32.mrb[0].mxu0
  %v4829 = vadd.f32 0.0, %v4828
  %v4830 = vpop.f32.mrb[0].mxu0
  %v4831 = vpop.f32.mrb[0].mxu0
  %v4832 = vadd.f32 0.0, %v4831
  %v4833 = vpop.f32.mrb[0].mxu0
  %4834 = vmatprep.mubr.bf16.mxu0 0
  %4835 = vmatmul.mubr.bf16.gmra.mrb[0].mxu0 %v4611
  %v4836 = vpop.f32.mrb[0].mxu0
  %v4837 = vadd.f32 0.0, %v4836
  %v4838 = vpop.f32.mrb[0].mxu0
  %v4839 = vpop.f32.mrb[0].mxu0
  %v4840 = vadd.f32 0.0, %v4839
  %v4841 = vpop.f32.mrb[0].mxu0
  %4842 = vmatprep.mubr.bf16.mxu0 0
  %4843 = vmatmul.mubr.bf16.gmra.mrb[0].mxu0 %v4614
  %v4844 = vpop.f32.mrb[0].mxu0
  %v4845 = vadd.f32 0.0, %v4844
  %v4846 = vpop.f32.mrb[0].mxu0
  %v4847 = vpop.f32.mrb[0].mxu0
  %v4848 = vadd.f32 0.0, %v4847
  %v4849 = vpop.f32.mrb[0].mxu0
  %4850 = vmatprep.mubr.bf16.mxu0 0
  %4851 = vmatmul.mubr.bf16.gmra.mrb[0].mxu0 %v4617
  %v4852 = vpop.f32.mrb[0].mxu0
  %v4853 = vadd.f32 0.0, %v4852
  %v4854 = vpop.f32.mrb[0].mxu0
  %v4855 = vpop.f32.mrb[0].mxu0
  %v4856 = vadd.f32 0.0, %v4855
  %v4857 = vpop.f32.mrb[0].mxu0
  %4858 = vmatprep.mubr.bf16.mxu0 0
  %4859 = vmatmul.mubr.bf16.gmra.mrb[0].mxu0 %v4620
  %v4860 = vpop.f32.mrb[0].mxu0
  %v4861 = vadd.f32 0.0, %v4860
  %v4862 = vpop.f32.mrb[0].mxu0
  %v4863 = vpop.f32.mrb[0].mxu0
  %v4864 = vadd.f32 0.0, %v4863
  %v4865 = vpop.f32.mrb[0].mxu0
  %4866 = vmatprep.mubr.bf16.mxu0 0
  %4867 = vmatmul.mubr.bf16.gmra.mrb[0].mxu0 %v4623
  %v4868 = vpop.f32.mrb[0].mxu0
  %v4869 = vadd.f32 0.0, %v4868
  %v4870 = vpop.f32.mrb[0].mxu0
  %v4871 = vpop.f32.mrb[0].mxu0
  %v4872 = vadd.f32 0.0, %v4871
  %v4873 = vpop.f32.mrb[0].mxu0
  %4874 = vmatprep.mubr.bf16.mxu0 0
  %4875 = vmatmul.mubr.bf16.gmra.mrb[0].mxu0 %v4626
  %v4876 = vpop.f32.mrb[0].mxu0
  %v4877 = vadd.f32 0.0, %v4876
  %v4878 = vpop.f32.mrb[0].mxu0
  %v4879 = vpop.f32.mrb[0].mxu0
  %v4880 = vadd.f32 0.0, %v4879
  %v4881 = vpop.f32.mrb[0].mxu0
  %4882 = vmatprep.mubr.bf16.mxu0 0
  %4883 = vmatmul.mubr.bf16.gmra.mrb[0].mxu0 %v4629
  %v4884 = vpop.f32.mrb[0].mxu0
  %v4885 = vadd.f32 0.0, %v4884
  %v4886 = vpop.f32.mrb[0].mxu0
  %v4887 = vpop.f32.mrb[0].mxu0
  %v4888 = vadd.f32 0.0, %v4887
  %v4889 = vpop.f32.mrb[0].mxu0
  %4890 = vmatprep.mubr.bf16.mxu0 0
  %4891 = vmatmul.mubr.bf16.gmra.mrb[0].mxu0 %v4632
  %v4892 = vpop.f32.mrb[0].mxu0
  %v4893 = vadd.f32 0.0, %v4892
  %v4894 = vpop.f32.mrb[0].mxu0
  %v4895 = vpop.f32.mrb[0].mxu0
  %v4896 = vadd.f32 0.0, %v4895
  %v4897 = vpop.f32.mrb[0].mxu0
  %4898 = vmatprep.mubr.bf16.mxu0 0
  %4899 = vmatmul.mubr.bf16.gmra.mrb[0].mxu0 %v4635
  %v4900 = vpop.f32.mrb[0].mxu0
  %v4901 = vadd.f32 0.0, %v4900
  %v4902 = vpop.f32.mrb[0].mxu0
  %v4903 = vpop.f32.mrb[0].mxu0
  %v4904 = vadd.f32 0.0, %v4903
  %v4905 = vpop.f32.mrb[0].mxu0
  %4906 = vmatprep.mubr.bf16.mxu0 0
  %4907 = vmatmul.mubr.bf16.gmra.mrb[0].mxu0 %v4638
  %v4908 = vpop.f32.mrb[0].mxu0
  %v4909 = vadd.f32 0.0, %v4908
  %v4910 = vpop.f32.mrb[0].mxu0
  %v4911 = vpop.f32.mrb[0].mxu0
  %v4912 = vadd.f32 0.0, %v4911
  %v4913 = vpop.f32.mrb[0].mxu0
  %4914 = vmatprep.mubr.bf16.mxu0 0
  %4915 = vmatmul.mubr.bf16.gmra.mrb[0].mxu0 %v4641
  %v4916 = vpop.f32.mrb[0].mxu0
  %v4917 = vadd.f32 0.0, %v4916
  %v4918 = vpop.f32.mrb[0].mxu0
  %v4919 = vpop.f32.mrb[0].mxu0
  %v4920 = vadd.f32 0.0, %v4919
  %v4921 = vpop.f32.mrb[0].mxu0
  %4922 = vmatprep.mubr.bf16.mxu0 0
  %4923 = vmatmul.mubr.bf16.gmra.mrb[0].mxu0 %v4644
  %v4924 = vpop.f32.mrb[0].mxu0
  %v4925 = vadd.f32 0.0, %v4924
  %v4926 = vpop.f32.mrb[0].mxu0
  %v4927 = vpop.f32.mrb[0].mxu0
  %v4928 = vadd.f32 0.0, %v4927
  %v4929 = vpop.f32.mrb[0].mxu0
  %4930 = vmatprep.mubr.bf16.mxu0 0
  %4931 = vmatmul.mubr.bf16.gmra.mrb[0].mxu0 %v4647
  %v4932 = vpop.f32.mrb[0].mxu0
  %v4933 = vadd.f32 0.0, %v4932
  %v4934 = vpop.f32.mrb[0].mxu0
  %v4935 = vpop.f32.mrb[0].mxu0
  %v4936 = vadd.f32 0.0, %v4935
  %v4937 = vpop.f32.mrb[0].mxu0
  %4938 = vmatprep.mubr.bf16.mxu0 0
  %4939 = vmatmul.mubr.bf16.gmra.mrb[0].mxu0 %v4650
  %v4940 = vpop.f32.mrb[0].mxu0
  %v4941 = vadd.f32 0.0, %v4940
  %v4942 = vpop.f32.mrb[0].mxu0
  %v4943 = vpop.f32.mrb[0].mxu0
  %v4944 = vadd.f32 0.0, %v4943
  %v4945 = vpop.f32.mrb[0].mxu0
  %4946 = vmatprep.mubr.bf16.mxu0 0
  %4947 = vmatmul.mubr.bf16.gmra.mrb[0].mxu0 %v4653
  %v4948 = vpop.f32.mrb[0].mxu0
  %v4949 = vadd.f32 0.0, %v4948
  %v4950 = vpop.f32.mrb[0].mxu0
  %v4951 = vpop.f32.mrb[0].mxu0
  %v4952 = vadd.f32 0.0, %v4951
  %v4953 = vpop.f32.mrb[0].mxu0
  %4954 = vmatprep.mubr.bf16.mxu0 0
  %4955 = vmatmul.mubr.bf16.gmra.mrb[0].mxu0 %v4656
  %v4956 = vpop.f32.mrb[0].mxu0
  %v4957 = vadd.f32 0.0, %v4956
  %v4958 = vpop.f32.mrb[0].mxu0
  %v4959 = vpop.f32.mrb[0].mxu0
  %v4960 = vpop.f32.mrb[0].mxu0
  %4961 = vdwg.mxu0
  %v4962 = vmax.f32 %v4253, %v4693
  %v4963 = vmax.f32 %v4254, %v4696
  %v4964 = vmax.f32 %v4255, %v4701
  %v4965 = vmax.f32 %v4256, %v4704
  %v4966 = vmax.f32 %v4257, %v4709
  %v4967 = vmax.f32 %v4258, %v4712
  %v4968 = vmax.f32 %v4259, %v4717
  %v4969 = vmax.f32 %v4260, %v4720
  %v4970 = vmax.f32 %v4261, %v4725
  %v4971 = vmax.f32 %v4262, %v4728
  %v4972 = vmax.f32 %v4263, %v4733
  %v4973 = vmax.f32 %v4264, %v4736
  %v4974 = vmax.f32 %v4265, %v4741
  %v4975 = vmax.f32 %v4266, %v4744
  %v4976 = vmax.f32 %v4267, %v4749
  %v4977 = vmax.f32 %v4268, %v4752
  %v4978 = vmax.f32 %v4269, %v4757
  %v4979 = vmax.f32 %v4270, %v4760
  %v4980 = vmax.f32 %v4271, %v4765
  %v4981 = vmax.f32 %v4272, %v4768
  %v4982 = vmax.f32 %v4273, %v4773
  %v4983 = vmax.f32 %v4274, %v4776
  %v4984 = vmax.f32 %v4275, %v4781
  %v4985 = vmax.f32 %v4276, %v4784
  %v4986 = vmax.f32 %v4277, %v4789
  %v4987 = vmax.f32 %v4278, %v4792
  %v4988 = vmax.f32 %v4279, %v4797
  %v4989 = vmax.f32 %v4280, %v4800
  %v4990 = vmax.f32 %v4281, %v4805
  %v4991 = vmax.f32 %v4282, %v4808
  %v4992 = vmax.f32 %v4283, %v4813
  %v4993 = vmax.f32 %v4284, %v4816
  %v4994 = vmax.f32 %v4285, %v4821
  %v4995 = vmax.f32 %v4286, %v4824
  %v4996 = vmax.f32 %v4287, %v4829
  %v4997 = vmax.f32 %v4288, %v4832
  %v4998 = vmax.f32 %v4289, %v4837
  %v4999 = vmax.f32 %v4290, %v4840
  %v5000 = vmax.f32 %v4291, %v4845
  %v5001 = vmax.f32 %v4292, %v4848
  %v5002 = vmax.f32 %v4293, %v4853
  %v5003 = vmax.f32 %v4294, %v4856
  %v5004 = vmax.f32 %v4295, %v4861
  %v5005 = vmax.f32 %v4296, %v4864
  %v5006 = vmax.f32 %v4297, %v4869
  %v5007 = vmax.f32 %v4298, %v4872
  %v5008 = vmax.f32 %v4299, %v4877
  %v5009 = vmax.f32 %v4300, %v4880
  %v5010 = vmax.f32 %v4301, %v4885
  %v5011 = vmax.f32 %v4302, %v4888
  %v5012 = vmax.f32 %v4303, %v4893
  %v5013 = vmax.f32 %v4304, %v4896
  %v5014 = vmax.f32 %v4305, %v4901
  %v5015 = vmax.f32 %v4306, %v4904
  %v5016 = vmax.f32 %v4307, %v4909
  %v5017 = vmax.f32 %v4308, %v4912
  %v5018 = vmax.f32 %v4309, %v4917
  %v5019 = vmax.f32 %v4310, %v4920
  %v5020 = vmax.f32 %v4311, %v4925
  %v5021 = vmax.f32 %v4312, %v4928
  %v5022 = vmax.f32 %v4313, %v4933
  %v5023 = vmax.f32 %v4314, %v4936
  %v5024 = vmax.f32 %v4315, %v4941
  %v5025 = vmax.f32 %v4316, %v4944
  %v5026 = vmax.f32 %v4317, %v4949
  %v5027 = vmax.f32 %v4318, %v4952
  %v5028 = vmax.f32 %v4319, %v4957
  %s5029 = scalar_lea.vmem %s0, 1876
  %v5030 = vld [vmem:[%s5029] sm:$0xf]
  %v5031 = vld [vmem:[%s5029 + $0x4] sm:$0xf]
  %v5032 = vld [vmem:[%s5029 + $0x8] sm:$0xf]
  %v5033 = vld [vmem:[%s5029 + $0xc] sm:$0xf]
  %v5034 = vld [vmem:[%s5029 + $0x10] sm:$0xf]
  %v5035 = vld [vmem:[%s5029 + $0x14] sm:$0xf]
  %v5036 = vld [vmem:[%s5029 + $0x18] sm:$0xf]
  %v5037 = vld [vmem:[%s5029 + $0x1c] sm:$0xf]
  %v5038 = vld [vmem:[%s5029 + $0x20] sm:$0xf]
  %v5039 = vld [vmem:[%s5029 + $0x24] sm:$0xf]
  %v5040 = vld [vmem:[%s5029 + $0x28] sm:$0xf]
  %v5041 = vld [vmem:[%s5029 + $0x2c] sm:$0xf]
  %v5042 = vld [vmem:[%s5029 + $0x30] sm:$0xf]
  %v5043 = vld [vmem:[%s5029 + $0x34] sm:$0xf]
  %v5044 = vld [vmem:[%s5029 + $0x38] sm:$0xf]
  %v5045 = vld [vmem:[%s5029 + $0x3c] sm:$0xf]
  %v5046 = vld [vmem:[%s5029 + $0x40] sm:$0xf]
  %v5047 = vld [vmem:[%s5029 + $0x44] sm:$0xf]
  %v5048 = vld [vmem:[%s5029 + $0x48] sm:$0xf]
  %v5049 = vld [vmem:[%s5029 + $0x4c] sm:$0xf]
  %v5050 = vld [vmem:[%s5029 + $0x50] sm:$0xf]
  %v5051 = vld [vmem:[%s5029 + $0x54] sm:$0xf]
  %v5052 = vld [vmem:[%s5029 + $0x58] sm:$0xf]
  %v5053 = vld [vmem:[%s5029 + $0x5c] sm:$0xf]
  %v5054 = vld [vmem:[%s5029 + $0x60] sm:$0xf]
  %v5055 = vld [vmem:[%s5029 + $0x64] sm:$0xf]
  %v5056 = vld [vmem:[%s5029 + $0x68] sm:$0xf]
  %v5057 = vld [vmem:[%s5029 + $0x6c] sm:$0xf]
  %v5058 = vld [vmem:[%s5029 + $0x70] sm:$0xf]
  %v5059 = vld [vmem:[%s5029 + $0x74] sm:$0xf]
  %v5060 = vld [vmem:[%s5029 + $0x78] sm:$0xf]
  %v5061 = vld [vmem:[%s5029 + $0x7c] sm:$0xf]
  %v5062 = vld [vmem:[%s5029 + $0x80] sm:$0xf]
  %v5063 = vld [vmem:[%s5029 + $0x84] sm:$0xf]
  %v5064 = vld [vmem:[%s5029 + $0x88] sm:$0xf]
  %v5065 = vld [vmem:[%s5029 + $0x8c] sm:$0xf]
  %v5066 = vld [vmem:[%s5029 + $0x90] sm:$0xf]
  %v5067 = vld [vmem:[%s5029 + $0x94] sm:$0xf]
  %v5068 = vld [vmem:[%s5029 + $0x98] sm:$0xf]
  %v5069 = vld [vmem:[%s5029 + $0x9c] sm:$0xf]
  %v5070 = vld [vmem:[%s5029 + $0xa0] sm:$0xf]
  %v5071 = vld [vmem:[%s5029 + $0xa4] sm:$0xf]
  %v5072 = vld [vmem:[%s5029 + $0xa8] sm:$0xf]
  %v5073 = vld [vmem:[%s5029 + $0xac] sm:$0xf]
  %v5074 = vld [vmem:[%s5029 + $0xb0] sm:$0xf]
  %v5075 = vld [vmem:[%s5029 + $0xb4] sm:$0xf]
  %v5076 = vld [vmem:[%s5029 + $0xb8] sm:$0xf]
  %v5077 = vld [vmem:[%s5029 + $0xbc] sm:$0xf]
  %v5078 = vld [vmem:[%s5029 + $0xc0] sm:$0xf]
  %v5079 = vld [vmem:[%s5029 + $0xc4] sm:$0xf]
  %v5080 = vld [vmem:[%s5029 + $0xc8] sm:$0xf]
  %v5081 = vld [vmem:[%s5029 + $0xcc] sm:$0xf]
  %v5082 = vld [vmem:[%s5029 + $0xd0] sm:$0xf]
  %v5083 = vld [vmem:[%s5029 + $0xd4] sm:$0xf]
  %v5084 = vld [vmem:[%s5029 + $0xd8] sm:$0xf]
  %v5085 = vld [vmem:[%s5029 + $0xdc] sm:$0xf]
  %v5086 = vld [vmem:[%s5029 + $0xe0] sm:$0xf]
  %v5087 = vld [vmem:[%s5029 + $0xe4] sm:$0xf]
  %v5088 = vld [vmem:[%s5029 + $0xe8] sm:$0xf]
  %v5089 = vld [vmem:[%s5029 + $0xec] sm:$0xf]
  %v5090 = vld [vmem:[%s5029 + $0xf0] sm:$0xf]
  %v5091 = vld [vmem:[%s5029 + $0xf4] sm:$0xf]
  %v5092 = vld [vmem:[%s5029 + $0xf8] sm:$0xf]
  %v5093 = vld [vmem:[%s5029 + $0xfc] sm:$0xf]
  %v5094 = vld [vmem:[%s5029 + $0x100] sm:$0xf]
  %v5095 = vld [vmem:[%s5029 + $0x104] sm:$0xf]
  %v5096 = vld [vmem:[%s5029 + $0x108] sm:$0x1]
  %v5164 = vunpack.c.l.b16 %v5030
  %v5165 = vunpack.c.l.b16 %v5031
  %v5166 = vunpack.c.l.b16 %v5032
  %v5167 = vunpack.c.l.b16 %v5033
  %v5168 = vunpack.c.l.b16 %v5034
  %v5169 = vunpack.c.l.b16 %v5035
  %v5170 = vunpack.c.l.b16 %v5036
  %v5171 = vunpack.c.l.b16 %v5037
  %v5172 = vunpack.c.l.b16 %v5038
  %v5173 = vunpack.c.l.b16 %v5039
  %v5174 = vunpack.c.l.b16 %v5040
  %v5175 = vunpack.c.l.b16 %v5041
  %v5176 = vunpack.c.l.b16 %v5042
  %v5177 = vunpack.c.l.b16 %v5043
  %v5178 = vunpack.c.l.b16 %v5044
  %v5179 = vunpack.c.l.b16 %v5045
  %v5180 = vunpack.c.l.b16 %v5046
  %v5181 = vunpack.c.l.b16 %v5047
  %v5182 = vunpack.c.l.b16 %v5048
  %v5183 = vunpack.c.l.b16 %v5049
  %v5184 = vunpack.c.l.b16 %v5050
  %v5185 = vunpack.c.l.b16 %v5051
  %v5186 = vunpack.c.l.b16 %v5052
  %v5187 = vunpack.c.l.b16 %v5053
  %v5188 = vunpack.c.l.b16 %v5054
  %v5189 = vunpack.c.l.b16 %v5055
  %v5190 = vunpack.c.l.b16 %v5056
  %v5191 = vunpack.c.l.b16 %v5057
  %v5192 = vunpack.c.l.b16 %v5058
  %v5193 = vunpack.c.l.b16 %v5059
  %v5194 = vunpack.c.l.b16 %v5060
  %v5195 = vunpack.c.l.b16 %v5061
  %v5196 = vunpack.c.l.b16 %v5062
  %v5197 = vunpack.c.l.b16 %v5063
  %v5198 = vunpack.c.l.b16 %v5064
  %v5199 = vunpack.c.l.b16 %v5065
  %v5200 = vunpack.c.l.b16 %v5066
  %v5201 = vunpack.c.l.b16 %v5067
  %v5202 = vunpack.c.l.b16 %v5068
  %v5203 = vunpack.c.l.b16 %v5069
  %v5204 = vunpack.c.l.b16 %v5070
  %v5205 = vunpack.c.l.b16 %v5071
  %v5206 = vunpack.c.l.b16 %v5072
  %v5207 = vunpack.c.l.b16 %v5073
  %v5208 = vunpack.c.l.b16 %v5074
  %v5209 = vunpack.c.l.b16 %v5075
  %v5210 = vunpack.c.l.b16 %v5076
  %v5211 = vunpack.c.l.b16 %v5077
  %v5212 = vunpack.c.l.b16 %v5078
  %v5213 = vunpack.c.l.b16 %v5079
  %v5214 = vunpack.c.l.b16 %v5080
  %v5215 = vunpack.c.l.b16 %v5081
  %v5216 = vunpack.c.l.b16 %v5082
  %v5217 = vunpack.c.l.b16 %v5083
  %v5218 = vunpack.c.l.b16 %v5084
  %v5219 = vunpack.c.l.b16 %v5085
  %v5220 = vunpack.c.l.b16 %v5086
  %v5221 = vunpack.c.l.b16 %v5087
  %v5222 = vunpack.c.l.b16 %v5088
  %v5223 = vunpack.c.l.b16 %v5089
  %v5224 = vunpack.c.l.b16 %v5090
  %v5225 = vunpack.c.l.b16 %v5091
  %v5226 = vunpack.c.l.b16 %v5092
  %v5227 = vunpack.c.l.b16 %v5093
  %v5228 = vunpack.c.l.b16 %v5094
  %v5229 = vunpack.c.l.b16 %v5095
  %v5230 = vunpack.c.l.b16 %v5096
  %v5231 = vpack.c.b16 %v5165, %v5164
  %v5232 = vpack.c.b16 %v5167, %v5166
  %v5233 = vpack.c.b16 %v5169, %v5168
  %v5234 = vpack.c.b16 %v5171, %v5170
  %v5235 = vpack.c.b16 %v5173, %v5172
  %v5236 = vpack.c.b16 %v5175, %v5174
  %v5237 = vpack.c.b16 %v5177, %v5176
  %v5238 = vpack.c.b16 %v5179, %v5178
  %v5239 = vpack.c.b16 %v5181, %v5180
  %v5240 = vpack.c.b16 %v5183, %v5182
  %v5241 = vpack.c.b16 %v5185, %v5184
  %v5242 = vpack.c.b16 %v5187, %v5186
  %v5243 = vpack.c.b16 %v5189, %v5188
  %v5244 = vpack.c.b16 %v5191, %v5190
  %v5245 = vpack.c.b16 %v5193, %v5192
  %v5246 = vpack.c.b16 %v5195, %v5194
  %v5247 = vpack.c.b16 %v5197, %v5196
  %v5248 = vpack.c.b16 %v5199, %v5198
  %v5249 = vpack.c.b16 %v5201, %v5200
  %v5250 = vpack.c.b16 %v5203, %v5202
  %v5251 = vpack.c.b16 %v5205, %v5204
  %v5252 = vpack.c.b16 %v5207, %v5206
  %v5253 = vpack.c.b16 %v5209, %v5208
  %v5254 = vpack.c.b16 %v5211, %v5210
  %v5255 = vpack.c.b16 %v5213, %v5212
  %v5256 = vpack.c.b16 %v5215, %v5214
  %v5257 = vpack.c.b16 %v5217, %v5216
  %v5258 = vpack.c.b16 %v5219, %v5218
  %v5259 = vpack.c.b16 %v5221, %v5220
  %v5260 = vpack.c.b16 %v5223, %v5222
  %v5261 = vpack.c.b16 %v5225, %v5224
  %v5262 = vpack.c.b16 %v5227, %v5226
  %v5263 = vpack.c.b16 %v5229, %v5228
  %v5264 = vpack.c.b16 %v5230, %v5230
  %v5266 = vsel %vm285, %v5231, 0
  %v5269 = vsel %vm285, %v5232, 0
  %v5272 = vsel %vm285, %v5233, 0
  %v5275 = vsel %vm285, %v5234, 0
  %v5278 = vsel %vm285, %v5235, 0
  %v5281 = vsel %vm285, %v5236, 0
  %v5284 = vsel %vm285, %v5237, 0
  %v5287 = vsel %vm285, %v5238, 0
  %v5290 = vsel %vm285, %v5239, 0
  %v5293 = vsel %vm285, %v5240, 0
  %v5296 = vsel %vm285, %v5241, 0
  %v5299 = vsel %vm285, %v5242, 0
  %v5302 = vsel %vm285, %v5243, 0
  %v5305 = vsel %vm285, %v5244, 0
  %v5308 = vsel %vm285, %v5245, 0
  %v5311 = vsel %vm285, %v5246, 0
  %v5314 = vsel %vm285, %v5247, 0
  %v5317 = vsel %vm285, %v5248, 0
  %v5320 = vsel %vm285, %v5249, 0
  %v5323 = vsel %vm285, %v5250, 0
  %v5326 = vsel %vm285, %v5251, 0
  %v5329 = vsel %vm285, %v5252, 0
  %v5332 = vsel %vm285, %v5253, 0
  %v5335 = vsel %vm285, %v5254, 0
  %v5338 = vsel %vm285, %v5255, 0
  %v5341 = vsel %vm285, %v5256, 0
  %v5344 = vsel %vm285, %v5257, 0
  %v5347 = vsel %vm285, %v5258, 0
  %v5350 = vsel %vm285, %v5259, 0
  %v5353 = vsel %vm285, %v5260, 0
  %v5356 = vsel %vm285, %v5261, 0
  %v5359 = vsel %vm285, %v5262, 0
  %v5362 = vsel %vm285, %v5263, 0
  %v5365 = vsel %vm285, %v5264, 0
  %5367 = vmatprep.subr.bf16.mxu0 0
  %5368 = vmatpush1.bf16.msra.mxu0 %v282
  %5369 = vmatprep.subr.bf16.mxu0 0
  %5370 = vmatpush1.bf16.msra.mxu0 %v393
  %5371 = vmatprep.subr.bf16.mxu0 0
  %5372 = vmatpush1.bf16.msra.mxu0 0
  %5373 = vmatprep.subr.bf16.mxu0 0
  %5374 = vmatpush1.bf16.msra.mxu0 0
  %5375 = vmatprep.subr.bf16.mxu0 0
  %5376 = vmatpush1.bf16.msra.mxu0 0
  %5377 = vmatprep.subr.bf16.mxu0 0
  %5378 = vmatpush1.bf16.msra.mxu0 0
  %5379 = vmatprep.subr.bf16.mxu0 0
  %5380 = vmatpush1.bf16.msra.mxu0 0
  %5381 = vmatprep.subr.bf16.mxu0 0
  %5382 = vmatpush1.bf16.msra.mxu0 0
  %5383 = vmatprep.subr.bf16.mxu0 0
  %5384 = vmatpush1.bf16.msra.mxu0 0
  %5385 = vmatprep.subr.bf16.mxu0 0
  %5386 = vmatpush1.bf16.msra.mxu0 0
  %5387 = vmatprep.subr.bf16.mxu0 0
  %5388 = vmatpush1.bf16.msra.mxu0 0
  %5389 = vmatprep.subr.bf16.mxu0 0
  %5390 = vmatpush1.bf16.msra.mxu0 0
  %5391 = vmatprep.subr.bf16.mxu0 0
  %5392 = vmatpush1.bf16.msra.mxu0 0
  %5393 = vmatprep.subr.bf16.mxu0 0
  %5394 = vmatpush1.bf16.msra.mxu0 0
  %5395 = vmatprep.subr.bf16.mxu0 0
  %5396 = vmatpush1.bf16.msra.mxu0 0
  %5397 = vmatprep.subr.bf16.mxu0 0
  %5398 = vmatpush1.bf16.msra.mxu0 0
  %5399 = vmatprep.mubr.bf16.mxu0 0
  %5400 = vmatmul.mubr.bf16.gmra.mrb[0].mxu0 %v5266
  %v5401 = vpop.f32.mrb[0].mxu0
  %v5402 = vadd.f32 0.0, %v5401
  %v5403 = vpop.f32.mrb[0].mxu0
  %v5404 = vpop.f32.mrb[0].mxu0
  %v5405 = vadd.f32 0.0, %v5404
  %v5406 = vpop.f32.mrb[0].mxu0
  %5407 = vmatprep.mubr.bf16.mxu0 0
  %5408 = vmatmul.mubr.bf16.gmra.mrb[0].mxu0 %v5269
  %v5409 = vpop.f32.mrb[0].mxu0
  %v5410 = vadd.f32 0.0, %v5409
  %v5411 = vpop.f32.mrb[0].mxu0
  %v5412 = vpop.f32.mrb[0].mxu0
  %v5413 = vadd.f32 0.0, %v5412
  %v5414 = vpop.f32.mrb[0].mxu0
  %5415 = vmatprep.mubr.bf16.mxu0 0
  %5416 = vmatmul.mubr.bf16.gmra.mrb[0].mxu0 %v5272
  %v5417 = vpop.f32.mrb[0].mxu0
  %v5418 = vadd.f32 0.0, %v5417
  %v5419 = vpop.f32.mrb[0].mxu0
  %v5420 = vpop.f32.mrb[0].mxu0
  %v5421 = vadd.f32 0.0, %v5420
  %v5422 = vpop.f32.mrb[0].mxu0
  %5423 = vmatprep.mubr.bf16.mxu0 0
  %5424 = vmatmul.mubr.bf16.gmra.mrb[0].mxu0 %v5275
  %v5425 = vpop.f32.mrb[0].mxu0
  %v5426 = vadd.f32 0.0, %v5425
  %v5427 = vpop.f32.mrb[0].mxu0
  %v5428 = vpop.f32.mrb[0].mxu0
  %v5429 = vadd.f32 0.0, %v5428
  %v5430 = vpop.f32.mrb[0].mxu0
  %5431 = vmatprep.mubr.bf16.mxu0 0
  %5432 = vmatmul.mubr.bf16.gmra.mrb[0].mxu0 %v5278
  %v5433 = vpop.f32.mrb[0].mxu0
  %v5434 = vadd.f32 0.0, %v5433
  %v5435 = vpop.f32.mrb[0].mxu0
  %v5436 = vpop.f32.mrb[0].mxu0
  %v5437 = vadd.f32 0.0, %v5436
  %v5438 = vpop.f32.mrb[0].mxu0
  %5439 = vmatprep.mubr.bf16.mxu0 0
  %5440 = vmatmul.mubr.bf16.gmra.mrb[0].mxu0 %v5281
  %v5441 = vpop.f32.mrb[0].mxu0
  %v5442 = vadd.f32 0.0, %v5441
  %v5443 = vpop.f32.mrb[0].mxu0
  %v5444 = vpop.f32.mrb[0].mxu0
  %v5445 = vadd.f32 0.0, %v5444
  %v5446 = vpop.f32.mrb[0].mxu0
  %5447 = vmatprep.mubr.bf16.mxu0 0
  %5448 = vmatmul.mubr.bf16.gmra.mrb[0].mxu0 %v5284
  %v5449 = vpop.f32.mrb[0].mxu0
  %v5450 = vadd.f32 0.0, %v5449
  %v5451 = vpop.f32.mrb[0].mxu0
  %v5452 = vpop.f32.mrb[0].mxu0
  %v5453 = vadd.f32 0.0, %v5452
  %v5454 = vpop.f32.mrb[0].mxu0
  %5455 = vmatprep.mubr.bf16.mxu0 0
  %5456 = vmatmul.mubr.bf16.gmra.mrb[0].mxu0 %v5287
  %v5457 = vpop.f32.mrb[0].mxu0
  %v5458 = vadd.f32 0.0, %v5457
  %v5459 = vpop.f32.mrb[0].mxu0
  %v5460 = vpop.f32.mrb[0].mxu0
  %v5461 = vadd.f32 0.0, %v5460
  %v5462 = vpop.f32.mrb[0].mxu0
  %5463 = vmatprep.mubr.bf16.mxu0 0
  %5464 = vmatmul.mubr.bf16.gmra.mrb[0].mxu0 %v5290
  %v5465 = vpop.f32.mrb[0].mxu0
  %v5466 = vadd.f32 0.0, %v5465
  %v5467 = vpop.f32.mrb[0].mxu0
  %v5468 = vpop.f32.mrb[0].mxu0
  %v5469 = vadd.f32 0.0, %v5468
  %v5470 = vpop.f32.mrb[0].mxu0
  %5471 = vmatprep.mubr.bf16.mxu0 0
  %5472 = vmatmul.mubr.bf16.gmra.mrb[0].mxu0 %v5293
  %v5473 = vpop.f32.mrb[0].mxu0
  %v5474 = vadd.f32 0.0, %v5473
  %v5475 = vpop.f32.mrb[0].mxu0
  %v5476 = vpop.f32.mrb[0].mxu0
  %v5477 = vadd.f32 0.0, %v5476
  %v5478 = vpop.f32.mrb[0].mxu0
  %5479 = vmatprep.mubr.bf16.mxu0 0
  %5480 = vmatmul.mubr.bf16.gmra.mrb[0].mxu0 %v5296
  %v5481 = vpop.f32.mrb[0].mxu0
  %v5482 = vadd.f32 0.0, %v5481
  %v5483 = vpop.f32.mrb[0].mxu0
  %v5484 = vpop.f32.mrb[0].mxu0
  %v5485 = vadd.f32 0.0, %v5484
  %v5486 = vpop.f32.mrb[0].mxu0
  %5487 = vmatprep.mubr.bf16.mxu0 0
  %5488 = vmatmul.mubr.bf16.gmra.mrb[0].mxu0 %v5299
  %v5489 = vpop.f32.mrb[0].mxu0
  %v5490 = vadd.f32 0.0, %v5489
  %v5491 = vpop.f32.mrb[0].mxu0
  %v5492 = vpop.f32.mrb[0].mxu0
  %v5493 = vadd.f32 0.0, %v5492
  %v5494 = vpop.f32.mrb[0].mxu0
  %5495 = vmatprep.mubr.bf16.mxu0 0
  %5496 = vmatmul.mubr.bf16.gmra.mrb[0].mxu0 %v5302
  %v5497 = vpop.f32.mrb[0].mxu0
  %v5498 = vadd.f32 0.0, %v5497
  %v5499 = vpop.f32.mrb[0].mxu0
  %v5500 = vpop.f32.mrb[0].mxu0
  %v5501 = vadd.f32 0.0, %v5500
  %v5502 = vpop.f32.mrb[0].mxu0
  %5503 = vmatprep.mubr.bf16.mxu0 0
  %5504 = vmatmul.mubr.bf16.gmra.mrb[0].mxu0 %v5305
  %v5505 = vpop.f32.mrb[0].mxu0
  %v5506 = vadd.f32 0.0, %v5505
  %v5507 = vpop.f32.mrb[0].mxu0
  %v5508 = vpop.f32.mrb[0].mxu0
  %v5509 = vadd.f32 0.0, %v5508
  %v5510 = vpop.f32.mrb[0].mxu0
  %5511 = vmatprep.mubr.bf16.mxu0 0
  %5512 = vmatmul.mubr.bf16.gmra.mrb[0].mxu0 %v5308
  %v5513 = vpop.f32.mrb[0].mxu0
  %v5514 = vadd.f32 0.0, %v5513
  %v5515 = vpop.f32.mrb[0].mxu0
  %v5516 = vpop.f32.mrb[0].mxu0
  %v5517 = vadd.f32 0.0, %v5516
  %v5518 = vpop.f32.mrb[0].mxu0
  %5519 = vmatprep.mubr.bf16.mxu0 0
  %5520 = vmatmul.mubr.bf16.gmra.mrb[0].mxu0 %v5311
  %v5521 = vpop.f32.mrb[0].mxu0
  %v5522 = vadd.f32 0.0, %v5521
  %v5523 = vpop.f32.mrb[0].mxu0
  %v5524 = vpop.f32.mrb[0].mxu0
  %v5525 = vadd.f32 0.0, %v5524
  %v5526 = vpop.f32.mrb[0].mxu0
  %5527 = vmatprep.mubr.bf16.mxu0 0
  %5528 = vmatmul.mubr.bf16.gmra.mrb[0].mxu0 %v5314
  %v5529 = vpop.f32.mrb[0].mxu0
  %v5530 = vadd.f32 0.0, %v5529
  %v5531 = vpop.f32.mrb[0].mxu0
  %v5532 = vpop.f32.mrb[0].mxu0
  %v5533 = vadd.f32 0.0, %v5532
  %v5534 = vpop.f32.mrb[0].mxu0
  %5535 = vmatprep.mubr.bf16.mxu0 0
  %5536 = vmatmul.mubr.bf16.gmra.mrb[0].mxu0 %v5317
  %v5537 = vpop.f32.mrb[0].mxu0
  %v5538 = vadd.f32 0.0, %v5537
  %v5539 = vpop.f32.mrb[0].mxu0
  %v5540 = vpop.f32.mrb[0].mxu0
  %v5541 = vadd.f32 0.0, %v5540
  %v5542 = vpop.f32.mrb[0].mxu0
  %5543 = vmatprep.mubr.bf16.mxu0 0
  %5544 = vmatmul.mubr.bf16.gmra.mrb[0].mxu0 %v5320
  %v5545 = vpop.f32.mrb[0].mxu0
  %v5546 = vadd.f32 0.0, %v5545
  %v5547 = vpop.f32.mrb[0].mxu0
  %v5548 = vpop.f32.mrb[0].mxu0
  %v5549 = vadd.f32 0.0, %v5548
  %v5550 = vpop.f32.mrb[0].mxu0
  %5551 = vmatprep.mubr.bf16.mxu0 0
  %5552 = vmatmul.mubr.bf16.gmra.mrb[0].mxu0 %v5323
  %v5553 = vpop.f32.mrb[0].mxu0
  %v5554 = vadd.f32 0.0, %v5553
  %v5555 = vpop.f32.mrb[0].mxu0
  %v5556 = vpop.f32.mrb[0].mxu0
  %v5557 = vadd.f32 0.0, %v5556
  %v5558 = vpop.f32.mrb[0].mxu0
  %5559 = vmatprep.mubr.bf16.mxu0 0
  %5560 = vmatmul.mubr.bf16.gmra.mrb[0].mxu0 %v5326
  %v5561 = vpop.f32.mrb[0].mxu0
  %v5562 = vadd.f32 0.0, %v5561
  %v5563 = vpop.f32.mrb[0].mxu0
  %v5564 = vpop.f32.mrb[0].mxu0
  %v5565 = vadd.f32 0.0, %v5564
  %v5566 = vpop.f32.mrb[0].mxu0
  %5567 = vmatprep.mubr.bf16.mxu0 0
  %5568 = vmatmul.mubr.bf16.gmra.mrb[0].mxu0 %v5329
  %v5569 = vpop.f32.mrb[0].mxu0
  %v5570 = vadd.f32 0.0, %v5569
  %v5571 = vpop.f32.mrb[0].mxu0
  %v5572 = vpop.f32.mrb[0].mxu0
  %v5573 = vadd.f32 0.0, %v5572
  %v5574 = vpop.f32.mrb[0].mxu0
  %5575 = vmatprep.mubr.bf16.mxu0 0
  %5576 = vmatmul.mubr.bf16.gmra.mrb[0].mxu0 %v5332
  %v5577 = vpop.f32.mrb[0].mxu0
  %v5578 = vadd.f32 0.0, %v5577
  %v5579 = vpop.f32.mrb[0].mxu0
  %v5580 = vpop.f32.mrb[0].mxu0
  %v5581 = vadd.f32 0.0, %v5580
  %v5582 = vpop.f32.mrb[0].mxu0
  %5583 = vmatprep.mubr.bf16.mxu0 0
  %5584 = vmatmul.mubr.bf16.gmra.mrb[0].mxu0 %v5335
  %v5585 = vpop.f32.mrb[0].mxu0
  %v5586 = vadd.f32 0.0, %v5585
  %v5587 = vpop.f32.mrb[0].mxu0
  %v5588 = vpop.f32.mrb[0].mxu0
  %v5589 = vadd.f32 0.0, %v5588
  %v5590 = vpop.f32.mrb[0].mxu0
  %5591 = vmatprep.mubr.bf16.mxu0 0
  %5592 = vmatmul.mubr.bf16.gmra.mrb[0].mxu0 %v5338
  %v5593 = vpop.f32.mrb[0].mxu0
  %v5594 = vadd.f32 0.0, %v5593
  %v5595 = vpop.f32.mrb[0].mxu0
  %v5596 = vpop.f32.mrb[0].mxu0
  %v5597 = vadd.f32 0.0, %v5596
  %v5598 = vpop.f32.mrb[0].mxu0
  %5599 = vmatprep.mubr.bf16.mxu0 0
  %5600 = vmatmul.mubr.bf16.gmra.mrb[0].mxu0 %v5341
  %v5601 = vpop.f32.mrb[0].mxu0
  %v5602 = vadd.f32 0.0, %v5601
  %v5603 = vpop.f32.mrb[0].mxu0
  %v5604 = vpop.f32.mrb[0].mxu0
  %v5605 = vadd.f32 0.0, %v5604
  %v5606 = vpop.f32.mrb[0].mxu0
  %5607 = vmatprep.mubr.bf16.mxu0 0
  %5608 = vmatmul.mubr.bf16.gmra.mrb[0].mxu0 %v5344
  %v5609 = vpop.f32.mrb[0].mxu0
  %v5610 = vadd.f32 0.0, %v5609
  %v5611 = vpop.f32.mrb[0].mxu0
  %v5612 = vpop.f32.mrb[0].mxu0
  %v5613 = vadd.f32 0.0, %v5612
  %v5614 = vpop.f32.mrb[0].mxu0
  %5615 = vmatprep.mubr.bf16.mxu0 0
  %5616 = vmatmul.mubr.bf16.gmra.mrb[0].mxu0 %v5347
  %v5617 = vpop.f32.mrb[0].mxu0
  %v5618 = vadd.f32 0.0, %v5617
  %v5619 = vpop.f32.mrb[0].mxu0
  %v5620 = vpop.f32.mrb[0].mxu0
  %v5621 = vadd.f32 0.0, %v5620
  %v5622 = vpop.f32.mrb[0].mxu0
  %5623 = vmatprep.mubr.bf16.mxu0 0
  %5624 = vmatmul.mubr.bf16.gmra.mrb[0].mxu0 %v5350
  %v5625 = vpop.f32.mrb[0].mxu0
  %v5626 = vadd.f32 0.0, %v5625
  %v5627 = vpop.f32.mrb[0].mxu0
  %v5628 = vpop.f32.mrb[0].mxu0
  %v5629 = vadd.f32 0.0, %v5628
  %v5630 = vpop.f32.mrb[0].mxu0
  %5631 = vmatprep.mubr.bf16.mxu0 0
  %5632 = vmatmul.mubr.bf16.gmra.mrb[0].mxu0 %v5353
  %v5633 = vpop.f32.mrb[0].mxu0
  %v5634 = vadd.f32 0.0, %v5633
  %v5635 = vpop.f32.mrb[0].mxu0
  %v5636 = vpop.f32.mrb[0].mxu0
  %v5637 = vadd.f32 0.0, %v5636
  %v5638 = vpop.f32.mrb[0].mxu0
  %5639 = vmatprep.mubr.bf16.mxu0 0
  %5640 = vmatmul.mubr.bf16.gmra.mrb[0].mxu0 %v5356
  %v5641 = vpop.f32.mrb[0].mxu0
  %v5642 = vadd.f32 0.0, %v5641
  %v5643 = vpop.f32.mrb[0].mxu0
  %v5644 = vpop.f32.mrb[0].mxu0
  %v5645 = vadd.f32 0.0, %v5644
  %v5646 = vpop.f32.mrb[0].mxu0
  %5647 = vmatprep.mubr.bf16.mxu0 0
  %5648 = vmatmul.mubr.bf16.gmra.mrb[0].mxu0 %v5359
  %v5649 = vpop.f32.mrb[0].mxu0
  %v5650 = vadd.f32 0.0, %v5649
  %v5651 = vpop.f32.mrb[0].mxu0
  %v5652 = vpop.f32.mrb[0].mxu0
  %v5653 = vadd.f32 0.0, %v5652
  %v5654 = vpop.f32.mrb[0].mxu0
  %5655 = vmatprep.mubr.bf16.mxu0 0
  %5656 = vmatmul.mubr.bf16.gmra.mrb[0].mxu0 %v5362
  %v5657 = vpop.f32.mrb[0].mxu0
  %v5658 = vadd.f32 0.0, %v5657
  %v5659 = vpop.f32.mrb[0].mxu0
  %v5660 = vpop.f32.mrb[0].mxu0
  %v5661 = vadd.f32 0.0, %v5660
  %v5662 = vpop.f32.mrb[0].mxu0
  %5663 = vmatprep.mubr.bf16.mxu0 0
  %5664 = vmatmul.mubr.bf16.gmra.mrb[0].mxu0 %v5365
  %v5665 = vpop.f32.mrb[0].mxu0
  %v5666 = vadd.f32 0.0, %v5665
  %v5667 = vpop.f32.mrb[0].mxu0
  %v5668 = vpop.f32.mrb[0].mxu0
  %v5669 = vpop.f32.mrb[0].mxu0
  %5670 = vdwg.mxu0
  %v5671 = vmax.f32 %v4962, %v5402
  %v5672 = vmax.f32 %v4963, %v5405
  %v5673 = vmax.f32 %v4964, %v5410
  %v5674 = vmax.f32 %v4965, %v5413
  %v5675 = vmax.f32 %v4966, %v5418
  %v5676 = vmax.f32 %v4967, %v5421
  %v5677 = vmax.f32 %v4968, %v5426
  %v5678 = vmax.f32 %v4969, %v5429
  %v5679 = vmax.f32 %v4970, %v5434
  %v5680 = vmax.f32 %v4971, %v5437
  %v5681 = vmax.f32 %v4972, %v5442
  %v5682 = vmax.f32 %v4973, %v5445
  %v5683 = vmax.f32 %v4974, %v5450
  %v5684 = vmax.f32 %v4975, %v5453
  %v5685 = vmax.f32 %v4976, %v5458
  %v5686 = vmax.f32 %v4977, %v5461
  %v5687 = vmax.f32 %v4978, %v5466
  %v5688 = vmax.f32 %v4979, %v5469
  %v5689 = vmax.f32 %v4980, %v5474
  %v5690 = vmax.f32 %v4981, %v5477
  %v5691 = vmax.f32 %v4982, %v5482
  %v5692 = vmax.f32 %v4983, %v5485
  %v5693 = vmax.f32 %v4984, %v5490
  %v5694 = vmax.f32 %v4985, %v5493
  %v5695 = vmax.f32 %v4986, %v5498
  %v5696 = vmax.f32 %v4987, %v5501
  %v5697 = vmax.f32 %v4988, %v5506
  %v5698 = vmax.f32 %v4989, %v5509
  %v5699 = vmax.f32 %v4990, %v5514
  %v5700 = vmax.f32 %v4991, %v5517
  %v5701 = vmax.f32 %v4992, %v5522
  %v5702 = vmax.f32 %v4993, %v5525
  %v5703 = vmax.f32 %v4994, %v5530
  %v5704 = vmax.f32 %v4995, %v5533
  %v5705 = vmax.f32 %v4996, %v5538
  %v5706 = vmax.f32 %v4997, %v5541
  %v5707 = vmax.f32 %v4998, %v5546
  %v5708 = vmax.f32 %v4999, %v5549
  %v5709 = vmax.f32 %v5000, %v5554
  %v5710 = vmax.f32 %v5001, %v5557
  %v5711 = vmax.f32 %v5002, %v5562
  %v5712 = vmax.f32 %v5003, %v5565
  %v5713 = vmax.f32 %v5004, %v5570
  %v5714 = vmax.f32 %v5005, %v5573
  %v5715 = vmax.f32 %v5006, %v5578
  %v5716 = vmax.f32 %v5007, %v5581
  %v5717 = vmax.f32 %v5008, %v5586
  %v5718 = vmax.f32 %v5009, %v5589
  %v5719 = vmax.f32 %v5010, %v5594
  %v5720 = vmax.f32 %v5011, %v5597
  %v5721 = vmax.f32 %v5012, %v5602
  %v5722 = vmax.f32 %v5013, %v5605
  %v5723 = vmax.f32 %v5014, %v5610
  %v5724 = vmax.f32 %v5015, %v5613
  %v5725 = vmax.f32 %v5016, %v5618
  %v5726 = vmax.f32 %v5017, %v5621
  %v5727 = vmax.f32 %v5018, %v5626
  %v5728 = vmax.f32 %v5019, %v5629
  %v5729 = vmax.f32 %v5020, %v5634
  %v5730 = vmax.f32 %v5021, %v5637
  %v5731 = vmax.f32 %v5022, %v5642
  %v5732 = vmax.f32 %v5023, %v5645
  %v5733 = vmax.f32 %v5024, %v5650
  %v5734 = vmax.f32 %v5025, %v5653
  %v5735 = vmax.f32 %v5026, %v5658
  %v5736 = vmax.f32 %v5027, %v5661
  %v5737 = vmax.f32 %v5028, %v5666
  %v5738 = vld [vmem:[%s2] sm:$0x1]
  %v5740 = vlaneseq
  %v5741 = vshrl.u32 %v5740, 7
  %v5742 = vsub.s32 0, %v5741
  %v5743 = vrot.slane %v5738, %v5742
  %v5745 = vadd.f32 %v5671, %v5743
  %v5746 = vadd.f32 %v5672, %v5743
  %v5747 = vadd.f32 %v5673, %v5743
  %v5748 = vadd.f32 %v5674, %v5743
  %v5749 = vadd.f32 %v5675, %v5743
  %v5750 = vadd.f32 %v5676, %v5743
  %v5751 = vadd.f32 %v5677, %v5743
  %v5752 = vadd.f32 %v5678, %v5743
  %v5753 = vadd.f32 %v5679, %v5743
  %v5754 = vadd.f32 %v5680, %v5743
  %v5755 = vadd.f32 %v5681, %v5743
  %v5756 = vadd.f32 %v5682, %v5743
  %v5757 = vadd.f32 %v5683, %v5743
  %v5758 = vadd.f32 %v5684, %v5743
  %v5759 = vadd.f32 %v5685, %v5743
  %v5760 = vadd.f32 %v5686, %v5743
  %v5761 = vadd.f32 %v5687, %v5743
  %v5762 = vadd.f32 %v5688, %v5743
  %v5763 = vadd.f32 %v5689, %v5743
  %v5764 = vadd.f32 %v5690, %v5743
  %v5765 = vadd.f32 %v5691, %v5743
  %v5766 = vadd.f32 %v5692, %v5743
  %v5767 = vadd.f32 %v5693, %v5743
  %v5768 = vadd.f32 %v5694, %v5743
  %v5769 = vadd.f32 %v5695, %v5743
  %v5770 = vadd.f32 %v5696, %v5743
  %v5771 = vadd.f32 %v5697, %v5743
  %v5772 = vadd.f32 %v5698, %v5743
  %v5773 = vadd.f32 %v5699, %v5743
  %v5774 = vadd.f32 %v5700, %v5743
  %v5775 = vadd.f32 %v5701, %v5743
  %v5776 = vadd.f32 %v5702, %v5743
  %v5777 = vadd.f32 %v5703, %v5743
  %v5778 = vadd.f32 %v5704, %v5743
  %v5779 = vadd.f32 %v5705, %v5743
  %v5780 = vadd.f32 %v5706, %v5743
  %v5781 = vadd.f32 %v5707, %v5743
  %v5782 = vadd.f32 %v5708, %v5743
  %v5783 = vadd.f32 %v5709, %v5743
  %v5784 = vadd.f32 %v5710, %v5743
  %v5785 = vadd.f32 %v5711, %v5743
  %v5786 = vadd.f32 %v5712, %v5743
  %v5787 = vadd.f32 %v5713, %v5743
  %v5788 = vadd.f32 %v5714, %v5743
  %v5789 = vadd.f32 %v5715, %v5743
  %v5790 = vadd.f32 %v5716, %v5743
  %v5791 = vadd.f32 %v5717, %v5743
  %v5792 = vadd.f32 %v5718, %v5743
  %v5793 = vadd.f32 %v5719, %v5743
  %v5794 = vadd.f32 %v5720, %v5743
  %v5795 = vadd.f32 %v5721, %v5743
  %v5796 = vadd.f32 %v5722, %v5743
  %v5797 = vadd.f32 %v5723, %v5743
  %v5798 = vadd.f32 %v5724, %v5743
  %v5799 = vadd.f32 %v5725, %v5743
  %v5800 = vadd.f32 %v5726, %v5743
  %v5801 = vadd.f32 %v5727, %v5743
  %v5802 = vadd.f32 %v5728, %v5743
  %v5803 = vadd.f32 %v5729, %v5743
  %v5804 = vadd.f32 %v5730, %v5743
  %v5805 = vadd.f32 %v5731, %v5743
  %v5806 = vadd.f32 %v5732, %v5743
  %v5807 = vadd.f32 %v5733, %v5743
  %v5808 = vadd.f32 %v5734, %v5743
  %v5809 = vadd.f32 %v5735, %v5743
  %v5810 = vadd.f32 %v5736, %v5743
  %v5811 = vadd.f32 %v5737, %v5743
  %s5812 = scalar_lea.vmem [#allocation2], 536
  %5813 = vst.msk [vmem:[%s5812] sm:$0xff] %vm2900, %v5745
  %5814 = vst.msk [vmem:[%s5812 + $0x8] sm:$0xff] %vm2900, %v5746
  %5815 = vst.msk [vmem:[%s5812 + $0x10] sm:$0xff] %vm2900, %v5747
  %5816 = vst.msk [vmem:[%s5812 + $0x18] sm:$0xff] %vm2900, %v5748
  %5817 = vst.msk [vmem:[%s5812 + $0x20] sm:$0xff] %vm2900, %v5749
  %5818 = vst.msk [vmem:[%s5812 + $0x28] sm:$0xff] %vm2900, %v5750
  %5819 = vst.msk [vmem:[%s5812 + $0x30] sm:$0xff] %vm2900, %v5751
  %5820 = vst.msk [vmem:[%s5812 + $0x38] sm:$0xff] %vm2900, %v5752
  %5821 = vst.msk [vmem:[%s5812 + $0x40] sm:$0xff] %vm2900, %v5753
  %5822 = vst.msk [vmem:[%s5812 + $0x48] sm:$0xff] %vm2900, %v5754
  %5823 = vst.msk [vmem:[%s5812 + $0x50] sm:$0xff] %vm2900, %v5755
  %5824 = vst.msk [vmem:[%s5812 + $0x58] sm:$0xff] %vm2900, %v5756
  %5825 = vst.msk [vmem:[%s5812 + $0x60] sm:$0xff] %vm2900, %v5757
  %5826 = vst.msk [vmem:[%s5812 + $0x68] sm:$0xff] %vm2900, %v5758
  %5827 = vst.msk [vmem:[%s5812 + $0x70] sm:$0xff] %vm2900, %v5759
  %5828 = vst.msk [vmem:[%s5812 + $0x78] sm:$0xff] %vm2900, %v5760
  %5829 = vst.msk [vmem:[%s5812 + $0x80] sm:$0xff] %vm2900, %v5761
  %5830 = vst.msk [vmem:[%s5812 + $0x88] sm:$0xff] %vm2900, %v5762
  %5831 = vst.msk [vmem:[%s5812 + $0x90] sm:$0xff] %vm2900, %v5763
  %5832 = vst.msk [vmem:[%s5812 + $0x98] sm:$0xff] %vm2900, %v5764
  %5833 = vst.msk [vmem:[%s5812 + $0xa0] sm:$0xff] %vm2900, %v5765
  %5834 = vst.msk [vmem:[%s5812 + $0xa8] sm:$0xff] %vm2900, %v5766
  %5835 = vst.msk [vmem:[%s5812 + $0xb0] sm:$0xff] %vm2900, %v5767
  %5836 = vst.msk [vmem:[%s5812 + $0xb8] sm:$0xff] %vm2900, %v5768
  %5837 = vst.msk [vmem:[%s5812 + $0xc0] sm:$0xff] %vm2900, %v5769
  %5838 = vst.msk [vmem:[%s5812 + $0xc8] sm:$0xff] %vm2900, %v5770
  %5839 = vst.msk [vmem:[%s5812 + $0xd0] sm:$0xff] %vm2900, %v5771
  %5840 = vst.msk [vmem:[%s5812 + $0xd8] sm:$0xff] %vm2900, %v5772
  %5841 = vst.msk [vmem:[%s5812 + $0xe0] sm:$0xff] %vm2900, %v5773
  %5842 = vst.msk [vmem:[%s5812 + $0xe8] sm:$0xff] %vm2900, %v5774
  %5843 = vst.msk [vmem:[%s5812 + $0xf0] sm:$0xff] %vm2900, %v5775
  %5844 = vst.msk [vmem:[%s5812 + $0xf8] sm:$0xff] %vm2900, %v5776
  %5845 = vst.msk [vmem:[%s5812 + $0x100] sm:$0xff] %vm2900, %v5777
  %5846 = vst.msk [vmem:[%s5812 + $0x108] sm:$0xff] %vm2900, %v5778
  %5847 = vst.msk [vmem:[%s5812 + $0x110] sm:$0xff] %vm2900, %v5779
  %5848 = vst.msk [vmem:[%s5812 + $0x118] sm:$0xff] %vm2900, %v5780
  %5849 = vst.msk [vmem:[%s5812 + $0x120] sm:$0xff] %vm2900, %v5781
  %5850 = vst.msk [vmem:[%s5812 + $0x128] sm:$0xff] %vm2900, %v5782
  %5851 = vst.msk [vmem:[%s5812 + $0x130] sm:$0xff] %vm2900, %v5783
  %5852 = vst.msk [vmem:[%s5812 + $0x138] sm:$0xff] %vm2900, %v5784
  %5853 = vst.msk [vmem:[%s5812 + $0x140] sm:$0xff] %vm2900, %v5785
  %5854 = vst.msk [vmem:[%s5812 + $0x148] sm:$0xff] %vm2900, %v5786
  %5855 = vst.msk [vmem:[%s5812 + $0x150] sm:$0xff] %vm2900, %v5787
  %5856 = vst.msk [vmem:[%s5812 + $0x158] sm:$0xff] %vm2900, %v5788
  %5857 = vst.msk [vmem:[%s5812 + $0x160] sm:$0xff] %vm2900, %v5789
  %5858 = vst.msk [vmem:[%s5812 + $0x168] sm:$0xff] %vm2900, %v5790
  %5859 = vst.msk [vmem:[%s5812 + $0x170] sm:$0xff] %vm2900, %v5791
  %5860 = vst.msk [vmem:[%s5812 + $0x178] sm:$0xff] %vm2900, %v5792
  %5861 = vst.msk [vmem:[%s5812 + $0x180] sm:$0xff] %vm2900, %v5793
  %5862 = vst.msk [vmem:[%s5812 + $0x188] sm:$0xff] %vm2900, %v5794
  %5863 = vst.msk [vmem:[%s5812 + $0x190] sm:$0xff] %vm2900, %v5795
  %5864 = vst.msk [vmem:[%s5812 + $0x198] sm:$0xff] %vm2900, %v5796
  %5865 = vst.msk [vmem:[%s5812 + $0x1a0] sm:$0xff] %vm2900, %v5797
  %5866 = vst.msk [vmem:[%s5812 + $0x1a8] sm:$0xff] %vm2900, %v5798
  %5867 = vst.msk [vmem:[%s5812 + $0x1b0] sm:$0xff] %vm2900, %v5799
  %5868 = vst.msk [vmem:[%s5812 + $0x1b8] sm:$0xff] %vm2900, %v5800
  %5869 = vst.msk [vmem:[%s5812 + $0x1c0] sm:$0xff] %vm2900, %v5801
  %5870 = vst.msk [vmem:[%s5812 + $0x1c8] sm:$0xff] %vm2900, %v5802
  %5871 = vst.msk [vmem:[%s5812 + $0x1d0] sm:$0xff] %vm2900, %v5803
  %5872 = vst.msk [vmem:[%s5812 + $0x1d8] sm:$0xff] %vm2900, %v5804
  %5873 = vst.msk [vmem:[%s5812 + $0x1e0] sm:$0xff] %vm2900, %v5805
  %5874 = vst.msk [vmem:[%s5812 + $0x1e8] sm:$0xff] %vm2900, %v5806
  %5875 = vst.msk [vmem:[%s5812 + $0x1f0] sm:$0xff] %vm2900, %v5807
  %5876 = vst.msk [vmem:[%s5812 + $0x1f8] sm:$0xff] %vm2900, %v5808
  %5877 = vst.msk [vmem:[%s5812 + $0x200] sm:$0xff] %vm2900, %v5809
  %5878 = vst.msk [vmem:[%s5812 + $0x208] sm:$0xff] %vm2900, %v5810
  %5879 = vst.msk [vmem:[%s5812 + $0x210] sm:$0x1] %vm2967, %v5811
  %v5880 = vld [vmem:[#allocation2] sm:$0xff]
  %v5881 = vld [vmem:[#allocation2 + $0x8] sm:$0xff]
  %v5882 = vld [vmem:[#allocation2 + $0x10] sm:$0xff]
  %v5883 = vld [vmem:[#allocation2 + $0x18] sm:$0xff]
  %v5884 = vld [vmem:[#allocation2 + $0x20] sm:$0xff]
  %v5885 = vld [vmem:[#allocation2 + $0x28] sm:$0xff]
  %v5886 = vld [vmem:[#allocation2 + $0x30] sm:$0xff]
  %v5887 = vld [vmem:[#allocation2 + $0x38] sm:$0xff]
  %v5888 = vld [vmem:[#allocation2 + $0x40] sm:$0xff]
  %v5889 = vld [vmem:[#allocation2 + $0x48] sm:$0xff]
  %v5890 = vld [vmem:[#allocation2 + $0x50] sm:$0xff]
  %v5891 = vld [vmem:[#allocation2 + $0x58] sm:$0xff]
  %v5892 = vld [vmem:[#allocation2 + $0x60] sm:$0xff]
  %v5893 = vld [vmem:[#allocation2 + $0x68] sm:$0xff]
  %v5894 = vld [vmem:[#allocation2 + $0x70] sm:$0xff]
  %v5895 = vld [vmem:[#allocation2 + $0x78] sm:$0xff]
  %v5896 = vld [vmem:[#allocation2 + $0x80] sm:$0xff]
  %v5897 = vld [vmem:[#allocation2 + $0x88] sm:$0xff]
  %v5898 = vld [vmem:[#allocation2 + $0x90] sm:$0xff]
  %v5899 = vld [vmem:[#allocation2 + $0x98] sm:$0xff]
  %v5900 = vld [vmem:[#allocation2 + $0xa0] sm:$0xff]
  %v5901 = vld [vmem:[#allocation2 + $0xa8] sm:$0xff]
  %v5902 = vld [vmem:[#allocation2 + $0xb0] sm:$0xff]
  %v5903 = vld [vmem:[#allocation2 + $0xb8] sm:$0xff]
  %v5904 = vld [vmem:[#allocation2 + $0xc0] sm:$0xff]
  %v5905 = vld [vmem:[#allocation2 + $0xc8] sm:$0xff]
  %v5906 = vld [vmem:[#allocation2 + $0xd0] sm:$0xff]
  %v5907 = vld [vmem:[#allocation2 + $0xd8] sm:$0xff]
  %v5908 = vld [vmem:[#allocation2 + $0xe0] sm:$0xff]
  %v5909 = vld [vmem:[#allocation2 + $0xe8] sm:$0xff]
  %v5910 = vld [vmem:[#allocation2 + $0xf0] sm:$0xff]
  %v5911 = vld [vmem:[#allocation2 + $0xf8] sm:$0xff]
  %v5912 = vld [vmem:[#allocation2 + $0x100] sm:$0xff]
  %v5913 = vld [vmem:[#allocation2 + $0x108] sm:$0xff]
  %v5914 = vld [vmem:[#allocation2 + $0x110] sm:$0xff]
  %v5915 = vld [vmem:[#allocation2 + $0x118] sm:$0xff]
  %v5916 = vld [vmem:[#allocation2 + $0x120] sm:$0xff]
  %v5917 = vld [vmem:[#allocation2 + $0x128] sm:$0xff]
  %v5918 = vld [vmem:[#allocation2 + $0x130] sm:$0xff]
  %v5919 = vld [vmem:[#allocation2 + $0x138] sm:$0xff]
  %v5920 = vld [vmem:[#allocation2 + $0x140] sm:$0xff]
  %v5921 = vld [vmem:[#allocation2 + $0x148] sm:$0xff]
  %v5922 = vld [vmem:[#allocation2 + $0x150] sm:$0xff]
  %v5923 = vld [vmem:[#allocation2 + $0x158] sm:$0xff]
  %v5924 = vld [vmem:[#allocation2 + $0x160] sm:$0xff]
  %v5925 = vld [vmem:[#allocation2 + $0x168] sm:$0xff]
  %v5926 = vld [vmem:[#allocation2 + $0x170] sm:$0xff]
  %v5927 = vld [vmem:[#allocation2 + $0x178] sm:$0xff]
  %v5928 = vld [vmem:[#allocation2 + $0x180] sm:$0xff]
  %v5929 = vld [vmem:[#allocation2 + $0x188] sm:$0xff]
  %v5930 = vld [vmem:[#allocation2 + $0x190] sm:$0xff]
  %v5931 = vld [vmem:[#allocation2 + $0x198] sm:$0xff]
  %v5932 = vld [vmem:[#allocation2 + $0x1a0] sm:$0xff]
  %v5933 = vld [vmem:[#allocation2 + $0x1a8] sm:$0xff]
  %v5934 = vld [vmem:[#allocation2 + $0x1b0] sm:$0xff]
  %v5935 = vld [vmem:[#allocation2 + $0x1b8] sm:$0xff]
  %v5936 = vld [vmem:[#allocation2 + $0x1c0] sm:$0xff]
  %v5937 = vld [vmem:[#allocation2 + $0x1c8] sm:$0xff]
  %v5938 = vld [vmem:[#allocation2 + $0x1d0] sm:$0xff]
  %v5939 = vld [vmem:[#allocation2 + $0x1d8] sm:$0xff]
  %v5940 = vld [vmem:[#allocation2 + $0x1e0] sm:$0xff]
  %v5941 = vld [vmem:[#allocation2 + $0x1e8] sm:$0xff]
  %v5942 = vld [vmem:[#allocation2 + $0x1f0] sm:$0xff]
  %v5943 = vld [vmem:[#allocation2 + $0x1f8] sm:$0xff]
  %v5944 = vld [vmem:[#allocation2 + $0x200] sm:$0xff]
  %v5945 = vld [vmem:[#allocation2 + $0x208] sm:$0xff]
  %v5946 = vld [vmem:[#allocation2 + $0x210] sm:$0x1]
  %v5947 = vld [vmem:[#allocation2 + $0x218] sm:$0xff]
  %v5948 = vld [vmem:[#allocation2 + $0x220] sm:$0xff]
  %v5949 = vld [vmem:[#allocation2 + $0x228] sm:$0xff]
  %v5950 = vld [vmem:[#allocation2 + $0x230] sm:$0xff]
  %v5951 = vld [vmem:[#allocation2 + $0x238] sm:$0xff]
  %v5952 = vld [vmem:[#allocation2 + $0x240] sm:$0xff]
  %v5953 = vld [vmem:[#allocation2 + $0x248] sm:$0xff]
  %v5954 = vld [vmem:[#allocation2 + $0x250] sm:$0xff]
  %v5955 = vld [vmem:[#allocation2 + $0x258] sm:$0xff]
  %v5956 = vld [vmem:[#allocation2 + $0x260] sm:$0xff]
  %v5957 = vld [vmem:[#allocation2 + $0x268] sm:$0xff]
  %v5958 = vld [vmem:[#allocation2 + $0x270] sm:$0xff]
  %v5959 = vld [vmem:[#allocation2 + $0x278] sm:$0xff]
  %v5960 = vld [vmem:[#allocation2 + $0x280] sm:$0xff]
  %v5961 = vld [vmem:[#allocation2 + $0x288] sm:$0xff]
  %v5962 = vld [vmem:[#allocation2 + $0x290] sm:$0xff]
  %v5963 = vld [vmem:[#allocation2 + $0x298] sm:$0xff]
  %v5964 = vld [vmem:[#allocation2 + $0x2a0] sm:$0xff]
  %v5965 = vld [vmem:[#allocation2 + $0x2a8] sm:$0xff]
  %v5966 = vld [vmem:[#allocation2 + $0x2b0] sm:$0xff]
  %v5967 = vld [vmem:[#allocation2 + $0x2b8] sm:$0xff]
  %v5968 = vld [vmem:[#allocation2 + $0x2c0] sm:$0xff]
  %v5969 = vld [vmem:[#allocation2 + $0x2c8] sm:$0xff]
  %v5970 = vld [vmem:[#allocation2 + $0x2d0] sm:$0xff]
  %v5971 = vld [vmem:[#allocation2 + $0x2d8] sm:$0xff]
  %v5972 = vld [vmem:[#allocation2 + $0x2e0] sm:$0xff]
  %v5973 = vld [vmem:[#allocation2 + $0x2e8] sm:$0xff]
  %v5974 = vld [vmem:[#allocation2 + $0x2f0] sm:$0xff]
  %v5975 = vld [vmem:[#allocation2 + $0x2f8] sm:$0xff]
  %v5976 = vld [vmem:[#allocation2 + $0x300] sm:$0xff]
  %v5977 = vld [vmem:[#allocation2 + $0x308] sm:$0xff]
  %v5978 = vld [vmem:[#allocation2 + $0x310] sm:$0xff]
  %v5979 = vld [vmem:[#allocation2 + $0x318] sm:$0xff]
  %v5980 = vld [vmem:[#allocation2 + $0x320] sm:$0xff]
  %v5981 = vld [vmem:[#allocation2 + $0x328] sm:$0xff]
  %v5982 = vld [vmem:[#allocation2 + $0x330] sm:$0xff]
  %v5983 = vld [vmem:[#allocation2 + $0x338] sm:$0xff]
  %v5984 = vld [vmem:[#allocation2 + $0x340] sm:$0xff]
  %v5985 = vld [vmem:[#allocation2 + $0x348] sm:$0xff]
  %v5986 = vld [vmem:[#allocation2 + $0x350] sm:$0xff]
  %v5987 = vld [vmem:[#allocation2 + $0x358] sm:$0xff]
  %v5988 = vld [vmem:[#allocation2 + $0x360] sm:$0xff]
  %v5989 = vld [vmem:[#allocation2 + $0x368] sm:$0xff]
  %v5990 = vld [vmem:[#allocation2 + $0x370] sm:$0xff]
  %v5991 = vld [vmem:[#allocation2 + $0x378] sm:$0xff]
  %v5992 = vld [vmem:[#allocation2 + $0x380] sm:$0xff]
  %v5993 = vld [vmem:[#allocation2 + $0x388] sm:$0xff]
  %v5994 = vld [vmem:[#allocation2 + $0x390] sm:$0xff]
  %v5995 = vld [vmem:[#allocation2 + $0x398] sm:$0xff]
  %v5996 = vld [vmem:[#allocation2 + $0x3a0] sm:$0xff]
  %v5997 = vld [vmem:[#allocation2 + $0x3a8] sm:$0xff]
  %v5998 = vld [vmem:[#allocation2 + $0x3b0] sm:$0xff]
  %v5999 = vld [vmem:[#allocation2 + $0x3b8] sm:$0xff]
  %v6000 = vld [vmem:[#allocation2 + $0x3c0] sm:$0xff]
  %v6001 = vld [vmem:[#allocation2 + $0x3c8] sm:$0xff]
  %v6002 = vld [vmem:[#allocation2 + $0x3d0] sm:$0xff]
  %v6003 = vld [vmem:[#allocation2 + $0x3d8] sm:$0xff]
  %v6004 = vld [vmem:[#allocation2 + $0x3e0] sm:$0xff]
  %v6005 = vld [vmem:[#allocation2 + $0x3e8] sm:$0xff]
  %v6006 = vld [vmem:[#allocation2 + $0x3f0] sm:$0xff]
  %v6007 = vld [vmem:[#allocation2 + $0x3f8] sm:$0xff]
  %v6008 = vld [vmem:[#allocation2 + $0x400] sm:$0xff]
  %v6009 = vld [vmem:[#allocation2 + $0x408] sm:$0xff]
  %v6010 = vld [vmem:[#allocation2 + $0x410] sm:$0xff]
  %v6011 = vld [vmem:[#allocation2 + $0x418] sm:$0xff]
  %v6012 = vld [vmem:[#allocation2 + $0x420] sm:$0xff]
  %v6013 = vld [vmem:[#allocation2 + $0x428] sm:$0x1]
  %v6014 = vsel %vm2900, %v5880, 0.0
  %v6015 = vsel %vm2900, %v5881, 0.0
  %v6016 = vadd.f32 %v6014, %v6015
  %v6017 = vsel %vm2900, %v5882, 0.0
  %v6018 = vadd.f32 %v6016, %v6017
  %v6019 = vsel %vm2900, %v5883, 0.0
  %v6020 = vadd.f32 %v6018, %v6019
  %v6021 = vsel %vm2900, %v5884, 0.0
  %v6022 = vadd.f32 %v6020, %v6021
  %v6023 = vsel %vm2900, %v5885, 0.0
  %v6024 = vadd.f32 %v6022, %v6023
  %v6025 = vsel %vm2900, %v5886, 0.0
  %v6026 = vadd.f32 %v6024, %v6025
  %v6027 = vsel %vm2900, %v5887, 0.0
  %v6028 = vadd.f32 %v6026, %v6027
  %v6029 = vsel %vm2900, %v5888, 0.0
  %v6030 = vadd.f32 %v6028, %v6029
  %v6031 = vsel %vm2900, %v5889, 0.0
  %v6032 = vadd.f32 %v6030, %v6031
  %v6033 = vsel %vm2900, %v5890, 0.0
  %v6034 = vadd.f32 %v6032, %v6033
  %v6035 = vsel %vm2900, %v5891, 0.0
  %v6036 = vadd.f32 %v6034, %v6035
  %v6037 = vsel %vm2900, %v5892, 0.0
  %v6038 = vadd.f32 %v6036, %v6037
  %v6039 = vsel %vm2900, %v5893, 0.0
  %v6040 = vadd.f32 %v6038, %v6039
  %v6041 = vsel %vm2900, %v5894, 0.0
  %v6042 = vadd.f32 %v6040, %v6041
  %v6043 = vsel %vm2900, %v5895, 0.0
  %v6044 = vadd.f32 %v6042, %v6043
  %v6045 = vsel %vm2900, %v5896, 0.0
  %v6046 = vadd.f32 %v6044, %v6045
  %v6047 = vsel %vm2900, %v5897, 0.0
  %v6048 = vadd.f32 %v6046, %v6047
  %v6049 = vsel %vm2900, %v5898, 0.0
  %v6050 = vadd.f32 %v6048, %v6049
  %v6051 = vsel %vm2900, %v5899, 0.0
  %v6052 = vadd.f32 %v6050, %v6051
  %v6053 = vsel %vm2900, %v5900, 0.0
  %v6054 = vadd.f32 %v6052, %v6053
  %v6055 = vsel %vm2900, %v5901, 0.0
  %v6056 = vadd.f32 %v6054, %v6055
  %v6057 = vsel %vm2900, %v5902, 0.0
  %v6058 = vadd.f32 %v6056, %v6057
  %v6059 = vsel %vm2900, %v5903, 0.0
  %v6060 = vadd.f32 %v6058, %v6059
  %v6061 = vsel %vm2900, %v5904, 0.0
  %v6062 = vadd.f32 %v6060, %v6061
  %v6063 = vsel %vm2900, %v5905, 0.0
  %v6064 = vadd.f32 %v6062, %v6063
  %v6065 = vsel %vm2900, %v5906, 0.0
  %v6066 = vadd.f32 %v6064, %v6065
  %v6067 = vsel %vm2900, %v5907, 0.0
  %v6068 = vadd.f32 %v6066, %v6067
  %v6069 = vsel %vm2900, %v5908, 0.0
  %v6070 = vadd.f32 %v6068, %v6069
  %v6071 = vsel %vm2900, %v5909, 0.0
  %v6072 = vadd.f32 %v6070, %v6071
  %v6073 = vsel %vm2900, %v5910, 0.0
  %v6074 = vadd.f32 %v6072, %v6073
  %v6075 = vsel %vm2900, %v5911, 0.0
  %v6076 = vadd.f32 %v6074, %v6075
  %v6077 = vsel %vm2900, %v5912, 0.0
  %v6078 = vadd.f32 %v6076, %v6077
  %v6079 = vsel %vm2900, %v5913, 0.0
  %v6080 = vadd.f32 %v6078, %v6079
  %v6081 = vsel %vm2900, %v5914, 0.0
  %v6082 = vadd.f32 %v6080, %v6081
  %v6083 = vsel %vm2900, %v5915, 0.0
  %v6084 = vadd.f32 %v6082, %v6083
  %v6085 = vsel %vm2900, %v5916, 0.0
  %v6086 = vadd.f32 %v6084, %v6085
  %v6087 = vsel %vm2900, %v5917, 0.0
  %v6088 = vadd.f32 %v6086, %v6087
  %v6089 = vsel %vm2900, %v5918, 0.0
  %v6090 = vadd.f32 %v6088, %v6089
  %v6091 = vsel %vm2900, %v5919, 0.0
  %v6092 = vadd.f32 %v6090, %v6091
  %v6093 = vsel %vm2900, %v5920, 0.0
  %v6094 = vadd.f32 %v6092, %v6093
  %v6095 = vsel %vm2900, %v5921, 0.0
  %v6096 = vadd.f32 %v6094, %v6095
  %v6097 = vsel %vm2900, %v5922, 0.0
  %v6098 = vadd.f32 %v6096, %v6097
  %v6099 = vsel %vm2900, %v5923, 0.0
  %v6100 = vadd.f32 %v6098, %v6099
  %v6101 = vsel %vm2900, %v5924, 0.0
  %v6102 = vadd.f32 %v6100, %v6101
  %v6103 = vsel %vm2900, %v5925, 0.0
  %v6104 = vadd.f32 %v6102, %v6103
  %v6105 = vsel %vm2900, %v5926, 0.0
  %v6106 = vadd.f32 %v6104, %v6105
  %v6107 = vsel %vm2900, %v5927, 0.0
  %v6108 = vadd.f32 %v6106, %v6107
  %v6109 = vsel %vm2900, %v5928, 0.0
  %v6110 = vadd.f32 %v6108, %v6109
  %v6111 = vsel %vm2900, %v5929, 0.0
  %v6112 = vadd.f32 %v6110, %v6111
  %v6113 = vsel %vm2900, %v5930, 0.0
  %v6114 = vadd.f32 %v6112, %v6113
  %v6115 = vsel %vm2900, %v5931, 0.0
  %v6116 = vadd.f32 %v6114, %v6115
  %v6117 = vsel %vm2900, %v5932, 0.0
  %v6118 = vadd.f32 %v6116, %v6117
  %v6119 = vsel %vm2900, %v5933, 0.0
  %v6120 = vadd.f32 %v6118, %v6119
  %v6121 = vsel %vm2900, %v5934, 0.0
  %v6122 = vadd.f32 %v6120, %v6121
  %v6123 = vsel %vm2900, %v5935, 0.0
  %v6124 = vadd.f32 %v6122, %v6123
  %v6125 = vsel %vm2900, %v5936, 0.0
  %v6126 = vadd.f32 %v6124, %v6125
  %v6127 = vsel %vm2900, %v5937, 0.0
  %v6128 = vadd.f32 %v6126, %v6127
  %v6129 = vsel %vm2900, %v5938, 0.0
  %v6130 = vadd.f32 %v6128, %v6129
  %v6131 = vsel %vm2900, %v5939, 0.0
  %v6132 = vadd.f32 %v6130, %v6131
  %v6133 = vsel %vm2900, %v5940, 0.0
  %v6134 = vadd.f32 %v6132, %v6133
  %v6135 = vsel %vm2900, %v5941, 0.0
  %v6136 = vadd.f32 %v6134, %v6135
  %v6137 = vsel %vm2900, %v5942, 0.0
  %v6138 = vadd.f32 %v6136, %v6137
  %v6139 = vsel %vm2900, %v5943, 0.0
  %v6140 = vadd.f32 %v6138, %v6139
  %v6141 = vsel %vm2900, %v5944, 0.0
  %v6142 = vadd.f32 %v6140, %v6141
  %v6143 = vsel %vm2900, %v5945, 0.0
  %v6144 = vadd.f32 %v6142, %v6143
  %v6145 = vsel %vm2967, %v5946, 0.0
  %v6146 = vadd.f32 %v6144, %v6145
  %v6147 = vrot.slane %v6146, 4
  %v6148 = vadd.f32 %v6146, %v6147
  %v6149 = vrot.slane %v6148, 2
  %v6150 = vadd.f32 %v6148, %v6149
  %v6151 = vrot.slane %v6150, 1
  %v6152 = vadd.f32 %v6150, %v6151
  %v6153 = vsel %vm2900, %v5947, 0.0
  %v6154 = vsel %vm2900, %v5948, 0.0
  %v6155 = vadd.f32 %v6153, %v6154
  %v6156 = vsel %vm2900, %v5949, 0.0
  %v6157 = vadd.f32 %v6155, %v6156
  %v6158 = vsel %vm2900, %v5950, 0.0
  %v6159 = vadd.f32 %v6157, %v6158
  %v6160 = vsel %vm2900, %v5951, 0.0
  %v6161 = vadd.f32 %v6159, %v6160
  %v6162 = vsel %vm2900, %v5952, 0.0
  %v6163 = vadd.f32 %v6161, %v6162
  %v6164 = vsel %vm2900, %v5953, 0.0
  %v6165 = vadd.f32 %v6163, %v6164
  %v6166 = vsel %vm2900, %v5954, 0.0
  %v6167 = vadd.f32 %v6165, %v6166
  %v6168 = vsel %vm2900, %v5955, 0.0
  %v6169 = vadd.f32 %v6167, %v6168
  %v6170 = vsel %vm2900, %v5956, 0.0
  %v6171 = vadd.f32 %v6169, %v6170
  %v6172 = vsel %vm2900, %v5957, 0.0
  %v6173 = vadd.f32 %v6171, %v6172
  %v6174 = vsel %vm2900, %v5958, 0.0
  %v6175 = vadd.f32 %v6173, %v6174
  %v6176 = vsel %vm2900, %v5959, 0.0
  %v6177 = vadd.f32 %v6175, %v6176
  %v6178 = vsel %vm2900, %v5960, 0.0
  %v6179 = vadd.f32 %v6177, %v6178
  %v6180 = vsel %vm2900, %v5961, 0.0
  %v6181 = vadd.f32 %v6179, %v6180
  %v6182 = vsel %vm2900, %v5962, 0.0
  %v6183 = vadd.f32 %v6181, %v6182
  %v6184 = vsel %vm2900, %v5963, 0.0
  %v6185 = vadd.f32 %v6183, %v6184
  %v6186 = vsel %vm2900, %v5964, 0.0
  %v6187 = vadd.f32 %v6185, %v6186
  %v6188 = vsel %vm2900, %v5965, 0.0
  %v6189 = vadd.f32 %v6187, %v6188
  %v6190 = vsel %vm2900, %v5966, 0.0
  %v6191 = vadd.f32 %v6189, %v6190
  %v6192 = vsel %vm2900, %v5967, 0.0
  %v6193 = vadd.f32 %v6191, %v6192
  %v6194 = vsel %vm2900, %v5968, 0.0
  %v6195 = vadd.f32 %v6193, %v6194
  %v6196 = vsel %vm2900, %v5969, 0.0
  %v6197 = vadd.f32 %v6195, %v6196
  %v6198 = vsel %vm2900, %v5970, 0.0
  %v6199 = vadd.f32 %v6197, %v6198
  %v6200 = vsel %vm2900, %v5971, 0.0
  %v6201 = vadd.f32 %v6199, %v6200
  %v6202 = vsel %vm2900, %v5972, 0.0
  %v6203 = vadd.f32 %v6201, %v6202
  %v6204 = vsel %vm2900, %v5973, 0.0
  %v6205 = vadd.f32 %v6203, %v6204
  %v6206 = vsel %vm2900, %v5974, 0.0
  %v6207 = vadd.f32 %v6205, %v6206
  %v6208 = vsel %vm2900, %v5975, 0.0
  %v6209 = vadd.f32 %v6207, %v6208
  %v6210 = vsel %vm2900, %v5976, 0.0
  %v6211 = vadd.f32 %v6209, %v6210
  %v6212 = vsel %vm2900, %v5977, 0.0
  %v6213 = vadd.f32 %v6211, %v6212
  %v6214 = vsel %vm2900, %v5978, 0.0
  %v6215 = vadd.f32 %v6213, %v6214
  %v6216 = vsel %vm2900, %v5979, 0.0
  %v6217 = vadd.f32 %v6215, %v6216
  %v6218 = vsel %vm2900, %v5980, 0.0
  %v6219 = vadd.f32 %v6217, %v6218
  %v6220 = vsel %vm2900, %v5981, 0.0
  %v6221 = vadd.f32 %v6219, %v6220
  %v6222 = vsel %vm2900, %v5982, 0.0
  %v6223 = vadd.f32 %v6221, %v6222
  %v6224 = vsel %vm2900, %v5983, 0.0
  %v6225 = vadd.f32 %v6223, %v6224
  %v6226 = vsel %vm2900, %v5984, 0.0
  %v6227 = vadd.f32 %v6225, %v6226
  %v6228 = vsel %vm2900, %v5985, 0.0
  %v6229 = vadd.f32 %v6227, %v6228
  %v6230 = vsel %vm2900, %v5986, 0.0
  %v6231 = vadd.f32 %v6229, %v6230
  %v6232 = vsel %vm2900, %v5987, 0.0
  %v6233 = vadd.f32 %v6231, %v6232
  %v6234 = vsel %vm2900, %v5988, 0.0
  %v6235 = vadd.f32 %v6233, %v6234
  %v6236 = vsel %vm2900, %v5989, 0.0
  %v6237 = vadd.f32 %v6235, %v6236
  %v6238 = vsel %vm2900, %v5990, 0.0
  %v6239 = vadd.f32 %v6237, %v6238
  %v6240 = vsel %vm2900, %v5991, 0.0
  %v6241 = vadd.f32 %v6239, %v6240
  %v6242 = vsel %vm2900, %v5992, 0.0
  %v6243 = vadd.f32 %v6241, %v6242
  %v6244 = vsel %vm2900, %v5993, 0.0
  %v6245 = vadd.f32 %v6243, %v6244
  %v6246 = vsel %vm2900, %v5994, 0.0
  %v6247 = vadd.f32 %v6245, %v6246
  %v6248 = vsel %vm2900, %v5995, 0.0
  %v6249 = vadd.f32 %v6247, %v6248
  %v6250 = vsel %vm2900, %v5996, 0.0
  %v6251 = vadd.f32 %v6249, %v6250
  %v6252 = vsel %vm2900, %v5997, 0.0
  %v6253 = vadd.f32 %v6251, %v6252
  %v6254 = vsel %vm2900, %v5998, 0.0
  %v6255 = vadd.f32 %v6253, %v6254
  %v6256 = vsel %vm2900, %v5999, 0.0
  %v6257 = vadd.f32 %v6255, %v6256
  %v6258 = vsel %vm2900, %v6000, 0.0
  %v6259 = vadd.f32 %v6257, %v6258
  %v6260 = vsel %vm2900, %v6001, 0.0
  %v6261 = vadd.f32 %v6259, %v6260
  %v6262 = vsel %vm2900, %v6002, 0.0
  %v6263 = vadd.f32 %v6261, %v6262
  %v6264 = vsel %vm2900, %v6003, 0.0
  %v6265 = vadd.f32 %v6263, %v6264
  %v6266 = vsel %vm2900, %v6004, 0.0
  %v6267 = vadd.f32 %v6265, %v6266
  %v6268 = vsel %vm2900, %v6005, 0.0
  %v6269 = vadd.f32 %v6267, %v6268
  %v6270 = vsel %vm2900, %v6006, 0.0
  %v6271 = vadd.f32 %v6269, %v6270
  %v6272 = vsel %vm2900, %v6007, 0.0
  %v6273 = vadd.f32 %v6271, %v6272
  %v6274 = vsel %vm2900, %v6008, 0.0
  %v6275 = vadd.f32 %v6273, %v6274
  %v6276 = vsel %vm2900, %v6009, 0.0
  %v6277 = vadd.f32 %v6275, %v6276
  %v6278 = vsel %vm2900, %v6010, 0.0
  %v6279 = vadd.f32 %v6277, %v6278
  %v6280 = vsel %vm2900, %v6011, 0.0
  %v6281 = vadd.f32 %v6279, %v6280
  %v6282 = vsel %vm2900, %v6012, 0.0
  %v6283 = vadd.f32 %v6281, %v6282
  %v6284 = vsel %vm2967, %v6013, 0.0
  %v6285 = vadd.f32 %v6283, %v6284
  %v6286 = vrot.slane %v6285, 4
  %v6287 = vadd.f32 %v6285, %v6286
  %v6288 = vrot.slane %v6287, 2
  %v6289 = vadd.f32 %v6287, %v6288
  %v6290 = vrot.slane %v6289, 1
  %v6291 = vadd.f32 %v6289, %v6290
  %v6292 = vrcp.pop 529.0
  %v6293 = vmul.f32 %v6152, %v6292
  %v6294 = vmul.f32 %v6291, %v6292
  %v6295 = vsel %vm2900, %v6293, 0.0
  %v6296 = vsel %vm2900, %v6294, 0.0
  %v6297 = vadd.f32 %v6295, %v6296
  %v6298 = vrcp.pop 2.0
  %v6299 = vmul.f32 %v6297, %v6298
  %v6300 = vmul.f32 %v5880, %v5880
  %v6301 = vmul.f32 %v5881, %v5881
  %v6302 = vmul.f32 %v5882, %v5882
  %v6303 = vmul.f32 %v5883, %v5883
  %v6304 = vmul.f32 %v5884, %v5884
  %v6305 = vmul.f32 %v5885, %v5885
  %v6306 = vmul.f32 %v5886, %v5886
  %v6307 = vmul.f32 %v5887, %v5887
  %v6308 = vmul.f32 %v5888, %v5888
  %v6309 = vmul.f32 %v5889, %v5889
  %v6310 = vmul.f32 %v5890, %v5890
  %v6311 = vmul.f32 %v5891, %v5891
  %v6312 = vmul.f32 %v5892, %v5892
  %v6313 = vmul.f32 %v5893, %v5893
  %v6314 = vmul.f32 %v5894, %v5894
  %v6315 = vmul.f32 %v5895, %v5895
  %v6316 = vmul.f32 %v5896, %v5896
  %v6317 = vmul.f32 %v5897, %v5897
  %v6318 = vmul.f32 %v5898, %v5898
  %v6319 = vmul.f32 %v5899, %v5899
  %v6320 = vmul.f32 %v5900, %v5900
  %v6321 = vmul.f32 %v5901, %v5901
  %v6322 = vmul.f32 %v5902, %v5902
  %v6323 = vmul.f32 %v5903, %v5903
  %v6324 = vmul.f32 %v5904, %v5904
  %v6325 = vmul.f32 %v5905, %v5905
  %v6326 = vmul.f32 %v5906, %v5906
  %v6327 = vmul.f32 %v5907, %v5907
  %v6328 = vmul.f32 %v5908, %v5908
  %v6329 = vmul.f32 %v5909, %v5909
  %v6330 = vmul.f32 %v5910, %v5910
  %v6331 = vmul.f32 %v5911, %v5911
  %v6332 = vmul.f32 %v5912, %v5912
  %v6333 = vmul.f32 %v5913, %v5913
  %v6334 = vmul.f32 %v5914, %v5914
  %v6335 = vmul.f32 %v5915, %v5915
  %v6336 = vmul.f32 %v5916, %v5916
  %v6337 = vmul.f32 %v5917, %v5917
  %v6338 = vmul.f32 %v5918, %v5918
  %v6339 = vmul.f32 %v5919, %v5919
  %v6340 = vmul.f32 %v5920, %v5920
  %v6341 = vmul.f32 %v5921, %v5921
  %v6342 = vmul.f32 %v5922, %v5922
  %v6343 = vmul.f32 %v5923, %v5923
  %v6344 = vmul.f32 %v5924, %v5924
  %v6345 = vmul.f32 %v5925, %v5925
  %v6346 = vmul.f32 %v5926, %v5926
  %v6347 = vmul.f32 %v5927, %v5927
  %v6348 = vmul.f32 %v5928, %v5928
  %v6349 = vmul.f32 %v5929, %v5929
  %v6350 = vmul.f32 %v5930, %v5930
  %v6351 = vmul.f32 %v5931, %v5931
  %v6352 = vmul.f32 %v5932, %v5932
  %v6353 = vmul.f32 %v5933, %v5933
  %v6354 = vmul.f32 %v5934, %v5934
  %v6355 = vmul.f32 %v5935, %v5935
  %v6356 = vmul.f32 %v5936, %v5936
  %v6357 = vmul.f32 %v5937, %v5937
  %v6358 = vmul.f32 %v5938, %v5938
  %v6359 = vmul.f32 %v5939, %v5939
  %v6360 = vmul.f32 %v5940, %v5940
  %v6361 = vmul.f32 %v5941, %v5941
  %v6362 = vmul.f32 %v5942, %v5942
  %v6363 = vmul.f32 %v5943, %v5943
  %v6364 = vmul.f32 %v5944, %v5944
  %v6365 = vmul.f32 %v5945, %v5945
  %v6366 = vmul.f32 %v5946, %v5946
  %v6367 = vmul.f32 %v5947, %v5947
  %v6368 = vmul.f32 %v5948, %v5948
  %v6369 = vmul.f32 %v5949, %v5949
  %v6370 = vmul.f32 %v5950, %v5950
  %v6371 = vmul.f32 %v5951, %v5951
  %v6372 = vmul.f32 %v5952, %v5952
  %v6373 = vmul.f32 %v5953, %v5953
  %v6374 = vmul.f32 %v5954, %v5954
  %v6375 = vmul.f32 %v5955, %v5955
  %v6376 = vmul.f32 %v5956, %v5956
  %v6377 = vmul.f32 %v5957, %v5957
  %v6378 = vmul.f32 %v5958, %v5958
  %v6379 = vmul.f32 %v5959, %v5959
  %v6380 = vmul.f32 %v5960, %v5960
  %v6381 = vmul.f32 %v5961, %v5961
  %v6382 = vmul.f32 %v5962, %v5962
  %v6383 = vmul.f32 %v5963, %v5963
  %v6384 = vmul.f32 %v5964, %v5964
  %v6385 = vmul.f32 %v5965, %v5965
  %v6386 = vmul.f32 %v5966, %v5966
  %v6387 = vmul.f32 %v5967, %v5967
  %v6388 = vmul.f32 %v5968, %v5968
  %v6389 = vmul.f32 %v5969, %v5969
  %v6390 = vmul.f32 %v5970, %v5970
  %v6391 = vmul.f32 %v5971, %v5971
  %v6392 = vmul.f32 %v5972, %v5972
  %v6393 = vmul.f32 %v5973, %v5973
  %v6394 = vmul.f32 %v5974, %v5974
  %v6395 = vmul.f32 %v5975, %v5975
  %v6396 = vmul.f32 %v5976, %v5976
  %v6397 = vmul.f32 %v5977, %v5977
  %v6398 = vmul.f32 %v5978, %v5978
  %v6399 = vmul.f32 %v5979, %v5979
  %v6400 = vmul.f32 %v5980, %v5980
  %v6401 = vmul.f32 %v5981, %v5981
  %v6402 = vmul.f32 %v5982, %v5982
  %v6403 = vmul.f32 %v5983, %v5983
  %v6404 = vmul.f32 %v5984, %v5984
  %v6405 = vmul.f32 %v5985, %v5985
  %v6406 = vmul.f32 %v5986, %v5986
  %v6407 = vmul.f32 %v5987, %v5987
  %v6408 = vmul.f32 %v5988, %v5988
  %v6409 = vmul.f32 %v5989, %v5989
  %v6410 = vmul.f32 %v5990, %v5990
  %v6411 = vmul.f32 %v5991, %v5991
  %v6412 = vmul.f32 %v5992, %v5992
  %v6413 = vmul.f32 %v5993, %v5993
  %v6414 = vmul.f32 %v5994, %v5994
  %v6415 = vmul.f32 %v5995, %v5995
  %v6416 = vmul.f32 %v5996, %v5996
  %v6417 = vmul.f32 %v5997, %v5997
  %v6418 = vmul.f32 %v5998, %v5998
  %v6419 = vmul.f32 %v5999, %v5999
  %v6420 = vmul.f32 %v6000, %v6000
  %v6421 = vmul.f32 %v6001, %v6001
  %v6422 = vmul.f32 %v6002, %v6002
  %v6423 = vmul.f32 %v6003, %v6003
  %v6424 = vmul.f32 %v6004, %v6004
  %v6425 = vmul.f32 %v6005, %v6005
  %v6426 = vmul.f32 %v6006, %v6006
  %v6427 = vmul.f32 %v6007, %v6007
  %v6428 = vmul.f32 %v6008, %v6008
  %v6429 = vmul.f32 %v6009, %v6009
  %v6430 = vmul.f32 %v6010, %v6010
  %v6431 = vmul.f32 %v6011, %v6011
  %v6432 = vmul.f32 %v6012, %v6012
  %v6433 = vmul.f32 %v6013, %v6013
  %v6434 = vsel %vm2900, %v6300, 0.0
  %v6435 = vsel %vm2900, %v6301, 0.0
  %v6436 = vadd.f32 %v6434, %v6435
  %v6437 = vsel %vm2900, %v6302, 0.0
  %v6438 = vadd.f32 %v6436, %v6437
  %v6439 = vsel %vm2900, %v6303, 0.0
  %v6440 = vadd.f32 %v6438, %v6439
  %v6441 = vsel %vm2900, %v6304, 0.0
  %v6442 = vadd.f32 %v6440, %v6441
  %v6443 = vsel %vm2900, %v6305, 0.0
  %v6444 = vadd.f32 %v6442, %v6443
  %v6445 = vsel %vm2900, %v6306, 0.0
  %v6446 = vadd.f32 %v6444, %v6445
  %v6447 = vsel %vm2900, %v6307, 0.0
  %v6448 = vadd.f32 %v6446, %v6447
  %v6449 = vsel %vm2900, %v6308, 0.0
  %v6450 = vadd.f32 %v6448, %v6449
  %v6451 = vsel %vm2900, %v6309, 0.0
  %v6452 = vadd.f32 %v6450, %v6451
  %v6453 = vsel %vm2900, %v6310, 0.0
  %v6454 = vadd.f32 %v6452, %v6453
  %v6455 = vsel %vm2900, %v6311, 0.0
  %v6456 = vadd.f32 %v6454, %v6455
  %v6457 = vsel %vm2900, %v6312, 0.0
  %v6458 = vadd.f32 %v6456, %v6457
  %v6459 = vsel %vm2900, %v6313, 0.0
  %v6460 = vadd.f32 %v6458, %v6459
  %v6461 = vsel %vm2900, %v6314, 0.0
  %v6462 = vadd.f32 %v6460, %v6461
  %v6463 = vsel %vm2900, %v6315, 0.0
  %v6464 = vadd.f32 %v6462, %v6463
  %v6465 = vsel %vm2900, %v6316, 0.0
  %v6466 = vadd.f32 %v6464, %v6465
  %v6467 = vsel %vm2900, %v6317, 0.0
  %v6468 = vadd.f32 %v6466, %v6467
  %v6469 = vsel %vm2900, %v6318, 0.0
  %v6470 = vadd.f32 %v6468, %v6469
  %v6471 = vsel %vm2900, %v6319, 0.0
  %v6472 = vadd.f32 %v6470, %v6471
  %v6473 = vsel %vm2900, %v6320, 0.0
  %v6474 = vadd.f32 %v6472, %v6473
  %v6475 = vsel %vm2900, %v6321, 0.0
  %v6476 = vadd.f32 %v6474, %v6475
  %v6477 = vsel %vm2900, %v6322, 0.0
  %v6478 = vadd.f32 %v6476, %v6477
  %v6479 = vsel %vm2900, %v6323, 0.0
  %v6480 = vadd.f32 %v6478, %v6479
  %v6481 = vsel %vm2900, %v6324, 0.0
  %v6482 = vadd.f32 %v6480, %v6481
  %v6483 = vsel %vm2900, %v6325, 0.0
  %v6484 = vadd.f32 %v6482, %v6483
  %v6485 = vsel %vm2900, %v6326, 0.0
  %v6486 = vadd.f32 %v6484, %v6485
  %v6487 = vsel %vm2900, %v6327, 0.0
  %v6488 = vadd.f32 %v6486, %v6487
  %v6489 = vsel %vm2900, %v6328, 0.0
  %v6490 = vadd.f32 %v6488, %v6489
  %v6491 = vsel %vm2900, %v6329, 0.0
  %v6492 = vadd.f32 %v6490, %v6491
  %v6493 = vsel %vm2900, %v6330, 0.0
  %v6494 = vadd.f32 %v6492, %v6493
  %v6495 = vsel %vm2900, %v6331, 0.0
  %v6496 = vadd.f32 %v6494, %v6495
  %v6497 = vsel %vm2900, %v6332, 0.0
  %v6498 = vadd.f32 %v6496, %v6497
  %v6499 = vsel %vm2900, %v6333, 0.0
  %v6500 = vadd.f32 %v6498, %v6499
  %v6501 = vsel %vm2900, %v6334, 0.0
  %v6502 = vadd.f32 %v6500, %v6501
  %v6503 = vsel %vm2900, %v6335, 0.0
  %v6504 = vadd.f32 %v6502, %v6503
  %v6505 = vsel %vm2900, %v6336, 0.0
  %v6506 = vadd.f32 %v6504, %v6505
  %v6507 = vsel %vm2900, %v6337, 0.0
  %v6508 = vadd.f32 %v6506, %v6507
  %v6509 = vsel %vm2900, %v6338, 0.0
  %v6510 = vadd.f32 %v6508, %v6509
  %v6511 = vsel %vm2900, %v6339, 0.0
  %v6512 = vadd.f32 %v6510, %v6511
  %v6513 = vsel %vm2900, %v6340, 0.0
  %v6514 = vadd.f32 %v6512, %v6513
  %v6515 = vsel %vm2900, %v6341, 0.0
  %v6516 = vadd.f32 %v6514, %v6515
  %v6517 = vsel %vm2900, %v6342, 0.0
  %v6518 = vadd.f32 %v6516, %v6517
  %v6519 = vsel %vm2900, %v6343, 0.0
  %v6520 = vadd.f32 %v6518, %v6519
  %v6521 = vsel %vm2900, %v6344, 0.0
  %v6522 = vadd.f32 %v6520, %v6521
  %v6523 = vsel %vm2900, %v6345, 0.0
  %v6524 = vadd.f32 %v6522, %v6523
  %v6525 = vsel %vm2900, %v6346, 0.0
  %v6526 = vadd.f32 %v6524, %v6525
  %v6527 = vsel %vm2900, %v6347, 0.0
  %v6528 = vadd.f32 %v6526, %v6527
  %v6529 = vsel %vm2900, %v6348, 0.0
  %v6530 = vadd.f32 %v6528, %v6529
  %v6531 = vsel %vm2900, %v6349, 0.0
  %v6532 = vadd.f32 %v6530, %v6531
  %v6533 = vsel %vm2900, %v6350, 0.0
  %v6534 = vadd.f32 %v6532, %v6533
  %v6535 = vsel %vm2900, %v6351, 0.0
  %v6536 = vadd.f32 %v6534, %v6535
  %v6537 = vsel %vm2900, %v6352, 0.0
  %v6538 = vadd.f32 %v6536, %v6537
  %v6539 = vsel %vm2900, %v6353, 0.0
  %v6540 = vadd.f32 %v6538, %v6539
  %v6541 = vsel %vm2900, %v6354, 0.0
  %v6542 = vadd.f32 %v6540, %v6541
  %v6543 = vsel %vm2900, %v6355, 0.0
  %v6544 = vadd.f32 %v6542, %v6543
  %v6545 = vsel %vm2900, %v6356, 0.0
  %v6546 = vadd.f32 %v6544, %v6545
  %v6547 = vsel %vm2900, %v6357, 0.0
  %v6548 = vadd.f32 %v6546, %v6547
  %v6549 = vsel %vm2900, %v6358, 0.0
  %v6550 = vadd.f32 %v6548, %v6549
  %v6551 = vsel %vm2900, %v6359, 0.0
  %v6552 = vadd.f32 %v6550, %v6551
  %v6553 = vsel %vm2900, %v6360, 0.0
  %v6554 = vadd.f32 %v6552, %v6553
  %v6555 = vsel %vm2900, %v6361, 0.0
  %v6556 = vadd.f32 %v6554, %v6555
  %v6557 = vsel %vm2900, %v6362, 0.0
  %v6558 = vadd.f32 %v6556, %v6557
  %v6559 = vsel %vm2900, %v6363, 0.0
  %v6560 = vadd.f32 %v6558, %v6559
  %v6561 = vsel %vm2900, %v6364, 0.0
  %v6562 = vadd.f32 %v6560, %v6561
  %v6563 = vsel %vm2900, %v6365, 0.0
  %v6564 = vadd.f32 %v6562, %v6563
  %v6565 = vsel %vm2967, %v6366, 0.0
  %v6566 = vadd.f32 %v6564, %v6565
  %v6567 = vrot.slane %v6566, 4
  %v6568 = vadd.f32 %v6566, %v6567
  %v6569 = vrot.slane %v6568, 2
  %v6570 = vadd.f32 %v6568, %v6569
  %v6571 = vrot.slane %v6570, 1
  %v6572 = vadd.f32 %v6570, %v6571
  %v6573 = vsel %vm2900, %v6367, 0.0
  %v6574 = vsel %vm2900, %v6368, 0.0
  %v6575 = vadd.f32 %v6573, %v6574
  %v6576 = vsel %vm2900, %v6369, 0.0
  %v6577 = vadd.f32 %v6575, %v6576
  %v6578 = vsel %vm2900, %v6370, 0.0
  %v6579 = vadd.f32 %v6577, %v6578
  %v6580 = vsel %vm2900, %v6371, 0.0
  %v6581 = vadd.f32 %v6579, %v6580
  %v6582 = vsel %vm2900, %v6372, 0.0
  %v6583 = vadd.f32 %v6581, %v6582
  %v6584 = vsel %vm2900, %v6373, 0.0
  %v6585 = vadd.f32 %v6583, %v6584
  %v6586 = vsel %vm2900, %v6374, 0.0
  %v6587 = vadd.f32 %v6585, %v6586
  %v6588 = vsel %vm2900, %v6375, 0.0
  %v6589 = vadd.f32 %v6587, %v6588
  %v6590 = vsel %vm2900, %v6376, 0.0
  %v6591 = vadd.f32 %v6589, %v6590
  %v6592 = vsel %vm2900, %v6377, 0.0
  %v6593 = vadd.f32 %v6591, %v6592
  %v6594 = vsel %vm2900, %v6378, 0.0
  %v6595 = vadd.f32 %v6593, %v6594
  %v6596 = vsel %vm2900, %v6379, 0.0
  %v6597 = vadd.f32 %v6595, %v6596
  %v6598 = vsel %vm2900, %v6380, 0.0
  %v6599 = vadd.f32 %v6597, %v6598
  %v6600 = vsel %vm2900, %v6381, 0.0
  %v6601 = vadd.f32 %v6599, %v6600
  %v6602 = vsel %vm2900, %v6382, 0.0
  %v6603 = vadd.f32 %v6601, %v6602
  %v6604 = vsel %vm2900, %v6383, 0.0
  %v6605 = vadd.f32 %v6603, %v6604
  %v6606 = vsel %vm2900, %v6384, 0.0
  %v6607 = vadd.f32 %v6605, %v6606
  %v6608 = vsel %vm2900, %v6385, 0.0
  %v6609 = vadd.f32 %v6607, %v6608
  %v6610 = vsel %vm2900, %v6386, 0.0
  %v6611 = vadd.f32 %v6609, %v6610
  %v6612 = vsel %vm2900, %v6387, 0.0
  %v6613 = vadd.f32 %v6611, %v6612
  %v6614 = vsel %vm2900, %v6388, 0.0
  %v6615 = vadd.f32 %v6613, %v6614
  %v6616 = vsel %vm2900, %v6389, 0.0
  %v6617 = vadd.f32 %v6615, %v6616
  %v6618 = vsel %vm2900, %v6390, 0.0
  %v6619 = vadd.f32 %v6617, %v6618
  %v6620 = vsel %vm2900, %v6391, 0.0
  %v6621 = vadd.f32 %v6619, %v6620
  %v6622 = vsel %vm2900, %v6392, 0.0
  %v6623 = vadd.f32 %v6621, %v6622
  %v6624 = vsel %vm2900, %v6393, 0.0
  %v6625 = vadd.f32 %v6623, %v6624
  %v6626 = vsel %vm2900, %v6394, 0.0
  %v6627 = vadd.f32 %v6625, %v6626
  %v6628 = vsel %vm2900, %v6395, 0.0
  %v6629 = vadd.f32 %v6627, %v6628
  %v6630 = vsel %vm2900, %v6396, 0.0
  %v6631 = vadd.f32 %v6629, %v6630
  %v6632 = vsel %vm2900, %v6397, 0.0
  %v6633 = vadd.f32 %v6631, %v6632
  %v6634 = vsel %vm2900, %v6398, 0.0
  %v6635 = vadd.f32 %v6633, %v6634
  %v6636 = vsel %vm2900, %v6399, 0.0
  %v6637 = vadd.f32 %v6635, %v6636
  %v6638 = vsel %vm2900, %v6400, 0.0
  %v6639 = vadd.f32 %v6637, %v6638
  %v6640 = vsel %vm2900, %v6401, 0.0
  %v6641 = vadd.f32 %v6639, %v6640
  %v6642 = vsel %vm2900, %v6402, 0.0
  %v6643 = vadd.f32 %v6641, %v6642
  %v6644 = vsel %vm2900, %v6403, 0.0
  %v6645 = vadd.f32 %v6643, %v6644
  %v6646 = vsel %vm2900, %v6404, 0.0
  %v6647 = vadd.f32 %v6645, %v6646
  %v6648 = vsel %vm2900, %v6405, 0.0
  %v6649 = vadd.f32 %v6647, %v6648
  %v6650 = vsel %vm2900, %v6406, 0.0
  %v6651 = vadd.f32 %v6649, %v6650
  %v6652 = vsel %vm2900, %v6407, 0.0
  %v6653 = vadd.f32 %v6651, %v6652
  %v6654 = vsel %vm2900, %v6408, 0.0
  %v6655 = vadd.f32 %v6653, %v6654
  %v6656 = vsel %vm2900, %v6409, 0.0
  %v6657 = vadd.f32 %v6655, %v6656
  %v6658 = vsel %vm2900, %v6410, 0.0
  %v6659 = vadd.f32 %v6657, %v6658
  %v6660 = vsel %vm2900, %v6411, 0.0
  %v6661 = vadd.f32 %v6659, %v6660
  %v6662 = vsel %vm2900, %v6412, 0.0
  %v6663 = vadd.f32 %v6661, %v6662
  %v6664 = vsel %vm2900, %v6413, 0.0
  %v6665 = vadd.f32 %v6663, %v6664
  %v6666 = vsel %vm2900, %v6414, 0.0
  %v6667 = vadd.f32 %v6665, %v6666
  %v6668 = vsel %vm2900, %v6415, 0.0
  %v6669 = vadd.f32 %v6667, %v6668
  %v6670 = vsel %vm2900, %v6416, 0.0
  %v6671 = vadd.f32 %v6669, %v6670
  %v6672 = vsel %vm2900, %v6417, 0.0
  %v6673 = vadd.f32 %v6671, %v6672
  %v6674 = vsel %vm2900, %v6418, 0.0
  %v6675 = vadd.f32 %v6673, %v6674
  %v6676 = vsel %vm2900, %v6419, 0.0
  %v6677 = vadd.f32 %v6675, %v6676
  %v6678 = vsel %vm2900, %v6420, 0.0
  %v6679 = vadd.f32 %v6677, %v6678
  %v6680 = vsel %vm2900, %v6421, 0.0
  %v6681 = vadd.f32 %v6679, %v6680
  %v6682 = vsel %vm2900, %v6422, 0.0
  %v6683 = vadd.f32 %v6681, %v6682
  %v6684 = vsel %vm2900, %v6423, 0.0
  %v6685 = vadd.f32 %v6683, %v6684
  %v6686 = vsel %vm2900, %v6424, 0.0
  %v6687 = vadd.f32 %v6685, %v6686
  %v6688 = vsel %vm2900, %v6425, 0.0
  %v6689 = vadd.f32 %v6687, %v6688
  %v6690 = vsel %vm2900, %v6426, 0.0
  %v6691 = vadd.f32 %v6689, %v6690
  %v6692 = vsel %vm2900, %v6427, 0.0
  %v6693 = vadd.f32 %v6691, %v6692
  %v6694 = vsel %vm2900, %v6428, 0.0
  %v6695 = vadd.f32 %v6693, %v6694
  %v6696 = vsel %vm2900, %v6429, 0.0
  %v6697 = vadd.f32 %v6695, %v6696
  %v6698 = vsel %vm2900, %v6430, 0.0
  %v6699 = vadd.f32 %v6697, %v6698
  %v6700 = vsel %vm2900, %v6431, 0.0
  %v6701 = vadd.f32 %v6699, %v6700
  %v6702 = vsel %vm2900, %v6432, 0.0
  %v6703 = vadd.f32 %v6701, %v6702
  %v6704 = vsel %vm2967, %v6433, 0.0
  %v6705 = vadd.f32 %v6703, %v6704
  %v6706 = vrot.slane %v6705, 4
  %v6707 = vadd.f32 %v6705, %v6706
  %v6708 = vrot.slane %v6707, 2
  %v6709 = vadd.f32 %v6707, %v6708
  %v6710 = vrot.slane %v6709, 1
  %v6711 = vadd.f32 %v6709, %v6710
  %v6712 = vmul.f32 %v6572, %v6292
  %v6713 = vmul.f32 %v6711, %v6292
  %v6714 = vsel %vm2900, %v6712, 0.0
  %v6715 = vsel %vm2900, %v6713, 0.0
  %v6716 = vadd.f32 %v6714, %v6715
  %v6717 = vmul.f32 %v6716, %v6298
  %v6718 = vmul.f32 %v6299, %v6299
  %v6719 = vsub.f32 %v6717, %v6718
  %v6720 = vsub.f32 %v5880, %v6299
  %v6721 = vsub.f32 %v5881, %v6299
  %v6722 = vsub.f32 %v5882, %v6299
  %v6723 = vsub.f32 %v5883, %v6299
  %v6724 = vsub.f32 %v5884, %v6299
  %v6725 = vsub.f32 %v5885, %v6299
  %v6726 = vsub.f32 %v5886, %v6299
  %v6727 = vsub.f32 %v5887, %v6299
  %v6728 = vsub.f32 %v5888, %v6299
  %v6729 = vsub.f32 %v5889, %v6299
  %v6730 = vsub.f32 %v5890, %v6299
  %v6731 = vsub.f32 %v5891, %v6299
  %v6732 = vsub.f32 %v5892, %v6299
  %v6733 = vsub.f32 %v5893, %v6299
  %v6734 = vsub.f32 %v5894, %v6299
  %v6735 = vsub.f32 %v5895, %v6299
  %v6736 = vsub.f32 %v5896, %v6299
  %v6737 = vsub.f32 %v5897, %v6299
  %v6738 = vsub.f32 %v5898, %v6299
  %v6739 = vsub.f32 %v5899, %v6299
  %v6740 = vsub.f32 %v5900, %v6299
  %v6741 = vsub.f32 %v5901, %v6299
  %v6742 = vsub.f32 %v5902, %v6299
  %v6743 = vsub.f32 %v5903, %v6299
  %v6744 = vsub.f32 %v5904, %v6299
  %v6745 = vsub.f32 %v5905, %v6299
  %v6746 = vsub.f32 %v5906, %v6299
  %v6747 = vsub.f32 %v5907, %v6299
  %v6748 = vsub.f32 %v5908, %v6299
  %v6749 = vsub.f32 %v5909, %v6299
  %v6750 = vsub.f32 %v5910, %v6299
  %v6751 = vsub.f32 %v5911, %v6299
  %v6752 = vsub.f32 %v5912, %v6299
  %v6753 = vsub.f32 %v5913, %v6299
  %v6754 = vsub.f32 %v5914, %v6299
  %v6755 = vsub.f32 %v5915, %v6299
  %v6756 = vsub.f32 %v5916, %v6299
  %v6757 = vsub.f32 %v5917, %v6299
  %v6758 = vsub.f32 %v5918, %v6299
  %v6759 = vsub.f32 %v5919, %v6299
  %v6760 = vsub.f32 %v5920, %v6299
  %v6761 = vsub.f32 %v5921, %v6299
  %v6762 = vsub.f32 %v5922, %v6299
  %v6763 = vsub.f32 %v5923, %v6299
  %v6764 = vsub.f32 %v5924, %v6299
  %v6765 = vsub.f32 %v5925, %v6299
  %v6766 = vsub.f32 %v5926, %v6299
  %v6767 = vsub.f32 %v5927, %v6299
  %v6768 = vsub.f32 %v5928, %v6299
  %v6769 = vsub.f32 %v5929, %v6299
  %v6770 = vsub.f32 %v5930, %v6299
  %v6771 = vsub.f32 %v5931, %v6299
  %v6772 = vsub.f32 %v5932, %v6299
  %v6773 = vsub.f32 %v5933, %v6299
  %v6774 = vsub.f32 %v5934, %v6299
  %v6775 = vsub.f32 %v5935, %v6299
  %v6776 = vsub.f32 %v5936, %v6299
  %v6777 = vsub.f32 %v5937, %v6299
  %v6778 = vsub.f32 %v5938, %v6299
  %v6779 = vsub.f32 %v5939, %v6299
  %v6780 = vsub.f32 %v5940, %v6299
  %v6781 = vsub.f32 %v5941, %v6299
  %v6782 = vsub.f32 %v5942, %v6299
  %v6783 = vsub.f32 %v5943, %v6299
  %v6784 = vsub.f32 %v5944, %v6299
  %v6785 = vsub.f32 %v5945, %v6299
  %v6786 = vsub.f32 %v5946, %v6299
  %v6787 = vsub.f32 %v5947, %v6299
  %v6788 = vsub.f32 %v5948, %v6299
  %v6789 = vsub.f32 %v5949, %v6299
  %v6790 = vsub.f32 %v5950, %v6299
  %v6791 = vsub.f32 %v5951, %v6299
  %v6792 = vsub.f32 %v5952, %v6299
  %v6793 = vsub.f32 %v5953, %v6299
  %v6794 = vsub.f32 %v5954, %v6299
  %v6795 = vsub.f32 %v5955, %v6299
  %v6796 = vsub.f32 %v5956, %v6299
  %v6797 = vsub.f32 %v5957, %v6299
  %v6798 = vsub.f32 %v5958, %v6299
  %v6799 = vsub.f32 %v5959, %v6299
  %v6800 = vsub.f32 %v5960, %v6299
  %v6801 = vsub.f32 %v5961, %v6299
  %v6802 = vsub.f32 %v5962, %v6299
  %v6803 = vsub.f32 %v5963, %v6299
  %v6804 = vsub.f32 %v5964, %v6299
  %v6805 = vsub.f32 %v5965, %v6299
  %v6806 = vsub.f32 %v5966, %v6299
  %v6807 = vsub.f32 %v5967, %v6299
  %v6808 = vsub.f32 %v5968, %v6299
  %v6809 = vsub.f32 %v5969, %v6299
  %v6810 = vsub.f32 %v5970, %v6299
  %v6811 = vsub.f32 %v5971, %v6299
  %v6812 = vsub.f32 %v5972, %v6299
  %v6813 = vsub.f32 %v5973, %v6299
  %v6814 = vsub.f32 %v5974, %v6299
  %v6815 = vsub.f32 %v5975, %v6299
  %v6816 = vsub.f32 %v5976, %v6299
  %v6817 = vsub.f32 %v5977, %v6299
  %v6818 = vsub.f32 %v5978, %v6299
  %v6819 = vsub.f32 %v5979, %v6299
  %v6820 = vsub.f32 %v5980, %v6299
  %v6821 = vsub.f32 %v5981, %v6299
  %v6822 = vsub.f32 %v5982, %v6299
  %v6823 = vsub.f32 %v5983, %v6299
  %v6824 = vsub.f32 %v5984, %v6299
  %v6825 = vsub.f32 %v5985, %v6299
  %v6826 = vsub.f32 %v5986, %v6299
  %v6827 = vsub.f32 %v5987, %v6299
  %v6828 = vsub.f32 %v5988, %v6299
  %v6829 = vsub.f32 %v5989, %v6299
  %v6830 = vsub.f32 %v5990, %v6299
  %v6831 = vsub.f32 %v5991, %v6299
  %v6832 = vsub.f32 %v5992, %v6299
  %v6833 = vsub.f32 %v5993, %v6299
  %v6834 = vsub.f32 %v5994, %v6299
  %v6835 = vsub.f32 %v5995, %v6299
  %v6836 = vsub.f32 %v5996, %v6299
  %v6837 = vsub.f32 %v5997, %v6299
  %v6838 = vsub.f32 %v5998, %v6299
  %v6839 = vsub.f32 %v5999, %v6299
  %v6840 = vsub.f32 %v6000, %v6299
  %v6841 = vsub.f32 %v6001, %v6299
  %v6842 = vsub.f32 %v6002, %v6299
  %v6843 = vsub.f32 %v6003, %v6299
  %v6844 = vsub.f32 %v6004, %v6299
  %v6845 = vsub.f32 %v6005, %v6299
  %v6846 = vsub.f32 %v6006, %v6299
  %v6847 = vsub.f32 %v6007, %v6299
  %v6848 = vsub.f32 %v6008, %v6299
  %v6849 = vsub.f32 %v6009, %v6299
  %v6850 = vsub.f32 %v6010, %v6299
  %v6851 = vsub.f32 %v6011, %v6299
  %v6852 = vsub.f32 %v6012, %v6299
  %v6853 = vsub.f32 %v6013, %v6299
  %v6854 = vadd.f32 %v6719, 1e-05
  %v6855 = vrsqrt.pop %v6854
  %v6856 = vmul.f32 %v6720, %v6855
  %v6857 = vmul.f32 %v6721, %v6855
  %v6858 = vmul.f32 %v6722, %v6855
  %v6859 = vmul.f32 %v6723, %v6855
  %v6860 = vmul.f32 %v6724, %v6855
  %v6861 = vmul.f32 %v6725, %v6855
  %v6862 = vmul.f32 %v6726, %v6855
  %v6863 = vmul.f32 %v6727, %v6855
  %v6864 = vmul.f32 %v6728, %v6855
  %v6865 = vmul.f32 %v6729, %v6855
  %v6866 = vmul.f32 %v6730, %v6855
  %v6867 = vmul.f32 %v6731, %v6855
  %v6868 = vmul.f32 %v6732, %v6855
  %v6869 = vmul.f32 %v6733, %v6855
  %v6870 = vmul.f32 %v6734, %v6855
  %v6871 = vmul.f32 %v6735, %v6855
  %v6872 = vmul.f32 %v6736, %v6855
  %v6873 = vmul.f32 %v6737, %v6855
  %v6874 = vmul.f32 %v6738, %v6855
  %v6875 = vmul.f32 %v6739, %v6855
  %v6876 = vmul.f32 %v6740, %v6855
  %v6877 = vmul.f32 %v6741, %v6855
  %v6878 = vmul.f32 %v6742, %v6855
  %v6879 = vmul.f32 %v6743, %v6855
  %v6880 = vmul.f32 %v6744, %v6855
  %v6881 = vmul.f32 %v6745, %v6855
  %v6882 = vmul.f32 %v6746, %v6855
  %v6883 = vmul.f32 %v6747, %v6855
  %v6884 = vmul.f32 %v6748, %v6855
  %v6885 = vmul.f32 %v6749, %v6855
  %v6886 = vmul.f32 %v6750, %v6855
  %v6887 = vmul.f32 %v6751, %v6855
  %v6888 = vmul.f32 %v6752, %v6855
  %v6889 = vmul.f32 %v6753, %v6855
  %v6890 = vmul.f32 %v6754, %v6855
  %v6891 = vmul.f32 %v6755, %v6855
  %v6892 = vmul.f32 %v6756, %v6855
  %v6893 = vmul.f32 %v6757, %v6855
  %v6894 = vmul.f32 %v6758, %v6855
  %v6895 = vmul.f32 %v6759, %v6855
  %v6896 = vmul.f32 %v6760, %v6855
  %v6897 = vmul.f32 %v6761, %v6855
  %v6898 = vmul.f32 %v6762, %v6855
  %v6899 = vmul.f32 %v6763, %v6855
  %v6900 = vmul.f32 %v6764, %v6855
  %v6901 = vmul.f32 %v6765, %v6855
  %v6902 = vmul.f32 %v6766, %v6855
  %v6903 = vmul.f32 %v6767, %v6855
  %v6904 = vmul.f32 %v6768, %v6855
  %v6905 = vmul.f32 %v6769, %v6855
  %v6906 = vmul.f32 %v6770, %v6855
  %v6907 = vmul.f32 %v6771, %v6855
  %v6908 = vmul.f32 %v6772, %v6855
  %v6909 = vmul.f32 %v6773, %v6855
  %v6910 = vmul.f32 %v6774, %v6855
  %v6911 = vmul.f32 %v6775, %v6855
  %v6912 = vmul.f32 %v6776, %v6855
  %v6913 = vmul.f32 %v6777, %v6855
  %v6914 = vmul.f32 %v6778, %v6855
  %v6915 = vmul.f32 %v6779, %v6855
  %v6916 = vmul.f32 %v6780, %v6855
  %v6917 = vmul.f32 %v6781, %v6855
  %v6918 = vmul.f32 %v6782, %v6855
  %v6919 = vmul.f32 %v6783, %v6855
  %v6920 = vmul.f32 %v6784, %v6855
  %v6921 = vmul.f32 %v6785, %v6855
  %v6922 = vmul.f32 %v6786, %v6855
  %v6923 = vmul.f32 %v6787, %v6855
  %v6924 = vmul.f32 %v6788, %v6855
  %v6925 = vmul.f32 %v6789, %v6855
  %v6926 = vmul.f32 %v6790, %v6855
  %v6927 = vmul.f32 %v6791, %v6855
  %v6928 = vmul.f32 %v6792, %v6855
  %v6929 = vmul.f32 %v6793, %v6855
  %v6930 = vmul.f32 %v6794, %v6855
  %v6931 = vmul.f32 %v6795, %v6855
  %v6932 = vmul.f32 %v6796, %v6855
  %v6933 = vmul.f32 %v6797, %v6855
  %v6934 = vmul.f32 %v6798, %v6855
  %v6935 = vmul.f32 %v6799, %v6855
  %v6936 = vmul.f32 %v6800, %v6855
  %v6937 = vmul.f32 %v6801, %v6855
  %v6938 = vmul.f32 %v6802, %v6855
  %v6939 = vmul.f32 %v6803, %v6855
  %v6940 = vmul.f32 %v6804, %v6855
  %v6941 = vmul.f32 %v6805, %v6855
  %v6942 = vmul.f32 %v6806, %v6855
  %v6943 = vmul.f32 %v6807, %v6855
  %v6944 = vmul.f32 %v6808, %v6855
  %v6945 = vmul.f32 %v6809, %v6855
  %v6946 = vmul.f32 %v6810, %v6855
  %v6947 = vmul.f32 %v6811, %v6855
  %v6948 = vmul.f32 %v6812, %v6855
  %v6949 = vmul.f32 %v6813, %v6855
  %v6950 = vmul.f32 %v6814, %v6855
  %v6951 = vmul.f32 %v6815, %v6855
  %v6952 = vmul.f32 %v6816, %v6855
  %v6953 = vmul.f32 %v6817, %v6855
  %v6954 = vmul.f32 %v6818, %v6855
  %v6955 = vmul.f32 %v6819, %v6855
  %v6956 = vmul.f32 %v6820, %v6855
  %v6957 = vmul.f32 %v6821, %v6855
  %v6958 = vmul.f32 %v6822, %v6855
  %v6959 = vmul.f32 %v6823, %v6855
  %v6960 = vmul.f32 %v6824, %v6855
  %v6961 = vmul.f32 %v6825, %v6855
  %v6962 = vmul.f32 %v6826, %v6855
  %v6963 = vmul.f32 %v6827, %v6855
  %v6964 = vmul.f32 %v6828, %v6855
  %v6965 = vmul.f32 %v6829, %v6855
  %v6966 = vmul.f32 %v6830, %v6855
  %v6967 = vmul.f32 %v6831, %v6855
  %v6968 = vmul.f32 %v6832, %v6855
  %v6969 = vmul.f32 %v6833, %v6855
  %v6970 = vmul.f32 %v6834, %v6855
  %v6971 = vmul.f32 %v6835, %v6855
  %v6972 = vmul.f32 %v6836, %v6855
  %v6973 = vmul.f32 %v6837, %v6855
  %v6974 = vmul.f32 %v6838, %v6855
  %v6975 = vmul.f32 %v6839, %v6855
  %v6976 = vmul.f32 %v6840, %v6855
  %v6977 = vmul.f32 %v6841, %v6855
  %v6978 = vmul.f32 %v6842, %v6855
  %v6979 = vmul.f32 %v6843, %v6855
  %v6980 = vmul.f32 %v6844, %v6855
  %v6981 = vmul.f32 %v6845, %v6855
  %v6982 = vmul.f32 %v6846, %v6855
  %v6983 = vmul.f32 %v6847, %v6855
  %v6984 = vmul.f32 %v6848, %v6855
  %v6985 = vmul.f32 %v6849, %v6855
  %v6986 = vmul.f32 %v6850, %v6855
  %v6987 = vmul.f32 %v6851, %v6855
  %v6988 = vmul.f32 %v6852, %v6855
  %v6989 = vmul.f32 %v6853, %v6855
  %v6990 = vld [vmem:[%s3] sm:$0x1]
  %v6992 = vlaneseq
  %v6993 = vshrl.u32 %v6992, 7
  %v6994 = vsub.s32 0, %v6993
  %v6995 = vrot.slane %v6990, %v6994
  %v6997 = vmul.f32 %v6856, %v6995
  %v6998 = vmul.f32 %v6857, %v6995
  %v6999 = vmul.f32 %v6858, %v6995
  %v7000 = vmul.f32 %v6859, %v6995
  %v7001 = vmul.f32 %v6860, %v6995
  %v7002 = vmul.f32 %v6861, %v6995
  %v7003 = vmul.f32 %v6862, %v6995
  %v7004 = vmul.f32 %v6863, %v6995
  %v7005 = vmul.f32 %v6864, %v6995
  %v7006 = vmul.f32 %v6865, %v6995
  %v7007 = vmul.f32 %v6866, %v6995
  %v7008 = vmul.f32 %v6867, %v6995
  %v7009 = vmul.f32 %v6868, %v6995
  %v7010 = vmul.f32 %v6869, %v6995
  %v7011 = vmul.f32 %v6870, %v6995
  %v7012 = vmul.f32 %v6871, %v6995
  %v7013 = vmul.f32 %v6872, %v6995
  %v7014 = vmul.f32 %v6873, %v6995
  %v7015 = vmul.f32 %v6874, %v6995
  %v7016 = vmul.f32 %v6875, %v6995
  %v7017 = vmul.f32 %v6876, %v6995
  %v7018 = vmul.f32 %v6877, %v6995
  %v7019 = vmul.f32 %v6878, %v6995
  %v7020 = vmul.f32 %v6879, %v6995
  %v7021 = vmul.f32 %v6880, %v6995
  %v7022 = vmul.f32 %v6881, %v6995
  %v7023 = vmul.f32 %v6882, %v6995
  %v7024 = vmul.f32 %v6883, %v6995
  %v7025 = vmul.f32 %v6884, %v6995
  %v7026 = vmul.f32 %v6885, %v6995
  %v7027 = vmul.f32 %v6886, %v6995
  %v7028 = vmul.f32 %v6887, %v6995
  %v7029 = vmul.f32 %v6888, %v6995
  %v7030 = vmul.f32 %v6889, %v6995
  %v7031 = vmul.f32 %v6890, %v6995
  %v7032 = vmul.f32 %v6891, %v6995
  %v7033 = vmul.f32 %v6892, %v6995
  %v7034 = vmul.f32 %v6893, %v6995
  %v7035 = vmul.f32 %v6894, %v6995
  %v7036 = vmul.f32 %v6895, %v6995
  %v7037 = vmul.f32 %v6896, %v6995
  %v7038 = vmul.f32 %v6897, %v6995
  %v7039 = vmul.f32 %v6898, %v6995
  %v7040 = vmul.f32 %v6899, %v6995
  %v7041 = vmul.f32 %v6900, %v6995
  %v7042 = vmul.f32 %v6901, %v6995
  %v7043 = vmul.f32 %v6902, %v6995
  %v7044 = vmul.f32 %v6903, %v6995
  %v7045 = vmul.f32 %v6904, %v6995
  %v7046 = vmul.f32 %v6905, %v6995
  %v7047 = vmul.f32 %v6906, %v6995
  %v7048 = vmul.f32 %v6907, %v6995
  %v7049 = vmul.f32 %v6908, %v6995
  %v7050 = vmul.f32 %v6909, %v6995
  %v7051 = vmul.f32 %v6910, %v6995
  %v7052 = vmul.f32 %v6911, %v6995
  %v7053 = vmul.f32 %v6912, %v6995
  %v7054 = vmul.f32 %v6913, %v6995
  %v7055 = vmul.f32 %v6914, %v6995
  %v7056 = vmul.f32 %v6915, %v6995
  %v7057 = vmul.f32 %v6916, %v6995
  %v7058 = vmul.f32 %v6917, %v6995
  %v7059 = vmul.f32 %v6918, %v6995
  %v7060 = vmul.f32 %v6919, %v6995
  %v7061 = vmul.f32 %v6920, %v6995
  %v7062 = vmul.f32 %v6921, %v6995
  %v7063 = vmul.f32 %v6922, %v6995
  %v7064 = vmul.f32 %v6923, %v6995
  %v7065 = vmul.f32 %v6924, %v6995
  %v7066 = vmul.f32 %v6925, %v6995
  %v7067 = vmul.f32 %v6926, %v6995
  %v7068 = vmul.f32 %v6927, %v6995
  %v7069 = vmul.f32 %v6928, %v6995
  %v7070 = vmul.f32 %v6929, %v6995
  %v7071 = vmul.f32 %v6930, %v6995
  %v7072 = vmul.f32 %v6931, %v6995
  %v7073 = vmul.f32 %v6932, %v6995
  %v7074 = vmul.f32 %v6933, %v6995
  %v7075 = vmul.f32 %v6934, %v6995
  %v7076 = vmul.f32 %v6935, %v6995
  %v7077 = vmul.f32 %v6936, %v6995
  %v7078 = vmul.f32 %v6937, %v6995
  %v7079 = vmul.f32 %v6938, %v6995
  %v7080 = vmul.f32 %v6939, %v6995
  %v7081 = vmul.f32 %v6940, %v6995
  %v7082 = vmul.f32 %v6941, %v6995
  %v7083 = vmul.f32 %v6942, %v6995
  %v7084 = vmul.f32 %v6943, %v6995
  %v7085 = vmul.f32 %v6944, %v6995
  %v7086 = vmul.f32 %v6945, %v6995
  %v7087 = vmul.f32 %v6946, %v6995
  %v7088 = vmul.f32 %v6947, %v6995
  %v7089 = vmul.f32 %v6948, %v6995
  %v7090 = vmul.f32 %v6949, %v6995
  %v7091 = vmul.f32 %v6950, %v6995
  %v7092 = vmul.f32 %v6951, %v6995
  %v7093 = vmul.f32 %v6952, %v6995
  %v7094 = vmul.f32 %v6953, %v6995
  %v7095 = vmul.f32 %v6954, %v6995
  %v7096 = vmul.f32 %v6955, %v6995
  %v7097 = vmul.f32 %v6956, %v6995
  %v7098 = vmul.f32 %v6957, %v6995
  %v7099 = vmul.f32 %v6958, %v6995
  %v7100 = vmul.f32 %v6959, %v6995
  %v7101 = vmul.f32 %v6960, %v6995
  %v7102 = vmul.f32 %v6961, %v6995
  %v7103 = vmul.f32 %v6962, %v6995
  %v7104 = vmul.f32 %v6963, %v6995
  %v7105 = vmul.f32 %v6964, %v6995
  %v7106 = vmul.f32 %v6965, %v6995
  %v7107 = vmul.f32 %v6966, %v6995
  %v7108 = vmul.f32 %v6967, %v6995
  %v7109 = vmul.f32 %v6968, %v6995
  %v7110 = vmul.f32 %v6969, %v6995
  %v7111 = vmul.f32 %v6970, %v6995
  %v7112 = vmul.f32 %v6971, %v6995
  %v7113 = vmul.f32 %v6972, %v6995
  %v7114 = vmul.f32 %v6973, %v6995
  %v7115 = vmul.f32 %v6974, %v6995
  %v7116 = vmul.f32 %v6975, %v6995
  %v7117 = vmul.f32 %v6976, %v6995
  %v7118 = vmul.f32 %v6977, %v6995
  %v7119 = vmul.f32 %v6978, %v6995
  %v7120 = vmul.f32 %v6979, %v6995
  %v7121 = vmul.f32 %v6980, %v6995
  %v7122 = vmul.f32 %v6981, %v6995
  %v7123 = vmul.f32 %v6982, %v6995
  %v7124 = vmul.f32 %v6983, %v6995
  %v7125 = vmul.f32 %v6984, %v6995
  %v7126 = vmul.f32 %v6985, %v6995
  %v7127 = vmul.f32 %v6986, %v6995
  %v7128 = vmul.f32 %v6987, %v6995
  %v7129 = vmul.f32 %v6988, %v6995
  %v7130 = vmul.f32 %v6989, %v6995
  %v7131 = vld [vmem:[%s4] sm:$0x1]
  %v7133 = vlaneseq
  %v7134 = vshrl.u32 %v7133, 7
  %v7135 = vsub.s32 0, %v7134
  %v7136 = vrot.slane %v7131, %v7135
  %v7138 = vadd.f32 %v6997, %v7136
  %v7139 = vadd.f32 %v6998, %v7136
  %v7140 = vadd.f32 %v6999, %v7136
  %v7141 = vadd.f32 %v7000, %v7136
  %v7142 = vadd.f32 %v7001, %v7136
  %v7143 = vadd.f32 %v7002, %v7136
  %v7144 = vadd.f32 %v7003, %v7136
  %v7145 = vadd.f32 %v7004, %v7136
  %v7146 = vadd.f32 %v7005, %v7136
  %v7147 = vadd.f32 %v7006, %v7136
  %v7148 = vadd.f32 %v7007, %v7136
  %v7149 = vadd.f32 %v7008, %v7136
  %v7150 = vadd.f32 %v7009, %v7136
  %v7151 = vadd.f32 %v7010, %v7136
  %v7152 = vadd.f32 %v7011, %v7136
  %v7153 = vadd.f32 %v7012, %v7136
  %v7154 = vadd.f32 %v7013, %v7136
  %v7155 = vadd.f32 %v7014, %v7136
  %v7156 = vadd.f32 %v7015, %v7136
  %v7157 = vadd.f32 %v7016, %v7136
  %v7158 = vadd.f32 %v7017, %v7136
  %v7159 = vadd.f32 %v7018, %v7136
  %v7160 = vadd.f32 %v7019, %v7136
  %v7161 = vadd.f32 %v7020, %v7136
  %v7162 = vadd.f32 %v7021, %v7136
  %v7163 = vadd.f32 %v7022, %v7136
  %v7164 = vadd.f32 %v7023, %v7136
  %v7165 = vadd.f32 %v7024, %v7136
  %v7166 = vadd.f32 %v7025, %v7136
  %v7167 = vadd.f32 %v7026, %v7136
  %v7168 = vadd.f32 %v7027, %v7136
  %v7169 = vadd.f32 %v7028, %v7136
  %v7170 = vadd.f32 %v7029, %v7136
  %v7171 = vadd.f32 %v7030, %v7136
  %v7172 = vadd.f32 %v7031, %v7136
  %v7173 = vadd.f32 %v7032, %v7136
  %v7174 = vadd.f32 %v7033, %v7136
  %v7175 = vadd.f32 %v7034, %v7136
  %v7176 = vadd.f32 %v7035, %v7136
  %v7177 = vadd.f32 %v7036, %v7136
  %v7178 = vadd.f32 %v7037, %v7136
  %v7179 = vadd.f32 %v7038, %v7136
  %v7180 = vadd.f32 %v7039, %v7136
  %v7181 = vadd.f32 %v7040, %v7136
  %v7182 = vadd.f32 %v7041, %v7136
  %v7183 = vadd.f32 %v7042, %v7136
  %v7184 = vadd.f32 %v7043, %v7136
  %v7185 = vadd.f32 %v7044, %v7136
  %v7186 = vadd.f32 %v7045, %v7136
  %v7187 = vadd.f32 %v7046, %v7136
  %v7188 = vadd.f32 %v7047, %v7136
  %v7189 = vadd.f32 %v7048, %v7136
  %v7190 = vadd.f32 %v7049, %v7136
  %v7191 = vadd.f32 %v7050, %v7136
  %v7192 = vadd.f32 %v7051, %v7136
  %v7193 = vadd.f32 %v7052, %v7136
  %v7194 = vadd.f32 %v7053, %v7136
  %v7195 = vadd.f32 %v7054, %v7136
  %v7196 = vadd.f32 %v7055, %v7136
  %v7197 = vadd.f32 %v7056, %v7136
  %v7198 = vadd.f32 %v7057, %v7136
  %v7199 = vadd.f32 %v7058, %v7136
  %v7200 = vadd.f32 %v7059, %v7136
  %v7201 = vadd.f32 %v7060, %v7136
  %v7202 = vadd.f32 %v7061, %v7136
  %v7203 = vadd.f32 %v7062, %v7136
  %v7204 = vadd.f32 %v7063, %v7136
  %v7205 = vadd.f32 %v7064, %v7136
  %v7206 = vadd.f32 %v7065, %v7136
  %v7207 = vadd.f32 %v7066, %v7136
  %v7208 = vadd.f32 %v7067, %v7136
  %v7209 = vadd.f32 %v7068, %v7136
  %v7210 = vadd.f32 %v7069, %v7136
  %v7211 = vadd.f32 %v7070, %v7136
  %v7212 = vadd.f32 %v7071, %v7136
  %v7213 = vadd.f32 %v7072, %v7136
  %v7214 = vadd.f32 %v7073, %v7136
  %v7215 = vadd.f32 %v7074, %v7136
  %v7216 = vadd.f32 %v7075, %v7136
  %v7217 = vadd.f32 %v7076, %v7136
  %v7218 = vadd.f32 %v7077, %v7136
  %v7219 = vadd.f32 %v7078, %v7136
  %v7220 = vadd.f32 %v7079, %v7136
  %v7221 = vadd.f32 %v7080, %v7136
  %v7222 = vadd.f32 %v7081, %v7136
  %v7223 = vadd.f32 %v7082, %v7136
  %v7224 = vadd.f32 %v7083, %v7136
  %v7225 = vadd.f32 %v7084, %v7136
  %v7226 = vadd.f32 %v7085, %v7136
  %v7227 = vadd.f32 %v7086, %v7136
  %v7228 = vadd.f32 %v7087, %v7136
  %v7229 = vadd.f32 %v7088, %v7136
  %v7230 = vadd.f32 %v7089, %v7136
  %v7231 = vadd.f32 %v7090, %v7136
  %v7232 = vadd.f32 %v7091, %v7136
  %v7233 = vadd.f32 %v7092, %v7136
  %v7234 = vadd.f32 %v7093, %v7136
  %v7235 = vadd.f32 %v7094, %v7136
  %v7236 = vadd.f32 %v7095, %v7136
  %v7237 = vadd.f32 %v7096, %v7136
  %v7238 = vadd.f32 %v7097, %v7136
  %v7239 = vadd.f32 %v7098, %v7136
  %v7240 = vadd.f32 %v7099, %v7136
  %v7241 = vadd.f32 %v7100, %v7136
  %v7242 = vadd.f32 %v7101, %v7136
  %v7243 = vadd.f32 %v7102, %v7136
  %v7244 = vadd.f32 %v7103, %v7136
  %v7245 = vadd.f32 %v7104, %v7136
  %v7246 = vadd.f32 %v7105, %v7136
  %v7247 = vadd.f32 %v7106, %v7136
  %v7248 = vadd.f32 %v7107, %v7136
  %v7249 = vadd.f32 %v7108, %v7136
  %v7250 = vadd.f32 %v7109, %v7136
  %v7251 = vadd.f32 %v7110, %v7136
  %v7252 = vadd.f32 %v7111, %v7136
  %v7253 = vadd.f32 %v7112, %v7136
  %v7254 = vadd.f32 %v7113, %v7136
  %v7255 = vadd.f32 %v7114, %v7136
  %v7256 = vadd.f32 %v7115, %v7136
  %v7257 = vadd.f32 %v7116, %v7136
  %v7258 = vadd.f32 %v7117, %v7136
  %v7259 = vadd.f32 %v7118, %v7136
  %v7260 = vadd.f32 %v7119, %v7136
  %v7261 = vadd.f32 %v7120, %v7136
  %v7262 = vadd.f32 %v7121, %v7136
  %v7263 = vadd.f32 %v7122, %v7136
  %v7264 = vadd.f32 %v7123, %v7136
  %v7265 = vadd.f32 %v7124, %v7136
  %v7266 = vadd.f32 %v7125, %v7136
  %v7267 = vadd.f32 %v7126, %v7136
  %v7268 = vadd.f32 %v7127, %v7136
  %v7269 = vadd.f32 %v7128, %v7136
  %v7270 = vadd.f32 %v7129, %v7136
  %v7271 = vadd.f32 %v7130, %v7136
  %vm7272 = vcmp.gt.f32.partialorder %v7138, 0.0
  %vm7273 = vcmp.gt.f32.partialorder %v7139, 0.0
  %vm7274 = vcmp.gt.f32.partialorder %v7140, 0.0
  %vm7275 = vcmp.gt.f32.partialorder %v7141, 0.0
  %vm7276 = vcmp.gt.f32.partialorder %v7142, 0.0
  %vm7277 = vcmp.gt.f32.partialorder %v7143, 0.0
  %vm7278 = vcmp.gt.f32.partialorder %v7144, 0.0
  %vm7279 = vcmp.gt.f32.partialorder %v7145, 0.0
  %vm7280 = vcmp.gt.f32.partialorder %v7146, 0.0
  %vm7281 = vcmp.gt.f32.partialorder %v7147, 0.0
  %vm7282 = vcmp.gt.f32.partialorder %v7148, 0.0
  %vm7283 = vcmp.gt.f32.partialorder %v7149, 0.0
  %vm7284 = vcmp.gt.f32.partialorder %v7150, 0.0
  %vm7285 = vcmp.gt.f32.partialorder %v7151, 0.0
  %vm7286 = vcmp.gt.f32.partialorder %v7152, 0.0
  %vm7287 = vcmp.gt.f32.partialorder %v7153, 0.0
  %vm7288 = vcmp.gt.f32.partialorder %v7154, 0.0
  %vm7289 = vcmp.gt.f32.partialorder %v7155, 0.0
  %vm7290 = vcmp.gt.f32.partialorder %v7156, 0.0
  %vm7291 = vcmp.gt.f32.partialorder %v7157, 0.0
  %vm7292 = vcmp.gt.f32.partialorder %v7158, 0.0
  %vm7293 = vcmp.gt.f32.partialorder %v7159, 0.0
  %vm7294 = vcmp.gt.f32.partialorder %v7160, 0.0
  %vm7295 = vcmp.gt.f32.partialorder %v7161, 0.0
  %vm7296 = vcmp.gt.f32.partialorder %v7162, 0.0
  %vm7297 = vcmp.gt.f32.partialorder %v7163, 0.0
  %vm7298 = vcmp.gt.f32.partialorder %v7164, 0.0
  %vm7299 = vcmp.gt.f32.partialorder %v7165, 0.0
  %vm7300 = vcmp.gt.f32.partialorder %v7166, 0.0
  %vm7301 = vcmp.gt.f32.partialorder %v7167, 0.0
  %vm7302 = vcmp.gt.f32.partialorder %v7168, 0.0
  %vm7303 = vcmp.gt.f32.partialorder %v7169, 0.0
  %vm7304 = vcmp.gt.f32.partialorder %v7170, 0.0
  %vm7305 = vcmp.gt.f32.partialorder %v7171, 0.0
  %vm7306 = vcmp.gt.f32.partialorder %v7172, 0.0
  %vm7307 = vcmp.gt.f32.partialorder %v7173, 0.0
  %vm7308 = vcmp.gt.f32.partialorder %v7174, 0.0
  %vm7309 = vcmp.gt.f32.partialorder %v7175, 0.0
  %vm7310 = vcmp.gt.f32.partialorder %v7176, 0.0
  %vm7311 = vcmp.gt.f32.partialorder %v7177, 0.0
  %vm7312 = vcmp.gt.f32.partialorder %v7178, 0.0
  %vm7313 = vcmp.gt.f32.partialorder %v7179, 0.0
  %vm7314 = vcmp.gt.f32.partialorder %v7180, 0.0
  %vm7315 = vcmp.gt.f32.partialorder %v7181, 0.0
  %vm7316 = vcmp.gt.f32.partialorder %v7182, 0.0
  %vm7317 = vcmp.gt.f32.partialorder %v7183, 0.0
  %vm7318 = vcmp.gt.f32.partialorder %v7184, 0.0
  %vm7319 = vcmp.gt.f32.partialorder %v7185, 0.0
  %vm7320 = vcmp.gt.f32.partialorder %v7186, 0.0
  %vm7321 = vcmp.gt.f32.partialorder %v7187, 0.0
  %vm7322 = vcmp.gt.f32.partialorder %v7188, 0.0
  %vm7323 = vcmp.gt.f32.partialorder %v7189, 0.0
  %vm7324 = vcmp.gt.f32.partialorder %v7190, 0.0
  %vm7325 = vcmp.gt.f32.partialorder %v7191, 0.0
  %vm7326 = vcmp.gt.f32.partialorder %v7192, 0.0
  %vm7327 = vcmp.gt.f32.partialorder %v7193, 0.0
  %vm7328 = vcmp.gt.f32.partialorder %v7194, 0.0
  %vm7329 = vcmp.gt.f32.partialorder %v7195, 0.0
  %vm7330 = vcmp.gt.f32.partialorder %v7196, 0.0
  %vm7331 = vcmp.gt.f32.partialorder %v7197, 0.0
  %vm7332 = vcmp.gt.f32.partialorder %v7198, 0.0
  %vm7333 = vcmp.gt.f32.partialorder %v7199, 0.0
  %vm7334 = vcmp.gt.f32.partialorder %v7200, 0.0
  %vm7335 = vcmp.gt.f32.partialorder %v7201, 0.0
  %vm7336 = vcmp.gt.f32.partialorder %v7202, 0.0
  %vm7337 = vcmp.gt.f32.partialorder %v7203, 0.0
  %vm7338 = vcmp.gt.f32.partialorder %v7204, 0.0
  %vm7339 = vcmp.gt.f32.partialorder %v7205, 0.0
  %vm7340 = vcmp.gt.f32.partialorder %v7206, 0.0
  %vm7341 = vcmp.gt.f32.partialorder %v7207, 0.0
  %vm7342 = vcmp.gt.f32.partialorder %v7208, 0.0
  %vm7343 = vcmp.gt.f32.partialorder %v7209, 0.0
  %vm7344 = vcmp.gt.f32.partialorder %v7210, 0.0
  %vm7345 = vcmp.gt.f32.partialorder %v7211, 0.0
  %vm7346 = vcmp.gt.f32.partialorder %v7212, 0.0
  %vm7347 = vcmp.gt.f32.partialorder %v7213, 0.0
  %vm7348 = vcmp.gt.f32.partialorder %v7214, 0.0
  %vm7349 = vcmp.gt.f32.partialorder %v7215, 0.0
  %vm7350 = vcmp.gt.f32.partialorder %v7216, 0.0
  %vm7351 = vcmp.gt.f32.partialorder %v7217, 0.0
  %vm7352 = vcmp.gt.f32.partialorder %v7218, 0.0
  %vm7353 = vcmp.gt.f32.partialorder %v7219, 0.0
  %vm7354 = vcmp.gt.f32.partialorder %v7220, 0.0
  %vm7355 = vcmp.gt.f32.partialorder %v7221, 0.0
  %vm7356 = vcmp.gt.f32.partialorder %v7222, 0.0
  %vm7357 = vcmp.gt.f32.partialorder %v7223, 0.0
  %vm7358 = vcmp.gt.f32.partialorder %v7224, 0.0
  %vm7359 = vcmp.gt.f32.partialorder %v7225, 0.0
  %vm7360 = vcmp.gt.f32.partialorder %v7226, 0.0
  %vm7361 = vcmp.gt.f32.partialorder %v7227, 0.0
  %vm7362 = vcmp.gt.f32.partialorder %v7228, 0.0
  %vm7363 = vcmp.gt.f32.partialorder %v7229, 0.0
  %vm7364 = vcmp.gt.f32.partialorder %v7230, 0.0
  %vm7365 = vcmp.gt.f32.partialorder %v7231, 0.0
  %vm7366 = vcmp.gt.f32.partialorder %v7232, 0.0
  %vm7367 = vcmp.gt.f32.partialorder %v7233, 0.0
  %vm7368 = vcmp.gt.f32.partialorder %v7234, 0.0
  %vm7369 = vcmp.gt.f32.partialorder %v7235, 0.0
  %vm7370 = vcmp.gt.f32.partialorder %v7236, 0.0
  %vm7371 = vcmp.gt.f32.partialorder %v7237, 0.0
  %vm7372 = vcmp.gt.f32.partialorder %v7238, 0.0
  %vm7373 = vcmp.gt.f32.partialorder %v7239, 0.0
  %vm7374 = vcmp.gt.f32.partialorder %v7240, 0.0
  %vm7375 = vcmp.gt.f32.partialorder %v7241, 0.0
  %vm7376 = vcmp.gt.f32.partialorder %v7242, 0.0
  %vm7377 = vcmp.gt.f32.partialorder %v7243, 0.0
  %vm7378 = vcmp.gt.f32.partialorder %v7244, 0.0
  %vm7379 = vcmp.gt.f32.partialorder %v7245, 0.0
  %vm7380 = vcmp.gt.f32.partialorder %v7246, 0.0
  %vm7381 = vcmp.gt.f32.partialorder %v7247, 0.0
  %vm7382 = vcmp.gt.f32.partialorder %v7248, 0.0
  %vm7383 = vcmp.gt.f32.partialorder %v7249, 0.0
  %vm7384 = vcmp.gt.f32.partialorder %v7250, 0.0
  %vm7385 = vcmp.gt.f32.partialorder %v7251, 0.0
  %vm7386 = vcmp.gt.f32.partialorder %v7252, 0.0
  %vm7387 = vcmp.gt.f32.partialorder %v7253, 0.0
  %vm7388 = vcmp.gt.f32.partialorder %v7254, 0.0
  %vm7389 = vcmp.gt.f32.partialorder %v7255, 0.0
  %vm7390 = vcmp.gt.f32.partialorder %v7256, 0.0
  %vm7391 = vcmp.gt.f32.partialorder %v7257, 0.0
  %vm7392 = vcmp.gt.f32.partialorder %v7258, 0.0
  %vm7393 = vcmp.gt.f32.partialorder %v7259, 0.0
  %vm7394 = vcmp.gt.f32.partialorder %v7260, 0.0
  %vm7395 = vcmp.gt.f32.partialorder %v7261, 0.0
  %vm7396 = vcmp.gt.f32.partialorder %v7262, 0.0
  %vm7397 = vcmp.gt.f32.partialorder %v7263, 0.0
  %vm7398 = vcmp.gt.f32.partialorder %v7264, 0.0
  %vm7399 = vcmp.gt.f32.partialorder %v7265, 0.0
  %vm7400 = vcmp.gt.f32.partialorder %v7266, 0.0
  %vm7401 = vcmp.gt.f32.partialorder %v7267, 0.0
  %vm7402 = vcmp.gt.f32.partialorder %v7268, 0.0
  %vm7403 = vcmp.gt.f32.partialorder %v7269, 0.0
  %vm7404 = vcmp.gt.f32.partialorder %v7270, 0.0
  %vm7405 = vcmp.gt.f32.partialorder %v7271, 0.0
  %v7406 = vmin.f32 %v7138, 0.0
  %v7407 = vmin.f32 %v7139, 0.0
  %v7408 = vmin.f32 %v7140, 0.0
  %v7409 = vmin.f32 %v7141, 0.0
  %v7410 = vmin.f32 %v7142, 0.0
  %v7411 = vmin.f32 %v7143, 0.0
  %v7412 = vmin.f32 %v7144, 0.0
  %v7413 = vmin.f32 %v7145, 0.0
  %v7414 = vmin.f32 %v7146, 0.0
  %v7415 = vmin.f32 %v7147, 0.0
  %v7416 = vmin.f32 %v7148, 0.0
  %v7417 = vmin.f32 %v7149, 0.0
  %v7418 = vmin.f32 %v7150, 0.0
  %v7419 = vmin.f32 %v7151, 0.0
  %v7420 = vmin.f32 %v7152, 0.0
  %v7421 = vmin.f32 %v7153, 0.0
  %v7422 = vmin.f32 %v7154, 0.0
  %v7423 = vmin.f32 %v7155, 0.0
  %v7424 = vmin.f32 %v7156, 0.0
  %v7425 = vmin.f32 %v7157, 0.0
  %v7426 = vmin.f32 %v7158, 0.0
  %v7427 = vmin.f32 %v7159, 0.0
  %v7428 = vmin.f32 %v7160, 0.0
  %v7429 = vmin.f32 %v7161, 0.0
  %v7430 = vmin.f32 %v7162, 0.0
  %v7431 = vmin.f32 %v7163, 0.0
  %v7432 = vmin.f32 %v7164, 0.0
  %v7433 = vmin.f32 %v7165, 0.0
  %v7434 = vmin.f32 %v7166, 0.0
  %v7435 = vmin.f32 %v7167, 0.0
  %v7436 = vmin.f32 %v7168, 0.0
  %v7437 = vmin.f32 %v7169, 0.0
  %v7438 = vmin.f32 %v7170, 0.0
  %v7439 = vmin.f32 %v7171, 0.0
  %v7440 = vmin.f32 %v7172, 0.0
  %v7441 = vmin.f32 %v7173, 0.0
  %v7442 = vmin.f32 %v7174, 0.0
  %v7443 = vmin.f32 %v7175, 0.0
  %v7444 = vmin.f32 %v7176, 0.0
  %v7445 = vmin.f32 %v7177, 0.0
  %v7446 = vmin.f32 %v7178, 0.0
  %v7447 = vmin.f32 %v7179, 0.0
  %v7448 = vmin.f32 %v7180, 0.0
  %v7449 = vmin.f32 %v7181, 0.0
  %v7450 = vmin.f32 %v7182, 0.0
  %v7451 = vmin.f32 %v7183, 0.0
  %v7452 = vmin.f32 %v7184, 0.0
  %v7453 = vmin.f32 %v7185, 0.0
  %v7454 = vmin.f32 %v7186, 0.0
  %v7455 = vmin.f32 %v7187, 0.0
  %v7456 = vmin.f32 %v7188, 0.0
  %v7457 = vmin.f32 %v7189, 0.0
  %v7458 = vmin.f32 %v7190, 0.0
  %v7459 = vmin.f32 %v7191, 0.0
  %v7460 = vmin.f32 %v7192, 0.0
  %v7461 = vmin.f32 %v7193, 0.0
  %v7462 = vmin.f32 %v7194, 0.0
  %v7463 = vmin.f32 %v7195, 0.0
  %v7464 = vmin.f32 %v7196, 0.0
  %v7465 = vmin.f32 %v7197, 0.0
  %v7466 = vmin.f32 %v7198, 0.0
  %v7467 = vmin.f32 %v7199, 0.0
  %v7468 = vmin.f32 %v7200, 0.0
  %v7469 = vmin.f32 %v7201, 0.0
  %v7470 = vmin.f32 %v7202, 0.0
  %v7471 = vmin.f32 %v7203, 0.0
  %v7472 = vmin.f32 %v7204, 0.0
  %v7473 = vmin.f32 %v7205, 0.0
  %v7474 = vmin.f32 %v7206, 0.0
  %v7475 = vmin.f32 %v7207, 0.0
  %v7476 = vmin.f32 %v7208, 0.0
  %v7477 = vmin.f32 %v7209, 0.0
  %v7478 = vmin.f32 %v7210, 0.0
  %v7479 = vmin.f32 %v7211, 0.0
  %v7480 = vmin.f32 %v7212, 0.0
  %v7481 = vmin.f32 %v7213, 0.0
  %v7482 = vmin.f32 %v7214, 0.0
  %v7483 = vmin.f32 %v7215, 0.0
  %v7484 = vmin.f32 %v7216, 0.0
  %v7485 = vmin.f32 %v7217, 0.0
  %v7486 = vmin.f32 %v7218, 0.0
  %v7487 = vmin.f32 %v7219, 0.0
  %v7488 = vmin.f32 %v7220, 0.0
  %v7489 = vmin.f32 %v7221, 0.0
  %v7490 = vmin.f32 %v7222, 0.0
  %v7491 = vmin.f32 %v7223, 0.0
  %v7492 = vmin.f32 %v7224, 0.0
  %v7493 = vmin.f32 %v7225, 0.0
  %v7494 = vmin.f32 %v7226, 0.0
  %v7495 = vmin.f32 %v7227, 0.0
  %v7496 = vmin.f32 %v7228, 0.0
  %v7497 = vmin.f32 %v7229, 0.0
  %v7498 = vmin.f32 %v7230, 0.0
  %v7499 = vmin.f32 %v7231, 0.0
  %v7500 = vmin.f32 %v7232, 0.0
  %v7501 = vmin.f32 %v7233, 0.0
  %v7502 = vmin.f32 %v7234, 0.0
  %v7503 = vmin.f32 %v7235, 0.0
  %v7504 = vmin.f32 %v7236, 0.0
  %v7505 = vmin.f32 %v7237, 0.0
  %v7506 = vmin.f32 %v7238, 0.0
  %v7507 = vmin.f32 %v7239, 0.0
  %v7508 = vmin.f32 %v7240, 0.0
  %v7509 = vmin.f32 %v7241, 0.0
  %v7510 = vmin.f32 %v7242, 0.0
  %v7511 = vmin.f32 %v7243, 0.0
  %v7512 = vmin.f32 %v7244, 0.0
  %v7513 = vmin.f32 %v7245, 0.0
  %v7514 = vmin.f32 %v7246, 0.0
  %v7515 = vmin.f32 %v7247, 0.0
  %v7516 = vmin.f32 %v7248, 0.0
  %v7517 = vmin.f32 %v7249, 0.0
  %v7518 = vmin.f32 %v7250, 0.0
  %v7519 = vmin.f32 %v7251, 0.0
  %v7520 = vmin.f32 %v7252, 0.0
  %v7521 = vmin.f32 %v7253, 0.0
  %v7522 = vmin.f32 %v7254, 0.0
  %v7523 = vmin.f32 %v7255, 0.0
  %v7524 = vmin.f32 %v7256, 0.0
  %v7525 = vmin.f32 %v7257, 0.0
  %v7526 = vmin.f32 %v7258, 0.0
  %v7527 = vmin.f32 %v7259, 0.0
  %v7528 = vmin.f32 %v7260, 0.0
  %v7529 = vmin.f32 %v7261, 0.0
  %v7530 = vmin.f32 %v7262, 0.0
  %v7531 = vmin.f32 %v7263, 0.0
  %v7532 = vmin.f32 %v7264, 0.0
  %v7533 = vmin.f32 %v7265, 0.0
  %v7534 = vmin.f32 %v7266, 0.0
  %v7535 = vmin.f32 %v7267, 0.0
  %v7536 = vmin.f32 %v7268, 0.0
  %v7537 = vmin.f32 %v7269, 0.0
  %v7538 = vmin.f32 %v7270, 0.0
  %v7539 = vmin.f32 %v7271, 0.0
  %v7540 = vmul.f32 %v7406, 1.442695
  %v7541 = vpow.pop %v7540
  %v7542 = vmul.f32 %v7407, 1.442695
  %v7543 = vpow.pop %v7542
  %v7544 = vmul.f32 %v7408, 1.442695
  %v7545 = vpow.pop %v7544
  %v7546 = vmul.f32 %v7409, 1.442695
  %v7547 = vpow.pop %v7546
  %v7548 = vmul.f32 %v7410, 1.442695
  %v7549 = vpow.pop %v7548
  %v7550 = vmul.f32 %v7411, 1.442695
  %v7551 = vpow.pop %v7550
  %v7552 = vmul.f32 %v7412, 1.442695
  %v7553 = vpow.pop %v7552
  %v7554 = vmul.f32 %v7413, 1.442695
  %v7555 = vpow.pop %v7554
  %v7556 = vmul.f32 %v7414, 1.442695
  %v7557 = vpow.pop %v7556
  %v7558 = vmul.f32 %v7415, 1.442695
  %v7559 = vpow.pop %v7558
  %v7560 = vmul.f32 %v7416, 1.442695
  %v7561 = vpow.pop %v7560
  %v7562 = vmul.f32 %v7417, 1.442695
  %v7563 = vpow.pop %v7562
  %v7564 = vmul.f32 %v7418, 1.442695
  %v7565 = vpow.pop %v7564
  %v7566 = vmul.f32 %v7419, 1.442695
  %v7567 = vpow.pop %v7566
  %v7568 = vmul.f32 %v7420, 1.442695
  %v7569 = vpow.pop %v7568
  %v7570 = vmul.f32 %v7421, 1.442695
  %v7571 = vpow.pop %v7570
  %v7572 = vmul.f32 %v7422, 1.442695
  %v7573 = vpow.pop %v7572
  %v7574 = vmul.f32 %v7423, 1.442695
  %v7575 = vpow.pop %v7574
  %v7576 = vmul.f32 %v7424, 1.442695
  %v7577 = vpow.pop %v7576
  %v7578 = vmul.f32 %v7425, 1.442695
  %v7579 = vpow.pop %v7578
  %v7580 = vmul.f32 %v7426, 1.442695
  %v7581 = vpow.pop %v7580
  %v7582 = vmul.f32 %v7427, 1.442695
  %v7583 = vpow.pop %v7582
  %v7584 = vmul.f32 %v7428, 1.442695
  %v7585 = vpow.pop %v7584
  %v7586 = vmul.f32 %v7429, 1.442695
  %v7587 = vpow.pop %v7586
  %v7588 = vmul.f32 %v7430, 1.442695
  %v7589 = vpow.pop %v7588
  %v7590 = vmul.f32 %v7431, 1.442695
  %v7591 = vpow.pop %v7590
  %v7592 = vmul.f32 %v7432, 1.442695
  %v7593 = vpow.pop %v7592
  %v7594 = vmul.f32 %v7433, 1.442695
  %v7595 = vpow.pop %v7594
  %v7596 = vmul.f32 %v7434, 1.442695
  %v7597 = vpow.pop %v7596
  %v7598 = vmul.f32 %v7435, 1.442695
  %v7599 = vpow.pop %v7598
  %v7600 = vmul.f32 %v7436, 1.442695
  %v7601 = vpow.pop %v7600
  %v7602 = vmul.f32 %v7437, 1.442695
  %v7603 = vpow.pop %v7602
  %v7604 = vmul.f32 %v7438, 1.442695
  %v7605 = vpow.pop %v7604
  %v7606 = vmul.f32 %v7439, 1.442695
  %v7607 = vpow.pop %v7606
  %v7608 = vmul.f32 %v7440, 1.442695
  %v7609 = vpow.pop %v7608
  %v7610 = vmul.f32 %v7441, 1.442695
  %v7611 = vpow.pop %v7610
  %v7612 = vmul.f32 %v7442, 1.442695
  %v7613 = vpow.pop %v7612
  %v7614 = vmul.f32 %v7443, 1.442695
  %v7615 = vpow.pop %v7614
  %v7616 = vmul.f32 %v7444, 1.442695
  %v7617 = vpow.pop %v7616
  %v7618 = vmul.f32 %v7445, 1.442695
  %v7619 = vpow.pop %v7618
  %v7620 = vmul.f32 %v7446, 1.442695
  %v7621 = vpow.pop %v7620
  %v7622 = vmul.f32 %v7447, 1.442695
  %v7623 = vpow.pop %v7622
  %v7624 = vmul.f32 %v7448, 1.442695
  %v7625 = vpow.pop %v7624
  %v7626 = vmul.f32 %v7449, 1.442695
  %v7627 = vpow.pop %v7626
  %v7628 = vmul.f32 %v7450, 1.442695
  %v7629 = vpow.pop %v7628
  %v7630 = vmul.f32 %v7451, 1.442695
  %v7631 = vpow.pop %v7630
  %v7632 = vmul.f32 %v7452, 1.442695
  %v7633 = vpow.pop %v7632
  %v7634 = vmul.f32 %v7453, 1.442695
  %v7635 = vpow.pop %v7634
  %v7636 = vmul.f32 %v7454, 1.442695
  %v7637 = vpow.pop %v7636
  %v7638 = vmul.f32 %v7455, 1.442695
  %v7639 = vpow.pop %v7638
  %v7640 = vmul.f32 %v7456, 1.442695
  %v7641 = vpow.pop %v7640
  %v7642 = vmul.f32 %v7457, 1.442695
  %v7643 = vpow.pop %v7642
  %v7644 = vmul.f32 %v7458, 1.442695
  %v7645 = vpow.pop %v7644
  %v7646 = vmul.f32 %v7459, 1.442695
  %v7647 = vpow.pop %v7646
  %v7648 = vmul.f32 %v7460, 1.442695
  %v7649 = vpow.pop %v7648
  %v7650 = vmul.f32 %v7461, 1.442695
  %v7651 = vpow.pop %v7650
  %v7652 = vmul.f32 %v7462, 1.442695
  %v7653 = vpow.pop %v7652
  %v7654 = vmul.f32 %v7463, 1.442695
  %v7655 = vpow.pop %v7654
  %v7656 = vmul.f32 %v7464, 1.442695
  %v7657 = vpow.pop %v7656
  %v7658 = vmul.f32 %v7465, 1.442695
  %v7659 = vpow.pop %v7658
  %v7660 = vmul.f32 %v7466, 1.442695
  %v7661 = vpow.pop %v7660
  %v7662 = vmul.f32 %v7467, 1.442695
  %v7663 = vpow.pop %v7662
  %v7664 = vmul.f32 %v7468, 1.442695
  %v7665 = vpow.pop %v7664
  %v7666 = vmul.f32 %v7469, 1.442695
  %v7667 = vpow.pop %v7666
  %v7668 = vmul.f32 %v7470, 1.442695
  %v7669 = vpow.pop %v7668
  %v7670 = vmul.f32 %v7471, 1.442695
  %v7671 = vpow.pop %v7670
  %v7672 = vmul.f32 %v7472, 1.442695
  %v7673 = vpow.pop %v7672
  %v7674 = vmul.f32 %v7473, 1.442695
  %v7675 = vpow.pop %v7674
  %v7676 = vmul.f32 %v7474, 1.442695
  %v7677 = vpow.pop %v7676
  %v7678 = vmul.f32 %v7475, 1.442695
  %v7679 = vpow.pop %v7678
  %v7680 = vmul.f32 %v7476, 1.442695
  %v7681 = vpow.pop %v7680
  %v7682 = vmul.f32 %v7477, 1.442695
  %v7683 = vpow.pop %v7682
  %v7684 = vmul.f32 %v7478, 1.442695
  %v7685 = vpow.pop %v7684
  %v7686 = vmul.f32 %v7479, 1.442695
  %v7687 = vpow.pop %v7686
  %v7688 = vmul.f32 %v7480, 1.442695
  %v7689 = vpow.pop %v7688
  %v7690 = vmul.f32 %v7481, 1.442695
  %v7691 = vpow.pop %v7690
  %v7692 = vmul.f32 %v7482, 1.442695
  %v7693 = vpow.pop %v7692
  %v7694 = vmul.f32 %v7483, 1.442695
  %v7695 = vpow.pop %v7694
  %v7696 = vmul.f32 %v7484, 1.442695
  %v7697 = vpow.pop %v7696
  %v7698 = vmul.f32 %v7485, 1.442695
  %v7699 = vpow.pop %v7698
  %v7700 = vmul.f32 %v7486, 1.442695
  %v7701 = vpow.pop %v7700
  %v7702 = vmul.f32 %v7487, 1.442695
  %v7703 = vpow.pop %v7702
  %v7704 = vmul.f32 %v7488, 1.442695
  %v7705 = vpow.pop %v7704
  %v7706 = vmul.f32 %v7489, 1.442695
  %v7707 = vpow.pop %v7706
  %v7708 = vmul.f32 %v7490, 1.442695
  %v7709 = vpow.pop %v7708
  %v7710 = vmul.f32 %v7491, 1.442695
  %v7711 = vpow.pop %v7710
  %v7712 = vmul.f32 %v7492, 1.442695
  %v7713 = vpow.pop %v7712
  %v7714 = vmul.f32 %v7493, 1.442695
  %v7715 = vpow.pop %v7714
  %v7716 = vmul.f32 %v7494, 1.442695
  %v7717 = vpow.pop %v7716
  %v7718 = vmul.f32 %v7495, 1.442695
  %v7719 = vpow.pop %v7718
  %v7720 = vmul.f32 %v7496, 1.442695
  %v7721 = vpow.pop %v7720
  %v7722 = vmul.f32 %v7497, 1.442695
  %v7723 = vpow.pop %v7722
  %v7724 = vmul.f32 %v7498, 1.442695
  %v7725 = vpow.pop %v7724
  %v7726 = vmul.f32 %v7499, 1.442695
  %v7727 = vpow.pop %v7726
  %v7728 = vmul.f32 %v7500, 1.442695
  %v7729 = vpow.pop %v7728
  %v7730 = vmul.f32 %v7501, 1.442695
  %v7731 = vpow.pop %v7730
  %v7732 = vmul.f32 %v7502, 1.442695
  %v7733 = vpow.pop %v7732
  %v7734 = vmul.f32 %v7503, 1.442695
  %v7735 = vpow.pop %v7734
  %v7736 = vmul.f32 %v7504, 1.442695
  %v7737 = vpow.pop %v7736
  %v7738 = vmul.f32 %v7505, 1.442695
  %v7739 = vpow.pop %v7738
  %v7740 = vmul.f32 %v7506, 1.442695
  %v7741 = vpow.pop %v7740
  %v7742 = vmul.f32 %v7507, 1.442695
  %v7743 = vpow.pop %v7742
  %v7744 = vmul.f32 %v7508, 1.442695
  %v7745 = vpow.pop %v7744
  %v7746 = vmul.f32 %v7509, 1.442695
  %v7747 = vpow.pop %v7746
  %v7748 = vmul.f32 %v7510, 1.442695
  %v7749 = vpow.pop %v7748
  %v7750 = vmul.f32 %v7511, 1.442695
  %v7751 = vpow.pop %v7750
  %v7752 = vmul.f32 %v7512, 1.442695
  %v7753 = vpow.pop %v7752
  %v7754 = vmul.f32 %v7513, 1.442695
  %v7755 = vpow.pop %v7754
  %v7756 = vmul.f32 %v7514, 1.442695
  %v7757 = vpow.pop %v7756
  %v7758 = vmul.f32 %v7515, 1.442695
  %v7759 = vpow.pop %v7758
  %v7760 = vmul.f32 %v7516, 1.442695
  %v7761 = vpow.pop %v7760
  %v7762 = vmul.f32 %v7517, 1.442695
  %v7763 = vpow.pop %v7762
  %v7764 = vmul.f32 %v7518, 1.442695
  %v7765 = vpow.pop %v7764
  %v7766 = vmul.f32 %v7519, 1.442695
  %v7767 = vpow.pop %v7766
  %v7768 = vmul.f32 %v7520, 1.442695
  %v7769 = vpow.pop %v7768
  %v7770 = vmul.f32 %v7521, 1.442695
  %v7771 = vpow.pop %v7770
  %v7772 = vmul.f32 %v7522, 1.442695
  %v7773 = vpow.pop %v7772
  %v7774 = vmul.f32 %v7523, 1.442695
  %v7775 = vpow.pop %v7774
  %v7776 = vmul.f32 %v7524, 1.442695
  %v7777 = vpow.pop %v7776
  %v7778 = vmul.f32 %v7525, 1.442695
  %v7779 = vpow.pop %v7778
  %v7780 = vmul.f32 %v7526, 1.442695
  %v7781 = vpow.pop %v7780
  %v7782 = vmul.f32 %v7527, 1.442695
  %v7783 = vpow.pop %v7782
  %v7784 = vmul.f32 %v7528, 1.442695
  %v7785 = vpow.pop %v7784
  %v7786 = vmul.f32 %v7529, 1.442695
  %v7787 = vpow.pop %v7786
  %v7788 = vmul.f32 %v7530, 1.442695
  %v7789 = vpow.pop %v7788
  %v7790 = vmul.f32 %v7531, 1.442695
  %v7791 = vpow.pop %v7790
  %v7792 = vmul.f32 %v7532, 1.442695
  %v7793 = vpow.pop %v7792
  %v7794 = vmul.f32 %v7533, 1.442695
  %v7795 = vpow.pop %v7794
  %v7796 = vmul.f32 %v7534, 1.442695
  %v7797 = vpow.pop %v7796
  %v7798 = vmul.f32 %v7535, 1.442695
  %v7799 = vpow.pop %v7798
  %v7800 = vmul.f32 %v7536, 1.442695
  %v7801 = vpow.pop %v7800
  %v7802 = vmul.f32 %v7537, 1.442695
  %v7803 = vpow.pop %v7802
  %v7804 = vmul.f32 %v7538, 1.442695
  %v7805 = vpow.pop %v7804
  %v7806 = vmul.f32 %v7539, 1.442695
  %v7807 = vpow.pop %v7806
  %v7808 = vsub.f32 %v7541, 1.0
  %v7809 = vsub.f32 %v7543, 1.0
  %v7810 = vsub.f32 %v7545, 1.0
  %v7811 = vsub.f32 %v7547, 1.0
  %v7812 = vsub.f32 %v7549, 1.0
  %v7813 = vsub.f32 %v7551, 1.0
  %v7814 = vsub.f32 %v7553, 1.0
  %v7815 = vsub.f32 %v7555, 1.0
  %v7816 = vsub.f32 %v7557, 1.0
  %v7817 = vsub.f32 %v7559, 1.0
  %v7818 = vsub.f32 %v7561, 1.0
  %v7819 = vsub.f32 %v7563, 1.0
  %v7820 = vsub.f32 %v7565, 1.0
  %v7821 = vsub.f32 %v7567, 1.0
  %v7822 = vsub.f32 %v7569, 1.0
  %v7823 = vsub.f32 %v7571, 1.0
  %v7824 = vsub.f32 %v7573, 1.0
  %v7825 = vsub.f32 %v7575, 1.0
  %v7826 = vsub.f32 %v7577, 1.0
  %v7827 = vsub.f32 %v7579, 1.0
  %v7828 = vsub.f32 %v7581, 1.0
  %v7829 = vsub.f32 %v7583, 1.0
  %v7830 = vsub.f32 %v7585, 1.0
  %v7831 = vsub.f32 %v7587, 1.0
  %v7832 = vsub.f32 %v7589, 1.0
  %v7833 = vsub.f32 %v7591, 1.0
  %v7834 = vsub.f32 %v7593, 1.0
  %v7835 = vsub.f32 %v7595, 1.0
  %v7836 = vsub.f32 %v7597, 1.0
  %v7837 = vsub.f32 %v7599, 1.0
  %v7838 = vsub.f32 %v7601, 1.0
  %v7839 = vsub.f32 %v7603, 1.0
  %v7840 = vsub.f32 %v7605, 1.0
  %v7841 = vsub.f32 %v7607, 1.0
  %v7842 = vsub.f32 %v7609, 1.0
  %v7843 = vsub.f32 %v7611, 1.0
  %v7844 = vsub.f32 %v7613, 1.0
  %v7845 = vsub.f32 %v7615, 1.0
  %v7846 = vsub.f32 %v7617, 1.0
  %v7847 = vsub.f32 %v7619, 1.0
  %v7848 = vsub.f32 %v7621, 1.0
  %v7849 = vsub.f32 %v7623, 1.0
  %v7850 = vsub.f32 %v7625, 1.0
  %v7851 = vsub.f32 %v7627, 1.0
  %v7852 = vsub.f32 %v7629, 1.0
  %v7853 = vsub.f32 %v7631, 1.0
  %v7854 = vsub.f32 %v7633, 1.0
  %v7855 = vsub.f32 %v7635, 1.0
  %v7856 = vsub.f32 %v7637, 1.0
  %v7857 = vsub.f32 %v7639, 1.0
  %v7858 = vsub.f32 %v7641, 1.0
  %v7859 = vsub.f32 %v7643, 1.0
  %v7860 = vsub.f32 %v7645, 1.0
  %v7861 = vsub.f32 %v7647, 1.0
  %v7862 = vsub.f32 %v7649, 1.0
  %v7863 = vsub.f32 %v7651, 1.0
  %v7864 = vsub.f32 %v7653, 1.0
  %v7865 = vsub.f32 %v7655, 1.0
  %v7866 = vsub.f32 %v7657, 1.0
  %v7867 = vsub.f32 %v7659, 1.0
  %v7868 = vsub.f32 %v7661, 1.0
  %v7869 = vsub.f32 %v7663, 1.0
  %v7870 = vsub.f32 %v7665, 1.0
  %v7871 = vsub.f32 %v7667, 1.0
  %v7872 = vsub.f32 %v7669, 1.0
  %v7873 = vsub.f32 %v7671, 1.0
  %v7874 = vsub.f32 %v7673, 1.0
  %v7875 = vsub.f32 %v7675, 1.0
  %v7876 = vsub.f32 %v7677, 1.0
  %v7877 = vsub.f32 %v7679, 1.0
  %v7878 = vsub.f32 %v7681, 1.0
  %v7879 = vsub.f32 %v7683, 1.0
  %v7880 = vsub.f32 %v7685, 1.0
  %v7881 = vsub.f32 %v7687, 1.0
  %v7882 = vsub.f32 %v7689, 1.0
  %v7883 = vsub.f32 %v7691, 1.0
  %v7884 = vsub.f32 %v7693, 1.0
  %v7885 = vsub.f32 %v7695, 1.0
  %v7886 = vsub.f32 %v7697, 1.0
  %v7887 = vsub.f32 %v7699, 1.0
  %v7888 = vsub.f32 %v7701, 1.0
  %v7889 = vsub.f32 %v7703, 1.0
  %v7890 = vsub.f32 %v7705, 1.0
  %v7891 = vsub.f32 %v7707, 1.0
  %v7892 = vsub.f32 %v7709, 1.0
  %v7893 = vsub.f32 %v7711, 1.0
  %v7894 = vsub.f32 %v7713, 1.0
  %v7895 = vsub.f32 %v7715, 1.0
  %v7896 = vsub.f32 %v7717, 1.0
  %v7897 = vsub.f32 %v7719, 1.0
  %v7898 = vsub.f32 %v7721, 1.0
  %v7899 = vsub.f32 %v7723, 1.0
  %v7900 = vsub.f32 %v7725, 1.0
  %v7901 = vsub.f32 %v7727, 1.0
  %v7902 = vsub.f32 %v7729, 1.0
  %v7903 = vsub.f32 %v7731, 1.0
  %v7904 = vsub.f32 %v7733, 1.0
  %v7905 = vsub.f32 %v7735, 1.0
  %v7906 = vsub.f32 %v7737, 1.0
  %v7907 = vsub.f32 %v7739, 1.0
  %v7908 = vsub.f32 %v7741, 1.0
  %v7909 = vsub.f32 %v7743, 1.0
  %v7910 = vsub.f32 %v7745, 1.0
  %v7911 = vsub.f32 %v7747, 1.0
  %v7912 = vsub.f32 %v7749, 1.0
  %v7913 = vsub.f32 %v7751, 1.0
  %v7914 = vsub.f32 %v7753, 1.0
  %v7915 = vsub.f32 %v7755, 1.0
  %v7916 = vsub.f32 %v7757, 1.0
  %v7917 = vsub.f32 %v7759, 1.0
  %v7918 = vsub.f32 %v7761, 1.0
  %v7919 = vsub.f32 %v7763, 1.0
  %v7920 = vsub.f32 %v7765, 1.0
  %v7921 = vsub.f32 %v7767, 1.0
  %v7922 = vsub.f32 %v7769, 1.0
  %v7923 = vsub.f32 %v7771, 1.0
  %v7924 = vsub.f32 %v7773, 1.0
  %v7925 = vsub.f32 %v7775, 1.0
  %v7926 = vsub.f32 %v7777, 1.0
  %v7927 = vsub.f32 %v7779, 1.0
  %v7928 = vsub.f32 %v7781, 1.0
  %v7929 = vsub.f32 %v7783, 1.0
  %v7930 = vsub.f32 %v7785, 1.0
  %v7931 = vsub.f32 %v7787, 1.0
  %v7932 = vsub.f32 %v7789, 1.0
  %v7933 = vsub.f32 %v7791, 1.0
  %v7934 = vsub.f32 %v7793, 1.0
  %v7935 = vsub.f32 %v7795, 1.0
  %v7936 = vsub.f32 %v7797, 1.0
  %v7937 = vsub.f32 %v7799, 1.0
  %v7938 = vsub.f32 %v7801, 1.0
  %v7939 = vsub.f32 %v7803, 1.0
  %v7940 = vsub.f32 %v7805, 1.0
  %v7941 = vsub.f32 %v7807, 1.0
  %v7942 = vmul.f32 %v7808, 1.6732632
  %v7943 = vmul.f32 %v7809, 1.6732632
  %v7944 = vmul.f32 %v7810, 1.6732632
  %v7945 = vmul.f32 %v7811, 1.6732632
  %v7946 = vmul.f32 %v7812, 1.6732632
  %v7947 = vmul.f32 %v7813, 1.6732632
  %v7948 = vmul.f32 %v7814, 1.6732632
  %v7949 = vmul.f32 %v7815, 1.6732632
  %v7950 = vmul.f32 %v7816, 1.6732632
  %v7951 = vmul.f32 %v7817, 1.6732632
  %v7952 = vmul.f32 %v7818, 1.6732632
  %v7953 = vmul.f32 %v7819, 1.6732632
  %v7954 = vmul.f32 %v7820, 1.6732632
  %v7955 = vmul.f32 %v7821, 1.6732632
  %v7956 = vmul.f32 %v7822, 1.6732632
  %v7957 = vmul.f32 %v7823, 1.6732632
  %v7958 = vmul.f32 %v7824, 1.6732632
  %v7959 = vmul.f32 %v7825, 1.6732632
  %v7960 = vmul.f32 %v7826, 1.6732632
  %v7961 = vmul.f32 %v7827, 1.6732632
  %v7962 = vmul.f32 %v7828, 1.6732632
  %v7963 = vmul.f32 %v7829, 1.6732632
  %v7964 = vmul.f32 %v7830, 1.6732632
  %v7965 = vmul.f32 %v7831, 1.6732632
  %v7966 = vmul.f32 %v7832, 1.6732632
  %v7967 = vmul.f32 %v7833, 1.6732632
  %v7968 = vmul.f32 %v7834, 1.6732632
  %v7969 = vmul.f32 %v7835, 1.6732632
  %v7970 = vmul.f32 %v7836, 1.6732632
  %v7971 = vmul.f32 %v7837, 1.6732632
  %v7972 = vmul.f32 %v7838, 1.6732632
  %v7973 = vmul.f32 %v7839, 1.6732632
  %v7974 = vmul.f32 %v7840, 1.6732632
  %v7975 = vmul.f32 %v7841, 1.6732632
  %v7976 = vmul.f32 %v7842, 1.6732632
  %v7977 = vmul.f32 %v7843, 1.6732632
  %v7978 = vmul.f32 %v7844, 1.6732632
  %v7979 = vmul.f32 %v7845, 1.6732632
  %v7980 = vmul.f32 %v7846, 1.6732632
  %v7981 = vmul.f32 %v7847, 1.6732632
  %v7982 = vmul.f32 %v7848, 1.6732632
  %v7983 = vmul.f32 %v7849, 1.6732632
  %v7984 = vmul.f32 %v7850, 1.6732632
  %v7985 = vmul.f32 %v7851, 1.6732632
  %v7986 = vmul.f32 %v7852, 1.6732632
  %v7987 = vmul.f32 %v7853, 1.6732632
  %v7988 = vmul.f32 %v7854, 1.6732632
  %v7989 = vmul.f32 %v7855, 1.6732632
  %v7990 = vmul.f32 %v7856, 1.6732632
  %v7991 = vmul.f32 %v7857, 1.6732632
  %v7992 = vmul.f32 %v7858, 1.6732632
  %v7993 = vmul.f32 %v7859, 1.6732632
  %v7994 = vmul.f32 %v7860, 1.6732632
  %v7995 = vmul.f32 %v7861, 1.6732632
  %v7996 = vmul.f32 %v7862, 1.6732632
  %v7997 = vmul.f32 %v7863, 1.6732632
  %v7998 = vmul.f32 %v7864, 1.6732632
  %v7999 = vmul.f32 %v7865, 1.6732632
  %v8000 = vmul.f32 %v7866, 1.6732632
  %v8001 = vmul.f32 %v7867, 1.6732632
  %v8002 = vmul.f32 %v7868, 1.6732632
  %v8003 = vmul.f32 %v7869, 1.6732632
  %v8004 = vmul.f32 %v7870, 1.6732632
  %v8005 = vmul.f32 %v7871, 1.6732632
  %v8006 = vmul.f32 %v7872, 1.6732632
  %v8007 = vmul.f32 %v7873, 1.6732632
  %v8008 = vmul.f32 %v7874, 1.6732632
  %v8009 = vmul.f32 %v7875, 1.6732632
  %v8010 = vmul.f32 %v7876, 1.6732632
  %v8011 = vmul.f32 %v7877, 1.6732632
  %v8012 = vmul.f32 %v7878, 1.6732632
  %v8013 = vmul.f32 %v7879, 1.6732632
  %v8014 = vmul.f32 %v7880, 1.6732632
  %v8015 = vmul.f32 %v7881, 1.6732632
  %v8016 = vmul.f32 %v7882, 1.6732632
  %v8017 = vmul.f32 %v7883, 1.6732632
  %v8018 = vmul.f32 %v7884, 1.6732632
  %v8019 = vmul.f32 %v7885, 1.6732632
  %v8020 = vmul.f32 %v7886, 1.6732632
  %v8021 = vmul.f32 %v7887, 1.6732632
  %v8022 = vmul.f32 %v7888, 1.6732632
  %v8023 = vmul.f32 %v7889, 1.6732632
  %v8024 = vmul.f32 %v7890, 1.6732632
  %v8025 = vmul.f32 %v7891, 1.6732632
  %v8026 = vmul.f32 %v7892, 1.6732632
  %v8027 = vmul.f32 %v7893, 1.6732632
  %v8028 = vmul.f32 %v7894, 1.6732632
  %v8029 = vmul.f32 %v7895, 1.6732632
  %v8030 = vmul.f32 %v7896, 1.6732632
  %v8031 = vmul.f32 %v7897, 1.6732632
  %v8032 = vmul.f32 %v7898, 1.6732632
  %v8033 = vmul.f32 %v7899, 1.6732632
  %v8034 = vmul.f32 %v7900, 1.6732632
  %v8035 = vmul.f32 %v7901, 1.6732632
  %v8036 = vmul.f32 %v7902, 1.6732632
  %v8037 = vmul.f32 %v7903, 1.6732632
  %v8038 = vmul.f32 %v7904, 1.6732632
  %v8039 = vmul.f32 %v7905, 1.6732632
  %v8040 = vmul.f32 %v7906, 1.6732632
  %v8041 = vmul.f32 %v7907, 1.6732632
  %v8042 = vmul.f32 %v7908, 1.6732632
  %v8043 = vmul.f32 %v7909, 1.6732632
  %v8044 = vmul.f32 %v7910, 1.6732632
  %v8045 = vmul.f32 %v7911, 1.6732632
  %v8046 = vmul.f32 %v7912, 1.6732632
  %v8047 = vmul.f32 %v7913, 1.6732632
  %v8048 = vmul.f32 %v7914, 1.6732632
  %v8049 = vmul.f32 %v7915, 1.6732632
  %v8050 = vmul.f32 %v7916, 1.6732632
  %v8051 = vmul.f32 %v7917, 1.6732632
  %v8052 = vmul.f32 %v7918, 1.6732632
  %v8053 = vmul.f32 %v7919, 1.6732632
  %v8054 = vmul.f32 %v7920, 1.6732632
  %v8055 = vmul.f32 %v7921, 1.6732632
  %v8056 = vmul.f32 %v7922, 1.6732632
  %v8057 = vmul.f32 %v7923, 1.6732632
  %v8058 = vmul.f32 %v7924, 1.6732632
  %v8059 = vmul.f32 %v7925, 1.6732632
  %v8060 = vmul.f32 %v7926, 1.6732632
  %v8061 = vmul.f32 %v7927, 1.6732632
  %v8062 = vmul.f32 %v7928, 1.6732632
  %v8063 = vmul.f32 %v7929, 1.6732632
  %v8064 = vmul.f32 %v7930, 1.6732632
  %v8065 = vmul.f32 %v7931, 1.6732632
  %v8066 = vmul.f32 %v7932, 1.6732632
  %v8067 = vmul.f32 %v7933, 1.6732632
  %v8068 = vmul.f32 %v7934, 1.6732632
  %v8069 = vmul.f32 %v7935, 1.6732632
  %v8070 = vmul.f32 %v7936, 1.6732632
  %v8071 = vmul.f32 %v7937, 1.6732632
  %v8072 = vmul.f32 %v7938, 1.6732632
  %v8073 = vmul.f32 %v7939, 1.6732632
  %v8074 = vmul.f32 %v7940, 1.6732632
  %v8075 = vmul.f32 %v7941, 1.6732632
  %v8076 = vsel %vm7272, %v7138, %v7942
  %v8077 = vsel %vm7273, %v7139, %v7943
  %v8078 = vsel %vm7274, %v7140, %v7944
  %v8079 = vsel %vm7275, %v7141, %v7945
  %v8080 = vsel %vm7276, %v7142, %v7946
  %v8081 = vsel %vm7277, %v7143, %v7947
  %v8082 = vsel %vm7278, %v7144, %v7948
  %v8083 = vsel %vm7279, %v7145, %v7949
  %v8084 = vsel %vm7280, %v7146, %v7950
  %v8085 = vsel %vm7281, %v7147, %v7951
  %v8086 = vsel %vm7282, %v7148, %v7952
  %v8087 = vsel %vm7283, %v7149, %v7953
  %v8088 = vsel %vm7284, %v7150, %v7954
  %v8089 = vsel %vm7285, %v7151, %v7955
  %v8090 = vsel %vm7286, %v7152, %v7956
  %v8091 = vsel %vm7287, %v7153, %v7957
  %v8092 = vsel %vm7288, %v7154, %v7958
  %v8093 = vsel %vm7289, %v7155, %v7959
  %v8094 = vsel %vm7290, %v7156, %v7960
  %v8095 = vsel %vm7291, %v7157, %v7961
  %v8096 = vsel %vm7292, %v7158, %v7962
  %v8097 = vsel %vm7293, %v7159, %v7963
  %v8098 = vsel %vm7294, %v7160, %v7964
  %v8099 = vsel %vm7295, %v7161, %v7965
  %v8100 = vsel %vm7296, %v7162, %v7966
  %v8101 = vsel %vm7297, %v7163, %v7967
  %v8102 = vsel %vm7298, %v7164, %v7968
  %v8103 = vsel %vm7299, %v7165, %v7969
  %v8104 = vsel %vm7300, %v7166, %v7970
  %v8105 = vsel %vm7301, %v7167, %v7971
  %v8106 = vsel %vm7302, %v7168, %v7972
  %v8107 = vsel %vm7303, %v7169, %v7973
  %v8108 = vsel %vm7304, %v7170, %v7974
  %v8109 = vsel %vm7305, %v7171, %v7975
  %v8110 = vsel %vm7306, %v7172, %v7976
  %v8111 = vsel %vm7307, %v7173, %v7977
  %v8112 = vsel %vm7308, %v7174, %v7978
  %v8113 = vsel %vm7309, %v7175, %v7979
  %v8114 = vsel %vm7310, %v7176, %v7980
  %v8115 = vsel %vm7311, %v7177, %v7981
  %v8116 = vsel %vm7312, %v7178, %v7982
  %v8117 = vsel %vm7313, %v7179, %v7983
  %v8118 = vsel %vm7314, %v7180, %v7984
  %v8119 = vsel %vm7315, %v7181, %v7985
  %v8120 = vsel %vm7316, %v7182, %v7986
  %v8121 = vsel %vm7317, %v7183, %v7987
  %v8122 = vsel %vm7318, %v7184, %v7988
  %v8123 = vsel %vm7319, %v7185, %v7989
  %v8124 = vsel %vm7320, %v7186, %v7990
  %v8125 = vsel %vm7321, %v7187, %v7991
  %v8126 = vsel %vm7322, %v7188, %v7992
  %v8127 = vsel %vm7323, %v7189, %v7993
  %v8128 = vsel %vm7324, %v7190, %v7994
  %v8129 = vsel %vm7325, %v7191, %v7995
  %v8130 = vsel %vm7326, %v7192, %v7996
  %v8131 = vsel %vm7327, %v7193, %v7997
  %v8132 = vsel %vm7328, %v7194, %v7998
  %v8133 = vsel %vm7329, %v7195, %v7999
  %v8134 = vsel %vm7330, %v7196, %v8000
  %v8135 = vsel %vm7331, %v7197, %v8001
  %v8136 = vsel %vm7332, %v7198, %v8002
  %v8137 = vsel %vm7333, %v7199, %v8003
  %v8138 = vsel %vm7334, %v7200, %v8004
  %v8139 = vsel %vm7335, %v7201, %v8005
  %v8140 = vsel %vm7336, %v7202, %v8006
  %v8141 = vsel %vm7337, %v7203, %v8007
  %v8142 = vsel %vm7338, %v7204, %v8008
  %v8143 = vsel %vm7339, %v7205, %v8009
  %v8144 = vsel %vm7340, %v7206, %v8010
  %v8145 = vsel %vm7341, %v7207, %v8011
  %v8146 = vsel %vm7342, %v7208, %v8012
  %v8147 = vsel %vm7343, %v7209, %v8013
  %v8148 = vsel %vm7344, %v7210, %v8014
  %v8149 = vsel %vm7345, %v7211, %v8015
  %v8150 = vsel %vm7346, %v7212, %v8016
  %v8151 = vsel %vm7347, %v7213, %v8017
  %v8152 = vsel %vm7348, %v7214, %v8018
  %v8153 = vsel %vm7349, %v7215, %v8019
  %v8154 = vsel %vm7350, %v7216, %v8020
  %v8155 = vsel %vm7351, %v7217, %v8021
  %v8156 = vsel %vm7352, %v7218, %v8022
  %v8157 = vsel %vm7353, %v7219, %v8023
  %v8158 = vsel %vm7354, %v7220, %v8024
  %v8159 = vsel %vm7355, %v7221, %v8025
  %v8160 = vsel %vm7356, %v7222, %v8026
  %v8161 = vsel %vm7357, %v7223, %v8027
  %v8162 = vsel %vm7358, %v7224, %v8028
  %v8163 = vsel %vm7359, %v7225, %v8029
  %v8164 = vsel %vm7360, %v7226, %v8030
  %v8165 = vsel %vm7361, %v7227, %v8031
  %v8166 = vsel %vm7362, %v7228, %v8032
  %v8167 = vsel %vm7363, %v7229, %v8033
  %v8168 = vsel %vm7364, %v7230, %v8034
  %v8169 = vsel %vm7365, %v7231, %v8035
  %v8170 = vsel %vm7366, %v7232, %v8036
  %v8171 = vsel %vm7367, %v7233, %v8037
  %v8172 = vsel %vm7368, %v7234, %v8038
  %v8173 = vsel %vm7369, %v7235, %v8039
  %v8174 = vsel %vm7370, %v7236, %v8040
  %v8175 = vsel %vm7371, %v7237, %v8041
  %v8176 = vsel %vm7372, %v7238, %v8042
  %v8177 = vsel %vm7373, %v7239, %v8043
  %v8178 = vsel %vm7374, %v7240, %v8044
  %v8179 = vsel %vm7375, %v7241, %v8045
  %v8180 = vsel %vm7376, %v7242, %v8046
  %v8181 = vsel %vm7377, %v7243, %v8047
  %v8182 = vsel %vm7378, %v7244, %v8048
  %v8183 = vsel %vm7379, %v7245, %v8049
  %v8184 = vsel %vm7380, %v7246, %v8050
  %v8185 = vsel %vm7381, %v7247, %v8051
  %v8186 = vsel %vm7382, %v7248, %v8052
  %v8187 = vsel %vm7383, %v7249, %v8053
  %v8188 = vsel %vm7384, %v7250, %v8054
  %v8189 = vsel %vm7385, %v7251, %v8055
  %v8190 = vsel %vm7386, %v7252, %v8056
  %v8191 = vsel %vm7387, %v7253, %v8057
  %v8192 = vsel %vm7388, %v7254, %v8058
  %v8193 = vsel %vm7389, %v7255, %v8059
  %v8194 = vsel %vm7390, %v7256, %v8060
  %v8195 = vsel %vm7391, %v7257, %v8061
  %v8196 = vsel %vm7392, %v7258, %v8062
  %v8197 = vsel %vm7393, %v7259, %v8063
  %v8198 = vsel %vm7394, %v7260, %v8064
  %v8199 = vsel %vm7395, %v7261, %v8065
  %v8200 = vsel %vm7396, %v7262, %v8066
  %v8201 = vsel %vm7397, %v7263, %v8067
  %v8202 = vsel %vm7398, %v7264, %v8068
  %v8203 = vsel %vm7399, %v7265, %v8069
  %v8204 = vsel %vm7400, %v7266, %v8070
  %v8205 = vsel %vm7401, %v7267, %v8071
  %v8206 = vsel %vm7402, %v7268, %v8072
  %v8207 = vsel %vm7403, %v7269, %v8073
  %v8208 = vsel %vm7404, %v7270, %v8074
  %v8209 = vsel %vm7405, %v7271, %v8075
  %v8210 = vmul.f32 %v8076, 1.050701
  %v8211 = vmul.f32 %v8077, 1.050701
  %v8212 = vmul.f32 %v8078, 1.050701
  %v8213 = vmul.f32 %v8079, 1.050701
  %v8214 = vmul.f32 %v8080, 1.050701
  %v8215 = vmul.f32 %v8081, 1.050701
  %v8216 = vmul.f32 %v8082, 1.050701
  %v8217 = vmul.f32 %v8083, 1.050701
  %v8218 = vmul.f32 %v8084, 1.050701
  %v8219 = vmul.f32 %v8085, 1.050701
  %v8220 = vmul.f32 %v8086, 1.050701
  %v8221 = vmul.f32 %v8087, 1.050701
  %v8222 = vmul.f32 %v8088, 1.050701
  %v8223 = vmul.f32 %v8089, 1.050701
  %v8224 = vmul.f32 %v8090, 1.050701
  %v8225 = vmul.f32 %v8091, 1.050701
  %v8226 = vmul.f32 %v8092, 1.050701
  %v8227 = vmul.f32 %v8093, 1.050701
  %v8228 = vmul.f32 %v8094, 1.050701
  %v8229 = vmul.f32 %v8095, 1.050701
  %v8230 = vmul.f32 %v8096, 1.050701
  %v8231 = vmul.f32 %v8097, 1.050701
  %v8232 = vmul.f32 %v8098, 1.050701
  %v8233 = vmul.f32 %v8099, 1.050701
  %v8234 = vmul.f32 %v8100, 1.050701
  %v8235 = vmul.f32 %v8101, 1.050701
  %v8236 = vmul.f32 %v8102, 1.050701
  %v8237 = vmul.f32 %v8103, 1.050701
  %v8238 = vmul.f32 %v8104, 1.050701
  %v8239 = vmul.f32 %v8105, 1.050701
  %v8240 = vmul.f32 %v8106, 1.050701
  %v8241 = vmul.f32 %v8107, 1.050701
  %v8242 = vmul.f32 %v8108, 1.050701
  %v8243 = vmul.f32 %v8109, 1.050701
  %v8244 = vmul.f32 %v8110, 1.050701
  %v8245 = vmul.f32 %v8111, 1.050701
  %v8246 = vmul.f32 %v8112, 1.050701
  %v8247 = vmul.f32 %v8113, 1.050701
  %v8248 = vmul.f32 %v8114, 1.050701
  %v8249 = vmul.f32 %v8115, 1.050701
  %v8250 = vmul.f32 %v8116, 1.050701
  %v8251 = vmul.f32 %v8117, 1.050701
  %v8252 = vmul.f32 %v8118, 1.050701
  %v8253 = vmul.f32 %v8119, 1.050701
  %v8254 = vmul.f32 %v8120, 1.050701
  %v8255 = vmul.f32 %v8121, 1.050701
  %v8256 = vmul.f32 %v8122, 1.050701
  %v8257 = vmul.f32 %v8123, 1.050701
  %v8258 = vmul.f32 %v8124, 1.050701
  %v8259 = vmul.f32 %v8125, 1.050701
  %v8260 = vmul.f32 %v8126, 1.050701
  %v8261 = vmul.f32 %v8127, 1.050701
  %v8262 = vmul.f32 %v8128, 1.050701
  %v8263 = vmul.f32 %v8129, 1.050701
  %v8264 = vmul.f32 %v8130, 1.050701
  %v8265 = vmul.f32 %v8131, 1.050701
  %v8266 = vmul.f32 %v8132, 1.050701
  %v8267 = vmul.f32 %v8133, 1.050701
  %v8268 = vmul.f32 %v8134, 1.050701
  %v8269 = vmul.f32 %v8135, 1.050701
  %v8270 = vmul.f32 %v8136, 1.050701
  %v8271 = vmul.f32 %v8137, 1.050701
  %v8272 = vmul.f32 %v8138, 1.050701
  %v8273 = vmul.f32 %v8139, 1.050701
  %v8274 = vmul.f32 %v8140, 1.050701
  %v8275 = vmul.f32 %v8141, 1.050701
  %v8276 = vmul.f32 %v8142, 1.050701
  %v8277 = vmul.f32 %v8143, 1.050701
  %v8278 = vmul.f32 %v8144, 1.050701
  %v8279 = vmul.f32 %v8145, 1.050701
  %v8280 = vmul.f32 %v8146, 1.050701
  %v8281 = vmul.f32 %v8147, 1.050701
  %v8282 = vmul.f32 %v8148, 1.050701
  %v8283 = vmul.f32 %v8149, 1.050701
  %v8284 = vmul.f32 %v8150, 1.050701
  %v8285 = vmul.f32 %v8151, 1.050701
  %v8286 = vmul.f32 %v8152, 1.050701
  %v8287 = vmul.f32 %v8153, 1.050701
  %v8288 = vmul.f32 %v8154, 1.050701
  %v8289 = vmul.f32 %v8155, 1.050701
  %v8290 = vmul.f32 %v8156, 1.050701
  %v8291 = vmul.f32 %v8157, 1.050701
  %v8292 = vmul.f32 %v8158, 1.050701
  %v8293 = vmul.f32 %v8159, 1.050701
  %v8294 = vmul.f32 %v8160, 1.050701
  %v8295 = vmul.f32 %v8161, 1.050701
  %v8296 = vmul.f32 %v8162, 1.050701
  %v8297 = vmul.f32 %v8163, 1.050701
  %v8298 = vmul.f32 %v8164, 1.050701
  %v8299 = vmul.f32 %v8165, 1.050701
  %v8300 = vmul.f32 %v8166, 1.050701
  %v8301 = vmul.f32 %v8167, 1.050701
  %v8302 = vmul.f32 %v8168, 1.050701
  %v8303 = vmul.f32 %v8169, 1.050701
  %v8304 = vmul.f32 %v8170, 1.050701
  %v8305 = vmul.f32 %v8171, 1.050701
  %v8306 = vmul.f32 %v8172, 1.050701
  %v8307 = vmul.f32 %v8173, 1.050701
  %v8308 = vmul.f32 %v8174, 1.050701
  %v8309 = vmul.f32 %v8175, 1.050701
  %v8310 = vmul.f32 %v8176, 1.050701
  %v8311 = vmul.f32 %v8177, 1.050701
  %v8312 = vmul.f32 %v8178, 1.050701
  %v8313 = vmul.f32 %v8179, 1.050701
  %v8314 = vmul.f32 %v8180, 1.050701
  %v8315 = vmul.f32 %v8181, 1.050701
  %v8316 = vmul.f32 %v8182, 1.050701
  %v8317 = vmul.f32 %v8183, 1.050701
  %v8318 = vmul.f32 %v8184, 1.050701
  %v8319 = vmul.f32 %v8185, 1.050701
  %v8320 = vmul.f32 %v8186, 1.050701
  %v8321 = vmul.f32 %v8187, 1.050701
  %v8322 = vmul.f32 %v8188, 1.050701
  %v8323 = vmul.f32 %v8189, 1.050701
  %v8324 = vmul.f32 %v8190, 1.050701
  %v8325 = vmul.f32 %v8191, 1.050701
  %v8326 = vmul.f32 %v8192, 1.050701
  %v8327 = vmul.f32 %v8193, 1.050701
  %v8328 = vmul.f32 %v8194, 1.050701
  %v8329 = vmul.f32 %v8195, 1.050701
  %v8330 = vmul.f32 %v8196, 1.050701
  %v8331 = vmul.f32 %v8197, 1.050701
  %v8332 = vmul.f32 %v8198, 1.050701
  %v8333 = vmul.f32 %v8199, 1.050701
  %v8334 = vmul.f32 %v8200, 1.050701
  %v8335 = vmul.f32 %v8201, 1.050701
  %v8336 = vmul.f32 %v8202, 1.050701
  %v8337 = vmul.f32 %v8203, 1.050701
  %v8338 = vmul.f32 %v8204, 1.050701
  %v8339 = vmul.f32 %v8205, 1.050701
  %v8340 = vmul.f32 %v8206, 1.050701
  %v8341 = vmul.f32 %v8207, 1.050701
  %v8342 = vmul.f32 %v8208, 1.050701
  %v8343 = vmul.f32 %v8209, 1.050701
  %v8344 = vsel %vm2900, %v8210, 0.0
  %v8345 = vsel %vm2900, %v8211, 0.0
  %v8346 = vadd.f32 %v8344, %v8345
  %v8347 = vsel %vm2900, %v8212, 0.0
  %v8348 = vadd.f32 %v8346, %v8347
  %v8349 = vsel %vm2900, %v8213, 0.0
  %v8350 = vadd.f32 %v8348, %v8349
  %v8351 = vsel %vm2900, %v8214, 0.0
  %v8352 = vadd.f32 %v8350, %v8351
  %v8353 = vsel %vm2900, %v8215, 0.0
  %v8354 = vadd.f32 %v8352, %v8353
  %v8355 = vsel %vm2900, %v8216, 0.0
  %v8356 = vadd.f32 %v8354, %v8355
  %v8357 = vsel %vm2900, %v8217, 0.0
  %v8358 = vadd.f32 %v8356, %v8357
  %v8359 = vsel %vm2900, %v8218, 0.0
  %v8360 = vadd.f32 %v8358, %v8359
  %v8361 = vsel %vm2900, %v8219, 0.0
  %v8362 = vadd.f32 %v8360, %v8361
  %v8363 = vsel %vm2900, %v8220, 0.0
  %v8364 = vadd.f32 %v8362, %v8363
  %v8365 = vsel %vm2900, %v8221, 0.0
  %v8366 = vadd.f32 %v8364, %v8365
  %v8367 = vsel %vm2900, %v8222, 0.0
  %v8368 = vadd.f32 %v8366, %v8367
  %v8369 = vsel %vm2900, %v8223, 0.0
  %v8370 = vadd.f32 %v8368, %v8369
  %v8371 = vsel %vm2900, %v8224, 0.0
  %v8372 = vadd.f32 %v8370, %v8371
  %v8373 = vsel %vm2900, %v8225, 0.0
  %v8374 = vadd.f32 %v8372, %v8373
  %v8375 = vsel %vm2900, %v8226, 0.0
  %v8376 = vadd.f32 %v8374, %v8375
  %v8377 = vsel %vm2900, %v8227, 0.0
  %v8378 = vadd.f32 %v8376, %v8377
  %v8379 = vsel %vm2900, %v8228, 0.0
  %v8380 = vadd.f32 %v8378, %v8379
  %v8381 = vsel %vm2900, %v8229, 0.0
  %v8382 = vadd.f32 %v8380, %v8381
  %v8383 = vsel %vm2900, %v8230, 0.0
  %v8384 = vadd.f32 %v8382, %v8383
  %v8385 = vsel %vm2900, %v8231, 0.0
  %v8386 = vadd.f32 %v8384, %v8385
  %v8387 = vsel %vm2900, %v8232, 0.0
  %v8388 = vadd.f32 %v8386, %v8387
  %v8389 = vsel %vm2900, %v8233, 0.0
  %v8390 = vadd.f32 %v8388, %v8389
  %v8391 = vsel %vm2900, %v8234, 0.0
  %v8392 = vadd.f32 %v8390, %v8391
  %v8393 = vsel %vm2900, %v8235, 0.0
  %v8394 = vadd.f32 %v8392, %v8393
  %v8395 = vsel %vm2900, %v8236, 0.0
  %v8396 = vadd.f32 %v8394, %v8395
  %v8397 = vsel %vm2900, %v8237, 0.0
  %v8398 = vadd.f32 %v8396, %v8397
  %v8399 = vsel %vm2900, %v8238, 0.0
  %v8400 = vadd.f32 %v8398, %v8399
  %v8401 = vsel %vm2900, %v8239, 0.0
  %v8402 = vadd.f32 %v8400, %v8401
  %v8403 = vsel %vm2900, %v8240, 0.0
  %v8404 = vadd.f32 %v8402, %v8403
  %v8405 = vsel %vm2900, %v8241, 0.0
  %v8406 = vadd.f32 %v8404, %v8405
  %v8407 = vsel %vm2900, %v8242, 0.0
  %v8408 = vadd.f32 %v8406, %v8407
  %v8409 = vsel %vm2900, %v8243, 0.0
  %v8410 = vadd.f32 %v8408, %v8409
  %v8411 = vsel %vm2900, %v8244, 0.0
  %v8412 = vadd.f32 %v8410, %v8411
  %v8413 = vsel %vm2900, %v8245, 0.0
  %v8414 = vadd.f32 %v8412, %v8413
  %v8415 = vsel %vm2900, %v8246, 0.0
  %v8416 = vadd.f32 %v8414, %v8415
  %v8417 = vsel %vm2900, %v8247, 0.0
  %v8418 = vadd.f32 %v8416, %v8417
  %v8419 = vsel %vm2900, %v8248, 0.0
  %v8420 = vadd.f32 %v8418, %v8419
  %v8421 = vsel %vm2900, %v8249, 0.0
  %v8422 = vadd.f32 %v8420, %v8421
  %v8423 = vsel %vm2900, %v8250, 0.0
  %v8424 = vadd.f32 %v8422, %v8423
  %v8425 = vsel %vm2900, %v8251, 0.0
  %v8426 = vadd.f32 %v8424, %v8425
  %v8427 = vsel %vm2900, %v8252, 0.0
  %v8428 = vadd.f32 %v8426, %v8427
  %v8429 = vsel %vm2900, %v8253, 0.0
  %v8430 = vadd.f32 %v8428, %v8429
  %v8431 = vsel %vm2900, %v8254, 0.0
  %v8432 = vadd.f32 %v8430, %v8431
  %v8433 = vsel %vm2900, %v8255, 0.0
  %v8434 = vadd.f32 %v8432, %v8433
  %v8435 = vsel %vm2900, %v8256, 0.0
  %v8436 = vadd.f32 %v8434, %v8435
  %v8437 = vsel %vm2900, %v8257, 0.0
  %v8438 = vadd.f32 %v8436, %v8437
  %v8439 = vsel %vm2900, %v8258, 0.0
  %v8440 = vadd.f32 %v8438, %v8439
  %v8441 = vsel %vm2900, %v8259, 0.0
  %v8442 = vadd.f32 %v8440, %v8441
  %v8443 = vsel %vm2900, %v8260, 0.0
  %v8444 = vadd.f32 %v8442, %v8443
  %v8445 = vsel %vm2900, %v8261, 0.0
  %v8446 = vadd.f32 %v8444, %v8445
  %v8447 = vsel %vm2900, %v8262, 0.0
  %v8448 = vadd.f32 %v8446, %v8447
  %v8449 = vsel %vm2900, %v8263, 0.0
  %v8450 = vadd.f32 %v8448, %v8449
  %v8451 = vsel %vm2900, %v8264, 0.0
  %v8452 = vadd.f32 %v8450, %v8451
  %v8453 = vsel %vm2900, %v8265, 0.0
  %v8454 = vadd.f32 %v8452, %v8453
  %v8455 = vsel %vm2900, %v8266, 0.0
  %v8456 = vadd.f32 %v8454, %v8455
  %v8457 = vsel %vm2900, %v8267, 0.0
  %v8458 = vadd.f32 %v8456, %v8457
  %v8459 = vsel %vm2900, %v8268, 0.0
  %v8460 = vadd.f32 %v8458, %v8459
  %v8461 = vsel %vm2900, %v8269, 0.0
  %v8462 = vadd.f32 %v8460, %v8461
  %v8463 = vsel %vm2900, %v8270, 0.0
  %v8464 = vadd.f32 %v8462, %v8463
  %v8465 = vsel %vm2900, %v8271, 0.0
  %v8466 = vadd.f32 %v8464, %v8465
  %v8467 = vsel %vm2900, %v8272, 0.0
  %v8468 = vadd.f32 %v8466, %v8467
  %v8469 = vsel %vm2900, %v8273, 0.0
  %v8470 = vadd.f32 %v8468, %v8469
  %v8471 = vsel %vm2900, %v8274, 0.0
  %v8472 = vadd.f32 %v8470, %v8471
  %v8473 = vsel %vm2900, %v8275, 0.0
  %v8474 = vadd.f32 %v8472, %v8473
  %v8475 = vsel %vm2967, %v8276, 0.0
  %v8476 = vadd.f32 %v8474, %v8475
  %v8477 = vrot.slane %v8476, 4
  %v8478 = vadd.f32 %v8476, %v8477
  %v8479 = vrot.slane %v8478, 2
  %v8480 = vadd.f32 %v8478, %v8479
  %v8481 = vrot.slane %v8480, 1
  %v8482 = vadd.f32 %v8480, %v8481
  %v8483 = vsel %vm2900, %v8277, 0.0
  %v8484 = vsel %vm2900, %v8278, 0.0
  %v8485 = vadd.f32 %v8483, %v8484
  %v8486 = vsel %vm2900, %v8279, 0.0
  %v8487 = vadd.f32 %v8485, %v8486
  %v8488 = vsel %vm2900, %v8280, 0.0
  %v8489 = vadd.f32 %v8487, %v8488
  %v8490 = vsel %vm2900, %v8281, 0.0
  %v8491 = vadd.f32 %v8489, %v8490
  %v8492 = vsel %vm2900, %v8282, 0.0
  %v8493 = vadd.f32 %v8491, %v8492
  %v8494 = vsel %vm2900, %v8283, 0.0
  %v8495 = vadd.f32 %v8493, %v8494
  %v8496 = vsel %vm2900, %v8284, 0.0
  %v8497 = vadd.f32 %v8495, %v8496
  %v8498 = vsel %vm2900, %v8285, 0.0
  %v8499 = vadd.f32 %v8497, %v8498
  %v8500 = vsel %vm2900, %v8286, 0.0
  %v8501 = vadd.f32 %v8499, %v8500
  %v8502 = vsel %vm2900, %v8287, 0.0
  %v8503 = vadd.f32 %v8501, %v8502
  %v8504 = vsel %vm2900, %v8288, 0.0
  %v8505 = vadd.f32 %v8503, %v8504
  %v8506 = vsel %vm2900, %v8289, 0.0
  %v8507 = vadd.f32 %v8505, %v8506
  %v8508 = vsel %vm2900, %v8290, 0.0
  %v8509 = vadd.f32 %v8507, %v8508
  %v8510 = vsel %vm2900, %v8291, 0.0
  %v8511 = vadd.f32 %v8509, %v8510
  %v8512 = vsel %vm2900, %v8292, 0.0
  %v8513 = vadd.f32 %v8511, %v8512
  %v8514 = vsel %vm2900, %v8293, 0.0
  %v8515 = vadd.f32 %v8513, %v8514
  %v8516 = vsel %vm2900, %v8294, 0.0
  %v8517 = vadd.f32 %v8515, %v8516
  %v8518 = vsel %vm2900, %v8295, 0.0
  %v8519 = vadd.f32 %v8517, %v8518
  %v8520 = vsel %vm2900, %v8296, 0.0
  %v8521 = vadd.f32 %v8519, %v8520
  %v8522 = vsel %vm2900, %v8297, 0.0
  %v8523 = vadd.f32 %v8521, %v8522
  %v8524 = vsel %vm2900, %v8298, 0.0
  %v8525 = vadd.f32 %v8523, %v8524
  %v8526 = vsel %vm2900, %v8299, 0.0
  %v8527 = vadd.f32 %v8525, %v8526
  %v8528 = vsel %vm2900, %v8300, 0.0
  %v8529 = vadd.f32 %v8527, %v8528
  %v8530 = vsel %vm2900, %v8301, 0.0
  %v8531 = vadd.f32 %v8529, %v8530
  %v8532 = vsel %vm2900, %v8302, 0.0
  %v8533 = vadd.f32 %v8531, %v8532
  %v8534 = vsel %vm2900, %v8303, 0.0
  %v8535 = vadd.f32 %v8533, %v8534
  %v8536 = vsel %vm2900, %v8304, 0.0
  %v8537 = vadd.f32 %v8535, %v8536
  %v8538 = vsel %vm2900, %v8305, 0.0
  %v8539 = vadd.f32 %v8537, %v8538
  %v8540 = vsel %vm2900, %v8306, 0.0
  %v8541 = vadd.f32 %v8539, %v8540
  %v8542 = vsel %vm2900, %v8307, 0.0
  %v8543 = vadd.f32 %v8541, %v8542
  %v8544 = vsel %vm2900, %v8308, 0.0
  %v8545 = vadd.f32 %v8543, %v8544
  %v8546 = vsel %vm2900, %v8309, 0.0
  %v8547 = vadd.f32 %v8545, %v8546
  %v8548 = vsel %vm2900, %v8310, 0.0
  %v8549 = vadd.f32 %v8547, %v8548
  %v8550 = vsel %vm2900, %v8311, 0.0
  %v8551 = vadd.f32 %v8549, %v8550
  %v8552 = vsel %vm2900, %v8312, 0.0
  %v8553 = vadd.f32 %v8551, %v8552
  %v8554 = vsel %vm2900, %v8313, 0.0
  %v8555 = vadd.f32 %v8553, %v8554
  %v8556 = vsel %vm2900, %v8314, 0.0
  %v8557 = vadd.f32 %v8555, %v8556
  %v8558 = vsel %vm2900, %v8315, 0.0
  %v8559 = vadd.f32 %v8557, %v8558
  %v8560 = vsel %vm2900, %v8316, 0.0
  %v8561 = vadd.f32 %v8559, %v8560
  %v8562 = vsel %vm2900, %v8317, 0.0
  %v8563 = vadd.f32 %v8561, %v8562
  %v8564 = vsel %vm2900, %v8318, 0.0
  %v8565 = vadd.f32 %v8563, %v8564
  %v8566 = vsel %vm2900, %v8319, 0.0
  %v8567 = vadd.f32 %v8565, %v8566
  %v8568 = vsel %vm2900, %v8320, 0.0
  %v8569 = vadd.f32 %v8567, %v8568
  %v8570 = vsel %vm2900, %v8321, 0.0
  %v8571 = vadd.f32 %v8569, %v8570
  %v8572 = vsel %vm2900, %v8322, 0.0
  %v8573 = vadd.f32 %v8571, %v8572
  %v8574 = vsel %vm2900, %v8323, 0.0
  %v8575 = vadd.f32 %v8573, %v8574
  %v8576 = vsel %vm2900, %v8324, 0.0
  %v8577 = vadd.f32 %v8575, %v8576
  %v8578 = vsel %vm2900, %v8325, 0.0
  %v8579 = vadd.f32 %v8577, %v8578
  %v8580 = vsel %vm2900, %v8326, 0.0
  %v8581 = vadd.f32 %v8579, %v8580
  %v8582 = vsel %vm2900, %v8327, 0.0
  %v8583 = vadd.f32 %v8581, %v8582
  %v8584 = vsel %vm2900, %v8328, 0.0
  %v8585 = vadd.f32 %v8583, %v8584
  %v8586 = vsel %vm2900, %v8329, 0.0
  %v8587 = vadd.f32 %v8585, %v8586
  %v8588 = vsel %vm2900, %v8330, 0.0
  %v8589 = vadd.f32 %v8587, %v8588
  %v8590 = vsel %vm2900, %v8331, 0.0
  %v8591 = vadd.f32 %v8589, %v8590
  %v8592 = vsel %vm2900, %v8332, 0.0
  %v8593 = vadd.f32 %v8591, %v8592
  %v8594 = vsel %vm2900, %v8333, 0.0
  %v8595 = vadd.f32 %v8593, %v8594
  %v8596 = vsel %vm2900, %v8334, 0.0
  %v8597 = vadd.f32 %v8595, %v8596
  %v8598 = vsel %vm2900, %v8335, 0.0
  %v8599 = vadd.f32 %v8597, %v8598
  %v8600 = vsel %vm2900, %v8336, 0.0
  %v8601 = vadd.f32 %v8599, %v8600
  %v8602 = vsel %vm2900, %v8337, 0.0
  %v8603 = vadd.f32 %v8601, %v8602
  %v8604 = vsel %vm2900, %v8338, 0.0
  %v8605 = vadd.f32 %v8603, %v8604
  %v8606 = vsel %vm2900, %v8339, 0.0
  %v8607 = vadd.f32 %v8605, %v8606
  %v8608 = vsel %vm2900, %v8340, 0.0
  %v8609 = vadd.f32 %v8607, %v8608
  %v8610 = vsel %vm2900, %v8341, 0.0
  %v8611 = vadd.f32 %v8609, %v8610
  %v8612 = vsel %vm2900, %v8342, 0.0
  %v8613 = vadd.f32 %v8611, %v8612
  %v8614 = vsel %vm2967, %v8343, 0.0
  %v8615 = vadd.f32 %v8613, %v8614
  %v8616 = vrot.slane %v8615, 4
  %v8617 = vadd.f32 %v8615, %v8616
  %v8618 = vrot.slane %v8617, 2
  %v8619 = vadd.f32 %v8617, %v8618
  %v8620 = vrot.slane %v8619, 1
  %v8621 = vadd.f32 %v8619, %v8620
  %v8622 = vmul.f32 %v8482, %v6292
  %v8623 = vmul.f32 %v8621, %v6292
  %v8624 = vld [vmem:[%s5] sm:$0x1]
  %v8625 = vmul.f32 %v8622, %v8624
  %v8626 = vmul.f32 %v8623, %v8624
  %v8627 = vsel %vm2967, %v8625, 0.0
  %8628 = vadd.xlane.f32.xlu0 %v8627
  %v8629 = vpop.xlane.xlu0 %8628
  %v8630 = vsel %vm2967, %v8626, 0.0
  %8631 = vadd.xlane.f32.xlu0 %v8630
  %v8632 = vpop.xlane.xlu0 %8631
  %v8633 = vld [vmem:[#allocation3] sm:$0x1]
  %v8635 = vlaneseq
  %v8636 = vshrl.u32 %v8635, 7
  %v8637 = vsub.s32 0, %v8636
  %v8638 = vrot.slane %v8633, %v8637
  %8640 = vbcast.lane.b32.xlu0 %v8638, 256
  %v8641 = vpop.permute.xlu0 %8640
  %v8643 = vadd.f32 %v8629, %v8641
  %v8644 = vadd.f32 %v8632, %v8641
  %v8645 = vxor.u32 %v8643, 2147483648
  %v8646 = vxor.u32 %v8644, 2147483648
  %v8647 = vmul.f32 %v8645, 1.442695
  %v8648 = vpow.pop %v8647
  %v8649 = vmul.f32 %v8646, 1.442695
  %v8650 = vpow.pop %v8649
  %v8651 = vadd.f32 %v8648, 1.0
  %v8652 = vadd.f32 %v8650, 1.0
  %v8653 = vrcp.pop %v8651
  %v8654 = vmul.f32 1.0, %v8653
  %v8655 = vrcp.pop %v8652
  %v8656 = vmul.f32 1.0, %v8655
  %v8657 = vld [vmem:[%s7] sm:$0x1]
  %8659 = vset.pattern.permute.xlu0 0
  %8660 = vperm.xlu0 %8659, %v8654
  %v8661 = vpop.permute.xlu0 %8660
  %8664 = vset.pattern.permute.xlu0 0
  %8665 = vperm.xlu0 %8664, %v8656
  %v8666 = vpop.permute.xlu0 %8665
  %v8668 = vmul.f32 %v8661, %v8657
  %v8669 = vmul.f32 %v8666, %v8657
  %v8670 = vadd.f32 %v8668, 0.0
  %v8671 = vadd.f32 %v8669, 0.0
  %v8672 = vld [vmem:[%s8] sm:$0x1]
  %v8674 = vlaneseq
  %v8675 = vshrl.u32 %v8674, 7
  %v8676 = vsub.s32 0, %v8675
  %v8677 = vrot.slane %v8672, %v8676
  %v8679 = vadd.f32 %v8670, %v8677
  %v8680 = vadd.f32 %v8671, %v8677
  %v8681 = vmax.f32 %v8679, 0.0
  %v8682 = vmax.f32 %v8680, 0.0
  %v8683 = vlaneseq
  %v8684 = vshrl.u32 %v8683, 7
  %v8685 = vsub.s32 0, %v8684
  %v8686 = vrot.slane %v8681, %v8685
  %v8687 = vlaneseq
  %v8688 = vshrl.u32 %v8687, 7
  %v8689 = vsub.s32 0, %v8688
  %v8690 = vrot.slane %v8682, %v8689
  %v8691 = vmul.f32 %v8210, %v8686
  %v8692 = vmul.f32 %v8211, %v8686
  %v8693 = vmul.f32 %v8212, %v8686
  %v8694 = vmul.f32 %v8213, %v8686
  %v8695 = vmul.f32 %v8214, %v8686
  %v8696 = vmul.f32 %v8215, %v8686
  %v8697 = vmul.f32 %v8216, %v8686
  %v8698 = vmul.f32 %v8217, %v8686
  %v8699 = vmul.f32 %v8218, %v8686
  %v8700 = vmul.f32 %v8219, %v8686
  %v8701 = vmul.f32 %v8220, %v8686
  %v8702 = vmul.f32 %v8221, %v8686
  %v8703 = vmul.f32 %v8222, %v8686
  %v8704 = vmul.f32 %v8223, %v8686
  %v8705 = vmul.f32 %v8224, %v8686
  %v8706 = vmul.f32 %v8225, %v8686
  %v8707 = vmul.f32 %v8226, %v8686
  %v8708 = vmul.f32 %v8227, %v8686
  %v8709 = vmul.f32 %v8228, %v8686
  %v8710 = vmul.f32 %v8229, %v8686
  %v8711 = vmul.f32 %v8230, %v8686
  %v8712 = vmul.f32 %v8231, %v8686
  %v8713 = vmul.f32 %v8232, %v8686
  %v8714 = vmul.f32 %v8233, %v8686
  %v8715 = vmul.f32 %v8234, %v8686
  %v8716 = vmul.f32 %v8235, %v8686
  %v8717 = vmul.f32 %v8236, %v8686
  %v8718 = vmul.f32 %v8237, %v8686
  %v8719 = vmul.f32 %v8238, %v8686
  %v8720 = vmul.f32 %v8239, %v8686
  %v8721 = vmul.f32 %v8240, %v8686
  %v8722 = vmul.f32 %v8241, %v8686
  %v8723 = vmul.f32 %v8242, %v8686
  %v8724 = vmul.f32 %v8243, %v8686
  %v8725 = vmul.f32 %v8244, %v8686
  %v8726 = vmul.f32 %v8245, %v8686
  %v8727 = vmul.f32 %v8246, %v8686
  %v8728 = vmul.f32 %v8247, %v8686
  %v8729 = vmul.f32 %v8248, %v8686
  %v8730 = vmul.f32 %v8249, %v8686
  %v8731 = vmul.f32 %v8250, %v8686
  %v8732 = vmul.f32 %v8251, %v8686
  %v8733 = vmul.f32 %v8252, %v8686
  %v8734 = vmul.f32 %v8253, %v8686
  %v8735 = vmul.f32 %v8254, %v8686
  %v8736 = vmul.f32 %v8255, %v8686
  %v8737 = vmul.f32 %v8256, %v8686
  %v8738 = vmul.f32 %v8257, %v8686
  %v8739 = vmul.f32 %v8258, %v8686
  %v8740 = vmul.f32 %v8259, %v8686
  %v8741 = vmul.f32 %v8260, %v8686
  %v8742 = vmul.f32 %v8261, %v8686
  %v8743 = vmul.f32 %v8262, %v8686
  %v8744 = vmul.f32 %v8263, %v8686
  %v8745 = vmul.f32 %v8264, %v8686
  %v8746 = vmul.f32 %v8265, %v8686
  %v8747 = vmul.f32 %v8266, %v8686
  %v8748 = vmul.f32 %v8267, %v8686
  %v8749 = vmul.f32 %v8268, %v8686
  %v8750 = vmul.f32 %v8269, %v8686
  %v8751 = vmul.f32 %v8270, %v8686
  %v8752 = vmul.f32 %v8271, %v8686
  %v8753 = vmul.f32 %v8272, %v8686
  %v8754 = vmul.f32 %v8273, %v8686
  %v8755 = vmul.f32 %v8274, %v8686
  %v8756 = vmul.f32 %v8275, %v8686
  %v8757 = vmul.f32 %v8276, %v8686
  %v8758 = vmul.f32 %v8277, %v8690
  %v8759 = vmul.f32 %v8278, %v8690
  %v8760 = vmul.f32 %v8279, %v8690
  %v8761 = vmul.f32 %v8280, %v8690
  %v8762 = vmul.f32 %v8281, %v8690
  %v8763 = vmul.f32 %v8282, %v8690
  %v8764 = vmul.f32 %v8283, %v8690
  %v8765 = vmul.f32 %v8284, %v8690
  %v8766 = vmul.f32 %v8285, %v8690
  %v8767 = vmul.f32 %v8286, %v8690
  %v8768 = vmul.f32 %v8287, %v8690
  %v8769 = vmul.f32 %v8288, %v8690
  %v8770 = vmul.f32 %v8289, %v8690
  %v8771 = vmul.f32 %v8290, %v8690
  %v8772 = vmul.f32 %v8291, %v8690
  %v8773 = vmul.f32 %v8292, %v8690
  %v8774 = vmul.f32 %v8293, %v8690
  %v8775 = vmul.f32 %v8294, %v8690
  %v8776 = vmul.f32 %v8295, %v8690
  %v8777 = vmul.f32 %v8296, %v8690
  %v8778 = vmul.f32 %v8297, %v8690
  %v8779 = vmul.f32 %v8298, %v8690
  %v8780 = vmul.f32 %v8299, %v8690
  %v8781 = vmul.f32 %v8300, %v8690
  %v8782 = vmul.f32 %v8301, %v8690
  %v8783 = vmul.f32 %v8302, %v8690
  %v8784 = vmul.f32 %v8303, %v8690
  %v8785 = vmul.f32 %v8304, %v8690
  %v8786 = vmul.f32 %v8305, %v8690
  %v8787 = vmul.f32 %v8306, %v8690
  %v8788 = vmul.f32 %v8307, %v8690
  %v8789 = vmul.f32 %v8308, %v8690
  %v8790 = vmul.f32 %v8309, %v8690
  %v8791 = vmul.f32 %v8310, %v8690
  %v8792 = vmul.f32 %v8311, %v8690
  %v8793 = vmul.f32 %v8312, %v8690
  %v8794 = vmul.f32 %v8313, %v8690
  %v8795 = vmul.f32 %v8314, %v8690
  %v8796 = vmul.f32 %v8315, %v8690
  %v8797 = vmul.f32 %v8316, %v8690
  %v8798 = vmul.f32 %v8317, %v8690
  %v8799 = vmul.f32 %v8318, %v8690
  %v8800 = vmul.f32 %v8319, %v8690
  %v8801 = vmul.f32 %v8320, %v8690
  %v8802 = vmul.f32 %v8321, %v8690
  %v8803 = vmul.f32 %v8322, %v8690
  %v8804 = vmul.f32 %v8323, %v8690
  %v8805 = vmul.f32 %v8324, %v8690
  %v8806 = vmul.f32 %v8325, %v8690
  %v8807 = vmul.f32 %v8326, %v8690
  %v8808 = vmul.f32 %v8327, %v8690
  %v8809 = vmul.f32 %v8328, %v8690
  %v8810 = vmul.f32 %v8329, %v8690
  %v8811 = vmul.f32 %v8330, %v8690
  %v8812 = vmul.f32 %v8331, %v8690
  %v8813 = vmul.f32 %v8332, %v8690
  %v8814 = vmul.f32 %v8333, %v8690
  %v8815 = vmul.f32 %v8334, %v8690
  %v8816 = vmul.f32 %v8335, %v8690
  %v8817 = vmul.f32 %v8336, %v8690
  %v8818 = vmul.f32 %v8337, %v8690
  %v8819 = vmul.f32 %v8338, %v8690
  %v8820 = vmul.f32 %v8339, %v8690
  %v8821 = vmul.f32 %v8340, %v8690
  %v8822 = vmul.f32 %v8341, %v8690
  %v8823 = vmul.f32 %v8342, %v8690
  %v8824 = vmul.f32 %v8343, %v8690
  %8825 = vst.msk [vmem:[%s9] sm:$0xff] %vm2900, %v8691
  %8826 = vst.msk [vmem:[%s9 + $0x8] sm:$0xff] %vm2900, %v8692
  %8827 = vst.msk [vmem:[%s9 + $0x10] sm:$0xff] %vm2900, %v8693
  %8828 = vst.msk [vmem:[%s9 + $0x18] sm:$0xff] %vm2900, %v8694
  %8829 = vst.msk [vmem:[%s9 + $0x20] sm:$0xff] %vm2900, %v8695
  %8830 = vst.msk [vmem:[%s9 + $0x28] sm:$0xff] %vm2900, %v8696
  %8831 = vst.msk [vmem:[%s9 + $0x30] sm:$0xff] %vm2900, %v8697
  %8832 = vst.msk [vmem:[%s9 + $0x38] sm:$0xff] %vm2900, %v8698
  %8833 = vst.msk [vmem:[%s9 + $0x40] sm:$0xff] %vm2900, %v8699
  %8834 = vst.msk [vmem:[%s9 + $0x48] sm:$0xff] %vm2900, %v8700
  %8835 = vst.msk [vmem:[%s9 + $0x50] sm:$0xff] %vm2900, %v8701
  %8836 = vst.msk [vmem:[%s9 + $0x58] sm:$0xff] %vm2900, %v8702
  %8837 = vst.msk [vmem:[%s9 + $0x60] sm:$0xff] %vm2900, %v8703
  %8838 = vst.msk [vmem:[%s9 + $0x68] sm:$0xff] %vm2900, %v8704
  %8839 = vst.msk [vmem:[%s9 + $0x70] sm:$0xff] %vm2900, %v8705
  %8840 = vst.msk [vmem:[%s9 + $0x78] sm:$0xff] %vm2900, %v8706
  %8841 = vst.msk [vmem:[%s9 + $0x80] sm:$0xff] %vm2900, %v8707
  %8842 = vst.msk [vmem:[%s9 + $0x88] sm:$0xff] %vm2900, %v8708
  %8843 = vst.msk [vmem:[%s9 + $0x90] sm:$0xff] %vm2900, %v8709
  %8844 = vst.msk [vmem:[%s9 + $0x98] sm:$0xff] %vm2900, %v8710
  %8845 = vst.msk [vmem:[%s9 + $0xa0] sm:$0xff] %vm2900, %v8711
  %8846 = vst.msk [vmem:[%s9 + $0xa8] sm:$0xff] %vm2900, %v8712
  %8847 = vst.msk [vmem:[%s9 + $0xb0] sm:$0xff] %vm2900, %v8713
  %8848 = vst.msk [vmem:[%s9 + $0xb8] sm:$0xff] %vm2900, %v8714
  %8849 = vst.msk [vmem:[%s9 + $0xc0] sm:$0xff] %vm2900, %v8715
  %8850 = vst.msk [vmem:[%s9 + $0xc8] sm:$0xff] %vm2900, %v8716
  %8851 = vst.msk [vmem:[%s9 + $0xd0] sm:$0xff] %vm2900, %v8717
  %8852 = vst.msk [vmem:[%s9 + $0xd8] sm:$0xff] %vm2900, %v8718
  %8853 = vst.msk [vmem:[%s9 + $0xe0] sm:$0xff] %vm2900, %v8719
  %8854 = vst.msk [vmem:[%s9 + $0xe8] sm:$0xff] %vm2900, %v8720
  %8855 = vst.msk [vmem:[%s9 + $0xf0] sm:$0xff] %vm2900, %v8721
  %8856 = vst.msk [vmem:[%s9 + $0xf8] sm:$0xff] %vm2900, %v8722
  %8857 = vst.msk [vmem:[%s9 + $0x100] sm:$0xff] %vm2900, %v8723
  %8858 = vst.msk [vmem:[%s9 + $0x108] sm:$0xff] %vm2900, %v8724
  %8859 = vst.msk [vmem:[%s9 + $0x110] sm:$0xff] %vm2900, %v8725
  %8860 = vst.msk [vmem:[%s9 + $0x118] sm:$0xff] %vm2900, %v8726
  %8861 = vst.msk [vmem:[%s9 + $0x120] sm:$0xff] %vm2900, %v8727
  %8862 = vst.msk [vmem:[%s9 + $0x128] sm:$0xff] %vm2900, %v8728
  %8863 = vst.msk [vmem:[%s9 + $0x130] sm:$0xff] %vm2900, %v8729
  %8864 = vst.msk [vmem:[%s9 + $0x138] sm:$0xff] %vm2900, %v8730
  %8865 = vst.msk [vmem:[%s9 + $0x140] sm:$0xff] %vm2900, %v8731
  %8866 = vst.msk [vmem:[%s9 + $0x148] sm:$0xff] %vm2900, %v8732
  %8867 = vst.msk [vmem:[%s9 + $0x150] sm:$0xff] %vm2900, %v8733
  %8868 = vst.msk [vmem:[%s9 + $0x158] sm:$0xff] %vm2900, %v8734
  %8869 = vst.msk [vmem:[%s9 + $0x160] sm:$0xff] %vm2900, %v8735
  %8870 = vst.msk [vmem:[%s9 + $0x168] sm:$0xff] %vm2900, %v8736
  %8871 = vst.msk [vmem:[%s9 + $0x170] sm:$0xff] %vm2900, %v8737
  %8872 = vst.msk [vmem:[%s9 + $0x178] sm:$0xff] %vm2900, %v8738
  %8873 = vst.msk [vmem:[%s9 + $0x180] sm:$0xff] %vm2900, %v8739
  %8874 = vst.msk [vmem:[%s9 + $0x188] sm:$0xff] %vm2900, %v8740
  %8875 = vst.msk [vmem:[%s9 + $0x190] sm:$0xff] %vm2900, %v8741
  %8876 = vst.msk [vmem:[%s9 + $0x198] sm:$0xff] %vm2900, %v8742
  %8877 = vst.msk [vmem:[%s9 + $0x1a0] sm:$0xff] %vm2900, %v8743
  %8878 = vst.msk [vmem:[%s9 + $0x1a8] sm:$0xff] %vm2900, %v8744
  %8879 = vst.msk [vmem:[%s9 + $0x1b0] sm:$0xff] %vm2900, %v8745
  %8880 = vst.msk [vmem:[%s9 + $0x1b8] sm:$0xff] %vm2900, %v8746
  %8881 = vst.msk [vmem:[%s9 + $0x1c0] sm:$0xff] %vm2900, %v8747
  %8882 = vst.msk [vmem:[%s9 + $0x1c8] sm:$0xff] %vm2900, %v8748
  %8883 = vst.msk [vmem:[%s9 + $0x1d0] sm:$0xff] %vm2900, %v8749
  %8884 = vst.msk [vmem:[%s9 + $0x1d8] sm:$0xff] %vm2900, %v8750
  %8885 = vst.msk [vmem:[%s9 + $0x1e0] sm:$0xff] %vm2900, %v8751
  %8886 = vst.msk [vmem:[%s9 + $0x1e8] sm:$0xff] %vm2900, %v8752
  %8887 = vst.msk [vmem:[%s9 + $0x1f0] sm:$0xff] %vm2900, %v8753
  %8888 = vst.msk [vmem:[%s9 + $0x1f8] sm:$0xff] %vm2900, %v8754
  %8889 = vst.msk [vmem:[%s9 + $0x200] sm:$0xff] %vm2900, %v8755
  %8890 = vst.msk [vmem:[%s9 + $0x208] sm:$0xff] %vm2900, %v8756
  %8891 = vst.msk [vmem:[%s9 + $0x210] sm:$0x1] %vm2967, %v8757
  %8892 = vst.msk [vmem:[%s9 + $0x218] sm:$0xff] %vm2900, %v8758
  %8893 = vst.msk [vmem:[%s9 + $0x220] sm:$0xff] %vm2900, %v8759
  %8894 = vst.msk [vmem:[%s9 + $0x228] sm:$0xff] %vm2900, %v8760
  %8895 = vst.msk [vmem:[%s9 + $0x230] sm:$0xff] %vm2900, %v8761
  %8896 = vst.msk [vmem:[%s9 + $0x238] sm:$0xff] %vm2900, %v8762
  %8897 = vst.msk [vmem:[%s9 + $0x240] sm:$0xff] %vm2900, %v8763
  %8898 = vst.msk [vmem:[%s9 + $0x248] sm:$0xff] %vm2900, %v8764
  %8899 = vst.msk [vmem:[%s9 + $0x250] sm:$0xff] %vm2900, %v8765
  %8900 = vst.msk [vmem:[%s9 + $0x258] sm:$0xff] %vm2900, %v8766
  %8901 = vst.msk [vmem:[%s9 + $0x260] sm:$0xff] %vm2900, %v8767
  %8902 = vst.msk [vmem:[%s9 + $0x268] sm:$0xff] %vm2900, %v8768
  %8903 = vst.msk [vmem:[%s9 + $0x270] sm:$0xff] %vm2900, %v8769
  %8904 = vst.msk [vmem:[%s9 + $0x278] sm:$0xff] %vm2900, %v8770
  %8905 = vst.msk [vmem:[%s9 + $0x280] sm:$0xff] %vm2900, %v8771
  %8906 = vst.msk [vmem:[%s9 + $0x288] sm:$0xff] %vm2900, %v8772
  %8907 = vst.msk [vmem:[%s9 + $0x290] sm:$0xff] %vm2900, %v8773
  %8908 = vst.msk [vmem:[%s9 + $0x298] sm:$0xff] %vm2900, %v8774
  %8909 = vst.msk [vmem:[%s9 + $0x2a0] sm:$0xff] %vm2900, %v8775
  %8910 = vst.msk [vmem:[%s9 + $0x2a8] sm:$0xff] %vm2900, %v8776
  %8911 = vst.msk [vmem:[%s9 + $0x2b0] sm:$0xff] %vm2900, %v8777
  %8912 = vst.msk [vmem:[%s9 + $0x2b8] sm:$0xff] %vm2900, %v8778
  %8913 = vst.msk [vmem:[%s9 + $0x2c0] sm:$0xff] %vm2900, %v8779
  %8914 = vst.msk [vmem:[%s9 + $0x2c8] sm:$0xff] %vm2900, %v8780
  %8915 = vst.msk [vmem:[%s9 + $0x2d0] sm:$0xff] %vm2900, %v8781
  %8916 = vst.msk [vmem:[%s9 + $0x2d8] sm:$0xff] %vm2900, %v8782
  %8917 = vst.msk [vmem:[%s9 + $0x2e0] sm:$0xff] %vm2900, %v8783
  %8918 = vst.msk [vmem:[%s9 + $0x2e8] sm:$0xff] %vm2900, %v8784
  %8919 = vst.msk [vmem:[%s9 + $0x2f0] sm:$0xff] %vm2900, %v8785
  %8920 = vst.msk [vmem:[%s9 + $0x2f8] sm:$0xff] %vm2900, %v8786
  %8921 = vst.msk [vmem:[%s9 + $0x300] sm:$0xff] %vm2900, %v8787
  %8922 = vst.msk [vmem:[%s9 + $0x308] sm:$0xff] %vm2900, %v8788
  %8923 = vst.msk [vmem:[%s9 + $0x310] sm:$0xff] %vm2900, %v8789
  %8924 = vst.msk [vmem:[%s9 + $0x318] sm:$0xff] %vm2900, %v8790
  %8925 = vst.msk [vmem:[%s9 + $0x320] sm:$0xff] %vm2900, %v8791
  %8926 = vst.msk [vmem:[%s9 + $0x328] sm:$0xff] %vm2900, %v8792
  %8927 = vst.msk [vmem:[%s9 + $0x330] sm:$0xff] %vm2900, %v8793
  %8928 = vst.msk [vmem:[%s9 + $0x338] sm:$0xff] %vm2900, %v8794
  %8929 = vst.msk [vmem:[%s9 + $0x340] sm:$0xff] %vm2900, %v8795
  %8930 = vst.msk [vmem:[%s9 + $0x348] sm:$0xff] %vm2900, %v8796
  %8931 = vst.msk [vmem:[%s9 + $0x350] sm:$0xff] %vm2900, %v8797
  %8932 = vst.msk [vmem:[%s9 + $0x358] sm:$0xff] %vm2900, %v8798
  %8933 = vst.msk [vmem:[%s9 + $0x360] sm:$0xff] %vm2900, %v8799
  %8934 = vst.msk [vmem:[%s9 + $0x368] sm:$0xff] %vm2900, %v8800
  %8935 = vst.msk [vmem:[%s9 + $0x370] sm:$0xff] %vm2900, %v8801
  %8936 = vst.msk [vmem:[%s9 + $0x378] sm:$0xff] %vm2900, %v8802
  %8937 = vst.msk [vmem:[%s9 + $0x380] sm:$0xff] %vm2900, %v8803
  %8938 = vst.msk [vmem:[%s9 + $0x388] sm:$0xff] %vm2900, %v8804
  %8939 = vst.msk [vmem:[%s9 + $0x390] sm:$0xff] %vm2900, %v8805
  %8940 = vst.msk [vmem:[%s9 + $0x398] sm:$0xff] %vm2900, %v8806
  %8941 = vst.msk [vmem:[%s9 + $0x3a0] sm:$0xff] %vm2900, %v8807
  %8942 = vst.msk [vmem:[%s9 + $0x3a8] sm:$0xff] %vm2900, %v8808
  %8943 = vst.msk [vmem:[%s9 + $0x3b0] sm:$0xff] %vm2900, %v8809
  %8944 = vst.msk [vmem:[%s9 + $0x3b8] sm:$0xff] %vm2900, %v8810
  %8945 = vst.msk [vmem:[%s9 + $0x3c0] sm:$0xff] %vm2900, %v8811
  %8946 = vst.msk [vmem:[%s9 + $0x3c8] sm:$0xff] %vm2900, %v8812
  %8947 = vst.msk [vmem:[%s9 + $0x3d0] sm:$0xff] %vm2900, %v8813
  %8948 = vst.msk [vmem:[%s9 + $0x3d8] sm:$0xff] %vm2900, %v8814
  %8949 = vst.msk [vmem:[%s9 + $0x3e0] sm:$0xff] %vm2900, %v8815
  %8950 = vst.msk [vmem:[%s9 + $0x3e8] sm:$0xff] %vm2900, %v8816
  %8951 = vst.msk [vmem:[%s9 + $0x3f0] sm:$0xff] %vm2900, %v8817
  %8952 = vst.msk [vmem:[%s9 + $0x3f8] sm:$0xff] %vm2900, %v8818
  %8953 = vst.msk [vmem:[%s9 + $0x400] sm:$0xff] %vm2900, %v8819
  %8954 = vst.msk [vmem:[%s9 + $0x408] sm:$0xff] %vm2900, %v8820
  %8955 = vst.msk [vmem:[%s9 + $0x410] sm:$0xff] %vm2900, %v8821
  %8956 = vst.msk [vmem:[%s9 + $0x418] sm:$0xff] %vm2900, %v8822
  %8957 = vst.msk [vmem:[%s9 + $0x420] sm:$0xff] %vm2900, %v8823
  %8958 = vst.msk [vmem:[%s9 + $0x428] sm:$0x1] %vm2967, %v8824
  // Predicated region
  $region38: #{branch_forward.3} parent=0 // pred_check
    _
  $region39: #{branch_forward.3} parent=0 // pred_check_branch
    %8960 = sbr.rel (0) target = $region41
  $region40: #{branch_forward.3} parent=0 // pred_region
    _
  $region41: #{branch_forward.3} parent=0 // pred_fallthru
    _
  // Predicated region
  $region42: #{branch_forward.3} parent=0 // pred_check
    _
  $region43: #{branch_forward.3} parent=0 // pred_check_branch
    %8962 = sbr.rel (0) target = $region45
  $region44: #{branch_forward.3} parent=0 // pred_region
    _
  $region45: #{branch_forward.3} parent=0 // pred_fallthru
    _

// kernel: branch_forward.4
$region0: #{branch_forward.4}
  #allocation0 [shape = 'u32[]', space=smem, size = 0x4, offset = 0x4, fixed_abs, tag = 'smem constant byte address 0x4 - core index']
  #allocation1 [shape = 'u32[144,128]{1,0:T(1,128)}', space=vmem, size = 0x12000, scoped, tag = 'internal scratch']
  #allocation2 [shape = 'f32[2,25,40]{2,1,0:T(8,128)}', space=vmem, size = 0x8000, scoped, tag = 'scratch operand']
  %s0 = inlined_call_operand.vmem [shape: bf16[4,2,25,216], index: 0, kind: input, shape index: {}]
  %s1 = inlined_call_operand.vmem [shape: bf16[216,40], index: 1, kind: input, shape index: {}]
  %s2 = inlined_call_operand.vmem [shape: f32[1,40], index: 2, kind: input, shape index: {}]
  %s3 = inlined_call_operand.vmem [shape: f32[1,40], index: 3, kind: input, shape index: {}]
  %s4 = inlined_call_operand.vmem [shape: f32[1,40], index: 4, kind: input, shape index: {}]
  %s5 = inlined_call_operand.vmem [shape: f32[2,25,40], index: 5, kind: output, shape index: {}]
  %s6 = sld [smem:[#allocation0]]
  $region30: #{branch_forward.4} parent=0
    _
  %s8 = ssub.s32 1, %s6
  %s9 = scalar_select 0, %s8, %s6
  // Predicated region
  $region2: #{branch_forward.4} parent=0 // pred_check
    _
  $region3: #{branch_forward.4} parent=0 // pred_check_branch
    %11 = sbr.rel (0) target = $region5
  $region4: #{branch_forward.4} parent=0 // pred_region
    _
  $region5: #{branch_forward.4} parent=0 // pred_fallthru
    _
  // Predicated region
  $region6: #{branch_forward.4} parent=0 // pred_check
    _
  $region7: #{branch_forward.4} parent=0 // pred_check_branch
    %13 = sbr.rel (0) target = $region9
  $region8: #{branch_forward.4} parent=0 // pred_region
    _
  $region9: #{branch_forward.4} parent=0 // pred_fallthru
    _
  // Predicated region
  $region10: #{branch_forward.4} parent=0 // pred_check
    _
  $region11: #{branch_forward.4} parent=0 // pred_check_branch
    %15 = sbr.rel (0) target = $region13
  $region12: #{branch_forward.4} parent=0 // pred_region
    _
  $region13: #{branch_forward.4} parent=0 // pred_fallthru
    _
  // Predicated region
  $region14: #{branch_forward.4} parent=0 // pred_check
    _
  $region15: #{branch_forward.4} parent=0 // pred_check_branch
    %17 = sbr.rel (0) target = $region17
  $region16: #{branch_forward.4} parent=0 // pred_region
    _
  $region17: #{branch_forward.4} parent=0 // pred_fallthru
    _
  // Predicated region
  $region18: #{branch_forward.4} parent=0 // pred_check
    _
  $region19: #{branch_forward.4} parent=0 // pred_check_branch
    %19 = sbr.rel (0) target = $region21
  $region20: #{branch_forward.4} parent=0 // pred_region
    _
  $region21: #{branch_forward.4} parent=0 // pred_fallthru
    _
  %v21 = vld [vmem:[%s1] sm:$0xf]
  %v22 = vld [vmem:[%s1 + $0x4] sm:$0xf]
  %v23 = vld [vmem:[%s1 + $0x8] sm:$0xf]
  %v24 = vld [vmem:[%s1 + $0xc] sm:$0xf]
  %v25 = vld [vmem:[%s1 + $0x10] sm:$0xf]
  %v26 = vld [vmem:[%s1 + $0x14] sm:$0xf]
  %v27 = vld [vmem:[%s1 + $0x18] sm:$0xf]
  %v28 = vld [vmem:[%s1 + $0x1c] sm:$0xf]
  %v29 = vld [vmem:[%s1 + $0x20] sm:$0xf]
  %v30 = vld [vmem:[%s1 + $0x24] sm:$0xf]
  %v31 = vld [vmem:[%s1 + $0x28] sm:$0xf]
  %v32 = vld [vmem:[%s1 + $0x2c] sm:$0xf]
  %v33 = vld [vmem:[%s1 + $0x30] sm:$0xf]
  %v34 = vld [vmem:[%s1 + $0x34] sm:$0xf]
  %v35 = vld [vmem:[%s1 + $0x38] sm:$0xf]
  %v36 = vld [vmem:[%s1 + $0x3c] sm:$0xf]
  %v37 = vld [vmem:[%s1 + $0x40] sm:$0xf]
  %v38 = vld [vmem:[%s1 + $0x44] sm:$0xf]
  %v39 = vld [vmem:[%s1 + $0x48] sm:$0xf]
  %v40 = vld [vmem:[%s1 + $0x4c] sm:$0xf]
  %v41 = vld [vmem:[%s1 + $0x50] sm:$0xf]
  %v42 = vld [vmem:[%s1 + $0x54] sm:$0xf]
  %v43 = vld [vmem:[%s1 + $0x58] sm:$0xf]
  %v44 = vld [vmem:[%s1 + $0x5c] sm:$0xf]
  %v45 = vld [vmem:[%s1 + $0x60] sm:$0xf]
  %v46 = vld [vmem:[%s1 + $0x64] sm:$0xf]
  %v47 = vld [vmem:[%s1 + $0x68] sm:$0xf]
  %v48 = vld [vmem:[%s0] sm:$0xff]
  %v49 = vld [vmem:[%s0 + $0x8] sm:$0xff]
  %v50 = vld [vmem:[%s0 + $0x10] sm:$0xff]
  %v51 = vld [vmem:[%s0 + $0x18] sm:$0x11]
  %v56 = vunpack.c.l.b16 %v48
  %v57 = vunpack.c.h.b16 %v48
  %v58 = vunpack.c.l.b16 %v49
  %v59 = vunpack.c.h.b16 %v49
  %v60 = vunpack.c.l.b16 %v50
  %v61 = vunpack.c.h.b16 %v50
  %v62 = vunpack.c.l.b16 %v51
  %v63 = vunpack.c.h.b16 %v51
  %v64 = vpack.c.b16 %v58, %v56
  %v65 = vpack.c.b16 %v59, %v57
  %v66 = vpack.c.b16 %v62, %v60
  %v67 = vpack.c.b16 %v63, %v61
  %v97 = vunpack.c.l.b16 %v21
  %v98 = vunpack.c.l.b16 %v22
  %v99 = vunpack.c.l.b16 %v23
  %v100 = vunpack.c.l.b16 %v24
  %v101 = vunpack.c.l.b16 %v25
  %v102 = vunpack.c.l.b16 %v26
  %v103 = vunpack.c.l.b16 %v27
  %v104 = vunpack.c.l.b16 %v28
  %v105 = vunpack.c.l.b16 %v29
  %v106 = vunpack.c.l.b16 %v30
  %v107 = vunpack.c.l.b16 %v31
  %v108 = vunpack.c.l.b16 %v32
  %v109 = vunpack.c.l.b16 %v33
  %v110 = vunpack.c.l.b16 %v34
  %v111 = vunpack.c.l.b16 %v35
  %v112 = vunpack.c.l.b16 %v36
  %v113 = vunpack.c.l.b16 %v37
  %v114 = vunpack.c.l.b16 %v38
  %v115 = vunpack.c.l.b16 %v39
  %v116 = vunpack.c.l.b16 %v40
  %v117 = vunpack.c.l.b16 %v41
  %v118 = vunpack.c.l.b16 %v42
  %v119 = vunpack.c.l.b16 %v43
  %v120 = vunpack.c.l.b16 %v44
  %v121 = vunpack.c.l.b16 %v45
  %v122 = vunpack.c.l.b16 %v46
  %v123 = vunpack.c.l.b16 %v47
  %v124 = vpack.c.b16 %v98, %v97
  %v125 = vpack.c.b16 %v100, %v99
  %v126 = vpack.c.b16 %v102, %v101
  %v127 = vpack.c.b16 %v104, %v103
  %v128 = vpack.c.b16 %v106, %v105
  %v129 = vpack.c.b16 %v108, %v107
  %v130 = vpack.c.b16 %v110, %v109
  %v131 = vpack.c.b16 %v112, %v111
  %v132 = vpack.c.b16 %v114, %v113
  %v133 = vpack.c.b16 %v116, %v115
  %v134 = vpack.c.b16 %v118, %v117
  %v135 = vpack.c.b16 %v120, %v119
  %v136 = vpack.c.b16 %v122, %v121
  %v137 = vpack.c.b16 %v123, %v123
  %vm151 = vcmask 719872
  %v153 = vsel %vm151, %v65, 0
  %v156 = vsel %vm151, %v67, 0
  %vm158 = vcmask 1043456
  %v160 = vsel %vm158, %v137, 0
  %162 = vmatprep.subr.bf16.mxu0 0
  %163 = vmatpush1.bf16.msra.mxu0 %v124
  %164 = vmatprep.subr.bf16.mxu0 0
  %165 = vmatpush1.bf16.msra.mxu0 %v125
  %166 = vmatprep.subr.bf16.mxu0 0
  %167 = vmatpush1.bf16.msra.mxu0 %v126
  %168 = vmatprep.subr.bf16.mxu0 0
  %169 = vmatpush1.bf16.msra.mxu0 %v127
  %170 = vmatprep.subr.bf16.mxu0 0
  %171 = vmatpush1.bf16.msra.mxu0 %v128
  %172 = vmatprep.subr.bf16.mxu0 0
  %173 = vmatpush1.bf16.msra.mxu0 %v129
  %174 = vmatprep.subr.bf16.mxu0 0
  %175 = vmatpush1.bf16.msra.mxu0 %v130
  %176 = vmatprep.subr.bf16.mxu0 0
  %177 = vmatpush1.bf16.msra.mxu0 %v131
  %178 = vmatprep.subr.bf16.mxu0 0
  %179 = vmatpush1.bf16.msra.mxu0 %v132
  %180 = vmatprep.subr.bf16.mxu0 0
  %181 = vmatpush1.bf16.msra.mxu0 %v133
  %182 = vmatprep.subr.bf16.mxu0 0
  %183 = vmatpush1.bf16.msra.mxu0 %v134
  %184 = vmatprep.subr.bf16.mxu0 0
  %185 = vmatpush1.bf16.msra.mxu0 %v135
  %186 = vmatprep.subr.bf16.mxu0 0
  %187 = vmatpush1.bf16.msra.mxu0 %v136
  %188 = vmatprep.subr.bf16.mxu0 0
  %189 = vmatpush1.bf16.msra.mxu0 %v160
  %190 = vmatprep.subr.bf16.mxu0 0
  %191 = vmatpush1.bf16.msra.mxu0 0
  %192 = vmatprep.subr.bf16.mxu0 0
  %193 = vmatpush1.bf16.msra.mxu0 0
  %194 = vmatprep.mubr.bf16.mxu0 %v153
  %195 = vmatmul.mubr.bf16.gmra.mrb[0].mxu0 %v64
  %v196 = vpop.f32.mrb[0].mxu0
  %v197 = vadd.f32 0.0, %v196
  %v198 = vpop.f32.mrb[0].mxu0
  %v199 = vpop.f32.mrb[0].mxu0
  %v200 = vadd.f32 0.0, %v199
  %v201 = vpop.f32.mrb[0].mxu0
  %202 = vmatprep.mubr.bf16.mxu0 %v156
  %203 = vmatmul.mubr.bf16.gmra.mrb[0].mxu0 %v66
  %v204 = vpop.f32.mrb[0].mxu0
  %v205 = vadd.f32 0.0, %v204
  %v206 = vpop.f32.mrb[0].mxu0
  %v207 = vpop.f32.mrb[0].mxu0
  %v208 = vadd.f32 0.0, %v207
  %v209 = vpop.f32.mrb[0].mxu0
  %210 = vdwg.mxu0
  %s211 = scalar_lea.vmem %s0, 64
  %v212 = vld [vmem:[%s211] sm:$0xff]
  %v213 = vld [vmem:[%s211 + $0x8] sm:$0xff]
  %v214 = vld [vmem:[%s211 + $0x10] sm:$0xff]
  %v215 = vld [vmem:[%s211 + $0x18] sm:$0x11]
  %v220 = vunpack.c.l.b16 %v212
  %v221 = vunpack.c.h.b16 %v212
  %v222 = vunpack.c.l.b16 %v213
  %v223 = vunpack.c.h.b16 %v213
  %v224 = vunpack.c.l.b16 %v214
  %v225 = vunpack.c.h.b16 %v214
  %v226 = vunpack.c.l.b16 %v215
  %v227 = vunpack.c.h.b16 %v215
  %v228 = vpack.c.b16 %v222, %v220
  %v229 = vpack.c.b16 %v223, %v221
  %v230 = vpack.c.b16 %v226, %v224
  %v231 = vpack.c.b16 %v227, %v225
  %v235 = vsel %vm151, %v229, 0
  %v238 = vsel %vm151, %v231, 0
  %240 = vmatprep.subr.bf16.mxu0 0
  %241 = vmatpush1.bf16.msra.mxu0 %v124
  %242 = vmatprep.subr.bf16.mxu0 0
  %243 = vmatpush1.bf16.msra.mxu0 %v125
  %244 = vmatprep.subr.bf16.mxu0 0
  %245 = vmatpush1.bf16.msra.mxu0 %v126
  %246 = vmatprep.subr.bf16.mxu0 0
  %247 = vmatpush1.bf16.msra.mxu0 %v127
  %248 = vmatprep.subr.bf16.mxu0 0
  %249 = vmatpush1.bf16.msra.mxu0 %v128
  %250 = vmatprep.subr.bf16.mxu0 0
  %251 = vmatpush1.bf16.msra.mxu0 %v129
  %252 = vmatprep.subr.bf16.mxu0 0
  %253 = vmatpush1.bf16.msra.mxu0 %v130
  %254 = vmatprep.subr.bf16.mxu0 0
  %255 = vmatpush1.bf16.msra.mxu0 %v131
  %256 = vmatprep.subr.bf16.mxu0 0
  %257 = vmatpush1.bf16.msra.mxu0 %v132
  %258 = vmatprep.subr.bf16.mxu0 0
  %259 = vmatpush1.bf16.msra.mxu0 %v133
  %260 = vmatprep.subr.bf16.mxu0 0
  %261 = vmatpush1.bf16.msra.mxu0 %v134
  %262 = vmatprep.subr.bf16.mxu0 0
  %263 = vmatpush1.bf16.msra.mxu0 %v135
  %264 = vmatprep.subr.bf16.mxu0 0
  %265 = vmatpush1.bf16.msra.mxu0 %v136
  %266 = vmatprep.subr.bf16.mxu0 0
  %267 = vmatpush1.bf16.msra.mxu0 %v160
  %268 = vmatprep.subr.bf16.mxu0 0
  %269 = vmatpush1.bf16.msra.mxu0 0
  %270 = vmatprep.subr.bf16.mxu0 0
  %271 = vmatpush1.bf16.msra.mxu0 0
  %272 = vmatprep.mubr.bf16.mxu0 %v235
  %273 = vmatmul.mubr.bf16.gmra.mrb[0].mxu0 %v228
  %v274 = vpop.f32.mrb[0].mxu0
  %v275 = vadd.f32 0.0, %v274
  %v276 = vpop.f32.mrb[0].mxu0
  %v277 = vpop.f32.mrb[0].mxu0
  %v278 = vadd.f32 0.0, %v277
  %v279 = vpop.f32.mrb[0].mxu0
  %280 = vmatprep.mubr.bf16.mxu0 %v238
  %281 = vmatmul.mubr.bf16.gmra.mrb[0].mxu0 %v230
  %v282 = vpop.f32.mrb[0].mxu0
  %v283 = vadd.f32 0.0, %v282
  %v284 = vpop.f32.mrb[0].mxu0
  %v285 = vpop.f32.mrb[0].mxu0
  %v286 = vadd.f32 0.0, %v285
  %v287 = vpop.f32.mrb[0].mxu0
  %288 = vdwg.mxu0
  %v289 = vmax.f32 %v197, %v275
  %v290 = vmax.f32 %v200, %v278
  %v291 = vmax.f32 %v205, %v283
  %v292 = vmax.f32 %v208, %v286
  %s293 = scalar_lea.vmem %s0, 128
  %v294 = vld [vmem:[%s293] sm:$0xff]
  %v295 = vld [vmem:[%s293 + $0x8] sm:$0xff]
  %v296 = vld [vmem:[%s293 + $0x10] sm:$0xff]
  %v297 = vld [vmem:[%s293 + $0x18] sm:$0x11]
  %v302 = vunpack.c.l.b16 %v294
  %v303 = vunpack.c.h.b16 %v294
  %v304 = vunpack.c.l.b16 %v295
  %v305 = vunpack.c.h.b16 %v295
  %v306 = vunpack.c.l.b16 %v296
  %v307 = vunpack.c.h.b16 %v296
  %v308 = vunpack.c.l.b16 %v297
  %v309 = vunpack.c.h.b16 %v297
  %v310 = vpack.c.b16 %v304, %v302
  %v311 = vpack.c.b16 %v305, %v303
  %v312 = vpack.c.b16 %v308, %v306
  %v313 = vpack.c.b16 %v309, %v307
  %v317 = vsel %vm151, %v311, 0
  %v320 = vsel %vm151, %v313, 0
  %322 = vmatprep.subr.bf16.mxu0 0
  %323 = vmatpush1.bf16.msra.mxu0 %v124
  %324 = vmatprep.subr.bf16.mxu0 0
  %325 = vmatpush1.bf16.msra.mxu0 %v125
  %326 = vmatprep.subr.bf16.mxu0 0
  %327 = vmatpush1.bf16.msra.mxu0 %v126
  %328 = vmatprep.subr.bf16.mxu0 0
  %329 = vmatpush1.bf16.msra.mxu0 %v127
  %330 = vmatprep.subr.bf16.mxu0 0
  %331 = vmatpush1.bf16.msra.mxu0 %v128
  %332 = vmatprep.subr.bf16.mxu0 0
  %333 = vmatpush1.bf16.msra.mxu0 %v129
  %334 = vmatprep.subr.bf16.mxu0 0
  %335 = vmatpush1.bf16.msra.mxu0 %v130
  %336 = vmatprep.subr.bf16.mxu0 0
  %337 = vmatpush1.bf16.msra.mxu0 %v131
  %338 = vmatprep.subr.bf16.mxu0 0
  %339 = vmatpush1.bf16.msra.mxu0 %v132
  %340 = vmatprep.subr.bf16.mxu0 0
  %341 = vmatpush1.bf16.msra.mxu0 %v133
  %342 = vmatprep.subr.bf16.mxu0 0
  %343 = vmatpush1.bf16.msra.mxu0 %v134
  %344 = vmatprep.subr.bf16.mxu0 0
  %345 = vmatpush1.bf16.msra.mxu0 %v135
  %346 = vmatprep.subr.bf16.mxu0 0
  %347 = vmatpush1.bf16.msra.mxu0 %v136
  %348 = vmatprep.subr.bf16.mxu0 0
  %349 = vmatpush1.bf16.msra.mxu0 %v160
  %350 = vmatprep.subr.bf16.mxu0 0
  %351 = vmatpush1.bf16.msra.mxu0 0
  %352 = vmatprep.subr.bf16.mxu0 0
  %353 = vmatpush1.bf16.msra.mxu0 0
  %354 = vmatprep.mubr.bf16.mxu0 %v317
  %355 = vmatmul.mubr.bf16.gmra.mrb[0].mxu0 %v310
  %v356 = vpop.f32.mrb[0].mxu0
  %v357 = vadd.f32 0.0, %v356
  %v358 = vpop.f32.mrb[0].mxu0
  %v359 = vpop.f32.mrb[0].mxu0
  %v360 = vadd.f32 0.0, %v359
  %v361 = vpop.f32.mrb[0].mxu0
  %362 = vmatprep.mubr.bf16.mxu0 %v320
  %363 = vmatmul.mubr.bf16.gmra.mrb[0].mxu0 %v312
  %v364 = vpop.f32.mrb[0].mxu0
  %v365 = vadd.f32 0.0, %v364
  %v366 = vpop.f32.mrb[0].mxu0
  %v367 = vpop.f32.mrb[0].mxu0
  %v368 = vadd.f32 0.0, %v367
  %v369 = vpop.f32.mrb[0].mxu0
  %370 = vdwg.mxu0
  %v371 = vmax.f32 %v289, %v357
  %v372 = vmax.f32 %v290, %v360
  %v373 = vmax.f32 %v291, %v365
  %v374 = vmax.f32 %v292, %v368
  %s375 = scalar_lea.vmem %s0, 192
  %v376 = vld [vmem:[%s375] sm:$0xff]
  %v377 = vld [vmem:[%s375 + $0x8] sm:$0xff]
  %v378 = vld [vmem:[%s375 + $0x10] sm:$0xff]
  %v379 = vld [vmem:[%s375 + $0x18] sm:$0x11]
  %v384 = vunpack.c.l.b16 %v376
  %v385 = vunpack.c.h.b16 %v376
  %v386 = vunpack.c.l.b16 %v377
  %v387 = vunpack.c.h.b16 %v377
  %v388 = vunpack.c.l.b16 %v378
  %v389 = vunpack.c.h.b16 %v378
  %v390 = vunpack.c.l.b16 %v379
  %v391 = vunpack.c.h.b16 %v379
  %v392 = vpack.c.b16 %v386, %v384
  %v393 = vpack.c.b16 %v387, %v385
  %v394 = vpack.c.b16 %v390, %v388
  %v395 = vpack.c.b16 %v391, %v389
  %v399 = vsel %vm151, %v393, 0
  %v402 = vsel %vm151, %v395, 0
  %404 = vmatprep.subr.bf16.mxu0 0
  %405 = vmatpush1.bf16.msra.mxu0 %v124
  %406 = vmatprep.subr.bf16.mxu0 0
  %407 = vmatpush1.bf16.msra.mxu0 %v125
  %408 = vmatprep.subr.bf16.mxu0 0
  %409 = vmatpush1.bf16.msra.mxu0 %v126
  %410 = vmatprep.subr.bf16.mxu0 0
  %411 = vmatpush1.bf16.msra.mxu0 %v127
  %412 = vmatprep.subr.bf16.mxu0 0
  %413 = vmatpush1.bf16.msra.mxu0 %v128
  %414 = vmatprep.subr.bf16.mxu0 0
  %415 = vmatpush1.bf16.msra.mxu0 %v129
  %416 = vmatprep.subr.bf16.mxu0 0
  %417 = vmatpush1.bf16.msra.mxu0 %v130
  %418 = vmatprep.subr.bf16.mxu0 0
  %419 = vmatpush1.bf16.msra.mxu0 %v131
  %420 = vmatprep.subr.bf16.mxu0 0
  %421 = vmatpush1.bf16.msra.mxu0 %v132
  %422 = vmatprep.subr.bf16.mxu0 0
  %423 = vmatpush1.bf16.msra.mxu0 %v133
  %424 = vmatprep.subr.bf16.mxu0 0
  %425 = vmatpush1.bf16.msra.mxu0 %v134
  %426 = vmatprep.subr.bf16.mxu0 0
  %427 = vmatpush1.bf16.msra.mxu0 %v135
  %428 = vmatprep.subr.bf16.mxu0 0
  %429 = vmatpush1.bf16.msra.mxu0 %v136
  %430 = vmatprep.subr.bf16.mxu0 0
  %431 = vmatpush1.bf16.msra.mxu0 %v160
  %432 = vmatprep.subr.bf16.mxu0 0
  %433 = vmatpush1.bf16.msra.mxu0 0
  %434 = vmatprep.subr.bf16.mxu0 0
  %435 = vmatpush1.bf16.msra.mxu0 0
  %436 = vmatprep.mubr.bf16.mxu0 %v399
  %437 = vmatmul.mubr.bf16.gmra.mrb[0].mxu0 %v392
  %v438 = vpop.f32.mrb[0].mxu0
  %v439 = vadd.f32 0.0, %v438
  %v440 = vpop.f32.mrb[0].mxu0
  %v441 = vpop.f32.mrb[0].mxu0
  %v442 = vadd.f32 0.0, %v441
  %v443 = vpop.f32.mrb[0].mxu0
  %444 = vmatprep.mubr.bf16.mxu0 %v402
  %445 = vmatmul.mubr.bf16.gmra.mrb[0].mxu0 %v394
  %v446 = vpop.f32.mrb[0].mxu0
  %v447 = vadd.f32 0.0, %v446
  %v448 = vpop.f32.mrb[0].mxu0
  %v449 = vpop.f32.mrb[0].mxu0
  %v450 = vadd.f32 0.0, %v449
  %v451 = vpop.f32.mrb[0].mxu0
  %452 = vdwg.mxu0
  %v453 = vmax.f32 %v371, %v439
  %v454 = vmax.f32 %v372, %v442
  %v455 = vmax.f32 %v373, %v447
  %v456 = vmax.f32 %v374, %v450
  %v457 = vld [vmem:[%s2] sm:$0x1]
  %v459 = vlaneseq
  %v460 = vshrl.u32 %v459, 7
  %v461 = vsub.s32 0, %v460
  %v462 = vrot.slane %v457, %v461
  %v464 = vadd.f32 %v453, %v462
  %v465 = vadd.f32 %v454, %v462
  %v466 = vadd.f32 %v455, %v462
  %v467 = vadd.f32 %v456, %v462
  %vm468 = vcmask 326656
  %469 = vst.msk [vmem:[#allocation2] sm:$0xff] %vm468, %v464
  %470 = vst.msk [vmem:[#allocation2 + $0x8] sm:$0xff] %vm468, %v465
  %471 = vst.msk [vmem:[#allocation2 + $0x10] sm:$0xff] %vm468, %v466
  %vm472 = vcmask 319488
  %473 = vst.msk [vmem:[#allocation2 + $0x18] sm:$0x1] %vm472, %v467
  %s474 = scalar_lea.vmem %s0, 32
  %v475 = vld [vmem:[%s474] sm:$0xff]
  %v476 = vld [vmem:[%s474 + $0x8] sm:$0xff]
  %v477 = vld [vmem:[%s474 + $0x10] sm:$0xff]
  %v478 = vld [vmem:[%s474 + $0x18] sm:$0x11]
  %v483 = vunpack.c.l.b16 %v475
  %v484 = vunpack.c.h.b16 %v475
  %v485 = vunpack.c.l.b16 %v476
  %v486 = vunpack.c.h.b16 %v476
  %v487 = vunpack.c.l.b16 %v477
  %v488 = vunpack.c.h.b16 %v477
  %v489 = vunpack.c.l.b16 %v478
  %v490 = vunpack.c.h.b16 %v478
  %v491 = vpack.c.b16 %v485, %v483
  %v492 = vpack.c.b16 %v486, %v484
  %v493 = vpack.c.b16 %v489, %v487
  %v494 = vpack.c.b16 %v490, %v488
  %v498 = vsel %vm151, %v492, 0
  %v501 = vsel %vm151, %v494, 0
  %503 = vmatprep.subr.bf16.mxu0 0
  %504 = vmatpush1.bf16.msra.mxu0 %v124
  %505 = vmatprep.subr.bf16.mxu0 0
  %506 = vmatpush1.bf16.msra.mxu0 %v125
  %507 = vmatprep.subr.bf16.mxu0 0
  %508 = vmatpush1.bf16.msra.mxu0 %v126
  %509 = vmatprep.subr.bf16.mxu0 0
  %510 = vmatpush1.bf16.msra.mxu0 %v127
  %511 = vmatprep.subr.bf16.mxu0 0
  %512 = vmatpush1.bf16.msra.mxu0 %v128
  %513 = vmatprep.subr.bf16.mxu0 0
  %514 = vmatpush1.bf16.msra.mxu0 %v129
  %515 = vmatprep.subr.bf16.mxu0 0
  %516 = vmatpush1.bf16.msra.mxu0 %v130
  %517 = vmatprep.subr.bf16.mxu0 0
  %518 = vmatpush1.bf16.msra.mxu0 %v131
  %519 = vmatprep.subr.bf16.mxu0 0
  %520 = vmatpush1.bf16.msra.mxu0 %v132
  %521 = vmatprep.subr.bf16.mxu0 0
  %522 = vmatpush1.bf16.msra.mxu0 %v133
  %523 = vmatprep.subr.bf16.mxu0 0
  %524 = vmatpush1.bf16.msra.mxu0 %v134
  %525 = vmatprep.subr.bf16.mxu0 0
  %526 = vmatpush1.bf16.msra.mxu0 %v135
  %527 = vmatprep.subr.bf16.mxu0 0
  %528 = vmatpush1.bf16.msra.mxu0 %v136
  %529 = vmatprep.subr.bf16.mxu0 0
  %530 = vmatpush1.bf16.msra.mxu0 %v160
  %531 = vmatprep.subr.bf16.mxu0 0
  %532 = vmatpush1.bf16.msra.mxu0 0
  %533 = vmatprep.subr.bf16.mxu0 0
  %534 = vmatpush1.bf16.msra.mxu0 0
  %535 = vmatprep.mubr.bf16.mxu0 %v498
  %536 = vmatmul.mubr.bf16.gmra.mrb[0].mxu0 %v491
  %v537 = vpop.f32.mrb[0].mxu0
  %v538 = vadd.f32 0.0, %v537
  %v539 = vpop.f32.mrb[0].mxu0
  %v540 = vpop.f32.mrb[0].mxu0
  %v541 = vadd.f32 0.0, %v540
  %v542 = vpop.f32.mrb[0].mxu0
  %543 = vmatprep.mubr.bf16.mxu0 %v501
  %544 = vmatmul.mubr.bf16.gmra.mrb[0].mxu0 %v493
  %v545 = vpop.f32.mrb[0].mxu0
  %v546 = vadd.f32 0.0, %v545
  %v547 = vpop.f32.mrb[0].mxu0
  %v548 = vpop.f32.mrb[0].mxu0
  %v549 = vadd.f32 0.0, %v548
  %v550 = vpop.f32.mrb[0].mxu0
  %551 = vdwg.mxu0
  %s552 = scalar_lea.vmem %s0, 96
  %v553 = vld [vmem:[%s552] sm:$0xff]
  %v554 = vld [vmem:[%s552 + $0x8] sm:$0xff]
  %v555 = vld [vmem:[%s552 + $0x10] sm:$0xff]
  %v556 = vld [vmem:[%s552 + $0x18] sm:$0x11]
  %v561 = vunpack.c.l.b16 %v553
  %v562 = vunpack.c.h.b16 %v553
  %v563 = vunpack.c.l.b16 %v554
  %v564 = vunpack.c.h.b16 %v554
  %v565 = vunpack.c.l.b16 %v555
  %v566 = vunpack.c.h.b16 %v555
  %v567 = vunpack.c.l.b16 %v556
  %v568 = vunpack.c.h.b16 %v556
  %v569 = vpack.c.b16 %v563, %v561
  %v570 = vpack.c.b16 %v564, %v562
  %v571 = vpack.c.b16 %v567, %v565
  %v572 = vpack.c.b16 %v568, %v566
  %v576 = vsel %vm151, %v570, 0
  %v579 = vsel %vm151, %v572, 0
  %581 = vmatprep.subr.bf16.mxu0 0
  %582 = vmatpush1.bf16.msra.mxu0 %v124
  %583 = vmatprep.subr.bf16.mxu0 0
  %584 = vmatpush1.bf16.msra.mxu0 %v125
  %585 = vmatprep.subr.bf16.mxu0 0
  %586 = vmatpush1.bf16.msra.mxu0 %v126
  %587 = vmatprep.subr.bf16.mxu0 0
  %588 = vmatpush1.bf16.msra.mxu0 %v127
  %589 = vmatprep.subr.bf16.mxu0 0
  %590 = vmatpush1.bf16.msra.mxu0 %v128
  %591 = vmatprep.subr.bf16.mxu0 0
  %592 = vmatpush1.bf16.msra.mxu0 %v129
  %593 = vmatprep.subr.bf16.mxu0 0
  %594 = vmatpush1.bf16.msra.mxu0 %v130
  %595 = vmatprep.subr.bf16.mxu0 0
  %596 = vmatpush1.bf16.msra.mxu0 %v131
  %597 = vmatprep.subr.bf16.mxu0 0
  %598 = vmatpush1.bf16.msra.mxu0 %v132
  %599 = vmatprep.subr.bf16.mxu0 0
  %600 = vmatpush1.bf16.msra.mxu0 %v133
  %601 = vmatprep.subr.bf16.mxu0 0
  %602 = vmatpush1.bf16.msra.mxu0 %v134
  %603 = vmatprep.subr.bf16.mxu0 0
  %604 = vmatpush1.bf16.msra.mxu0 %v135
  %605 = vmatprep.subr.bf16.mxu0 0
  %606 = vmatpush1.bf16.msra.mxu0 %v136
  %607 = vmatprep.subr.bf16.mxu0 0
  %608 = vmatpush1.bf16.msra.mxu0 %v160
  %609 = vmatprep.subr.bf16.mxu0 0
  %610 = vmatpush1.bf16.msra.mxu0 0
  %611 = vmatprep.subr.bf16.mxu0 0
  %612 = vmatpush1.bf16.msra.mxu0 0
  %613 = vmatprep.mubr.bf16.mxu0 %v576
  %614 = vmatmul.mubr.bf16.gmra.mrb[0].mxu0 %v569
  %v615 = vpop.f32.mrb[0].mxu0
  %v616 = vadd.f32 0.0, %v615
  %v617 = vpop.f32.mrb[0].mxu0
  %v618 = vpop.f32.mrb[0].mxu0
  %v619 = vadd.f32 0.0, %v618
  %v620 = vpop.f32.mrb[0].mxu0
  %621 = vmatprep.mubr.bf16.mxu0 %v579
  %622 = vmatmul.mubr.bf16.gmra.mrb[0].mxu0 %v571
  %v623 = vpop.f32.mrb[0].mxu0
  %v624 = vadd.f32 0.0, %v623
  %v625 = vpop.f32.mrb[0].mxu0
  %v626 = vpop.f32.mrb[0].mxu0
  %v627 = vadd.f32 0.0, %v626
  %v628 = vpop.f32.mrb[0].mxu0
  %629 = vdwg.mxu0
  %v630 = vmax.f32 %v538, %v616
  %v631 = vmax.f32 %v541, %v619
  %v632 = vmax.f32 %v546, %v624
  %v633 = vmax.f32 %v549, %v627
  %s634 = scalar_lea.vmem %s0, 160
  %v635 = vld [vmem:[%s634] sm:$0xff]
  %v636 = vld [vmem:[%s634 + $0x8] sm:$0xff]
  %v637 = vld [vmem:[%s634 + $0x10] sm:$0xff]
  %v638 = vld [vmem:[%s634 + $0x18] sm:$0x11]
  %v643 = vunpack.c.l.b16 %v635
  %v644 = vunpack.c.h.b16 %v635
  %v645 = vunpack.c.l.b16 %v636
  %v646 = vunpack.c.h.b16 %v636
  %v647 = vunpack.c.l.b16 %v637
  %v648 = vunpack.c.h.b16 %v637
  %v649 = vunpack.c.l.b16 %v638
  %v650 = vunpack.c.h.b16 %v638
  %v651 = vpack.c.b16 %v645, %v643
  %v652 = vpack.c.b16 %v646, %v644
  %v653 = vpack.c.b16 %v649, %v647
  %v654 = vpack.c.b16 %v650, %v648
  %v658 = vsel %vm151, %v652, 0
  %v661 = vsel %vm151, %v654, 0
  %663 = vmatprep.subr.bf16.mxu0 0
  %664 = vmatpush1.bf16.msra.mxu0 %v124
  %665 = vmatprep.subr.bf16.mxu0 0
  %666 = vmatpush1.bf16.msra.mxu0 %v125
  %667 = vmatprep.subr.bf16.mxu0 0
  %668 = vmatpush1.bf16.msra.mxu0 %v126
  %669 = vmatprep.subr.bf16.mxu0 0
  %670 = vmatpush1.bf16.msra.mxu0 %v127
  %671 = vmatprep.subr.bf16.mxu0 0
  %672 = vmatpush1.bf16.msra.mxu0 %v128
  %673 = vmatprep.subr.bf16.mxu0 0
  %674 = vmatpush1.bf16.msra.mxu0 %v129
  %675 = vmatprep.subr.bf16.mxu0 0
  %676 = vmatpush1.bf16.msra.mxu0 %v130
  %677 = vmatprep.subr.bf16.mxu0 0
  %678 = vmatpush1.bf16.msra.mxu0 %v131
  %679 = vmatprep.subr.bf16.mxu0 0
  %680 = vmatpush1.bf16.msra.mxu0 %v132
  %681 = vmatprep.subr.bf16.mxu0 0
  %682 = vmatpush1.bf16.msra.mxu0 %v133
  %683 = vmatprep.subr.bf16.mxu0 0
  %684 = vmatpush1.bf16.msra.mxu0 %v134
  %685 = vmatprep.subr.bf16.mxu0 0
  %686 = vmatpush1.bf16.msra.mxu0 %v135
  %687 = vmatprep.subr.bf16.mxu0 0
  %688 = vmatpush1.bf16.msra.mxu0 %v136
  %689 = vmatprep.subr.bf16.mxu0 0
  %690 = vmatpush1.bf16.msra.mxu0 %v160
  %691 = vmatprep.subr.bf16.mxu0 0
  %692 = vmatpush1.bf16.msra.mxu0 0
  %693 = vmatprep.subr.bf16.mxu0 0
  %694 = vmatpush1.bf16.msra.mxu0 0
  %695 = vmatprep.mubr.bf16.mxu0 %v658
  %696 = vmatmul.mubr.bf16.gmra.mrb[0].mxu0 %v651
  %v697 = vpop.f32.mrb[0].mxu0
  %v698 = vadd.f32 0.0, %v697
  %v699 = vpop.f32.mrb[0].mxu0
  %v700 = vpop.f32.mrb[0].mxu0
  %v701 = vadd.f32 0.0, %v700
  %v702 = vpop.f32.mrb[0].mxu0
  %703 = vmatprep.mubr.bf16.mxu0 %v661
  %704 = vmatmul.mubr.bf16.gmra.mrb[0].mxu0 %v653
  %v705 = vpop.f32.mrb[0].mxu0
  %v706 = vadd.f32 0.0, %v705
  %v707 = vpop.f32.mrb[0].mxu0
  %v708 = vpop.f32.mrb[0].mxu0
  %v709 = vadd.f32 0.0, %v708
  %v710 = vpop.f32.mrb[0].mxu0
  %711 = vdwg.mxu0
  %v712 = vmax.f32 %v630, %v698
  %v713 = vmax.f32 %v631, %v701
  %v714 = vmax.f32 %v632, %v706
  %v715 = vmax.f32 %v633, %v709
  %s716 = scalar_lea.vmem %s0, 224
  %v717 = vld [vmem:[%s716] sm:$0xff]
  %v718 = vld [vmem:[%s716 + $0x8] sm:$0xff]
  %v719 = vld [vmem:[%s716 + $0x10] sm:$0xff]
  %v720 = vld [vmem:[%s716 + $0x18] sm:$0x11]
  %v725 = vunpack.c.l.b16 %v717
  %v726 = vunpack.c.h.b16 %v717
  %v727 = vunpack.c.l.b16 %v718
  %v728 = vunpack.c.h.b16 %v718
  %v729 = vunpack.c.l.b16 %v719
  %v730 = vunpack.c.h.b16 %v719
  %v731 = vunpack.c.l.b16 %v720
  %v732 = vunpack.c.h.b16 %v720
  %v733 = vpack.c.b16 %v727, %v725
  %v734 = vpack.c.b16 %v728, %v726
  %v735 = vpack.c.b16 %v731, %v729
  %v736 = vpack.c.b16 %v732, %v730
  %v740 = vsel %vm151, %v734, 0
  %v743 = vsel %vm151, %v736, 0
  %745 = vmatprep.subr.bf16.mxu0 0
  %746 = vmatpush1.bf16.msra.mxu0 %v124
  %747 = vmatprep.subr.bf16.mxu0 0
  %748 = vmatpush1.bf16.msra.mxu0 %v125
  %749 = vmatprep.subr.bf16.mxu0 0
  %750 = vmatpush1.bf16.msra.mxu0 %v126
  %751 = vmatprep.subr.bf16.mxu0 0
  %752 = vmatpush1.bf16.msra.mxu0 %v127
  %753 = vmatprep.subr.bf16.mxu0 0
  %754 = vmatpush1.bf16.msra.mxu0 %v128
  %755 = vmatprep.subr.bf16.mxu0 0
  %756 = vmatpush1.bf16.msra.mxu0 %v129
  %757 = vmatprep.subr.bf16.mxu0 0
  %758 = vmatpush1.bf16.msra.mxu0 %v130
  %759 = vmatprep.subr.bf16.mxu0 0
  %760 = vmatpush1.bf16.msra.mxu0 %v131
  %761 = vmatprep.subr.bf16.mxu0 0
  %762 = vmatpush1.bf16.msra.mxu0 %v132
  %763 = vmatprep.subr.bf16.mxu0 0
  %764 = vmatpush1.bf16.msra.mxu0 %v133
  %765 = vmatprep.subr.bf16.mxu0 0
  %766 = vmatpush1.bf16.msra.mxu0 %v134
  %767 = vmatprep.subr.bf16.mxu0 0
  %768 = vmatpush1.bf16.msra.mxu0 %v135
  %769 = vmatprep.subr.bf16.mxu0 0
  %770 = vmatpush1.bf16.msra.mxu0 %v136
  %771 = vmatprep.subr.bf16.mxu0 0
  %772 = vmatpush1.bf16.msra.mxu0 %v160
  %773 = vmatprep.subr.bf16.mxu0 0
  %774 = vmatpush1.bf16.msra.mxu0 0
  %775 = vmatprep.subr.bf16.mxu0 0
  %776 = vmatpush1.bf16.msra.mxu0 0
  %777 = vmatprep.mubr.bf16.mxu0 %v740
  %778 = vmatmul.mubr.bf16.gmra.mrb[0].mxu0 %v733
  %v779 = vpop.f32.mrb[0].mxu0
  %v780 = vadd.f32 0.0, %v779
  %v781 = vpop.f32.mrb[0].mxu0
  %v782 = vpop.f32.mrb[0].mxu0
  %v783 = vadd.f32 0.0, %v782
  %v784 = vpop.f32.mrb[0].mxu0
  %785 = vmatprep.mubr.bf16.mxu0 %v743
  %786 = vmatmul.mubr.bf16.gmra.mrb[0].mxu0 %v735
  %v787 = vpop.f32.mrb[0].mxu0
  %v788 = vadd.f32 0.0, %v787
  %v789 = vpop.f32.mrb[0].mxu0
  %v790 = vpop.f32.mrb[0].mxu0
  %v791 = vadd.f32 0.0, %v790
  %v792 = vpop.f32.mrb[0].mxu0
  %793 = vdwg.mxu0
  %v794 = vmax.f32 %v712, %v780
  %v795 = vmax.f32 %v713, %v783
  %v796 = vmax.f32 %v714, %v788
  %v797 = vmax.f32 %v715, %v791
  %v798 = vld [vmem:[%s2] sm:$0x1]
  %v800 = vlaneseq
  %v801 = vshrl.u32 %v800, 7
  %v802 = vsub.s32 0, %v801
  %v803 = vrot.slane %v798, %v802
  %v805 = vadd.f32 %v794, %v803
  %v806 = vadd.f32 %v795, %v803
  %v807 = vadd.f32 %v796, %v803
  %v808 = vadd.f32 %v797, %v803
  %s809 = scalar_lea.vmem [#allocation2], 32
  %810 = vst.msk [vmem:[%s809] sm:$0xff] %vm468, %v805
  %811 = vst.msk [vmem:[%s809 + $0x8] sm:$0xff] %vm468, %v806
  %812 = vst.msk [vmem:[%s809 + $0x10] sm:$0xff] %vm468, %v807
  %813 = vst.msk [vmem:[%s809 + $0x18] sm:$0x1] %vm472, %v808
  %v814 = vld [vmem:[#allocation2] sm:$0xff]
  %v815 = vld [vmem:[#allocation2 + $0x8] sm:$0xff]
  %v816 = vld [vmem:[#allocation2 + $0x10] sm:$0xff]
  %v817 = vld [vmem:[#allocation2 + $0x18] sm:$0x1]
  %v818 = vld [vmem:[#allocation2 + $0x20] sm:$0xff]
  %v819 = vld [vmem:[#allocation2 + $0x28] sm:$0xff]
  %v820 = vld [vmem:[#allocation2 + $0x30] sm:$0xff]
  %v821 = vld [vmem:[#allocation2 + $0x38] sm:$0x1]
  %v822 = vsel %vm468, %v814, 0.0
  %v823 = vsel %vm468, %v815, 0.0
  %v824 = vadd.f32 %v822, %v823
  %v825 = vsel %vm468, %v816, 0.0
  %v826 = vadd.f32 %v824, %v825
  %v827 = vsel %vm472, %v817, 0.0
  %v828 = vadd.f32 %v826, %v827
  %v829 = vrot.slane %v828, 4
  %v830 = vadd.f32 %v828, %v829
  %v831 = vrot.slane %v830, 2
  %v832 = vadd.f32 %v830, %v831
  %v833 = vrot.slane %v832, 1
  %v834 = vadd.f32 %v832, %v833
  %v835 = vsel %vm468, %v818, 0.0
  %v836 = vsel %vm468, %v819, 0.0
  %v837 = vadd.f32 %v835, %v836
  %v838 = vsel %vm468, %v820, 0.0
  %v839 = vadd.f32 %v837, %v838
  %v840 = vsel %vm472, %v821, 0.0
  %v841 = vadd.f32 %v839, %v840
  %v842 = vrot.slane %v841, 4
  %v843 = vadd.f32 %v841, %v842
  %v844 = vrot.slane %v843, 2
  %v845 = vadd.f32 %v843, %v844
  %v846 = vrot.slane %v845, 1
  %v847 = vadd.f32 %v845, %v846
  %v848 = vrcp.pop 25.0
  %v849 = vmul.f32 %v834, %v848
  %v850 = vmul.f32 %v847, %v848
  %v851 = vsel %vm468, %v849, 0.0
  %v852 = vsel %vm468, %v850, 0.0
  %v853 = vadd.f32 %v851, %v852
  %v854 = vrcp.pop 2.0
  %v855 = vmul.f32 %v853, %v854
  %v856 = vmul.f32 %v814, %v814
  %v857 = vmul.f32 %v815, %v815
  %v858 = vmul.f32 %v816, %v816
  %v859 = vmul.f32 %v817, %v817
  %v860 = vmul.f32 %v818, %v818
  %v861 = vmul.f32 %v819, %v819
  %v862 = vmul.f32 %v820, %v820
  %v863 = vmul.f32 %v821, %v821
  %v864 = vsel %vm468, %v856, 0.0
  %v865 = vsel %vm468, %v857, 0.0
  %v866 = vadd.f32 %v864, %v865
  %v867 = vsel %vm468, %v858, 0.0
  %v868 = vadd.f32 %v866, %v867
  %v869 = vsel %vm472, %v859, 0.0
  %v870 = vadd.f32 %v868, %v869
  %v871 = vrot.slane %v870, 4
  %v872 = vadd.f32 %v870, %v871
  %v873 = vrot.slane %v872, 2
  %v874 = vadd.f32 %v872, %v873
  %v875 = vrot.slane %v874, 1
  %v876 = vadd.f32 %v874, %v875
  %v877 = vsel %vm468, %v860, 0.0
  %v878 = vsel %vm468, %v861, 0.0
  %v879 = vadd.f32 %v877, %v878
  %v880 = vsel %vm468, %v862, 0.0
  %v881 = vadd.f32 %v879, %v880
  %v882 = vsel %vm472, %v863, 0.0
  %v883 = vadd.f32 %v881, %v882
  %v884 = vrot.slane %v883, 4
  %v885 = vadd.f32 %v883, %v884
  %v886 = vrot.slane %v885, 2
  %v887 = vadd.f32 %v885, %v886
  %v888 = vrot.slane %v887, 1
  %v889 = vadd.f32 %v887, %v888
  %v890 = vmul.f32 %v876, %v848
  %v891 = vmul.f32 %v889, %v848
  %v892 = vsel %vm468, %v890, 0.0
  %v893 = vsel %vm468, %v891, 0.0
  %v894 = vadd.f32 %v892, %v893
  %v895 = vmul.f32 %v894, %v854
  %v896 = vmul.f32 %v855, %v855
  %v897 = vsub.f32 %v895, %v896
  %v898 = vsub.f32 %v814, %v855
  %v899 = vsub.f32 %v815, %v855
  %v900 = vsub.f32 %v816, %v855
  %v901 = vsub.f32 %v817, %v855
  %v902 = vsub.f32 %v818, %v855
  %v903 = vsub.f32 %v819, %v855
  %v904 = vsub.f32 %v820, %v855
  %v905 = vsub.f32 %v821, %v855
  %v906 = vadd.f32 %v897, 1e-05
  %v907 = vrsqrt.pop %v906
  %v908 = vmul.f32 %v898, %v907
  %v909 = vmul.f32 %v899, %v907
  %v910 = vmul.f32 %v900, %v907
  %v911 = vmul.f32 %v901, %v907
  %v912 = vmul.f32 %v902, %v907
  %v913 = vmul.f32 %v903, %v907
  %v914 = vmul.f32 %v904, %v907
  %v915 = vmul.f32 %v905, %v907
  %v916 = vld [vmem:[%s3] sm:$0x1]
  %v918 = vlaneseq
  %v919 = vshrl.u32 %v918, 7
  %v920 = vsub.s32 0, %v919
  %v921 = vrot.slane %v916, %v920
  %v923 = vmul.f32 %v908, %v921
  %v924 = vmul.f32 %v909, %v921
  %v925 = vmul.f32 %v910, %v921
  %v926 = vmul.f32 %v911, %v921
  %v927 = vmul.f32 %v912, %v921
  %v928 = vmul.f32 %v913, %v921
  %v929 = vmul.f32 %v914, %v921
  %v930 = vmul.f32 %v915, %v921
  %v931 = vld [vmem:[%s4] sm:$0x1]
  %v933 = vlaneseq
  %v934 = vshrl.u32 %v933, 7
  %v935 = vsub.s32 0, %v934
  %v936 = vrot.slane %v931, %v935
  %v938 = vadd.f32 %v923, %v936
  %v939 = vadd.f32 %v924, %v936
  %v940 = vadd.f32 %v925, %v936
  %v941 = vadd.f32 %v926, %v936
  %v942 = vadd.f32 %v927, %v936
  %v943 = vadd.f32 %v928, %v936
  %v944 = vadd.f32 %v929, %v936
  %v945 = vadd.f32 %v930, %v936
  %vm946 = vcmp.gt.f32.partialorder %v938, 0.0
  %vm947 = vcmp.gt.f32.partialorder %v939, 0.0
  %vm948 = vcmp.gt.f32.partialorder %v940, 0.0
  %vm949 = vcmp.gt.f32.partialorder %v941, 0.0
  %vm950 = vcmp.gt.f32.partialorder %v942, 0.0
  %vm951 = vcmp.gt.f32.partialorder %v943, 0.0
  %vm952 = vcmp.gt.f32.partialorder %v944, 0.0
  %vm953 = vcmp.gt.f32.partialorder %v945, 0.0
  %v954 = vmin.f32 %v938, 0.0
  %v955 = vmin.f32 %v939, 0.0
  %v956 = vmin.f32 %v940, 0.0
  %v957 = vmin.f32 %v941, 0.0
  %v958 = vmin.f32 %v942, 0.0
  %v959 = vmin.f32 %v943, 0.0
  %v960 = vmin.f32 %v944, 0.0
  %v961 = vmin.f32 %v945, 0.0
  %v962 = vmul.f32 %v954, 1.442695
  %v963 = vpow.pop %v962
  %v964 = vmul.f32 %v955, 1.442695
  %v965 = vpow.pop %v964
  %v966 = vmul.f32 %v956, 1.442695
  %v967 = vpow.pop %v966
  %v968 = vmul.f32 %v957, 1.442695
  %v969 = vpow.pop %v968
  %v970 = vmul.f32 %v958, 1.442695
  %v971 = vpow.pop %v970
  %v972 = vmul.f32 %v959, 1.442695
  %v973 = vpow.pop %v972
  %v974 = vmul.f32 %v960, 1.442695
  %v975 = vpow.pop %v974
  %v976 = vmul.f32 %v961, 1.442695
  %v977 = vpow.pop %v976
  %v978 = vsub.f32 %v963, 1.0
  %v979 = vsub.f32 %v965, 1.0
  %v980 = vsub.f32 %v967, 1.0
  %v981 = vsub.f32 %v969, 1.0
  %v982 = vsub.f32 %v971, 1.0
  %v983 = vsub.f32 %v973, 1.0
  %v984 = vsub.f32 %v975, 1.0
  %v985 = vsub.f32 %v977, 1.0
  %v986 = vmul.f32 %v978, 1.6732632
  %v987 = vmul.f32 %v979, 1.6732632
  %v988 = vmul.f32 %v980, 1.6732632
  %v989 = vmul.f32 %v981, 1.6732632
  %v990 = vmul.f32 %v982, 1.6732632
  %v991 = vmul.f32 %v983, 1.6732632
  %v992 = vmul.f32 %v984, 1.6732632
  %v993 = vmul.f32 %v985, 1.6732632
  %v994 = vsel %vm946, %v938, %v986
  %v995 = vsel %vm947, %v939, %v987
  %v996 = vsel %vm948, %v940, %v988
  %v997 = vsel %vm949, %v941, %v989
  %v998 = vsel %vm950, %v942, %v990
  %v999 = vsel %vm951, %v943, %v991
  %v1000 = vsel %vm952, %v944, %v992
  %v1001 = vsel %vm953, %v945, %v993
  %v1002 = vmul.f32 %v994, 1.050701
  %v1003 = vmul.f32 %v995, 1.050701
  %v1004 = vmul.f32 %v996, 1.050701
  %v1005 = vmul.f32 %v997, 1.050701
  %v1006 = vmul.f32 %v998, 1.050701
  %v1007 = vmul.f32 %v999, 1.050701
  %v1008 = vmul.f32 %v1000, 1.050701
  %v1009 = vmul.f32 %v1001, 1.050701
  %1010 = vst.msk [vmem:[%s5] sm:$0xff] %vm468, %v1002
  %1011 = vst.msk [vmem:[%s5 + $0x8] sm:$0xff] %vm468, %v1003
  %1012 = vst.msk [vmem:[%s5 + $0x10] sm:$0xff] %vm468, %v1004
  %1013 = vst.msk [vmem:[%s5 + $0x18] sm:$0x1] %vm472, %v1005
  %1014 = vst.msk [vmem:[%s5 + $0x20] sm:$0xff] %vm468, %v1006
  %1015 = vst.msk [vmem:[%s5 + $0x28] sm:$0xff] %vm468, %v1007
  %1016 = vst.msk [vmem:[%s5 + $0x30] sm:$0xff] %vm468, %v1008
  %1017 = vst.msk [vmem:[%s5 + $0x38] sm:$0x1] %vm472, %v1009
  // Predicated region
  $region22: #{branch_forward.4} parent=0 // pred_check
    _
  $region23: #{branch_forward.4} parent=0 // pred_check_branch
    %1019 = sbr.rel (0) target = $region25
  $region24: #{branch_forward.4} parent=0 // pred_region
    _
  $region25: #{branch_forward.4} parent=0 // pred_fallthru
    _
  // Predicated region
  $region26: #{branch_forward.4} parent=0 // pred_check
    _
  $region27: #{branch_forward.4} parent=0 // pred_check_branch
    %1021 = sbr.rel (0) target = $region29
  $region28: #{branch_forward.4} parent=0 // pred_region
    _
  $region29: #{branch_forward.4} parent=0 // pred_fallthru
    _

// kernel: branch_forward.5
$region0: #{branch_forward.5}
  #allocation0 [shape = 'u32[]', space=smem, size = 0x4, offset = 0x4, fixed_abs, tag = 'smem constant byte address 0x4 - core index']
  #allocation1 [shape = 'u32[144,128]{1,0:T(1,128)}', space=vmem, size = 0x12000, scoped, tag = 'internal scratch']
  #allocation2 [shape = 'f32[2,1,64]{2,1,0:T(1,128)}', space=vmem, size = 0x400, scoped, tag = 'scratch operand']
  %s0 = inlined_call_operand.vmem [shape: bf16[4,2,1,360], index: 0, kind: input, shape index: {}]
  %s1 = inlined_call_operand.vmem [shape: bf16[360,64], index: 1, kind: input, shape index: {}]
  %s2 = inlined_call_operand.vmem [shape: f32[1,64], index: 2, kind: input, shape index: {}]
  %s3 = inlined_call_operand.vmem [shape: f32[1,64], index: 3, kind: input, shape index: {}]
  %s4 = inlined_call_operand.vmem [shape: f32[1,64], index: 4, kind: input, shape index: {}]
  %s5 = inlined_call_operand.hbm [shape: f32[2,1,64], index: 5, kind: output, shape index: {}]
  %s6 = sld [smem:[#allocation0]]
  $region30: #{branch_forward.5} parent=0
    _
  %s8 = ssub.s32 1, %s6
  %s9 = scalar_select 0, %s8, %s6
  $region1: #{branch_forward.5} parent=0
    #allocation3 [shape = 'u8[1024]{0}', space=vmem, size = 0x400, scoped, tag = 'output window, operand 0, single buffered']
    #allocation4 [shape = 's32[1]{0}', space=sflag, size = 0x4, scoped, tag = 'scoped memory for branch_forward.5']
    %10 = vsyncpa [#allocation4], 0
    // Predicated region
    $region2: #{branch_forward.5} parent=1 // pred_check
      _
    $region3: #{branch_forward.5} parent=1 // pred_check_branch
      %12 = sbr.rel (0) target = $region5
    $region4: #{branch_forward.5} parent=1 // pred_region
      _
    $region5: #{branch_forward.5} parent=1 // pred_fallthru
      _
    // Predicated region
    $region6: #{branch_forward.5} parent=1 // pred_check
      _
    $region7: #{branch_forward.5} parent=1 // pred_check_branch
      %14 = sbr.rel (0) target = $region9
    $region8: #{branch_forward.5} parent=1 // pred_region
      _
    $region9: #{branch_forward.5} parent=1 // pred_fallthru
      _
    // Predicated region
    $region10: #{branch_forward.5} parent=1 // pred_check
      _
    $region11: #{branch_forward.5} parent=1 // pred_check_branch
      %16 = sbr.rel (0) target = $region13
    $region12: #{branch_forward.5} parent=1 // pred_region
      _
    $region13: #{branch_forward.5} parent=1 // pred_fallthru
      _
    // Predicated region
    $region14: #{branch_forward.5} parent=1 // pred_check
      _
    $region15: #{branch_forward.5} parent=1 // pred_check_branch
      %18 = sbr.rel (0) target = $region17
    $region16: #{branch_forward.5} parent=1 // pred_region
      _
    $region17: #{branch_forward.5} parent=1 // pred_fallthru
      _
    // Predicated region
    $region18: #{branch_forward.5} parent=1 // pred_check
      _
    $region19: #{branch_forward.5} parent=1 // pred_check_branch
      %20 = sbr.rel (0) target = $region21
    $region20: #{branch_forward.5} parent=1 // pred_region
      _
    $region21: #{branch_forward.5} parent=1 // pred_fallthru
      _
    %v22 = vld [vmem:[%s1] sm:$0xf]
    %v23 = vld [vmem:[%s1 + $0x4] sm:$0xf]
    %v24 = vld [vmem:[%s1 + $0x8] sm:$0xf]
    %v25 = vld [vmem:[%s1 + $0xc] sm:$0xf]
    %v26 = vld [vmem:[%s1 + $0x10] sm:$0xf]
    %v27 = vld [vmem:[%s1 + $0x14] sm:$0xf]
    %v28 = vld [vmem:[%s1 + $0x18] sm:$0xf]
    %v29 = vld [vmem:[%s1 + $0x1c] sm:$0xf]
    %v30 = vld [vmem:[%s1 + $0x20] sm:$0xf]
    %v31 = vld [vmem:[%s1 + $0x24] sm:$0xf]
    %v32 = vld [vmem:[%s1 + $0x28] sm:$0xf]
    %v33 = vld [vmem:[%s1 + $0x2c] sm:$0xf]
    %v34 = vld [vmem:[%s1 + $0x30] sm:$0xf]
    %v35 = vld [vmem:[%s1 + $0x34] sm:$0xf]
    %v36 = vld [vmem:[%s1 + $0x38] sm:$0xf]
    %v37 = vld [vmem:[%s1 + $0x3c] sm:$0xf]
    %v38 = vld [vmem:[%s1 + $0x40] sm:$0xf]
    %v39 = vld [vmem:[%s1 + $0x44] sm:$0xf]
    %v40 = vld [vmem:[%s1 + $0x48] sm:$0xf]
    %v41 = vld [vmem:[%s1 + $0x4c] sm:$0xf]
    %v42 = vld [vmem:[%s1 + $0x50] sm:$0xf]
    %v43 = vld [vmem:[%s1 + $0x54] sm:$0xf]
    %v44 = vld [vmem:[%s1 + $0x58] sm:$0xf]
    %v45 = vld [vmem:[%s1 + $0x5c] sm:$0xf]
    %v46 = vld [vmem:[%s1 + $0x60] sm:$0xf]
    %v47 = vld [vmem:[%s1 + $0x64] sm:$0xf]
    %v48 = vld [vmem:[%s1 + $0x68] sm:$0xf]
    %v49 = vld [vmem:[%s1 + $0x6c] sm:$0xf]
    %v50 = vld [vmem:[%s1 + $0x70] sm:$0xf]
    %v51 = vld [vmem:[%s1 + $0x74] sm:$0xf]
    %v52 = vld [vmem:[%s1 + $0x78] sm:$0xf]
    %v53 = vld [vmem:[%s1 + $0x7c] sm:$0xf]
    %v54 = vld [vmem:[%s1 + $0x80] sm:$0xf]
    %v55 = vld [vmem:[%s1 + $0x84] sm:$0xf]
    %v56 = vld [vmem:[%s1 + $0x88] sm:$0xf]
    %v57 = vld [vmem:[%s1 + $0x8c] sm:$0xf]
    %v58 = vld [vmem:[%s1 + $0x90] sm:$0xf]
    %v59 = vld [vmem:[%s1 + $0x94] sm:$0xf]
    %v60 = vld [vmem:[%s1 + $0x98] sm:$0xf]
    %v61 = vld [vmem:[%s1 + $0x9c] sm:$0xf]
    %v62 = vld [vmem:[%s1 + $0xa0] sm:$0xf]
    %v63 = vld [vmem:[%s1 + $0xa4] sm:$0xf]
    %v64 = vld [vmem:[%s1 + $0xa8] sm:$0xf]
    %v65 = vld [vmem:[%s1 + $0xac] sm:$0xf]
    %v66 = vld [vmem:[%s1 + $0xb0] sm:$0xf]
    %v67 = vld [vmem:[%s0] sm:$0x7]
    %v70 = vunpack.c.l.s4 1966171168
    %v71 = vunpack.c.0.s8 %v70
    %v72 = vlaneseq
    %v73 = vshrl.u32 %v72, 7
    %v74 = vsub.s32 %v71, %v73
    %v75 = vrot.slane %v67, %v74
    %v76 = vcombine.high %v75, %v75
    %v78 = vunpack.c.l.s4 1966171168
    %v79 = vunpack.c.0.s8 %v78
    %v80 = vlaneseq
    %v81 = vshrl.u32 %v80, 7
    %v82 = vsub.s32 %v79, %v81
    %v83 = vrot.slane %v75, %v82
    %v85 = vunpack.c.l.s4 1966171168
    %v86 = vunpack.c.0.s8 %v85
    %v87 = vlaneseq
    %v88 = vshrl.u32 %v87, 7
    %v89 = vsub.s32 %v86, %v88
    %v90 = vrot.slane %v76, %v89
    %v91 = vcombine.high %v83, %v83
    %v139 = vunpack.c.l.b16 %v22
    %v140 = vunpack.c.l.b16 %v23
    %v141 = vunpack.c.l.b16 %v24
    %v142 = vunpack.c.l.b16 %v25
    %v143 = vunpack.c.l.b16 %v26
    %v144 = vunpack.c.l.b16 %v27
    %v145 = vunpack.c.l.b16 %v28
    %v146 = vunpack.c.l.b16 %v29
    %v147 = vunpack.c.l.b16 %v30
    %v148 = vunpack.c.l.b16 %v31
    %v149 = vunpack.c.l.b16 %v32
    %v150 = vunpack.c.l.b16 %v33
    %v151 = vunpack.c.l.b16 %v34
    %v152 = vunpack.c.l.b16 %v35
    %v153 = vunpack.c.l.b16 %v36
    %v154 = vunpack.c.l.b16 %v37
    %v155 = vunpack.c.l.b16 %v38
    %v156 = vunpack.c.l.b16 %v39
    %v157 = vunpack.c.l.b16 %v40
    %v158 = vunpack.c.l.b16 %v41
    %v159 = vunpack.c.l.b16 %v42
    %v160 = vunpack.c.l.b16 %v43
    %v161 = vunpack.c.l.b16 %v44
    %v162 = vunpack.c.l.b16 %v45
    %v163 = vunpack.c.l.b16 %v46
    %v164 = vunpack.c.l.b16 %v47
    %v165 = vunpack.c.l.b16 %v48
    %v166 = vunpack.c.l.b16 %v49
    %v167 = vunpack.c.l.b16 %v50
    %v168 = vunpack.c.l.b16 %v51
    %v169 = vunpack.c.l.b16 %v52
    %v170 = vunpack.c.l.b16 %v53
    %v171 = vunpack.c.l.b16 %v54
    %v172 = vunpack.c.l.b16 %v55
    %v173 = vunpack.c.l.b16 %v56
    %v174 = vunpack.c.l.b16 %v57
    %v175 = vunpack.c.l.b16 %v58
    %v176 = vunpack.c.l.b16 %v59
    %v177 = vunpack.c.l.b16 %v60
    %v178 = vunpack.c.l.b16 %v61
    %v179 = vunpack.c.l.b16 %v62
    %v180 = vunpack.c.l.b16 %v63
    %v181 = vunpack.c.l.b16 %v64
    %v182 = vunpack.c.l.b16 %v65
    %v183 = vunpack.c.l.b16 %v66
    %v184 = vpack.c.b16 %v140, %v139
    %v185 = vpack.c.b16 %v142, %v141
    %v186 = vpack.c.b16 %v144, %v143
    %v187 = vpack.c.b16 %v146, %v145
    %v188 = vpack.c.b16 %v148, %v147
    %v189 = vpack.c.b16 %v150, %v149
    %v190 = vpack.c.b16 %v152, %v151
    %v191 = vpack.c.b16 %v154, %v153
    %v192 = vpack.c.b16 %v156, %v155
    %v193 = vpack.c.b16 %v158, %v157
    %v194 = vpack.c.b16 %v160, %v159
    %v195 = vpack.c.b16 %v162, %v161
    %v196 = vpack.c.b16 %v164, %v163
    %v197 = vpack.c.b16 %v166, %v165
    %v198 = vpack.c.b16 %v168, %v167
    %v199 = vpack.c.b16 %v170, %v169
    %v200 = vpack.c.b16 %v172, %v171
    %v201 = vpack.c.b16 %v174, %v173
    %v202 = vpack.c.b16 %v176, %v175
    %v203 = vpack.c.b16 %v178, %v177
    %v204 = vpack.c.b16 %v180, %v179
    %v205 = vpack.c.b16 %v182, %v181
    %v206 = vpack.c.b16 %v183, %v183
    %vm229 = vcmask 850944
    %v231 = vsel %vm229, %v91, 0
    %vm233 = vcmask 1043456
    %v235 = vsel %vm233, %v206, 0
    %237 = vmatprep.subr.bf16.mxu0 0
    %238 = vmatpush1.bf16.msra.mxu0 %v184
    %239 = vmatprep.subr.bf16.mxu0 0
    %240 = vmatpush1.bf16.msra.mxu0 %v185
    %241 = vmatprep.subr.bf16.mxu0 0
    %242 = vmatpush1.bf16.msra.mxu0 %v186
    %243 = vmatprep.subr.bf16.mxu0 0
    %244 = vmatpush1.bf16.msra.mxu0 %v187
    %245 = vmatprep.subr.bf16.mxu0 0
    %246 = vmatpush1.bf16.msra.mxu0 %v188
    %247 = vmatprep.subr.bf16.mxu0 0
    %248 = vmatpush1.bf16.msra.mxu0 %v189
    %249 = vmatprep.subr.bf16.mxu0 0
    %250 = vmatpush1.bf16.msra.mxu0 %v190
    %251 = vmatprep.subr.bf16.mxu0 0
    %252 = vmatpush1.bf16.msra.mxu0 %v191
    %253 = vmatprep.subr.bf16.mxu0 0
    %254 = vmatpush1.bf16.msra.mxu0 %v192
    %255 = vmatprep.subr.bf16.mxu0 0
    %256 = vmatpush1.bf16.msra.mxu0 %v193
    %257 = vmatprep.subr.bf16.mxu0 0
    %258 = vmatpush1.bf16.msra.mxu0 %v194
    %259 = vmatprep.subr.bf16.mxu0 0
    %260 = vmatpush1.bf16.msra.mxu0 %v195
    %261 = vmatprep.subr.bf16.mxu0 0
    %262 = vmatpush1.bf16.msra.mxu0 %v196
    %263 = vmatprep.subr.bf16.mxu0 0
    %264 = vmatpush1.bf16.msra.mxu0 %v197
    %265 = vmatprep.subr.bf16.mxu0 0
    %266 = vmatpush1.bf16.msra.mxu0 %v198
    %267 = vmatprep.subr.bf16.mxu0 0
    %268 = vmatpush1.bf16.msra.mxu0 %v199
    %269 = vmatprep.mubr.bf16.mxu0 %v90
    %270 = vmatmul.mubr.bf16.gmra.mrb[0].mxu0 %v83
    %v271 = vpop.f32.mrb[0].mxu0
    %v272 = vadd.f32 0.0, %v271
    %v273 = vpop.f32.mrb[0].mxu0
    %v274 = vpop.f32.mrb[0].mxu0
    %v275 = vpop.f32.mrb[0].mxu0
    %276 = vdwg.mxu0
    %277 = vmatprep.subr.bf16.mxu0 0
    %278 = vmatpush1.bf16.msra.mxu0 %v200
    %279 = vmatprep.subr.bf16.mxu0 0
    %280 = vmatpush1.bf16.msra.mxu0 %v201
    %281 = vmatprep.subr.bf16.mxu0 0
    %282 = vmatpush1.bf16.msra.mxu0 %v202
    %283 = vmatprep.subr.bf16.mxu0 0
    %284 = vmatpush1.bf16.msra.mxu0 %v203
    %285 = vmatprep.subr.bf16.mxu0 0
    %286 = vmatpush1.bf16.msra.mxu0 %v204
    %287 = vmatprep.subr.bf16.mxu0 0
    %288 = vmatpush1.bf16.msra.mxu0 %v205
    %289 = vmatprep.subr.bf16.mxu0 0
    %290 = vmatpush1.bf16.msra.mxu0 %v235
    %291 = vmatprep.subr.bf16.mxu0 0
    %292 = vmatpush1.bf16.msra.mxu0 0
    %293 = vmatprep.subr.bf16.mxu0 0
    %294 = vmatpush1.bf16.msra.mxu0 0
    %295 = vmatprep.subr.bf16.mxu0 0
    %296 = vmatpush1.bf16.msra.mxu0 0
    %297 = vmatprep.subr.bf16.mxu0 0
    %298 = vmatpush1.bf16.msra.mxu0 0
    %299 = vmatprep.subr.bf16.mxu0 0
    %300 = vmatpush1.bf16.msra.mxu0 0
    %301 = vmatprep.subr.bf16.mxu0 0
    %302 = vmatpush1.bf16.msra.mxu0 0
    %303 = vmatprep.subr.bf16.mxu0 0
    %304 = vmatpush1.bf16.msra.mxu0 0
    %305 = vmatprep.subr.bf16.mxu0 0
    %306 = vmatpush1.bf16.msra.mxu0 0
    %307 = vmatprep.subr.bf16.mxu0 0
    %308 = vmatpush1.bf16.msra.mxu0 0
    %309 = vmatprep.mubr.bf16.mxu0 0
    %310 = vmatmul.mubr.bf16.gmra.mrb[0].mxu0 %v231
    %v311 = vpop.f32.mrb[0].mxu0
    %v312 = vadd.f32 %v272, %v311
    %v313 = vpop.f32.mrb[0].mxu0
    %v314 = vpop.f32.mrb[0].mxu0
    %v315 = vpop.f32.mrb[0].mxu0
    %316 = vdwg.mxu0
    %s317 = scalar_lea.vmem %s0, 6
    %v318 = vld [vmem:[%s317] sm:$0x7]
    %v321 = vunpack.c.l.s4 1966171168
    %v322 = vunpack.c.0.s8 %v321
    %v323 = vlaneseq
    %v324 = vshrl.u32 %v323, 7
    %v325 = vsub.s32 %v322, %v324
    %v326 = vrot.slane %v318, %v325
    %v327 = vcombine.high %v326, %v326
    %v329 = vunpack.c.l.s4 1966171168
    %v330 = vunpack.c.0.s8 %v329
    %v331 = vlaneseq
    %v332 = vshrl.u32 %v331, 7
    %v333 = vsub.s32 %v330, %v332
    %v334 = vrot.slane %v326, %v333
    %v336 = vunpack.c.l.s4 1966171168
    %v337 = vunpack.c.0.s8 %v336
    %v338 = vlaneseq
    %v339 = vshrl.u32 %v338, 7
    %v340 = vsub.s32 %v337, %v339
    %v341 = vrot.slane %v327, %v340
    %v342 = vcombine.high %v334, %v334
    %v346 = vsel %vm229, %v342, 0
    %348 = vmatprep.subr.bf16.mxu0 0
    %349 = vmatpush1.bf16.msra.mxu0 %v184
    %350 = vmatprep.subr.bf16.mxu0 0
    %351 = vmatpush1.bf16.msra.mxu0 %v185
    %352 = vmatprep.subr.bf16.mxu0 0
    %353 = vmatpush1.bf16.msra.mxu0 %v186
    %354 = vmatprep.subr.bf16.mxu0 0
    %355 = vmatpush1.bf16.msra.mxu0 %v187
    %356 = vmatprep.subr.bf16.mxu0 0
    %357 = vmatpush1.bf16.msra.mxu0 %v188
    %358 = vmatprep.subr.bf16.mxu0 0
    %359 = vmatpush1.bf16.msra.mxu0 %v189
    %360 = vmatprep.subr.bf16.mxu0 0
    %361 = vmatpush1.bf16.msra.mxu0 %v190
    %362 = vmatprep.subr.bf16.mxu0 0
    %363 = vmatpush1.bf16.msra.mxu0 %v191
    %364 = vmatprep.subr.bf16.mxu0 0
    %365 = vmatpush1.bf16.msra.mxu0 %v192
    %366 = vmatprep.subr.bf16.mxu0 0
    %367 = vmatpush1.bf16.msra.mxu0 %v193
    %368 = vmatprep.subr.bf16.mxu0 0
    %369 = vmatpush1.bf16.msra.mxu0 %v194
    %370 = vmatprep.subr.bf16.mxu0 0
    %371 = vmatpush1.bf16.msra.mxu0 %v195
    %372 = vmatprep.subr.bf16.mxu0 0
    %373 = vmatpush1.bf16.msra.mxu0 %v196
    %374 = vmatprep.subr.bf16.mxu0 0
    %375 = vmatpush1.bf16.msra.mxu0 %v197
    %376 = vmatprep.subr.bf16.mxu0 0
    %377 = vmatpush1.bf16.msra.mxu0 %v198
    %378 = vmatprep.subr.bf16.mxu0 0
    %379 = vmatpush1.bf16.msra.mxu0 %v199
    %380 = vmatprep.mubr.bf16.mxu0 %v341
    %381 = vmatmul.mubr.bf16.gmra.mrb[0].mxu0 %v334
    %v382 = vpop.f32.mrb[0].mxu0
    %v383 = vadd.f32 0.0, %v382
    %v384 = vpop.f32.mrb[0].mxu0
    %v385 = vpop.f32.mrb[0].mxu0
    %v386 = vpop.f32.mrb[0].mxu0
    %387 = vdwg.mxu0
    %388 = vmatprep.subr.bf16.mxu0 0
    %389 = vmatpush1.bf16.msra.mxu0 %v200
    %390 = vmatprep.subr.bf16.mxu0 0
    %391 = vmatpush1.bf16.msra.mxu0 %v201
    %392 = vmatprep.subr.bf16.mxu0 0
    %393 = vmatpush1.bf16.msra.mxu0 %v202
    %394 = vmatprep.subr.bf16.mxu0 0
    %395 = vmatpush1.bf16.msra.mxu0 %v203
    %396 = vmatprep.subr.bf16.mxu0 0
    %397 = vmatpush1.bf16.msra.mxu0 %v204
    %398 = vmatprep.subr.bf16.mxu0 0
    %399 = vmatpush1.bf16.msra.mxu0 %v205
    %400 = vmatprep.subr.bf16.mxu0 0
    %401 = vmatpush1.bf16.msra.mxu0 %v235
    %402 = vmatprep.subr.bf16.mxu0 0
    %403 = vmatpush1.bf16.msra.mxu0 0
    %404 = vmatprep.subr.bf16.mxu0 0
    %405 = vmatpush1.bf16.msra.mxu0 0
    %406 = vmatprep.subr.bf16.mxu0 0
    %407 = vmatpush1.bf16.msra.mxu0 0
    %408 = vmatprep.subr.bf16.mxu0 0
    %409 = vmatpush1.bf16.msra.mxu0 0
    %410 = vmatprep.subr.bf16.mxu0 0
    %411 = vmatpush1.bf16.msra.mxu0 0
    %412 = vmatprep.subr.bf16.mxu0 0
    %413 = vmatpush1.bf16.msra.mxu0 0
    %414 = vmatprep.subr.bf16.mxu0 0
    %415 = vmatpush1.bf16.msra.mxu0 0
    %416 = vmatprep.subr.bf16.mxu0 0
    %417 = vmatpush1.bf16.msra.mxu0 0
    %418 = vmatprep.subr.bf16.mxu0 0
    %419 = vmatpush1.bf16.msra.mxu0 0
    %420 = vmatprep.mubr.bf16.mxu0 0
    %421 = vmatmul.mubr.bf16.gmra.mrb[0].mxu0 %v346
    %v422 = vpop.f32.mrb[0].mxu0
    %v423 = vadd.f32 %v383, %v422
    %v424 = vpop.f32.mrb[0].mxu0
    %v425 = vpop.f32.mrb[0].mxu0
    %v426 = vpop.f32.mrb[0].mxu0
    %427 = vdwg.mxu0
    %v428 = vmax.f32 %v312, %v423
    %s429 = scalar_lea.vmem %s0, 12
    %v430 = vld [vmem:[%s429] sm:$0x7]
    %v433 = vunpack.c.l.s4 1966171168
    %v434 = vunpack.c.0.s8 %v433
    %v435 = vlaneseq
    %v436 = vshrl.u32 %v435, 7
    %v437 = vsub.s32 %v434, %v436
    %v438 = vrot.slane %v430, %v437
    %v439 = vcombine.high %v438, %v438
    %v441 = vunpack.c.l.s4 1966171168
    %v442 = vunpack.c.0.s8 %v441
    %v443 = vlaneseq
    %v444 = vshrl.u32 %v443, 7
    %v445 = vsub.s32 %v442, %v444
    %v446 = vrot.slane %v438, %v445
    %v448 = vunpack.c.l.s4 1966171168
    %v449 = vunpack.c.0.s8 %v448
    %v450 = vlaneseq
    %v451 = vshrl.u32 %v450, 7
    %v452 = vsub.s32 %v449, %v451
    %v453 = vrot.slane %v439, %v452
    %v454 = vcombine.high %v446, %v446
    %v458 = vsel %vm229, %v454, 0
    %460 = vmatprep.subr.bf16.mxu0 0
    %461 = vmatpush1.bf16.msra.mxu0 %v184
    %462 = vmatprep.subr.bf16.mxu0 0
    %463 = vmatpush1.bf16.msra.mxu0 %v185
    %464 = vmatprep.subr.bf16.mxu0 0
    %465 = vmatpush1.bf16.msra.mxu0 %v186
    %466 = vmatprep.subr.bf16.mxu0 0
    %467 = vmatpush1.bf16.msra.mxu0 %v187
    %468 = vmatprep.subr.bf16.mxu0 0
    %469 = vmatpush1.bf16.msra.mxu0 %v188
    %470 = vmatprep.subr.bf16.mxu0 0
    %471 = vmatpush1.bf16.msra.mxu0 %v189
    %472 = vmatprep.subr.bf16.mxu0 0
    %473 = vmatpush1.bf16.msra.mxu0 %v190
    %474 = vmatprep.subr.bf16.mxu0 0
    %475 = vmatpush1.bf16.msra.mxu0 %v191
    %476 = vmatprep.subr.bf16.mxu0 0
    %477 = vmatpush1.bf16.msra.mxu0 %v192
    %478 = vmatprep.subr.bf16.mxu0 0
    %479 = vmatpush1.bf16.msra.mxu0 %v193
    %480 = vmatprep.subr.bf16.mxu0 0
    %481 = vmatpush1.bf16.msra.mxu0 %v194
    %482 = vmatprep.subr.bf16.mxu0 0
    %483 = vmatpush1.bf16.msra.mxu0 %v195
    %484 = vmatprep.subr.bf16.mxu0 0
    %485 = vmatpush1.bf16.msra.mxu0 %v196
    %486 = vmatprep.subr.bf16.mxu0 0
    %487 = vmatpush1.bf16.msra.mxu0 %v197
    %488 = vmatprep.subr.bf16.mxu0 0
    %489 = vmatpush1.bf16.msra.mxu0 %v198
    %490 = vmatprep.subr.bf16.mxu0 0
    %491 = vmatpush1.bf16.msra.mxu0 %v199
    %492 = vmatprep.mubr.bf16.mxu0 %v453
    %493 = vmatmul.mubr.bf16.gmra.mrb[0].mxu0 %v446
    %v494 = vpop.f32.mrb[0].mxu0
    %v495 = vadd.f32 0.0, %v494
    %v496 = vpop.f32.mrb[0].mxu0
    %v497 = vpop.f32.mrb[0].mxu0
    %v498 = vpop.f32.mrb[0].mxu0
    %499 = vdwg.mxu0
    %500 = vmatprep.subr.bf16.mxu0 0
    %501 = vmatpush1.bf16.msra.mxu0 %v200
    %502 = vmatprep.subr.bf16.mxu0 0
    %503 = vmatpush1.bf16.msra.mxu0 %v201
    %504 = vmatprep.subr.bf16.mxu0 0
    %505 = vmatpush1.bf16.msra.mxu0 %v202
    %506 = vmatprep.subr.bf16.mxu0 0
    %507 = vmatpush1.bf16.msra.mxu0 %v203
    %508 = vmatprep.subr.bf16.mxu0 0
    %509 = vmatpush1.bf16.msra.mxu0 %v204
    %510 = vmatprep.subr.bf16.mxu0 0
    %511 = vmatpush1.bf16.msra.mxu0 %v205
    %512 = vmatprep.subr.bf16.mxu0 0
    %513 = vmatpush1.bf16.msra.mxu0 %v235
    %514 = vmatprep.subr.bf16.mxu0 0
    %515 = vmatpush1.bf16.msra.mxu0 0
    %516 = vmatprep.subr.bf16.mxu0 0
    %517 = vmatpush1.bf16.msra.mxu0 0
    %518 = vmatprep.subr.bf16.mxu0 0
    %519 = vmatpush1.bf16.msra.mxu0 0
    %520 = vmatprep.subr.bf16.mxu0 0
    %521 = vmatpush1.bf16.msra.mxu0 0
    %522 = vmatprep.subr.bf16.mxu0 0
    %523 = vmatpush1.bf16.msra.mxu0 0
    %524 = vmatprep.subr.bf16.mxu0 0
    %525 = vmatpush1.bf16.msra.mxu0 0
    %526 = vmatprep.subr.bf16.mxu0 0
    %527 = vmatpush1.bf16.msra.mxu0 0
    %528 = vmatprep.subr.bf16.mxu0 0
    %529 = vmatpush1.bf16.msra.mxu0 0
    %530 = vmatprep.subr.bf16.mxu0 0
    %531 = vmatpush1.bf16.msra.mxu0 0
    %532 = vmatprep.mubr.bf16.mxu0 0
    %533 = vmatmul.mubr.bf16.gmra.mrb[0].mxu0 %v458
    %v534 = vpop.f32.mrb[0].mxu0
    %v535 = vadd.f32 %v495, %v534
    %v536 = vpop.f32.mrb[0].mxu0
    %v537 = vpop.f32.mrb[0].mxu0
    %v538 = vpop.f32.mrb[0].mxu0
    %539 = vdwg.mxu0
    %v540 = vmax.f32 %v428, %v535
    %s541 = scalar_lea.vmem %s0, 18
    %v542 = vld [vmem:[%s541] sm:$0x7]
    %v545 = vunpack.c.l.s4 1966171168
    %v546 = vunpack.c.0.s8 %v545
    %v547 = vlaneseq
    %v548 = vshrl.u32 %v547, 7
    %v549 = vsub.s32 %v546, %v548
    %v550 = vrot.slane %v542, %v549
    %v551 = vcombine.high %v550, %v550
    %v553 = vunpack.c.l.s4 1966171168
    %v554 = vunpack.c.0.s8 %v553
    %v555 = vlaneseq
    %v556 = vshrl.u32 %v555, 7
    %v557 = vsub.s32 %v554, %v556
    %v558 = vrot.slane %v550, %v557
    %v560 = vunpack.c.l.s4 1966171168
    %v561 = vunpack.c.0.s8 %v560
    %v562 = vlaneseq
    %v563 = vshrl.u32 %v562, 7
    %v564 = vsub.s32 %v561, %v563
    %v565 = vrot.slane %v551, %v564
    %v566 = vcombine.high %v558, %v558
    %v570 = vsel %vm229, %v566, 0
    %572 = vmatprep.subr.bf16.mxu0 0
    %573 = vmatpush1.bf16.msra.mxu0 %v184
    %574 = vmatprep.subr.bf16.mxu0 0
    %575 = vmatpush1.bf16.msra.mxu0 %v185
    %576 = vmatprep.subr.bf16.mxu0 0
    %577 = vmatpush1.bf16.msra.mxu0 %v186
    %578 = vmatprep.subr.bf16.mxu0 0
    %579 = vmatpush1.bf16.msra.mxu0 %v187
    %580 = vmatprep.subr.bf16.mxu0 0
    %581 = vmatpush1.bf16.msra.mxu0 %v188
    %582 = vmatprep.subr.bf16.mxu0 0
    %583 = vmatpush1.bf16.msra.mxu0 %v189
    %584 = vmatprep.subr.bf16.mxu0 0
    %585 = vmatpush1.bf16.msra.mxu0 %v190
    %586 = vmatprep.subr.bf16.mxu0 0
    %587 = vmatpush1.bf16.msra.mxu0 %v191
    %588 = vmatprep.subr.bf16.mxu0 0
    %589 = vmatpush1.bf16.msra.mxu0 %v192
    %590 = vmatprep.subr.bf16.mxu0 0
    %591 = vmatpush1.bf16.msra.mxu0 %v193
    %592 = vmatprep.subr.bf16.mxu0 0
    %593 = vmatpush1.bf16.msra.mxu0 %v194
    %594 = vmatprep.subr.bf16.mxu0 0
    %595 = vmatpush1.bf16.msra.mxu0 %v195
    %596 = vmatprep.subr.bf16.mxu0 0
    %597 = vmatpush1.bf16.msra.mxu0 %v196
    %598 = vmatprep.subr.bf16.mxu0 0
    %599 = vmatpush1.bf16.msra.mxu0 %v197
    %600 = vmatprep.subr.bf16.mxu0 0
    %601 = vmatpush1.bf16.msra.mxu0 %v198
    %602 = vmatprep.subr.bf16.mxu0 0
    %603 = vmatpush1.bf16.msra.mxu0 %v199
    %604 = vmatprep.mubr.bf16.mxu0 %v565
    %605 = vmatmul.mubr.bf16.gmra.mrb[0].mxu0 %v558
    %v606 = vpop.f32.mrb[0].mxu0
    %v607 = vadd.f32 0.0, %v606
    %v608 = vpop.f32.mrb[0].mxu0
    %v609 = vpop.f32.mrb[0].mxu0
    %v610 = vpop.f32.mrb[0].mxu0
    %611 = vdwg.mxu0
    %612 = vmatprep.subr.bf16.mxu0 0
    %613 = vmatpush1.bf16.msra.mxu0 %v200
    %614 = vmatprep.subr.bf16.mxu0 0
    %615 = vmatpush1.bf16.msra.mxu0 %v201
    %616 = vmatprep.subr.bf16.mxu0 0
    %617 = vmatpush1.bf16.msra.mxu0 %v202
    %618 = vmatprep.subr.bf16.mxu0 0
    %619 = vmatpush1.bf16.msra.mxu0 %v203
    %620 = vmatprep.subr.bf16.mxu0 0
    %621 = vmatpush1.bf16.msra.mxu0 %v204
    %622 = vmatprep.subr.bf16.mxu0 0
    %623 = vmatpush1.bf16.msra.mxu0 %v205
    %624 = vmatprep.subr.bf16.mxu0 0
    %625 = vmatpush1.bf16.msra.mxu0 %v235
    %626 = vmatprep.subr.bf16.mxu0 0
    %627 = vmatpush1.bf16.msra.mxu0 0
    %628 = vmatprep.subr.bf16.mxu0 0
    %629 = vmatpush1.bf16.msra.mxu0 0
    %630 = vmatprep.subr.bf16.mxu0 0
    %631 = vmatpush1.bf16.msra.mxu0 0
    %632 = vmatprep.subr.bf16.mxu0 0
    %633 = vmatpush1.bf16.msra.mxu0 0
    %634 = vmatprep.subr.bf16.mxu0 0
    %635 = vmatpush1.bf16.msra.mxu0 0
    %636 = vmatprep.subr.bf16.mxu0 0
    %637 = vmatpush1.bf16.msra.mxu0 0
    %638 = vmatprep.subr.bf16.mxu0 0
    %639 = vmatpush1.bf16.msra.mxu0 0
    %640 = vmatprep.subr.bf16.mxu0 0
    %641 = vmatpush1.bf16.msra.mxu0 0
    %642 = vmatprep.subr.bf16.mxu0 0
    %643 = vmatpush1.bf16.msra.mxu0 0
    %644 = vmatprep.mubr.bf16.mxu0 0
    %645 = vmatmul.mubr.bf16.gmra.mrb[0].mxu0 %v570
    %v646 = vpop.f32.mrb[0].mxu0
    %v647 = vadd.f32 %v607, %v646
    %v648 = vpop.f32.mrb[0].mxu0
    %v649 = vpop.f32.mrb[0].mxu0
    %v650 = vpop.f32.mrb[0].mxu0
    %651 = vdwg.mxu0
    %v652 = vmax.f32 %v540, %v647
    %v653 = vld [vmem:[%s2] sm:$0x1]
    %v654 = vadd.f32 %v652, %v653
    %vm655 = vcmask 516096
    %656 = vst.msk [vmem:[#allocation2] sm:$0x1] %vm655, %v654
    %s657 = scalar_lea.vmem %s0, 3
    %v658 = vld [vmem:[%s657] sm:$0x7]
    %v661 = vunpack.c.l.s4 1966171168
    %v662 = vunpack.c.0.s8 %v661
    %v663 = vlaneseq
    %v664 = vshrl.u32 %v663, 7
    %v665 = vsub.s32 %v662, %v664
    %v666 = vrot.slane %v658, %v665
    %v667 = vcombine.high %v666, %v666
    %v669 = vunpack.c.l.s4 1966171168
    %v670 = vunpack.c.0.s8 %v669
    %v671 = vlaneseq
    %v672 = vshrl.u32 %v671, 7
    %v673 = vsub.s32 %v670, %v672
    %v674 = vrot.slane %v666, %v673
    %v676 = vunpack.c.l.s4 1966171168
    %v677 = vunpack.c.0.s8 %v676
    %v678 = vlaneseq
    %v679 = vshrl.u32 %v678, 7
    %v680 = vsub.s32 %v677, %v679
    %v681 = vrot.slane %v667, %v680
    %v682 = vcombine.high %v674, %v674
    %v686 = vsel %vm229, %v682, 0
    %688 = vmatprep.subr.bf16.mxu0 0
    %689 = vmatpush1.bf16.msra.mxu0 %v184
    %690 = vmatprep.subr.bf16.mxu0 0
    %691 = vmatpush1.bf16.msra.mxu0 %v185
    %692 = vmatprep.subr.bf16.mxu0 0
    %693 = vmatpush1.bf16.msra.mxu0 %v186
    %694 = vmatprep.subr.bf16.mxu0 0
    %695 = vmatpush1.bf16.msra.mxu0 %v187
    %696 = vmatprep.subr.bf16.mxu0 0
    %697 = vmatpush1.bf16.msra.mxu0 %v188
    %698 = vmatprep.subr.bf16.mxu0 0
    %699 = vmatpush1.bf16.msra.mxu0 %v189
    %700 = vmatprep.subr.bf16.mxu0 0
    %701 = vmatpush1.bf16.msra.mxu0 %v190
    %702 = vmatprep.subr.bf16.mxu0 0
    %703 = vmatpush1.bf16.msra.mxu0 %v191
    %704 = vmatprep.subr.bf16.mxu0 0
    %705 = vmatpush1.bf16.msra.mxu0 %v192
    %706 = vmatprep.subr.bf16.mxu0 0
    %707 = vmatpush1.bf16.msra.mxu0 %v193
    %708 = vmatprep.subr.bf16.mxu0 0
    %709 = vmatpush1.bf16.msra.mxu0 %v194
    %710 = vmatprep.subr.bf16.mxu0 0
    %711 = vmatpush1.bf16.msra.mxu0 %v195
    %712 = vmatprep.subr.bf16.mxu0 0
    %713 = vmatpush1.bf16.msra.mxu0 %v196
    %714 = vmatprep.subr.bf16.mxu0 0
    %715 = vmatpush1.bf16.msra.mxu0 %v197
    %716 = vmatprep.subr.bf16.mxu0 0
    %717 = vmatpush1.bf16.msra.mxu0 %v198
    %718 = vmatprep.subr.bf16.mxu0 0
    %719 = vmatpush1.bf16.msra.mxu0 %v199
    %720 = vmatprep.mubr.bf16.mxu0 %v681
    %721 = vmatmul.mubr.bf16.gmra.mrb[0].mxu0 %v674
    %v722 = vpop.f32.mrb[0].mxu0
    %v723 = vadd.f32 0.0, %v722
    %v724 = vpop.f32.mrb[0].mxu0
    %v725 = vpop.f32.mrb[0].mxu0
    %v726 = vpop.f32.mrb[0].mxu0
    %727 = vdwg.mxu0
    %728 = vmatprep.subr.bf16.mxu0 0
    %729 = vmatpush1.bf16.msra.mxu0 %v200
    %730 = vmatprep.subr.bf16.mxu0 0
    %731 = vmatpush1.bf16.msra.mxu0 %v201
    %732 = vmatprep.subr.bf16.mxu0 0
    %733 = vmatpush1.bf16.msra.mxu0 %v202
    %734 = vmatprep.subr.bf16.mxu0 0
    %735 = vmatpush1.bf16.msra.mxu0 %v203
    %736 = vmatprep.subr.bf16.mxu0 0
    %737 = vmatpush1.bf16.msra.mxu0 %v204
    %738 = vmatprep.subr.bf16.mxu0 0
    %739 = vmatpush1.bf16.msra.mxu0 %v205
    %740 = vmatprep.subr.bf16.mxu0 0
    %741 = vmatpush1.bf16.msra.mxu0 %v235
    %742 = vmatprep.subr.bf16.mxu0 0
    %743 = vmatpush1.bf16.msra.mxu0 0
    %744 = vmatprep.subr.bf16.mxu0 0
    %745 = vmatpush1.bf16.msra.mxu0 0
    %746 = vmatprep.subr.bf16.mxu0 0
    %747 = vmatpush1.bf16.msra.mxu0 0
    %748 = vmatprep.subr.bf16.mxu0 0
    %749 = vmatpush1.bf16.msra.mxu0 0
    %750 = vmatprep.subr.bf16.mxu0 0
    %751 = vmatpush1.bf16.msra.mxu0 0
    %752 = vmatprep.subr.bf16.mxu0 0
    %753 = vmatpush1.bf16.msra.mxu0 0
    %754 = vmatprep.subr.bf16.mxu0 0
    %755 = vmatpush1.bf16.msra.mxu0 0
    %756 = vmatprep.subr.bf16.mxu0 0
    %757 = vmatpush1.bf16.msra.mxu0 0
    %758 = vmatprep.subr.bf16.mxu0 0
    %759 = vmatpush1.bf16.msra.mxu0 0
    %760 = vmatprep.mubr.bf16.mxu0 0
    %761 = vmatmul.mubr.bf16.gmra.mrb[0].mxu0 %v686
    %v762 = vpop.f32.mrb[0].mxu0
    %v763 = vadd.f32 %v723, %v762
    %v764 = vpop.f32.mrb[0].mxu0
    %v765 = vpop.f32.mrb[0].mxu0
    %v766 = vpop.f32.mrb[0].mxu0
    %767 = vdwg.mxu0
    %s768 = scalar_lea.vmem %s0, 9
    %v769 = vld [vmem:[%s768] sm:$0x7]
    %v772 = vunpack.c.l.s4 1966171168
    %v773 = vunpack.c.0.s8 %v772
    %v774 = vlaneseq
    %v775 = vshrl.u32 %v774, 7
    %v776 = vsub.s32 %v773, %v775
    %v777 = vrot.slane %v769, %v776
    %v778 = vcombine.high %v777, %v777
    %v780 = vunpack.c.l.s4 1966171168
    %v781 = vunpack.c.0.s8 %v780
    %v782 = vlaneseq
    %v783 = vshrl.u32 %v782, 7
    %v784 = vsub.s32 %v781, %v783
    %v785 = vrot.slane %v777, %v784
    %v787 = vunpack.c.l.s4 1966171168
    %v788 = vunpack.c.0.s8 %v787
    %v789 = vlaneseq
    %v790 = vshrl.u32 %v789, 7
    %v791 = vsub.s32 %v788, %v790
    %v792 = vrot.slane %v778, %v791
    %v793 = vcombine.high %v785, %v785
    %v797 = vsel %vm229, %v793, 0
    %799 = vmatprep.subr.bf16.mxu0 0
    %800 = vmatpush1.bf16.msra.mxu0 %v184
    %801 = vmatprep.subr.bf16.mxu0 0
    %802 = vmatpush1.bf16.msra.mxu0 %v185
    %803 = vmatprep.subr.bf16.mxu0 0
    %804 = vmatpush1.bf16.msra.mxu0 %v186
    %805 = vmatprep.subr.bf16.mxu0 0
    %806 = vmatpush1.bf16.msra.mxu0 %v187
    %807 = vmatprep.subr.bf16.mxu0 0
    %808 = vmatpush1.bf16.msra.mxu0 %v188
    %809 = vmatprep.subr.bf16.mxu0 0
    %810 = vmatpush1.bf16.msra.mxu0 %v189
    %811 = vmatprep.subr.bf16.mxu0 0
    %812 = vmatpush1.bf16.msra.mxu0 %v190
    %813 = vmatprep.subr.bf16.mxu0 0
    %814 = vmatpush1.bf16.msra.mxu0 %v191
    %815 = vmatprep.subr.bf16.mxu0 0
    %816 = vmatpush1.bf16.msra.mxu0 %v192
    %817 = vmatprep.subr.bf16.mxu0 0
    %818 = vmatpush1.bf16.msra.mxu0 %v193
    %819 = vmatprep.subr.bf16.mxu0 0
    %820 = vmatpush1.bf16.msra.mxu0 %v194
    %821 = vmatprep.subr.bf16.mxu0 0
    %822 = vmatpush1.bf16.msra.mxu0 %v195
    %823 = vmatprep.subr.bf16.mxu0 0
    %824 = vmatpush1.bf16.msra.mxu0 %v196
    %825 = vmatprep.subr.bf16.mxu0 0
    %826 = vmatpush1.bf16.msra.mxu0 %v197
    %827 = vmatprep.subr.bf16.mxu0 0
    %828 = vmatpush1.bf16.msra.mxu0 %v198
    %829 = vmatprep.subr.bf16.mxu0 0
    %830 = vmatpush1.bf16.msra.mxu0 %v199
    %831 = vmatprep.mubr.bf16.mxu0 %v792
    %832 = vmatmul.mubr.bf16.gmra.mrb[0].mxu0 %v785
    %v833 = vpop.f32.mrb[0].mxu0
    %v834 = vadd.f32 0.0, %v833
    %v835 = vpop.f32.mrb[0].mxu0
    %v836 = vpop.f32.mrb[0].mxu0
    %v837 = vpop.f32.mrb[0].mxu0
    %838 = vdwg.mxu0
    %839 = vmatprep.subr.bf16.mxu0 0
    %840 = vmatpush1.bf16.msra.mxu0 %v200
    %841 = vmatprep.subr.bf16.mxu0 0
    %842 = vmatpush1.bf16.msra.mxu0 %v201
    %843 = vmatprep.subr.bf16.mxu0 0
    %844 = vmatpush1.bf16.msra.mxu0 %v202
    %845 = vmatprep.subr.bf16.mxu0 0
    %846 = vmatpush1.bf16.msra.mxu0 %v203
    %847 = vmatprep.subr.bf16.mxu0 0
    %848 = vmatpush1.bf16.msra.mxu0 %v204
    %849 = vmatprep.subr.bf16.mxu0 0
    %850 = vmatpush1.bf16.msra.mxu0 %v205
    %851 = vmatprep.subr.bf16.mxu0 0
    %852 = vmatpush1.bf16.msra.mxu0 %v235
    %853 = vmatprep.subr.bf16.mxu0 0
    %854 = vmatpush1.bf16.msra.mxu0 0
    %855 = vmatprep.subr.bf16.mxu0 0
    %856 = vmatpush1.bf16.msra.mxu0 0
    %857 = vmatprep.subr.bf16.mxu0 0
    %858 = vmatpush1.bf16.msra.mxu0 0
    %859 = vmatprep.subr.bf16.mxu0 0
    %860 = vmatpush1.bf16.msra.mxu0 0
    %861 = vmatprep.subr.bf16.mxu0 0
    %862 = vmatpush1.bf16.msra.mxu0 0
    %863 = vmatprep.subr.bf16.mxu0 0
    %864 = vmatpush1.bf16.msra.mxu0 0
    %865 = vmatprep.subr.bf16.mxu0 0
    %866 = vmatpush1.bf16.msra.mxu0 0
    %867 = vmatprep.subr.bf16.mxu0 0
    %868 = vmatpush1.bf16.msra.mxu0 0
    %869 = vmatprep.subr.bf16.mxu0 0
    %870 = vmatpush1.bf16.msra.mxu0 0
    %871 = vmatprep.mubr.bf16.mxu0 0
    %872 = vmatmul.mubr.bf16.gmra.mrb[0].mxu0 %v797
    %v873 = vpop.f32.mrb[0].mxu0
    %v874 = vadd.f32 %v834, %v873
    %v875 = vpop.f32.mrb[0].mxu0
    %v876 = vpop.f32.mrb[0].mxu0
    %v877 = vpop.f32.mrb[0].mxu0
    %878 = vdwg.mxu0
    %v879 = vmax.f32 %v763, %v874
    %s880 = scalar_lea.vmem %s0, 15
    %v881 = vld [vmem:[%s880] sm:$0x7]
    %v884 = vunpack.c.l.s4 1966171168
    %v885 = vunpack.c.0.s8 %v884
    %v886 = vlaneseq
    %v887 = vshrl.u32 %v886, 7
    %v888 = vsub.s32 %v885, %v887
    %v889 = vrot.slane %v881, %v888
    %v890 = vcombine.high %v889, %v889
    %v892 = vunpack.c.l.s4 1966171168
    %v893 = vunpack.c.0.s8 %v892
    %v894 = vlaneseq
    %v895 = vshrl.u32 %v894, 7
    %v896 = vsub.s32 %v893, %v895
    %v897 = vrot.slane %v889, %v896
    %v899 = vunpack.c.l.s4 1966171168
    %v900 = vunpack.c.0.s8 %v899
    %v901 = vlaneseq
    %v902 = vshrl.u32 %v901, 7
    %v903 = vsub.s32 %v900, %v902
    %v904 = vrot.slane %v890, %v903
    %v905 = vcombine.high %v897, %v897
    %v909 = vsel %vm229, %v905, 0
    %911 = vmatprep.subr.bf16.mxu0 0
    %912 = vmatpush1.bf16.msra.mxu0 %v184
    %913 = vmatprep.subr.bf16.mxu0 0
    %914 = vmatpush1.bf16.msra.mxu0 %v185
    %915 = vmatprep.subr.bf16.mxu0 0
    %916 = vmatpush1.bf16.msra.mxu0 %v186
    %917 = vmatprep.subr.bf16.mxu0 0
    %918 = vmatpush1.bf16.msra.mxu0 %v187
    %919 = vmatprep.subr.bf16.mxu0 0
    %920 = vmatpush1.bf16.msra.mxu0 %v188
    %921 = vmatprep.subr.bf16.mxu0 0
    %922 = vmatpush1.bf16.msra.mxu0 %v189
    %923 = vmatprep.subr.bf16.mxu0 0
    %924 = vmatpush1.bf16.msra.mxu0 %v190
    %925 = vmatprep.subr.bf16.mxu0 0
    %926 = vmatpush1.bf16.msra.mxu0 %v191
    %927 = vmatprep.subr.bf16.mxu0 0
    %928 = vmatpush1.bf16.msra.mxu0 %v192
    %929 = vmatprep.subr.bf16.mxu0 0
    %930 = vmatpush1.bf16.msra.mxu0 %v193
    %931 = vmatprep.subr.bf16.mxu0 0
    %932 = vmatpush1.bf16.msra.mxu0 %v194
    %933 = vmatprep.subr.bf16.mxu0 0
    %934 = vmatpush1.bf16.msra.mxu0 %v195
    %935 = vmatprep.subr.bf16.mxu0 0
    %936 = vmatpush1.bf16.msra.mxu0 %v196
    %937 = vmatprep.subr.bf16.mxu0 0
    %938 = vmatpush1.bf16.msra.mxu0 %v197
    %939 = vmatprep.subr.bf16.mxu0 0
    %940 = vmatpush1.bf16.msra.mxu0 %v198
    %941 = vmatprep.subr.bf16.mxu0 0
    %942 = vmatpush1.bf16.msra.mxu0 %v199
    %943 = vmatprep.mubr.bf16.mxu0 %v904
    %944 = vmatmul.mubr.bf16.gmra.mrb[0].mxu0 %v897
    %v945 = vpop.f32.mrb[0].mxu0
    %v946 = vadd.f32 0.0, %v945
    %v947 = vpop.f32.mrb[0].mxu0
    %v948 = vpop.f32.mrb[0].mxu0
    %v949 = vpop.f32.mrb[0].mxu0
    %950 = vdwg.mxu0
    %951 = vmatprep.subr.bf16.mxu0 0
    %952 = vmatpush1.bf16.msra.mxu0 %v200
    %953 = vmatprep.subr.bf16.mxu0 0
    %954 = vmatpush1.bf16.msra.mxu0 %v201
    %955 = vmatprep.subr.bf16.mxu0 0
    %956 = vmatpush1.bf16.msra.mxu0 %v202
    %957 = vmatprep.subr.bf16.mxu0 0
    %958 = vmatpush1.bf16.msra.mxu0 %v203
    %959 = vmatprep.subr.bf16.mxu0 0
    %960 = vmatpush1.bf16.msra.mxu0 %v204
    %961 = vmatprep.subr.bf16.mxu0 0
    %962 = vmatpush1.bf16.msra.mxu0 %v205
    %963 = vmatprep.subr.bf16.mxu0 0
    %964 = vmatpush1.bf16.msra.mxu0 %v235
    %965 = vmatprep.subr.bf16.mxu0 0
    %966 = vmatpush1.bf16.msra.mxu0 0
    %967 = vmatprep.subr.bf16.mxu0 0
    %968 = vmatpush1.bf16.msra.mxu0 0
    %969 = vmatprep.subr.bf16.mxu0 0
    %970 = vmatpush1.bf16.msra.mxu0 0
    %971 = vmatprep.subr.bf16.mxu0 0
    %972 = vmatpush1.bf16.msra.mxu0 0
    %973 = vmatprep.subr.bf16.mxu0 0
    %974 = vmatpush1.bf16.msra.mxu0 0
    %975 = vmatprep.subr.bf16.mxu0 0
    %976 = vmatpush1.bf16.msra.mxu0 0
    %977 = vmatprep.subr.bf16.mxu0 0
    %978 = vmatpush1.bf16.msra.mxu0 0
    %979 = vmatprep.subr.bf16.mxu0 0
    %980 = vmatpush1.bf16.msra.mxu0 0
    %981 = vmatprep.subr.bf16.mxu0 0
    %982 = vmatpush1.bf16.msra.mxu0 0
    %983 = vmatprep.mubr.bf16.mxu0 0
    %984 = vmatmul.mubr.bf16.gmra.mrb[0].mxu0 %v909
    %v985 = vpop.f32.mrb[0].mxu0
    %v986 = vadd.f32 %v946, %v985
    %v987 = vpop.f32.mrb[0].mxu0
    %v988 = vpop.f32.mrb[0].mxu0
    %v989 = vpop.f32.mrb[0].mxu0
    %990 = vdwg.mxu0
    %v991 = vmax.f32 %v879, %v986
    %s992 = scalar_lea.vmem %s0, 21
    %v993 = vld [vmem:[%s992] sm:$0x7]
    %v996 = vunpack.c.l.s4 1966171168
    %v997 = vunpack.c.0.s8 %v996
    %v998 = vlaneseq
    %v999 = vshrl.u32 %v998, 7
    %v1000 = vsub.s32 %v997, %v999
    %v1001 = vrot.slane %v993, %v1000
    %v1002 = vcombine.high %v1001, %v1001
    %v1004 = vunpack.c.l.s4 1966171168
    %v1005 = vunpack.c.0.s8 %v1004
    %v1006 = vlaneseq
    %v1007 = vshrl.u32 %v1006, 7
    %v1008 = vsub.s32 %v1005, %v1007
    %v1009 = vrot.slane %v1001, %v1008
    %v1011 = vunpack.c.l.s4 1966171168
    %v1012 = vunpack.c.0.s8 %v1011
    %v1013 = vlaneseq
    %v1014 = vshrl.u32 %v1013, 7
    %v1015 = vsub.s32 %v1012, %v1014
    %v1016 = vrot.slane %v1002, %v1015
    %v1017 = vcombine.high %v1009, %v1009
    %v1021 = vsel %vm229, %v1017, 0
    %1023 = vmatprep.subr.bf16.mxu0 0
    %1024 = vmatpush1.bf16.msra.mxu0 %v184
    %1025 = vmatprep.subr.bf16.mxu0 0
    %1026 = vmatpush1.bf16.msra.mxu0 %v185
    %1027 = vmatprep.subr.bf16.mxu0 0
    %1028 = vmatpush1.bf16.msra.mxu0 %v186
    %1029 = vmatprep.subr.bf16.mxu0 0
    %1030 = vmatpush1.bf16.msra.mxu0 %v187
    %1031 = vmatprep.subr.bf16.mxu0 0
    %1032 = vmatpush1.bf16.msra.mxu0 %v188
    %1033 = vmatprep.subr.bf16.mxu0 0
    %1034 = vmatpush1.bf16.msra.mxu0 %v189
    %1035 = vmatprep.subr.bf16.mxu0 0
    %1036 = vmatpush1.bf16.msra.mxu0 %v190
    %1037 = vmatprep.subr.bf16.mxu0 0
    %1038 = vmatpush1.bf16.msra.mxu0 %v191
    %1039 = vmatprep.subr.bf16.mxu0 0
    %1040 = vmatpush1.bf16.msra.mxu0 %v192
    %1041 = vmatprep.subr.bf16.mxu0 0
    %1042 = vmatpush1.bf16.msra.mxu0 %v193
    %1043 = vmatprep.subr.bf16.mxu0 0
    %1044 = vmatpush1.bf16.msra.mxu0 %v194
    %1045 = vmatprep.subr.bf16.mxu0 0
    %1046 = vmatpush1.bf16.msra.mxu0 %v195
    %1047 = vmatprep.subr.bf16.mxu0 0
    %1048 = vmatpush1.bf16.msra.mxu0 %v196
    %1049 = vmatprep.subr.bf16.mxu0 0
    %1050 = vmatpush1.bf16.msra.mxu0 %v197
    %1051 = vmatprep.subr.bf16.mxu0 0
    %1052 = vmatpush1.bf16.msra.mxu0 %v198
    %1053 = vmatprep.subr.bf16.mxu0 0
    %1054 = vmatpush1.bf16.msra.mxu0 %v199
    %1055 = vmatprep.mubr.bf16.mxu0 %v1016
    %1056 = vmatmul.mubr.bf16.gmra.mrb[0].mxu0 %v1009
    %v1057 = vpop.f32.mrb[0].mxu0
    %v1058 = vadd.f32 0.0, %v1057
    %v1059 = vpop.f32.mrb[0].mxu0
    %v1060 = vpop.f32.mrb[0].mxu0
    %v1061 = vpop.f32.mrb[0].mxu0
    %1062 = vdwg.mxu0
    %1063 = vmatprep.subr.bf16.mxu0 0
    %1064 = vmatpush1.bf16.msra.mxu0 %v200
    %1065 = vmatprep.subr.bf16.mxu0 0
    %1066 = vmatpush1.bf16.msra.mxu0 %v201
    %1067 = vmatprep.subr.bf16.mxu0 0
    %1068 = vmatpush1.bf16.msra.mxu0 %v202
    %1069 = vmatprep.subr.bf16.mxu0 0
    %1070 = vmatpush1.bf16.msra.mxu0 %v203
    %1071 = vmatprep.subr.bf16.mxu0 0
    %1072 = vmatpush1.bf16.msra.mxu0 %v204
    %1073 = vmatprep.subr.bf16.mxu0 0
    %1074 = vmatpush1.bf16.msra.mxu0 %v205
    %1075 = vmatprep.subr.bf16.mxu0 0
    %1076 = vmatpush1.bf16.msra.mxu0 %v235
    %1077 = vmatprep.subr.bf16.mxu0 0
    %1078 = vmatpush1.bf16.msra.mxu0 0
    %1079 = vmatprep.subr.bf16.mxu0 0
    %1080 = vmatpush1.bf16.msra.mxu0 0
    %1081 = vmatprep.subr.bf16.mxu0 0
    %1082 = vmatpush1.bf16.msra.mxu0 0
    %1083 = vmatprep.subr.bf16.mxu0 0
    %1084 = vmatpush1.bf16.msra.mxu0 0
    %1085 = vmatprep.subr.bf16.mxu0 0
    %1086 = vmatpush1.bf16.msra.mxu0 0
    %1087 = vmatprep.subr.bf16.mxu0 0
    %1088 = vmatpush1.bf16.msra.mxu0 0
    %1089 = vmatprep.subr.bf16.mxu0 0
    %1090 = vmatpush1.bf16.msra.mxu0 0
    %1091 = vmatprep.subr.bf16.mxu0 0
    %1092 = vmatpush1.bf16.msra.mxu0 0
    %1093 = vmatprep.subr.bf16.mxu0 0
    %1094 = vmatpush1.bf16.msra.mxu0 0
    %1095 = vmatprep.mubr.bf16.mxu0 0
    %1096 = vmatmul.mubr.bf16.gmra.mrb[0].mxu0 %v1021
    %v1097 = vpop.f32.mrb[0].mxu0
    %v1098 = vadd.f32 %v1058, %v1097
    %v1099 = vpop.f32.mrb[0].mxu0
    %v1100 = vpop.f32.mrb[0].mxu0
    %v1101 = vpop.f32.mrb[0].mxu0
    %1102 = vdwg.mxu0
    %v1103 = vmax.f32 %v991, %v1098
    %v1104 = vld [vmem:[%s2] sm:$0x1]
    %v1105 = vadd.f32 %v1103, %v1104
    %s1106 = scalar_lea.vmem [#allocation2], 1
    %1107 = vst.msk [vmem:[%s1106] sm:$0x1] %vm655, %v1105
    %v1108 = vld [vmem:[#allocation2] sm:$0x1]
    %v1109 = vld [vmem:[#allocation2 + $0x1] sm:$0x1]
    %v1110 = vadd.f32 %v1108, 0.0
    %v1111 = vadd.f32 %v1109, 0.0
    %v1112 = vsel %vm655, %v1110, 0.0
    %v1113 = vsel %vm655, %v1111, 0.0
    %v1114 = vadd.f32 %v1112, %v1113
    %v1115 = vrcp.pop 2.0
    %v1116 = vmul.f32 %v1114, %v1115
    %v1117 = vmul.f32 %v1108, %v1108
    %v1118 = vmul.f32 %v1109, %v1109
    %v1119 = vadd.f32 %v1117, 0.0
    %v1120 = vadd.f32 %v1118, 0.0
    %v1121 = vsel %vm655, %v1119, 0.0
    %v1122 = vsel %vm655, %v1120, 0.0
    %v1123 = vadd.f32 %v1121, %v1122
    %v1124 = vmul.f32 %v1123, %v1115
    %v1125 = vmul.f32 %v1116, %v1116
    %v1126 = vsub.f32 %v1124, %v1125
    %v1127 = vsub.f32 %v1108, %v1116
    %v1128 = vsub.f32 %v1109, %v1116
    %v1129 = vadd.f32 %v1126, 1e-05
    %v1130 = vrsqrt.pop %v1129
    %v1131 = vmul.f32 %v1127, %v1130
    %v1132 = vmul.f32 %v1128, %v1130
    %v1133 = vld [vmem:[%s3] sm:$0x1]
    %v1134 = vmul.f32 %v1131, %v1133
    %v1135 = vmul.f32 %v1132, %v1133
    %v1136 = vld [vmem:[%s4] sm:$0x1]
    %v1137 = vadd.f32 %v1134, %v1136
    %v1138 = vadd.f32 %v1135, %v1136
    %vm1139 = vcmp.gt.f32.partialorder %v1137, 0.0
    %vm1140 = vcmp.gt.f32.partialorder %v1138, 0.0
    %v1141 = vmin.f32 %v1137, 0.0
    %v1142 = vmin.f32 %v1138, 0.0
    %v1143 = vmul.f32 %v1141, 1.442695
    %v1144 = vpow.pop %v1143
    %v1145 = vmul.f32 %v1142, 1.442695
    %v1146 = vpow.pop %v1145
    %v1147 = vsub.f32 %v1144, 1.0
    %v1148 = vsub.f32 %v1146, 1.0
    %v1149 = vmul.f32 %v1147, 1.6732632
    %v1150 = vmul.f32 %v1148, 1.6732632
    %v1151 = vsel %vm1139, %v1137, %v1149
    %v1152 = vsel %vm1140, %v1138, %v1150
    %v1153 = vmul.f32 %v1151, 1.050701
    %v1154 = vmul.f32 %v1152, 1.050701
    %1155 = vst.msk [vmem:[#allocation3] sm:$0x1] %vm655, %v1153
    %1156 = vst.msk [vmem:[#allocation3 + $0x1] sm:$0x1] %vm655, %v1154
    // Predicated region
    $region22: #{branch_forward.5} parent=1 // pred_check
      _
    $region23: #{branch_forward.5} parent=1 // pred_check_branch
      %1158 = sbr.rel (0) target = $region25
    $region24: #{branch_forward.5} parent=1 // pred_region
      %s1160 = ssub.s32 32, 32
      %1161 = vsyncadd [#allocation4], %s1160
      %s1162 = sshll.u32 [#allocation3], 4
      %s1163 = int_to_ptr.vmem [resolvable:$true] %s1162
      %1168 = dma.vmem_to_hbm [thread:$0]  %s1163, 32, %s5, [#allocation4], 16, 16, 1
    $region25: #{branch_forward.5} parent=1 // pred_fallthru
      _
    // Predicated region
    $region26: #{branch_forward.5} parent=1 // pred_check
      _
    $region27: #{branch_forward.5} parent=1 // pred_check_branch
      %1170 = sbr.rel (0) target = $region29
    $region28: #{branch_forward.5} parent=1 // pred_region
      %1171 = dma.done [#allocation4], 32
    $region29: #{branch_forward.5} parent=1 // pred_fallthru
      _
    %1172 = vsyncpa [#allocation4], 1

</llo_original>
